<compile_context>
chip_gen: v6e
topology: v6e:2x2x1
jax: 0.10.0
libtpu: 0.0.40
codegen_flags: <defaults>
</compile_context>

<pallas_src>
import jax
import jax.numpy as jnp
from jax.experimental import pallas as pl
from jax.experimental.pallas import tpu as pltpu


# ---------------------------------------------------------------------------
# Static network geometry (fixed by the PyTorch module: dense1 takes 2048
# features = 32*8*8, which forces an 80x80 single-channel input).
# ---------------------------------------------------------------------------
H_IN = W_IN = 80
K1, S1, C1 = 8, 4, 16                      # conv1
OH1 = OW1 = (H_IN - K1) // S1 + 1          # 19
NPATCH1 = OH1 * OW1                        # 361
NPATCH1_PAD = 368                          # padded to a multiple of 8
K2, S2, C2 = 4, 2, 32                      # conv2
OH2 = OW2 = (OH1 - K2) // S2 + 1           # 8
KCOLS2 = K2 * K2 * C1                      # 256 patch columns per conv2 tap
ROWCOLS2 = OW2 * KCOLS2                    # 2048 patch columns per conv2 row
CONV2_OUT_ROW = OW2 * C2                   # 256 conv2 outputs per row (w,c)
HID = 128

IMG_PER_STEP = 8                           # images per grid step
VMEM_LIMIT = 32 * 1024 * 1024


# ---------------------------------------------------------------------------
# Pallas kernels
# ---------------------------------------------------------------------------
def _conv1_kernel(p_ref, w_ref, b_ref, o_ref):
    """o = relu(p @ w + b); bf16 operands, f32 accumulate, bf16 store."""
    acc = jnp.dot(p_ref[...], w_ref[...], preferred_element_type=jnp.float32)
    o_ref[...] = jnp.maximum(acc + b_ref[...], 0.0).astype(o_ref.dtype)


def _head_kernel(p2_ref, w2bd_ref, b2_ref, w1h_ref, b1_ref, w2d_ref, b2d_ref,
                 o_ref):
    """Fused conv2 -> (C,H,W)-flatten -> dense1 -> ReLU -> dense2 -> softmax.

    p2_ref  : (8, IMG, 2048) bf16  conv2 im2col patches; group `oh` holds, per
              image, output row oh with column order ow*256 + kh*64 + kw*16 + ic
    w2bd_ref: (2048, 256) bf16     block-diagonal conv2 weight (8 x (256, 32))
    w1h_ref : (8, 256, 128) bf16   dense1 weight permuted to (oh, ow*32+c, n),
              which reproduces PyTorch's .view(B,-1) flatten order exactly.
    """
    n_img = o_ref.shape[0]
    w2bd = w2bd_ref[...]
    b2 = b2_ref[...]
    acc = jnp.zeros((n_img, HID), jnp.float32) + b1_ref[...]     # start at bias
    for oh in range(OH2):                                        # static 8 iters
        x = p2_ref[oh]                                           # (IMG, 2048) bf16
        h = jnp.dot(x, w2bd, preferred_element_type=jnp.float32) + b2
        h = jnp.maximum(h, 0.0).astype(jnp.bfloat16)             # conv2 row, (IMG, 256)
        acc = acc + jnp.dot(h, w1h_ref[oh],
                            preferred_element_type=jnp.float32)  # (IMG, 128)
    d1 = jnp.maximum(acc, 0.0).astype(jnp.bfloat16)              # dense1 + ReLU
    logits = jnp.dot(d1, w2d_ref[...], preferred_element_type=jnp.float32)
    logits = logits + b2d_ref[...]
    m = jnp.max(logits, axis=-1, keepdims=True)
    e = jnp.exp(logits - m)
    inv = pl.reciprocal(jnp.sum(e, axis=-1, keepdims=True), approx=True)
    o_ref[...] = e * inv


# ---------------------------------------------------------------------------
# pallas_call wrappers
# ---------------------------------------------------------------------------
def _conv1_pallas(p1, w1c, b1c, n_img):
    m_blk = IMG_PER_STEP * NPATCH1_PAD
    return pl.pallas_call(
        _conv1_kernel,
        out_shape=jax.ShapeDtypeStruct((n_img * NPATCH1_PAD, C1), jnp.bfloat16),
        grid_spec=pltpu.PrefetchScalarGridSpec(
            num_scalar_prefetch=0,
            grid=(n_img // IMG_PER_STEP,),
            in_specs=[
                pl.BlockSpec((m_blk, K1 * K1), lambda i: (i, 0)),
                pl.BlockSpec((K1 * K1, C1), lambda i: (0, 0)),
                pl.BlockSpec((1, C1), lambda i: (0, 0)),
            ],
            out_specs=pl.BlockSpec((m_blk, C1), lambda i: (i, 0)),
        ),
        compiler_params=pltpu.CompilerParams(
            dimension_semantics=("parallel",),
            vmem_limit_bytes=VMEM_LIMIT),
    )(p1, w1c, b1c)


def _head_pallas(p2, pk, n_img, n_actions):
    return pl.pallas_call(
        _head_kernel,
        out_shape=jax.ShapeDtypeStruct((n_img, n_actions), jnp.float32),
        grid_spec=pltpu.PrefetchScalarGridSpec(
            num_scalar_prefetch=0,
            grid=(n_img // IMG_PER_STEP,),
            in_specs=[
                pl.BlockSpec((OH2, IMG_PER_STEP, ROWCOLS2), lambda i: (0, i, 0)),
                pl.BlockSpec((ROWCOLS2, CONV2_OUT_ROW), lambda i: (0, 0)),
                pl.BlockSpec((1, CONV2_OUT_ROW), lambda i: (0, 0)),
                pl.BlockSpec((OH2, CONV2_OUT_ROW, HID), lambda i: (0, 0, 0)),
                pl.BlockSpec((1, HID), lambda i: (0, 0)),
                pl.BlockSpec((HID, n_actions), lambda i: (0, 0)),
                pl.BlockSpec((1, n_actions), lambda i: (0, 0)),
            ],
            out_specs=pl.BlockSpec((IMG_PER_STEP, n_actions), lambda i: (i, 0)),
        ),
        compiler_params=pltpu.CompilerParams(
            dimension_semantics=("parallel",),
            vmem_limit_bytes=VMEM_LIMIT),
    )(p2, pk["w2bd"], pk["b2c"], pk["w1h"], pk["b1d"], pk["w2d"], pk["b2d"])


# ---------------------------------------------------------------------------
# XLA-side im2col (pure gathers, emitted directly in bf16)
# ---------------------------------------------------------------------------
def _im2col_conv1(x):
    """x: (B, 1, 80, 80) f32 -> (B*368, 64) bf16, columns in (kh, kw) order."""
    b = x.shape[0]
    img = x[:, 0]                                                 # (B, 80, 80)
    r = S1 * jnp.arange(OH1)[:, None] + jnp.arange(K1)[None, :]   # (19, 8)
    p = img[:, r, :]                                              # (B, oh, kh, w)
    p = p[:, :, :, r]                                             # (B, oh, kh, ow, kw)
    p = p.transpose(0, 1, 3, 2, 4)                                # (B, oh, ow, kh, kw)
    p = p.reshape(b, NPATCH1, K1 * K1)
    p = jnp.pad(p, ((0, 0), (0, NPATCH1_PAD - NPATCH1), (0, 0)))  # 361 -> 368
    return p.reshape(b * NPATCH1_PAD, K1 * K1).astype(jnp.bfloat16)


def _im2col_conv2(y1):
    """y1: (B, 19, 19, 16) bf16 NHWC -> (8, B, 2048) bf16 patches.

    Group `oh` holds conv2 output row oh for every image, columns ordered
    ow*256 + kh*64 + kw*16 + ic (matches w2bd and w1h packing)."""
    b = y1.shape[0]
    r = S2 * jnp.arange(OH2)[:, None] + jnp.arange(K2)[None, :]   # (8, 4)
    p = y1[:, r, :, :]                                            # (B, oh, kh, w, ic)
    p = p[:, :, :, r, :]                                          # (B, oh, kh, ow, kw, ic)
    p = p.transpose(1, 0, 3, 2, 4, 5)                             # (oh, B, ow, kh, kw, ic)
    return p.reshape(OH2, b, ROWCOLS2)


# ---------------------------------------------------------------------------
# Parameters: PyTorch-layout init + one-time MXU-ready packing
# ---------------------------------------------------------------------------
def init_params(key, action_count):
    ks = jax.random.split(key, 8)
    scale = 0.05
    return {
        "conv1_w": scale * jax.random.normal(ks[0], (16, 1, 8, 8), jnp.float32),
        "conv1_b": scale * jax.random.normal(ks[1], (16,), jnp.float32),
        "conv2_w": scale * jax.random.normal(ks[2], (32, 16, 4, 4), jnp.float32),
        "conv2_b": scale * jax.random.normal(ks[3], (32,), jnp.float32),
        "dense1_w": scale * jax.random.normal(ks[4], (128, 2048), jnp.float32),
        "dense1_b": scale * jax.random.normal(ks[5], (128,), jnp.float32),
        "dense2_w": scale * jax.random.normal(ks[6], (action_count, 128), jnp.float32),
        "dense2_b": scale * jax.random.normal(ks[7], (action_count,), jnp.float32),
    }


def pack_params(params):
    """One-time weight re-layout into the forms the kernels consume (bf16)."""
    # conv1: (16,1,8,8) -> (64, 16), rows in (kh, kw) order (ic == 1).
    w1c = params["conv1_w"].reshape(C1, K1 * K1).T.astype(jnp.bfloat16)
    b1c = params["conv1_b"].reshape(1, C1).astype(jnp.float32)

    # conv2: (32,16,4,4) -> (kh,kw,ic, oc) -> (256, 32), then block-diagonal
    # (2048, 256) so each grid row of 8 spatial positions is one GEMM.
    w2c = params["conv2_w"].transpose(2, 3, 1, 0).reshape(KCOLS2, C2)
    eye = jnp.eye(OW2, dtype=w2c.dtype)
    w2bd = jnp.einsum("kc,oq->okqc", w2c, eye).reshape(ROWCOLS2, CONV2_OUT_ROW)
    w2bd = w2bd.astype(jnp.bfloat16)
    b2c = jnp.tile(params["conv2_b"], OW2).reshape(1, CONV2_OUT_ROW)
    b2c = b2c.astype(jnp.float32)

    # dense1: (128, 2048) with PyTorch flatten index c*64 + h*8 + w, permuted
    # to (oh, ow*32 + c, n) so the conv2 GEMM output multiplies it directly.
    w1h = params["dense1_w"].reshape(HID, C2, OH2, OW2)
    w1h = w1h.transpose(2, 3, 1, 0).reshape(OH2, CONV2_OUT_ROW, HID)
    w1h = w1h.astype(jnp.bfloat16)
    b1d = params["dense1_b"].reshape(1, HID).astype(jnp.float32)

    # dense2: (A, 128) -> (128, A)
    w2d = params["dense2_w"].T.astype(jnp.bfloat16)
    b2d = params["dense2_b"].reshape(1, -1).astype(jnp.float32)

    return {"w1c": w1c, "b1c": b1c, "w2bd": w2bd, "b2c": b2c,
            "w1h": w1h, "b1d": b1d, "w2d": w2d, "b2d": b2d}


# ---------------------------------------------------------------------------
# Forward pass (Policy.forward)
# ---------------------------------------------------------------------------
def policy_forward(packed, x):
    """x: (B, 1, 80, 80) f32 NCHW (PyTorch layout). Returns (B, A) softmax."""
    b = x.shape[0]
    b_pad = ((b + IMG_PER_STEP - 1) // IMG_PER_STEP) * IMG_PER_STEP
    if b_pad != b:
        x = jnp.pad(x, ((0, b_pad - b), (0, 0), (0, 0), (0, 0)))

    # conv1 + ReLU (Pallas GEMM); activations stay NHWC / bf16, no transpose.
    p1 = _im2col_conv1(x)                                         # (B*368, 64)
    y1 = _conv1_pallas(p1, packed["w1c"], packed["b1c"], b_pad)   # (B*368, 16)
    y1 = y1.reshape(b_pad, NPATCH1_PAD, C1)[:, :NPATCH1, :]
    y1 = y1.reshape(b_pad, OH1, OW1, C1)                          # (B,19,19,16)

    # conv2 + flatten + dense1 + ReLU + dense2 + softmax: one fused kernel.
    p2 = _im2col_conv2(y1)                                        # (8, B, 2048)
    n_actions = packed["w2d"].shape[1]
    probs = _head_pallas(p2, packed, b_pad, n_actions)            # (B_pad, A)
    return probs[:b]


# ---------------------------------------------------------------------------
# Pure-JAX reference (f32) for validation
# ---------------------------------------------------------------------------
def reference_forward(params, x):
    dn = ("NCHW", "OIHW", "NCHW")
    y = jax.lax.conv_general_dilated(x, params["conv1_w"], (S1, S1), "VALID",
                                     dimension_numbers=dn)
    y = jax.nn.relu(y + params["conv1_b"][None, :, None, None])
    y = jax.lax.conv_general_dilated(y, params["conv2_w"], (S2, S2), "VALID",
                                     dimension_numbers=dn)
    y = jax.nn.relu(y + params["conv2_b"][None, :, None, None])
    f = y.reshape(y.shape[0], -1)
    h = jax.nn.relu(f @ params["dense1_w"].T + params["dense1_b"])
    logits = h @ params["dense2_w"].T + params["dense2_b"]
    return jax.nn.softmax(logits, axis=1)


# ---------------------------------------------------------------------------
if __name__ == "__main__":
    ACTION_COUNT = 6   # e.g. Pong
    BATCH = 2
    key = jax.random.PRNGKey(0)
    k_x, k_p = jax.random.split(key)

    x = jax.random.normal(k_x, (BATCH, 1, H_IN, W_IN), jnp.float32)
    params = init_params(k_p, ACTION_COUNT)
    packed = pack_params(params)

    fwd = jax.jit(policy_forward)
    probs = fwd(packed, x)
    jax.block_until_ready(probs)

    assert probs.shape == (BATCH, ACTION_COUNT)
    assert bool(jnp.all(jnp.isfinite(probs)))
    # softmax rows sum to ~1 (approx reciprocal => loose tolerance)
    assert bool(jnp.allclose(jnp.sum(probs, axis=1), 1.0, atol=1e-2))

    # match the f32 PyTorch-semantics reference to bf16 accuracy
    ref = reference_forward(params, x)
    assert bool(jnp.allclose(probs, ref, atol=2e-2))

    print("KERNEL_OK")
</pallas_src>

<mosaic_0001>
module attributes {stable_mosaic.version = 11 : i64} {
  func.func @_conv1_kernel(%arg0: i32, %arg1: memref<2944x64xbf16, #tpu.memory_space<vmem>>, %arg2: memref<64x16xbf16, #tpu.memory_space<vmem>>, %arg3: memref<1x16xf32, #tpu.memory_space<vmem>>, %arg4: memref<2944x16xbf16, #tpu.memory_space<vmem>>) attributes {dimension_semantics = [#tpu.dimension_semantics<parallel>], iteration_bounds = array<i64: 1>, scalar_prefetch = 0 : i64, scratch_operands = 0 : i64, tpu.core_type = #tpu.core_type<tc>, window_params = [{transform_indices = @transform_0, window_bounds = array<i64: 2944, 64>}, {pipeline_mode = #tpu.pipeline_mode<synchronous>, transform_indices = @transform_1, window_bounds = array<i64: 64, 16>}, {pipeline_mode = #tpu.pipeline_mode<synchronous>, transform_indices = @transform_2, window_bounds = array<i64: 1, 16>}, {transform_indices = @transform_3, window_bounds = array<i64: 2944, 16>}]} {
    %c0 = arith.constant 0 : index
    %c0_0 = arith.constant 0 : index
    %0 = vector.load %arg1[%c0, %c0_0] : memref<2944x64xbf16, #tpu.memory_space<vmem>>, vector<2944x64xbf16>
    %c0_1 = arith.constant 0 : index
    %c0_2 = arith.constant 0 : index
    %1 = vector.load %arg2[%c0_1, %c0_2] : memref<64x16xbf16, #tpu.memory_space<vmem>>, vector<64x16xbf16>
    %cst = arith.constant dense<0.000000e+00> : vector<2944x16xf32>
    %2 = tpu.matmul %0, %1, %cst {dimension_numbers = #tpu.dot_dimension_numbers<[1], [0], [0], [1], [0, 0, 1, 1], [], []>} : vector<2944x64xbf16>, vector<64x16xbf16>, vector<2944x16xf32> -> vector<2944x16xf32>
    %c0_3 = arith.constant 0 : index
    %c0_4 = arith.constant 0 : index
    %3 = vector.load %arg3[%c0_3, %c0_4] : memref<1x16xf32, #tpu.memory_space<vmem>>, vector<1x16xf32>
    %4 = vector.broadcast %3 : vector<1x16xf32> to vector<2944x16xf32>
    %5 = arith.addf %2, %4 : vector<2944x16xf32>
    %cst_5 = arith.constant 0.000000e+00 : f32
    %6 = vector.broadcast %cst_5 : f32 to vector<2944x16xf32>
    %7 = arith.maximumf %5, %6 : vector<2944x16xf32>
    %8 = arith.truncf %7 : vector<2944x16xf32> to vector<2944x16xbf16>
    %c0_6 = arith.constant 0 : index
    %c0_7 = arith.constant 0 : index
    %9 = vector.load %arg4[%c0_6, %c0_7] : memref<2944x16xbf16, #tpu.memory_space<vmem>>, vector<2944x16xbf16>
    tpu.vector_store %arg4[%c0_6, %c0_7], %8 {strides = array<i32>} : memref<2944x16xbf16, #tpu.memory_space<vmem>>, vector<2944x16xbf16>,
    return
  }
  func.func @transform_0(%arg0: i32) -> (i32, i32) {
    %c0_i32 = arith.constant 0 : i32
    %c0_i32_0 = arith.constant 0 : i32
    return %arg0, %c0_i32 : i32, i32
  }
  func.func @transform_1(%arg0: i32) -> (i32, i32) {
    %c0_i32 = arith.constant 0 : i32
    %c0_i32_0 = arith.constant 0 : i32
    %c0_i32_1 = arith.constant 0 : i32
    return %c0_i32, %c0_i32_0 : i32, i32
  }
  func.func @transform_2(%arg0: i32) -> (i32, i32) {
    %c0_i32 = arith.constant 0 : i32
    %c0_i32_0 = arith.constant 0 : i32
    %c0_i32_1 = arith.constant 0 : i32
    return %c0_i32, %c0_i32_0 : i32, i32
  }
  func.func @transform_3(%arg0: i32) -> (i32, i32) {
    %c0_i32 = arith.constant 0 : i32
    %c0_i32_0 = arith.constant 0 : i32
    return %arg0, %c0_i32 : i32, i32
  }
}

module attributes {stable_mosaic.version = 11 : i64} {
  func.func @_head_kernel(%arg0: i32, %arg1: memref<8x8x2048xbf16, #tpu.memory_space<vmem>>, %arg2: memref<2048x256xbf16, #tpu.memory_space<vmem>>, %arg3: memref<1x256xf32, #tpu.memory_space<vmem>>, %arg4: memref<8x256x128xbf16, #tpu.memory_space<vmem>>, %arg5: memref<1x128xf32, #tpu.memory_space<vmem>>, %arg6: memref<128x6xbf16, #tpu.memory_space<vmem>>, %arg7: memref<1x6xf32, #tpu.memory_space<vmem>>, %arg8: memref<8x6xf32, #tpu.memory_space<vmem>>) attributes {dimension_semantics = [#tpu.dimension_semantics<parallel>], iteration_bounds = array<i64: 1>, scalar_prefetch = 0 : i64, scratch_operands = 0 : i64, tpu.core_type = #tpu.core_type<tc>, window_params = [{transform_indices = @transform_0, window_bounds = array<i64: 8, 8, 2048>}, {pipeline_mode = #tpu.pipeline_mode<synchronous>, transform_indices = @transform_1, window_bounds = array<i64: 2048, 256>}, {pipeline_mode = #tpu.pipeline_mode<synchronous>, transform_indices = @transform_2, window_bounds = array<i64: 1, 256>}, {pipeline_mode = #tpu.pipeline_mode<synchronous>, transform_indices = @transform_3, window_bounds = array<i64: 8, 256, 128>}, {pipeline_mode = #tpu.pipeline_mode<synchronous>, transform_indices = @transform_4, window_bounds = array<i64: 1, 128>}, {pipeline_mode = #tpu.pipeline_mode<synchronous>, transform_indices = @transform_5, window_bounds = array<i64: 128, 6>}, {pipeline_mode = #tpu.pipeline_mode<synchronous>, transform_indices = @transform_6, window_bounds = array<i64: 1, 6>}, {transform_indices = @transform_7, window_bounds = array<i64: 8, 6>}]} {
    %c0 = arith.constant 0 : index
    %c0_0 = arith.constant 0 : index
    %0 = vector.load %arg2[%c0, %c0_0] : memref<2048x256xbf16, #tpu.memory_space<vmem>>, vector<2048x256xbf16>
    %c0_1 = arith.constant 0 : index
    %c0_2 = arith.constant 0 : index
    %1 = vector.load %arg3[%c0_1, %c0_2] : memref<1x256xf32, #tpu.memory_space<vmem>>, vector<1x256xf32>
    %cst = arith.constant 0.000000e+00 : f32
    %2 = vector.broadcast %cst : f32 to vector<8x128xf32>
    %c0_3 = arith.constant 0 : index
    %c0_4 = arith.constant 0 : index
    %3 = vector.load %arg5[%c0_3, %c0_4] : memref<1x128xf32, #tpu.memory_space<vmem>>, vector<1x128xf32>
    %4 = vector.broadcast %3 : vector<1x128xf32> to vector<8x128xf32>
    %5 = arith.addf %2, %4 : vector<8x128xf32>
    %c0_5 = arith.constant 0 : index
    %c0_6 = arith.constant 0 : index
    %c0_7 = arith.constant 0 : index
    %6 = vector.load %arg1[%c0_5, %c0_6, %c0_7] : memref<8x8x2048xbf16, #tpu.memory_space<vmem>>, vector<1x8x2048xbf16>
    %7 = vector.shape_cast %6 : vector<1x8x2048xbf16> to vector<8x2048xbf16>
    %cst_8 = arith.constant dense<0.000000e+00> : vector<8x256xf32>
    %8 = tpu.matmul %7, %0, %cst_8 {dimension_numbers = #tpu.dot_dimension_numbers<[1], [0], [0], [1], [0, 0, 1, 1], [], []>} : vector<8x2048xbf16>, vector<2048x256xbf16>, vector<8x256xf32> -> vector<8x256xf32>
    %9 = vector.broadcast %1 : vector<1x256xf32> to vector<8x256xf32>
    %10 = arith.addf %8, %9 : vector<8x256xf32>
    %cst_9 = arith.constant 0.000000e+00 : f32
    %11 = vector.broadcast %cst_9 : f32 to vector<8x256xf32>
    %12 = arith.maximumf %10, %11 : vector<8x256xf32>
    %13 = arith.truncf %12 : vector<8x256xf32> to vector<8x256xbf16>
    %c0_10 = arith.constant 0 : index
    %c0_11 = arith.constant 0 : index
    %c0_12 = arith.constant 0 : index
    %14 = vector.load %arg4[%c0_10, %c0_11, %c0_12] : memref<8x256x128xbf16, #tpu.memory_space<vmem>>, vector<1x256x128xbf16>
    %15 = vector.shape_cast %14 : vector<1x256x128xbf16> to vector<256x128xbf16>
    %cst_13 = arith.constant dense<0.000000e+00> : vector<8x128xf32>
    %16 = tpu.matmul %13, %15, %cst_13 {dimension_numbers = #tpu.dot_dimension_numbers<[1], [0], [0], [1], [0, 0, 1, 1], [], []>} : vector<8x256xbf16>, vector<256x128xbf16>, vector<8x128xf32> -> vector<8x128xf32>
    %17 = arith.addf %5, %16 : vector<8x128xf32>
    %c1 = arith.constant 1 : index
    %c0_14 = arith.constant 0 : index
    %c0_15 = arith.constant 0 : index
    %18 = vector.load %arg1[%c1, %c0_14, %c0_15] : memref<8x8x2048xbf16, #tpu.memory_space<vmem>>, vector<1x8x2048xbf16>
    %19 = vector.shape_cast %18 : vector<1x8x2048xbf16> to vector<8x2048xbf16>
    %cst_16 = arith.constant dense<0.000000e+00> : vector<8x256xf32>
    %20 = tpu.matmul %19, %0, %cst_16 {dimension_numbers = #tpu.dot_dimension_numbers<[1], [0], [0], [1], [0, 0, 1, 1], [], []>} : vector<8x2048xbf16>, vector<2048x256xbf16>, vector<8x256xf32> -> vector<8x256xf32>
    %21 = vector.broadcast %1 : vector<1x256xf32> to vector<8x256xf32>
    %22 = arith.addf %20, %21 : vector<8x256xf32>
    %cst_17 = arith.constant 0.000000e+00 : f32
    %23 = vector.broadcast %cst_17 : f32 to vector<8x256xf32>
    %24 = arith.maximumf %22, %23 : vector<8x256xf32>
    %25 = arith.truncf %24 : vector<8x256xf32> to vector<8x256xbf16>
    %c1_18 = arith.constant 1 : index
    %c0_19 = arith.constant 0 : index
    %c0_20 = arith.constant 0 : index
    %26 = vector.load %arg4[%c1_18, %c0_19, %c0_20] : memref<8x256x128xbf16, #tpu.memory_space<vmem>>, vector<1x256x128xbf16>
    %27 = vector.shape_cast %26 : vector<1x256x128xbf16> to vector<256x128xbf16>
    %cst_21 = arith.constant dense<0.000000e+00> : vector<8x128xf32>
    %28 = tpu.matmul %25, %27, %cst_21 {dimension_numbers = #tpu.dot_dimension_numbers<[1], [0], [0], [1], [0, 0, 1, 1], [], []>} : vector<8x256xbf16>, vector<256x128xbf16>, vector<8x128xf32> -> vector<8x128xf32>
    %29 = arith.addf %17, %28 : vector<8x128xf32>
    %c2 = arith.constant 2 : index
    %c0_22 = arith.constant 0 : index
    %c0_23 = arith.constant 0 : index
    %30 = vector.load %arg1[%c2, %c0_22, %c0_23] : memref<8x8x2048xbf16, #tpu.memory_space<vmem>>, vector<1x8x2048xbf16>
    %31 = vector.shape_cast %30 : vector<1x8x2048xbf16> to vector<8x2048xbf16>
    %cst_24 = arith.constant dense<0.000000e+00> : vector<8x256xf32>
    %32 = tpu.matmul %31, %0, %cst_24 {dimension_numbers = #tpu.dot_dimension_numbers<[1], [0], [0], [1], [0, 0, 1, 1], [], []>} : vector<8x2048xbf16>, vector<2048x256xbf16>, vector<8x256xf32> -> vector<8x256xf32>
    %33 = vector.broadcast %1 : vector<1x256xf32> to vector<8x256xf32>
    %34 = arith.addf %32, %33 : vector<8x256xf32>
    %cst_25 = arith.constant 0.000000e+00 : f32
    %35 = vector.broadcast %cst_25 : f32 to vector<8x256xf32>
    %36 = arith.maximumf %34, %35 : vector<8x256xf32>
    %37 = arith.truncf %36 : vector<8x256xf32> to vector<8x256xbf16>
    %c2_26 = arith.constant 2 : index
    %c0_27 = arith.constant 0 : index
    %c0_28 = arith.constant 0 : index
    %38 = vector.load %arg4[%c2_26, %c0_27, %c0_28] : memref<8x256x128xbf16, #tpu.memory_space<vmem>>, vector<1x256x128xbf16>
    %39 = vector.shape_cast %38 : vector<1x256x128xbf16> to vector<256x128xbf16>
    %cst_29 = arith.constant dense<0.000000e+00> : vector<8x128xf32>
    %40 = tpu.matmul %37, %39, %cst_29 {dimension_numbers = #tpu.dot_dimension_numbers<[1], [0], [0], [1], [0, 0, 1, 1], [], []>} : vector<8x256xbf16>, vector<256x128xbf16>, vector<8x128xf32> -> vector<8x128xf32>
    %41 = arith.addf %29, %40 : vector<8x128xf32>
    %c3 = arith.constant 3 : index
    %c0_30 = arith.constant 0 : index
    %c0_31 = arith.constant 0 : index
    %42 = vector.load %arg1[%c3, %c0_30, %c0_31] : memref<8x8x2048xbf16, #tpu.memory_space<vmem>>, vector<1x8x2048xbf16>
    %43 = vector.shape_cast %42 : vector<1x8x2048xbf16> to vector<8x2048xbf16>
    %cst_32 = arith.constant dense<0.000000e+00> : vector<8x256xf32>
    %44 = tpu.matmul %43, %0, %cst_32 {dimension_numbers = #tpu.dot_dimension_numbers<[1], [0], [0], [1], [0, 0, 1, 1], [], []>} : vector<8x2048xbf16>, vector<2048x256xbf16>, vector<8x256xf32> -> vector<8x256xf32>
    %45 = vector.broadcast %1 : vector<1x256xf32> to vector<8x256xf32>
    %46 = arith.addf %44, %45 : vector<8x256xf32>
    %cst_33 = arith.constant 0.000000e+00 : f32
    %47 = vector.broadcast %cst_33 : f32 to vector<8x256xf32>
    %48 = arith.maximumf %46, %47 : vector<8x256xf32>
    %49 = arith.truncf %48 : vector<8x256xf32> to vector<8x256xbf16>
    %c3_34 = arith.constant 3 : index
    %c0_35 = arith.constant 0 : index
    %c0_36 = arith.constant 0 : index
    %50 = vector.load %arg4[%c3_34, %c0_35, %c0_36] : memref<8x256x128xbf16, #tpu.memory_space<vmem>>, vector<1x256x128xbf16>
    %51 = vector.shape_cast %50 : vector<1x256x128xbf16> to vector<256x128xbf16>
    %cst_37 = arith.constant dense<0.000000e+00> : vector<8x128xf32>
    %52 = tpu.matmul %49, %51, %cst_37 {dimension_numbers = #tpu.dot_dimension_numbers<[1], [0], [0], [1], [0, 0, 1, 1], [], []>} : vector<8x256xbf16>, vector<256x128xbf16>, vector<8x128xf32> -> vector<8x128xf32>
    %53 = arith.addf %41, %52 : vector<8x128xf32>
    %c4 = arith.constant 4 : index
    %c0_38 = arith.constant 0 : index
    %c0_39 = arith.constant 0 : index
    %54 = vector.load %arg1[%c4, %c0_38, %c0_39] : memref<8x8x2048xbf16, #tpu.memory_space<vmem>>, vector<1x8x2048xbf16>
    %55 = vector.shape_cast %54 : vector<1x8x2048xbf16> to vector<8x2048xbf16>
    %cst_40 = arith.constant dense<0.000000e+00> : vector<8x256xf32>
    %56 = tpu.matmul %55, %0, %cst_40 {dimension_numbers = #tpu.dot_dimension_numbers<[1], [0], [0], [1], [0, 0, 1, 1], [], []>} : vector<8x2048xbf16>, vector<2048x256xbf16>, vector<8x256xf32> -> vector<8x256xf32>
    %57 = vector.broadcast %1 : vector<1x256xf32> to vector<8x256xf32>
    %58 = arith.addf %56, %57 : vector<8x256xf32>
    %cst_41 = arith.constant 0.000000e+00 : f32
    %59 = vector.broadcast %cst_41 : f32 to vector<8x256xf32>
    %60 = arith.maximumf %58, %59 : vector<8x256xf32>
    %61 = arith.truncf %60 : vector<8x256xf32> to vector<8x256xbf16>
    %c4_42 = arith.constant 4 : index
    %c0_43 = arith.constant 0 : index
    %c0_44 = arith.constant 0 : index
    %62 = vector.load %arg4[%c4_42, %c0_43, %c0_44] : memref<8x256x128xbf16, #tpu.memory_space<vmem>>, vector<1x256x128xbf16>
    %63 = vector.shape_cast %62 : vector<1x256x128xbf16> to vector<256x128xbf16>
    %cst_45 = arith.constant dense<0.000000e+00> : vector<8x128xf32>
    %64 = tpu.matmul %61, %63, %cst_45 {dimension_numbers = #tpu.dot_dimension_numbers<[1], [0], [0], [1], [0, 0, 1, 1], [], []>} : vector<8x256xbf16>, vector<256x128xbf16>, vector<8x128xf32> -> vector<8x128xf32>
    %65 = arith.addf %53, %64 : vector<8x128xf32>
    %c5 = arith.constant 5 : index
    %c0_46 = arith.constant 0 : index
    %c0_47 = arith.constant 0 : index
    %66 = vector.load %arg1[%c5, %c0_46, %c0_47] : memref<8x8x2048xbf16, #tpu.memory_space<vmem>>, vector<1x8x2048xbf16>
    %67 = vector.shape_cast %66 : vector<1x8x2048xbf16> to vector<8x2048xbf16>
    %cst_48 = arith.constant dense<0.000000e+00> : vector<8x256xf32>
    %68 = tpu.matmul %67, %0, %cst_48 {dimension_numbers = #tpu.dot_dimension_numbers<[1], [0], [0], [1], [0, 0, 1, 1], [], []>} : vector<8x2048xbf16>, vector<2048x256xbf16>, vector<8x256xf32> -> vector<8x256xf32>
    %69 = vector.broadcast %1 : vector<1x256xf32> to vector<8x256xf32>
    %70 = arith.addf %68, %69 : vector<8x256xf32>
    %cst_49 = arith.constant 0.000000e+00 : f32
    %71 = vector.broadcast %cst_49 : f32 to vector<8x256xf32>
    %72 = arith.maximumf %70, %71 : vector<8x256xf32>
    %73 = arith.truncf %72 : vector<8x256xf32> to vector<8x256xbf16>
    %c5_50 = arith.constant 5 : index
    %c0_51 = arith.constant 0 : index
    %c0_52 = arith.constant 0 : index
    %74 = vector.load %arg4[%c5_50, %c0_51, %c0_52] : memref<8x256x128xbf16, #tpu.memory_space<vmem>>, vector<1x256x128xbf16>
    %75 = vector.shape_cast %74 : vector<1x256x128xbf16> to vector<256x128xbf16>
    %cst_53 = arith.constant dense<0.000000e+00> : vector<8x128xf32>
    %76 = tpu.matmul %73, %75, %cst_53 {dimension_numbers = #tpu.dot_dimension_numbers<[1], [0], [0], [1], [0, 0, 1, 1], [], []>} : vector<8x256xbf16>, vector<256x128xbf16>, vector<8x128xf32> -> vector<8x128xf32>
    %77 = arith.addf %65, %76 : vector<8x128xf32>
    %c6 = arith.constant 6 : index
    %c0_54 = arith.constant 0 : index
    %c0_55 = arith.constant 0 : index
    %78 = vector.load %arg1[%c6, %c0_54, %c0_55] : memref<8x8x2048xbf16, #tpu.memory_space<vmem>>, vector<1x8x2048xbf16>
    %79 = vector.shape_cast %78 : vector<1x8x2048xbf16> to vector<8x2048xbf16>
    %cst_56 = arith.constant dense<0.000000e+00> : vector<8x256xf32>
    %80 = tpu.matmul %79, %0, %cst_56 {dimension_numbers = #tpu.dot_dimension_numbers<[1], [0], [0], [1], [0, 0, 1, 1], [], []>} : vector<8x2048xbf16>, vector<2048x256xbf16>, vector<8x256xf32> -> vector<8x256xf32>
    %81 = vector.broadcast %1 : vector<1x256xf32> to vector<8x256xf32>
    %82 = arith.addf %80, %81 : vector<8x256xf32>
    %cst_57 = arith.constant 0.000000e+00 : f32
    %83 = vector.broadcast %cst_57 : f32 to vector<8x256xf32>
    %84 = arith.maximumf %82, %83 : vector<8x256xf32>
    %85 = arith.truncf %84 : vector<8x256xf32> to vector<8x256xbf16>
    %c6_58 = arith.constant 6 : index
    %c0_59 = arith.constant 0 : index
    %c0_60 = arith.constant 0 : index
    %86 = vector.load %arg4[%c6_58, %c0_59, %c0_60] : memref<8x256x128xbf16, #tpu.memory_space<vmem>>, vector<1x256x128xbf16>
    %87 = vector.shape_cast %86 : vector<1x256x128xbf16> to vector<256x128xbf16>
    %cst_61 = arith.constant dense<0.000000e+00> : vector<8x128xf32>
    %88 = tpu.matmul %85, %87, %cst_61 {dimension_numbers = #tpu.dot_dimension_numbers<[1], [0], [0], [1], [0, 0, 1, 1], [], []>} : vector<8x256xbf16>, vector<256x128xbf16>, vector<8x128xf32> -> vector<8x128xf32>
    %89 = arith.addf %77, %88 : vector<8x128xf32>
    %c7 = arith.constant 7 : index
    %c0_62 = arith.constant 0 : index
    %c0_63 = arith.constant 0 : index
    %90 = vector.load %arg1[%c7, %c0_62, %c0_63] : memref<8x8x2048xbf16, #tpu.memory_space<vmem>>, vector<1x8x2048xbf16>
    %91 = vector.shape_cast %90 : vector<1x8x2048xbf16> to vector<8x2048xbf16>
    %cst_64 = arith.constant dense<0.000000e+00> : vector<8x256xf32>
    %92 = tpu.matmul %91, %0, %cst_64 {dimension_numbers = #tpu.dot_dimension_numbers<[1], [0], [0], [1], [0, 0, 1, 1], [], []>} : vector<8x2048xbf16>, vector<2048x256xbf16>, vector<8x256xf32> -> vector<8x256xf32>
    %93 = vector.broadcast %1 : vector<1x256xf32> to vector<8x256xf32>
    %94 = arith.addf %92, %93 : vector<8x256xf32>
    %cst_65 = arith.constant 0.000000e+00 : f32
    %95 = vector.broadcast %cst_65 : f32 to vector<8x256xf32>
    %96 = arith.maximumf %94, %95 : vector<8x256xf32>
    %97 = arith.truncf %96 : vector<8x256xf32> to vector<8x256xbf16>
    %c7_66 = arith.constant 7 : index
    %c0_67 = arith.constant 0 : index
    %c0_68 = arith.constant 0 : index
    %98 = vector.load %arg4[%c7_66, %c0_67, %c0_68] : memref<8x256x128xbf16, #tpu.memory_space<vmem>>, vector<1x256x128xbf16>
    %99 = vector.shape_cast %98 : vector<1x256x128xbf16> to vector<256x128xbf16>
    %cst_69 = arith.constant dense<0.000000e+00> : vector<8x128xf32>
    %100 = tpu.matmul %97, %99, %cst_69 {dimension_numbers = #tpu.dot_dimension_numbers<[1], [0], [0], [1], [0, 0, 1, 1], [], []>} : vector<8x256xbf16>, vector<256x128xbf16>, vector<8x128xf32> -> vector<8x128xf32>
    %101 = arith.addf %89, %100 : vector<8x128xf32>
    %cst_70 = arith.constant 0.000000e+00 : f32
    %102 = vector.broadcast %cst_70 : f32 to vector<8x128xf32>
    %103 = arith.maximumf %101, %102 : vector<8x128xf32>
    %104 = arith.truncf %103 : vector<8x128xf32> to vector<8x128xbf16>
    %c0_71 = arith.constant 0 : index
    %c0_72 = arith.constant 0 : index
    %105 = vector.load %arg6[%c0_71, %c0_72] : memref<128x6xbf16, #tpu.memory_space<vmem>>, vector<128x6xbf16>
    %cst_73 = arith.constant dense<0.000000e+00> : vector<8x6xf32>
    %106 = tpu.matmul %104, %105, %cst_73 {dimension_numbers = #tpu.dot_dimension_numbers<[1], [0], [0], [1], [0, 0, 1, 1], [], []>} : vector<8x128xbf16>, vector<128x6xbf16>, vector<8x6xf32> -> vector<8x6xf32>
    %c0_74 = arith.constant 0 : index
    %c0_75 = arith.constant 0 : index
    %107 = vector.load %arg7[%c0_74, %c0_75] : memref<1x6xf32, #tpu.memory_space<vmem>>, vector<1x6xf32>
    %108 = vector.broadcast %107 : vector<1x6xf32> to vector<8x6xf32>
    %109 = arith.addf %106, %108 : vector<8x6xf32>
    %cst_76 = arith.constant dense<0xFF800000> : vector<8xf32>
    %110 = vector.multi_reduction <maximumf>, %109, %cst_76 [1] : vector<8x6xf32> to vector<8xf32>
    %111 = vector.shape_cast %110 : vector<8xf32> to vector<8x1xf32>
    %112 = vector.broadcast %111 : vector<8x1xf32> to vector<8x6xf32>
    %113 = arith.subf %109, %112 : vector<8x6xf32>
    %114 = math.exp %113 : vector<8x6xf32>
    %cst_77 = arith.constant dense<0.000000e+00> : vector<8xf32>
    %115 = vector.multi_reduction <add>, %114, %cst_77 [1] : vector<8x6xf32> to vector<8xf32>
    %116 = vector.shape_cast %115 : vector<8xf32> to vector<8x1xf32>
    %117 = tpu.reciprocal %116 {approx = true} : vector<8x1xf32> -> vector<8x1xf32>
    %118 = vector.broadcast %117 : vector<8x1xf32> to vector<8x6xf32>
    %119 = arith.mulf %114, %118 : vector<8x6xf32>
    %c0_78 = arith.constant 0 : index
    %c0_79 = arith.constant 0 : index
    %120 = vector.load %arg8[%c0_78, %c0_79] : memref<8x6xf32, #tpu.memory_space<vmem>>, vector<8x6xf32>
    tpu.vector_store %arg8[%c0_78, %c0_79], %119 {strides = array<i32>} : memref<8x6xf32, #tpu.memory_space<vmem>>, vector<8x6xf32>,
    return
  }
  func.func @transform_0(%arg0: i32) -> (i32, i32, i32) {
    %c0_i32 = arith.constant 0 : i32
    %c0_i32_0 = arith.constant 0 : i32
    %c0_i32_1 = arith.constant 0 : i32
    return %c0_i32, %arg0, %c0_i32_0 : i32, i32, i32
  }
  func.func @transform_1(%arg0: i32) -> (i32, i32) {
    %c0_i32 = arith.constant 0 : i32
    %c0_i32_0 = arith.constant 0 : i32
    %c0_i32_1 = arith.constant 0 : i32
    return %c0_i32, %c0_i32_0 : i32, i32
  }
  func.func @transform_2(%arg0: i32) -> (i32, i32) {
    %c0_i32 = arith.constant 0 : i32
    %c0_i32_0 = arith.constant 0 : i32
    %c0_i32_1 = arith.constant 0 : i32
    return %c0_i32, %c0_i32_0 : i32, i32
  }
  func.func @transform_3(%arg0: i32) -> (i32, i32, i32) {
    %c0_i32 = arith.constant 0 : i32
    %c0_i32_0 = arith.constant 0 : i32
    %c0_i32_1 = arith.constant 0 : i32
    %c0_i32_2 = arith.constant 0 : i32
    return %c0_i32, %c0_i32_0, %c0_i32_1 : i32, i32, i32
  }
  func.func @transform_4(%arg0: i32) -> (i32, i32) {
    %c0_i32 = arith.constant 0 : i32
    %c0_i32_0 = arith.constant 0 : i32
    %c0_i32_1 = arith.constant 0 : i32
    return %c0_i32, %c0_i32_0 : i32, i32
  }
  func.func @transform_5(%arg0: i32) -> (i32, i32) {
    %c0_i32 = arith.constant 0 : i32
    %c0_i32_0 = arith.constant 0 : i32
    %c0_i32_1 = arith.constant 0 : i32
    return %c0_i32, %c0_i32_0 : i32, i32
  }
  func.func @transform_6(%arg0: i32) -> (i32, i32) {
    %c0_i32 = arith.constant 0 : i32
    %c0_i32_0 = arith.constant 0 : i32
    %c0_i32_1 = arith.constant 0 : i32
    return %c0_i32, %c0_i32_0 : i32, i32
  }
  func.func @transform_7(%arg0: i32) -> (i32, i32) {
    %c0_i32 = arith.constant 0 : i32
    %c0_i32_0 = arith.constant 0 : i32
    return %arg0, %c0_i32 : i32, i32
  }
}

</mosaic_0001>

<llo_original>
// kernel: policy_forward.2
$region0: #{policy_forward.2}
  #allocation0 [shape = 'u32[]', space=smem, size = 0x4, offset = 0x4, fixed_abs, tag = 'smem constant byte address 0x4 - core index']
  #allocation1 [shape = 'u32[144,128]{1,0:T(1,128)}', space=vmem, size = 0x12000, scoped, tag = 'internal scratch']
  %s0 = inlined_call_operand.vmem [shape: bf16[2944,64], index: 0, kind: input, shape index: {}]
  %s1 = inlined_call_operand.vmem [shape: bf16[64,16], index: 1, kind: input, shape index: {}]
  %s2 = inlined_call_operand.vmem [shape: f32[1,16], index: 2, kind: input, shape index: {}]
  %s3 = inlined_call_operand.vmem [shape: bf16[2944,16], index: 3, kind: output, shape index: {}]
  %s4 = sld [smem:[#allocation0]]
  $region22: #{policy_forward.2} parent=0
    _
  %s6 = ssub.s32 1, %s4
  %s7 = scalar_select 0, %s6, %s4
  // Predicated region
  $region2: #{policy_forward.2} parent=0 // pred_check
    _
  $region3: #{policy_forward.2} parent=0 // pred_check_branch
    %9 = sbr.rel (0) target = $region5
  $region4: #{policy_forward.2} parent=0 // pred_region
    _
  $region5: #{policy_forward.2} parent=0 // pred_fallthru
    _
  // Predicated region
  $region6: #{policy_forward.2} parent=0 // pred_check
    _
  $region7: #{policy_forward.2} parent=0 // pred_check_branch
    %11 = sbr.rel (0) target = $region9
  $region8: #{policy_forward.2} parent=0 // pred_region
    _
  $region9: #{policy_forward.2} parent=0 // pred_fallthru
    _
  // Predicated region
  $region10: #{policy_forward.2} parent=0 // pred_check
    _
  $region11: #{policy_forward.2} parent=0 // pred_check_branch
    %13 = sbr.rel (0) target = $region13
  $region12: #{policy_forward.2} parent=0 // pred_region
    _
  $region13: #{policy_forward.2} parent=0 // pred_fallthru
    _
  %v15 = vld [vmem:[%s0] sm:$0xf]
  %v16 = vld [vmem:[%s0 + $0x4] sm:$0xf]
  %v17 = vld [vmem:[%s0 + $0x8] sm:$0xf]
  %v18 = vld [vmem:[%s0 + $0xc] sm:$0xf]
  %v19 = vld [vmem:[%s0 + $0x10] sm:$0xf]
  %v20 = vld [vmem:[%s0 + $0x14] sm:$0xf]
  %v21 = vld [vmem:[%s0 + $0x18] sm:$0xf]
  %v22 = vld [vmem:[%s0 + $0x1c] sm:$0xf]
  %v23 = vld [vmem:[%s0 + $0x20] sm:$0xf]
  %v24 = vld [vmem:[%s0 + $0x24] sm:$0xf]
  %v25 = vld [vmem:[%s0 + $0x28] sm:$0xf]
  %v26 = vld [vmem:[%s0 + $0x2c] sm:$0xf]
  %v27 = vld [vmem:[%s0 + $0x30] sm:$0xf]
  %v28 = vld [vmem:[%s0 + $0x34] sm:$0xf]
  %v29 = vld [vmem:[%s0 + $0x38] sm:$0xf]
  %v30 = vld [vmem:[%s0 + $0x3c] sm:$0xf]
  %v31 = vld [vmem:[%s0 + $0x40] sm:$0xf]
  %v32 = vld [vmem:[%s0 + $0x44] sm:$0xf]
  %v33 = vld [vmem:[%s0 + $0x48] sm:$0xf]
  %v34 = vld [vmem:[%s0 + $0x4c] sm:$0xf]
  %v35 = vld [vmem:[%s0 + $0x50] sm:$0xf]
  %v36 = vld [vmem:[%s0 + $0x54] sm:$0xf]
  %v37 = vld [vmem:[%s0 + $0x58] sm:$0xf]
  %v38 = vld [vmem:[%s0 + $0x5c] sm:$0xf]
  %v39 = vld [vmem:[%s0 + $0x60] sm:$0xf]
  %v40 = vld [vmem:[%s0 + $0x64] sm:$0xf]
  %v41 = vld [vmem:[%s0 + $0x68] sm:$0xf]
  %v42 = vld [vmem:[%s0 + $0x6c] sm:$0xf]
  %v43 = vld [vmem:[%s0 + $0x70] sm:$0xf]
  %v44 = vld [vmem:[%s0 + $0x74] sm:$0xf]
  %v45 = vld [vmem:[%s0 + $0x78] sm:$0xf]
  %v46 = vld [vmem:[%s0 + $0x7c] sm:$0xf]
  %v47 = vld [vmem:[%s0 + $0x80] sm:$0xf]
  %v48 = vld [vmem:[%s0 + $0x84] sm:$0xf]
  %v49 = vld [vmem:[%s0 + $0x88] sm:$0xf]
  %v50 = vld [vmem:[%s0 + $0x8c] sm:$0xf]
  %v51 = vld [vmem:[%s0 + $0x90] sm:$0xf]
  %v52 = vld [vmem:[%s0 + $0x94] sm:$0xf]
  %v53 = vld [vmem:[%s0 + $0x98] sm:$0xf]
  %v54 = vld [vmem:[%s0 + $0x9c] sm:$0xf]
  %v55 = vld [vmem:[%s0 + $0xa0] sm:$0xf]
  %v56 = vld [vmem:[%s0 + $0xa4] sm:$0xf]
  %v57 = vld [vmem:[%s0 + $0xa8] sm:$0xf]
  %v58 = vld [vmem:[%s0 + $0xac] sm:$0xf]
  %v59 = vld [vmem:[%s0 + $0xb0] sm:$0xf]
  %v60 = vld [vmem:[%s0 + $0xb4] sm:$0xf]
  %v61 = vld [vmem:[%s0 + $0xb8] sm:$0xf]
  %v62 = vld [vmem:[%s0 + $0xbc] sm:$0xf]
  %v63 = vld [vmem:[%s0 + $0xc0] sm:$0xf]
  %v64 = vld [vmem:[%s0 + $0xc4] sm:$0xf]
  %v65 = vld [vmem:[%s0 + $0xc8] sm:$0xf]
  %v66 = vld [vmem:[%s0 + $0xcc] sm:$0xf]
  %v67 = vld [vmem:[%s0 + $0xd0] sm:$0xf]
  %v68 = vld [vmem:[%s0 + $0xd4] sm:$0xf]
  %v69 = vld [vmem:[%s0 + $0xd8] sm:$0xf]
  %v70 = vld [vmem:[%s0 + $0xdc] sm:$0xf]
  %v71 = vld [vmem:[%s0 + $0xe0] sm:$0xf]
  %v72 = vld [vmem:[%s0 + $0xe4] sm:$0xf]
  %v73 = vld [vmem:[%s0 + $0xe8] sm:$0xf]
  %v74 = vld [vmem:[%s0 + $0xec] sm:$0xf]
  %v75 = vld [vmem:[%s0 + $0xf0] sm:$0xf]
  %v76 = vld [vmem:[%s0 + $0xf4] sm:$0xf]
  %v77 = vld [vmem:[%s0 + $0xf8] sm:$0xf]
  %v78 = vld [vmem:[%s0 + $0xfc] sm:$0xf]
  %v79 = vld [vmem:[%s0 + $0x100] sm:$0xf]
  %v80 = vld [vmem:[%s0 + $0x104] sm:$0xf]
  %v81 = vld [vmem:[%s0 + $0x108] sm:$0xf]
  %v82 = vld [vmem:[%s0 + $0x10c] sm:$0xf]
  %v83 = vld [vmem:[%s0 + $0x110] sm:$0xf]
  %v84 = vld [vmem:[%s0 + $0x114] sm:$0xf]
  %v85 = vld [vmem:[%s0 + $0x118] sm:$0xf]
  %v86 = vld [vmem:[%s0 + $0x11c] sm:$0xf]
  %v87 = vld [vmem:[%s0 + $0x120] sm:$0xf]
  %v88 = vld [vmem:[%s0 + $0x124] sm:$0xf]
  %v89 = vld [vmem:[%s0 + $0x128] sm:$0xf]
  %v90 = vld [vmem:[%s0 + $0x12c] sm:$0xf]
  %v91 = vld [vmem:[%s0 + $0x130] sm:$0xf]
  %v92 = vld [vmem:[%s0 + $0x134] sm:$0xf]
  %v93 = vld [vmem:[%s0 + $0x138] sm:$0xf]
  %v94 = vld [vmem:[%s0 + $0x13c] sm:$0xf]
  %v95 = vld [vmem:[%s0 + $0x140] sm:$0xf]
  %v96 = vld [vmem:[%s0 + $0x144] sm:$0xf]
  %v97 = vld [vmem:[%s0 + $0x148] sm:$0xf]
  %v98 = vld [vmem:[%s0 + $0x14c] sm:$0xf]
  %v99 = vld [vmem:[%s0 + $0x150] sm:$0xf]
  %v100 = vld [vmem:[%s0 + $0x154] sm:$0xf]
  %v101 = vld [vmem:[%s0 + $0x158] sm:$0xf]
  %v102 = vld [vmem:[%s0 + $0x15c] sm:$0xf]
  %v103 = vld [vmem:[%s0 + $0x160] sm:$0xf]
  %v104 = vld [vmem:[%s0 + $0x164] sm:$0xf]
  %v105 = vld [vmem:[%s0 + $0x168] sm:$0xf]
  %v106 = vld [vmem:[%s0 + $0x16c] sm:$0xf]
  %v107 = vld [vmem:[%s0 + $0x170] sm:$0xf]
  %v108 = vld [vmem:[%s0 + $0x174] sm:$0xf]
  %v109 = vld [vmem:[%s0 + $0x178] sm:$0xf]
  %v110 = vld [vmem:[%s0 + $0x17c] sm:$0xf]
  %v111 = vld [vmem:[%s0 + $0x180] sm:$0xf]
  %v112 = vld [vmem:[%s0 + $0x184] sm:$0xf]
  %v113 = vld [vmem:[%s0 + $0x188] sm:$0xf]
  %v114 = vld [vmem:[%s0 + $0x18c] sm:$0xf]
  %v115 = vld [vmem:[%s0 + $0x190] sm:$0xf]
  %v116 = vld [vmem:[%s0 + $0x194] sm:$0xf]
  %v117 = vld [vmem:[%s0 + $0x198] sm:$0xf]
  %v118 = vld [vmem:[%s0 + $0x19c] sm:$0xf]
  %v119 = vld [vmem:[%s0 + $0x1a0] sm:$0xf]
  %v120 = vld [vmem:[%s0 + $0x1a4] sm:$0xf]
  %v121 = vld [vmem:[%s0 + $0x1a8] sm:$0xf]
  %v122 = vld [vmem:[%s0 + $0x1ac] sm:$0xf]
  %v123 = vld [vmem:[%s0 + $0x1b0] sm:$0xf]
  %v124 = vld [vmem:[%s0 + $0x1b4] sm:$0xf]
  %v125 = vld [vmem:[%s0 + $0x1b8] sm:$0xf]
  %v126 = vld [vmem:[%s0 + $0x1bc] sm:$0xf]
  %v127 = vld [vmem:[%s0 + $0x1c0] sm:$0xf]
  %v128 = vld [vmem:[%s0 + $0x1c4] sm:$0xf]
  %v129 = vld [vmem:[%s0 + $0x1c8] sm:$0xf]
  %v130 = vld [vmem:[%s0 + $0x1cc] sm:$0xf]
  %v131 = vld [vmem:[%s0 + $0x1d0] sm:$0xf]
  %v132 = vld [vmem:[%s0 + $0x1d4] sm:$0xf]
  %v133 = vld [vmem:[%s0 + $0x1d8] sm:$0xf]
  %v134 = vld [vmem:[%s0 + $0x1dc] sm:$0xf]
  %v135 = vld [vmem:[%s0 + $0x1e0] sm:$0xf]
  %v136 = vld [vmem:[%s0 + $0x1e4] sm:$0xf]
  %v137 = vld [vmem:[%s0 + $0x1e8] sm:$0xf]
  %v138 = vld [vmem:[%s0 + $0x1ec] sm:$0xf]
  %v139 = vld [vmem:[%s0 + $0x1f0] sm:$0xf]
  %v140 = vld [vmem:[%s0 + $0x1f4] sm:$0xf]
  %v141 = vld [vmem:[%s0 + $0x1f8] sm:$0xf]
  %v142 = vld [vmem:[%s0 + $0x1fc] sm:$0xf]
  %v143 = vld [vmem:[%s0 + $0x200] sm:$0xf]
  %v144 = vld [vmem:[%s0 + $0x204] sm:$0xf]
  %v145 = vld [vmem:[%s0 + $0x208] sm:$0xf]
  %v146 = vld [vmem:[%s0 + $0x20c] sm:$0xf]
  %v147 = vld [vmem:[%s0 + $0x210] sm:$0xf]
  %v148 = vld [vmem:[%s0 + $0x214] sm:$0xf]
  %v149 = vld [vmem:[%s0 + $0x218] sm:$0xf]
  %v150 = vld [vmem:[%s0 + $0x21c] sm:$0xf]
  %v151 = vld [vmem:[%s0 + $0x220] sm:$0xf]
  %v152 = vld [vmem:[%s0 + $0x224] sm:$0xf]
  %v153 = vld [vmem:[%s0 + $0x228] sm:$0xf]
  %v154 = vld [vmem:[%s0 + $0x22c] sm:$0xf]
  %v155 = vld [vmem:[%s0 + $0x230] sm:$0xf]
  %v156 = vld [vmem:[%s0 + $0x234] sm:$0xf]
  %v157 = vld [vmem:[%s0 + $0x238] sm:$0xf]
  %v158 = vld [vmem:[%s0 + $0x23c] sm:$0xf]
  %v159 = vld [vmem:[%s0 + $0x240] sm:$0xf]
  %v160 = vld [vmem:[%s0 + $0x244] sm:$0xf]
  %v161 = vld [vmem:[%s0 + $0x248] sm:$0xf]
  %v162 = vld [vmem:[%s0 + $0x24c] sm:$0xf]
  %v163 = vld [vmem:[%s0 + $0x250] sm:$0xf]
  %v164 = vld [vmem:[%s0 + $0x254] sm:$0xf]
  %v165 = vld [vmem:[%s0 + $0x258] sm:$0xf]
  %v166 = vld [vmem:[%s0 + $0x25c] sm:$0xf]
  %v167 = vld [vmem:[%s0 + $0x260] sm:$0xf]
  %v168 = vld [vmem:[%s0 + $0x264] sm:$0xf]
  %v169 = vld [vmem:[%s0 + $0x268] sm:$0xf]
  %v170 = vld [vmem:[%s0 + $0x26c] sm:$0xf]
  %v171 = vld [vmem:[%s0 + $0x270] sm:$0xf]
  %v172 = vld [vmem:[%s0 + $0x274] sm:$0xf]
  %v173 = vld [vmem:[%s0 + $0x278] sm:$0xf]
  %v174 = vld [vmem:[%s0 + $0x27c] sm:$0xf]
  %v175 = vld [vmem:[%s0 + $0x280] sm:$0xf]
  %v176 = vld [vmem:[%s0 + $0x284] sm:$0xf]
  %v177 = vld [vmem:[%s0 + $0x288] sm:$0xf]
  %v178 = vld [vmem:[%s0 + $0x28c] sm:$0xf]
  %v179 = vld [vmem:[%s0 + $0x290] sm:$0xf]
  %v180 = vld [vmem:[%s0 + $0x294] sm:$0xf]
  %v181 = vld [vmem:[%s0 + $0x298] sm:$0xf]
  %v182 = vld [vmem:[%s0 + $0x29c] sm:$0xf]
  %v183 = vld [vmem:[%s0 + $0x2a0] sm:$0xf]
  %v184 = vld [vmem:[%s0 + $0x2a4] sm:$0xf]
  %v185 = vld [vmem:[%s0 + $0x2a8] sm:$0xf]
  %v186 = vld [vmem:[%s0 + $0x2ac] sm:$0xf]
  %v187 = vld [vmem:[%s0 + $0x2b0] sm:$0xf]
  %v188 = vld [vmem:[%s0 + $0x2b4] sm:$0xf]
  %v189 = vld [vmem:[%s0 + $0x2b8] sm:$0xf]
  %v190 = vld [vmem:[%s0 + $0x2bc] sm:$0xf]
  %v191 = vld [vmem:[%s0 + $0x2c0] sm:$0xf]
  %v192 = vld [vmem:[%s0 + $0x2c4] sm:$0xf]
  %v193 = vld [vmem:[%s0 + $0x2c8] sm:$0xf]
  %v194 = vld [vmem:[%s0 + $0x2cc] sm:$0xf]
  %v195 = vld [vmem:[%s0 + $0x2d0] sm:$0xf]
  %v196 = vld [vmem:[%s0 + $0x2d4] sm:$0xf]
  %v197 = vld [vmem:[%s0 + $0x2d8] sm:$0xf]
  %v198 = vld [vmem:[%s0 + $0x2dc] sm:$0xf]
  %v199 = vld [vmem:[%s0 + $0x2e0] sm:$0xf]
  %v200 = vld [vmem:[%s0 + $0x2e4] sm:$0xf]
  %v201 = vld [vmem:[%s0 + $0x2e8] sm:$0xf]
  %v202 = vld [vmem:[%s0 + $0x2ec] sm:$0xf]
  %v203 = vld [vmem:[%s0 + $0x2f0] sm:$0xf]
  %v204 = vld [vmem:[%s0 + $0x2f4] sm:$0xf]
  %v205 = vld [vmem:[%s0 + $0x2f8] sm:$0xf]
  %v206 = vld [vmem:[%s0 + $0x2fc] sm:$0xf]
  %v207 = vld [vmem:[%s0 + $0x300] sm:$0xf]
  %v208 = vld [vmem:[%s0 + $0x304] sm:$0xf]
  %v209 = vld [vmem:[%s0 + $0x308] sm:$0xf]
  %v210 = vld [vmem:[%s0 + $0x30c] sm:$0xf]
  %v211 = vld [vmem:[%s0 + $0x310] sm:$0xf]
  %v212 = vld [vmem:[%s0 + $0x314] sm:$0xf]
  %v213 = vld [vmem:[%s0 + $0x318] sm:$0xf]
  %v214 = vld [vmem:[%s0 + $0x31c] sm:$0xf]
  %v215 = vld [vmem:[%s0 + $0x320] sm:$0xf]
  %v216 = vld [vmem:[%s0 + $0x324] sm:$0xf]
  %v217 = vld [vmem:[%s0 + $0x328] sm:$0xf]
  %v218 = vld [vmem:[%s0 + $0x32c] sm:$0xf]
  %v219 = vld [vmem:[%s0 + $0x330] sm:$0xf]
  %v220 = vld [vmem:[%s0 + $0x334] sm:$0xf]
  %v221 = vld [vmem:[%s0 + $0x338] sm:$0xf]
  %v222 = vld [vmem:[%s0 + $0x33c] sm:$0xf]
  %v223 = vld [vmem:[%s0 + $0x340] sm:$0xf]
  %v224 = vld [vmem:[%s0 + $0x344] sm:$0xf]
  %v225 = vld [vmem:[%s0 + $0x348] sm:$0xf]
  %v226 = vld [vmem:[%s0 + $0x34c] sm:$0xf]
  %v227 = vld [vmem:[%s0 + $0x350] sm:$0xf]
  %v228 = vld [vmem:[%s0 + $0x354] sm:$0xf]
  %v229 = vld [vmem:[%s0 + $0x358] sm:$0xf]
  %v230 = vld [vmem:[%s0 + $0x35c] sm:$0xf]
  %v231 = vld [vmem:[%s0 + $0x360] sm:$0xf]
  %v232 = vld [vmem:[%s0 + $0x364] sm:$0xf]
  %v233 = vld [vmem:[%s0 + $0x368] sm:$0xf]
  %v234 = vld [vmem:[%s0 + $0x36c] sm:$0xf]
  %v235 = vld [vmem:[%s0 + $0x370] sm:$0xf]
  %v236 = vld [vmem:[%s0 + $0x374] sm:$0xf]
  %v237 = vld [vmem:[%s0 + $0x378] sm:$0xf]
  %v238 = vld [vmem:[%s0 + $0x37c] sm:$0xf]
  %v239 = vld [vmem:[%s0 + $0x380] sm:$0xf]
  %v240 = vld [vmem:[%s0 + $0x384] sm:$0xf]
  %v241 = vld [vmem:[%s0 + $0x388] sm:$0xf]
  %v242 = vld [vmem:[%s0 + $0x38c] sm:$0xf]
  %v243 = vld [vmem:[%s0 + $0x390] sm:$0xf]
  %v244 = vld [vmem:[%s0 + $0x394] sm:$0xf]
  %v245 = vld [vmem:[%s0 + $0x398] sm:$0xf]
  %v246 = vld [vmem:[%s0 + $0x39c] sm:$0xf]
  %v247 = vld [vmem:[%s0 + $0x3a0] sm:$0xf]
  %v248 = vld [vmem:[%s0 + $0x3a4] sm:$0xf]
  %v249 = vld [vmem:[%s0 + $0x3a8] sm:$0xf]
  %v250 = vld [vmem:[%s0 + $0x3ac] sm:$0xf]
  %v251 = vld [vmem:[%s0 + $0x3b0] sm:$0xf]
  %v252 = vld [vmem:[%s0 + $0x3b4] sm:$0xf]
  %v253 = vld [vmem:[%s0 + $0x3b8] sm:$0xf]
  %v254 = vld [vmem:[%s0 + $0x3bc] sm:$0xf]
  %v255 = vld [vmem:[%s0 + $0x3c0] sm:$0xf]
  %v256 = vld [vmem:[%s0 + $0x3c4] sm:$0xf]
  %v257 = vld [vmem:[%s0 + $0x3c8] sm:$0xf]
  %v258 = vld [vmem:[%s0 + $0x3cc] sm:$0xf]
  %v259 = vld [vmem:[%s0 + $0x3d0] sm:$0xf]
  %v260 = vld [vmem:[%s0 + $0x3d4] sm:$0xf]
  %v261 = vld [vmem:[%s0 + $0x3d8] sm:$0xf]
  %v262 = vld [vmem:[%s0 + $0x3dc] sm:$0xf]
  %v263 = vld [vmem:[%s0 + $0x3e0] sm:$0xf]
  %v264 = vld [vmem:[%s0 + $0x3e4] sm:$0xf]
  %v265 = vld [vmem:[%s0 + $0x3e8] sm:$0xf]
  %v266 = vld [vmem:[%s0 + $0x3ec] sm:$0xf]
  %v267 = vld [vmem:[%s0 + $0x3f0] sm:$0xf]
  %v268 = vld [vmem:[%s0 + $0x3f4] sm:$0xf]
  %v269 = vld [vmem:[%s0 + $0x3f8] sm:$0xf]
  %v270 = vld [vmem:[%s0 + $0x3fc] sm:$0xf]
  %v271 = vld [vmem:[%s0 + $0x400] sm:$0xf]
  %v272 = vld [vmem:[%s0 + $0x404] sm:$0xf]
  %v273 = vld [vmem:[%s0 + $0x408] sm:$0xf]
  %v274 = vld [vmem:[%s0 + $0x40c] sm:$0xf]
  %v275 = vld [vmem:[%s0 + $0x410] sm:$0xf]
  %v276 = vld [vmem:[%s0 + $0x414] sm:$0xf]
  %v277 = vld [vmem:[%s0 + $0x418] sm:$0xf]
  %v278 = vld [vmem:[%s0 + $0x41c] sm:$0xf]
  %v279 = vld [vmem:[%s0 + $0x420] sm:$0xf]
  %v280 = vld [vmem:[%s0 + $0x424] sm:$0xf]
  %v281 = vld [vmem:[%s0 + $0x428] sm:$0xf]
  %v282 = vld [vmem:[%s0 + $0x42c] sm:$0xf]
  %v283 = vld [vmem:[%s0 + $0x430] sm:$0xf]
  %v284 = vld [vmem:[%s0 + $0x434] sm:$0xf]
  %v285 = vld [vmem:[%s0 + $0x438] sm:$0xf]
  %v286 = vld [vmem:[%s0 + $0x43c] sm:$0xf]
  %v287 = vld [vmem:[%s0 + $0x440] sm:$0xf]
  %v288 = vld [vmem:[%s0 + $0x444] sm:$0xf]
  %v289 = vld [vmem:[%s0 + $0x448] sm:$0xf]
  %v290 = vld [vmem:[%s0 + $0x44c] sm:$0xf]
  %v291 = vld [vmem:[%s0 + $0x450] sm:$0xf]
  %v292 = vld [vmem:[%s0 + $0x454] sm:$0xf]
  %v293 = vld [vmem:[%s0 + $0x458] sm:$0xf]
  %v294 = vld [vmem:[%s0 + $0x45c] sm:$0xf]
  %v295 = vld [vmem:[%s0 + $0x460] sm:$0xf]
  %v296 = vld [vmem:[%s0 + $0x464] sm:$0xf]
  %v297 = vld [vmem:[%s0 + $0x468] sm:$0xf]
  %v298 = vld [vmem:[%s0 + $0x46c] sm:$0xf]
  %v299 = vld [vmem:[%s0 + $0x470] sm:$0xf]
  %v300 = vld [vmem:[%s0 + $0x474] sm:$0xf]
  %v301 = vld [vmem:[%s0 + $0x478] sm:$0xf]
  %v302 = vld [vmem:[%s0 + $0x47c] sm:$0xf]
  %v303 = vld [vmem:[%s0 + $0x480] sm:$0xf]
  %v304 = vld [vmem:[%s0 + $0x484] sm:$0xf]
  %v305 = vld [vmem:[%s0 + $0x488] sm:$0xf]
  %v306 = vld [vmem:[%s0 + $0x48c] sm:$0xf]
  %v307 = vld [vmem:[%s0 + $0x490] sm:$0xf]
  %v308 = vld [vmem:[%s0 + $0x494] sm:$0xf]
  %v309 = vld [vmem:[%s0 + $0x498] sm:$0xf]
  %v310 = vld [vmem:[%s0 + $0x49c] sm:$0xf]
  %v311 = vld [vmem:[%s0 + $0x4a0] sm:$0xf]
  %v312 = vld [vmem:[%s0 + $0x4a4] sm:$0xf]
  %v313 = vld [vmem:[%s0 + $0x4a8] sm:$0xf]
  %v314 = vld [vmem:[%s0 + $0x4ac] sm:$0xf]
  %v315 = vld [vmem:[%s0 + $0x4b0] sm:$0xf]
  %v316 = vld [vmem:[%s0 + $0x4b4] sm:$0xf]
  %v317 = vld [vmem:[%s0 + $0x4b8] sm:$0xf]
  %v318 = vld [vmem:[%s0 + $0x4bc] sm:$0xf]
  %v319 = vld [vmem:[%s0 + $0x4c0] sm:$0xf]
  %v320 = vld [vmem:[%s0 + $0x4c4] sm:$0xf]
  %v321 = vld [vmem:[%s0 + $0x4c8] sm:$0xf]
  %v322 = vld [vmem:[%s0 + $0x4cc] sm:$0xf]
  %v323 = vld [vmem:[%s0 + $0x4d0] sm:$0xf]
  %v324 = vld [vmem:[%s0 + $0x4d4] sm:$0xf]
  %v325 = vld [vmem:[%s0 + $0x4d8] sm:$0xf]
  %v326 = vld [vmem:[%s0 + $0x4dc] sm:$0xf]
  %v327 = vld [vmem:[%s0 + $0x4e0] sm:$0xf]
  %v328 = vld [vmem:[%s0 + $0x4e4] sm:$0xf]
  %v329 = vld [vmem:[%s0 + $0x4e8] sm:$0xf]
  %v330 = vld [vmem:[%s0 + $0x4ec] sm:$0xf]
  %v331 = vld [vmem:[%s0 + $0x4f0] sm:$0xf]
  %v332 = vld [vmem:[%s0 + $0x4f4] sm:$0xf]
  %v333 = vld [vmem:[%s0 + $0x4f8] sm:$0xf]
  %v334 = vld [vmem:[%s0 + $0x4fc] sm:$0xf]
  %v335 = vld [vmem:[%s0 + $0x500] sm:$0xf]
  %v336 = vld [vmem:[%s0 + $0x504] sm:$0xf]
  %v337 = vld [vmem:[%s0 + $0x508] sm:$0xf]
  %v338 = vld [vmem:[%s0 + $0x50c] sm:$0xf]
  %v339 = vld [vmem:[%s0 + $0x510] sm:$0xf]
  %v340 = vld [vmem:[%s0 + $0x514] sm:$0xf]
  %v341 = vld [vmem:[%s0 + $0x518] sm:$0xf]
  %v342 = vld [vmem:[%s0 + $0x51c] sm:$0xf]
  %v343 = vld [vmem:[%s0 + $0x520] sm:$0xf]
  %v344 = vld [vmem:[%s0 + $0x524] sm:$0xf]
  %v345 = vld [vmem:[%s0 + $0x528] sm:$0xf]
  %v346 = vld [vmem:[%s0 + $0x52c] sm:$0xf]
  %v347 = vld [vmem:[%s0 + $0x530] sm:$0xf]
  %v348 = vld [vmem:[%s0 + $0x534] sm:$0xf]
  %v349 = vld [vmem:[%s0 + $0x538] sm:$0xf]
  %v350 = vld [vmem:[%s0 + $0x53c] sm:$0xf]
  %v351 = vld [vmem:[%s0 + $0x540] sm:$0xf]
  %v352 = vld [vmem:[%s0 + $0x544] sm:$0xf]
  %v353 = vld [vmem:[%s0 + $0x548] sm:$0xf]
  %v354 = vld [vmem:[%s0 + $0x54c] sm:$0xf]
  %v355 = vld [vmem:[%s0 + $0x550] sm:$0xf]
  %v356 = vld [vmem:[%s0 + $0x554] sm:$0xf]
  %v357 = vld [vmem:[%s0 + $0x558] sm:$0xf]
  %v358 = vld [vmem:[%s0 + $0x55c] sm:$0xf]
  %v359 = vld [vmem:[%s0 + $0x560] sm:$0xf]
  %v360 = vld [vmem:[%s0 + $0x564] sm:$0xf]
  %v361 = vld [vmem:[%s0 + $0x568] sm:$0xf]
  %v362 = vld [vmem:[%s0 + $0x56c] sm:$0xf]
  %v363 = vld [vmem:[%s0 + $0x570] sm:$0xf]
  %v364 = vld [vmem:[%s0 + $0x574] sm:$0xf]
  %v365 = vld [vmem:[%s0 + $0x578] sm:$0xf]
  %v366 = vld [vmem:[%s0 + $0x57c] sm:$0xf]
  %v367 = vld [vmem:[%s0 + $0x580] sm:$0xf]
  %v368 = vld [vmem:[%s0 + $0x584] sm:$0xf]
  %v369 = vld [vmem:[%s0 + $0x588] sm:$0xf]
  %v370 = vld [vmem:[%s0 + $0x58c] sm:$0xf]
  %v371 = vld [vmem:[%s0 + $0x590] sm:$0xf]
  %v372 = vld [vmem:[%s0 + $0x594] sm:$0xf]
  %v373 = vld [vmem:[%s0 + $0x598] sm:$0xf]
  %v374 = vld [vmem:[%s0 + $0x59c] sm:$0xf]
  %v375 = vld [vmem:[%s0 + $0x5a0] sm:$0xf]
  %v376 = vld [vmem:[%s0 + $0x5a4] sm:$0xf]
  %v377 = vld [vmem:[%s0 + $0x5a8] sm:$0xf]
  %v378 = vld [vmem:[%s0 + $0x5ac] sm:$0xf]
  %v379 = vld [vmem:[%s0 + $0x5b0] sm:$0xf]
  %v380 = vld [vmem:[%s0 + $0x5b4] sm:$0xf]
  %v381 = vld [vmem:[%s0 + $0x5b8] sm:$0xf]
  %v382 = vld [vmem:[%s0 + $0x5bc] sm:$0xf]
  %v383 = vld [vmem:[%s1] sm:$0xf]
  %v384 = vld [vmem:[%s1 + $0x4] sm:$0xf]
  %v385 = vld [vmem:[%s1 + $0x8] sm:$0xf]
  %v386 = vld [vmem:[%s1 + $0xc] sm:$0xf]
  %v387 = vld [vmem:[%s1 + $0x10] sm:$0xf]
  %v388 = vld [vmem:[%s1 + $0x14] sm:$0xf]
  %v389 = vld [vmem:[%s1 + $0x18] sm:$0xf]
  %v390 = vld [vmem:[%s1 + $0x1c] sm:$0xf]
  %v391 = vld [vmem:[%s2] sm:$0x1]
  %v393 = vlaneseq
  %v394 = vshrl.u32 %v393, 7
  %v395 = vsub.s32 0, %v394
  %v396 = vrot.slane %v391, %v395
  %v766 = vunpack.c.l.b16 %v15
  %v767 = vunpack.c.l.b16 %v16
  %v768 = vunpack.c.l.b16 %v17
  %v769 = vunpack.c.l.b16 %v18
  %v770 = vunpack.c.l.b16 %v19
  %v771 = vunpack.c.l.b16 %v20
  %v772 = vunpack.c.l.b16 %v21
  %v773 = vunpack.c.l.b16 %v22
  %v774 = vunpack.c.l.b16 %v23
  %v775 = vunpack.c.l.b16 %v24
  %v776 = vunpack.c.l.b16 %v25
  %v777 = vunpack.c.l.b16 %v26
  %v778 = vunpack.c.l.b16 %v27
  %v779 = vunpack.c.l.b16 %v28
  %v780 = vunpack.c.l.b16 %v29
  %v781 = vunpack.c.l.b16 %v30
  %v782 = vunpack.c.l.b16 %v31
  %v783 = vunpack.c.l.b16 %v32
  %v784 = vunpack.c.l.b16 %v33
  %v785 = vunpack.c.l.b16 %v34
  %v786 = vunpack.c.l.b16 %v35
  %v787 = vunpack.c.l.b16 %v36
  %v788 = vunpack.c.l.b16 %v37
  %v789 = vunpack.c.l.b16 %v38
  %v790 = vunpack.c.l.b16 %v39
  %v791 = vunpack.c.l.b16 %v40
  %v792 = vunpack.c.l.b16 %v41
  %v793 = vunpack.c.l.b16 %v42
  %v794 = vunpack.c.l.b16 %v43
  %v795 = vunpack.c.l.b16 %v44
  %v796 = vunpack.c.l.b16 %v45
  %v797 = vunpack.c.l.b16 %v46
  %v798 = vunpack.c.l.b16 %v47
  %v799 = vunpack.c.l.b16 %v48
  %v800 = vunpack.c.l.b16 %v49
  %v801 = vunpack.c.l.b16 %v50
  %v802 = vunpack.c.l.b16 %v51
  %v803 = vunpack.c.l.b16 %v52
  %v804 = vunpack.c.l.b16 %v53
  %v805 = vunpack.c.l.b16 %v54
  %v806 = vunpack.c.l.b16 %v55
  %v807 = vunpack.c.l.b16 %v56
  %v808 = vunpack.c.l.b16 %v57
  %v809 = vunpack.c.l.b16 %v58
  %v810 = vunpack.c.l.b16 %v59
  %v811 = vunpack.c.l.b16 %v60
  %v812 = vunpack.c.l.b16 %v61
  %v813 = vunpack.c.l.b16 %v62
  %v814 = vunpack.c.l.b16 %v63
  %v815 = vunpack.c.l.b16 %v64
  %v816 = vunpack.c.l.b16 %v65
  %v817 = vunpack.c.l.b16 %v66
  %v818 = vunpack.c.l.b16 %v67
  %v819 = vunpack.c.l.b16 %v68
  %v820 = vunpack.c.l.b16 %v69
  %v821 = vunpack.c.l.b16 %v70
  %v822 = vunpack.c.l.b16 %v71
  %v823 = vunpack.c.l.b16 %v72
  %v824 = vunpack.c.l.b16 %v73
  %v825 = vunpack.c.l.b16 %v74
  %v826 = vunpack.c.l.b16 %v75
  %v827 = vunpack.c.l.b16 %v76
  %v828 = vunpack.c.l.b16 %v77
  %v829 = vunpack.c.l.b16 %v78
  %v830 = vunpack.c.l.b16 %v79
  %v831 = vunpack.c.l.b16 %v80
  %v832 = vunpack.c.l.b16 %v81
  %v833 = vunpack.c.l.b16 %v82
  %v834 = vunpack.c.l.b16 %v83
  %v835 = vunpack.c.l.b16 %v84
  %v836 = vunpack.c.l.b16 %v85
  %v837 = vunpack.c.l.b16 %v86
  %v838 = vunpack.c.l.b16 %v87
  %v839 = vunpack.c.l.b16 %v88
  %v840 = vunpack.c.l.b16 %v89
  %v841 = vunpack.c.l.b16 %v90
  %v842 = vunpack.c.l.b16 %v91
  %v843 = vunpack.c.l.b16 %v92
  %v844 = vunpack.c.l.b16 %v93
  %v845 = vunpack.c.l.b16 %v94
  %v846 = vunpack.c.l.b16 %v95
  %v847 = vunpack.c.l.b16 %v96
  %v848 = vunpack.c.l.b16 %v97
  %v849 = vunpack.c.l.b16 %v98
  %v850 = vunpack.c.l.b16 %v99
  %v851 = vunpack.c.l.b16 %v100
  %v852 = vunpack.c.l.b16 %v101
  %v853 = vunpack.c.l.b16 %v102
  %v854 = vunpack.c.l.b16 %v103
  %v855 = vunpack.c.l.b16 %v104
  %v856 = vunpack.c.l.b16 %v105
  %v857 = vunpack.c.l.b16 %v106
  %v858 = vunpack.c.l.b16 %v107
  %v859 = vunpack.c.l.b16 %v108
  %v860 = vunpack.c.l.b16 %v109
  %v861 = vunpack.c.l.b16 %v110
  %v862 = vunpack.c.l.b16 %v111
  %v863 = vunpack.c.l.b16 %v112
  %v864 = vunpack.c.l.b16 %v113
  %v865 = vunpack.c.l.b16 %v114
  %v866 = vunpack.c.l.b16 %v115
  %v867 = vunpack.c.l.b16 %v116
  %v868 = vunpack.c.l.b16 %v117
  %v869 = vunpack.c.l.b16 %v118
  %v870 = vunpack.c.l.b16 %v119
  %v871 = vunpack.c.l.b16 %v120
  %v872 = vunpack.c.l.b16 %v121
  %v873 = vunpack.c.l.b16 %v122
  %v874 = vunpack.c.l.b16 %v123
  %v875 = vunpack.c.l.b16 %v124
  %v876 = vunpack.c.l.b16 %v125
  %v877 = vunpack.c.l.b16 %v126
  %v878 = vunpack.c.l.b16 %v127
  %v879 = vunpack.c.l.b16 %v128
  %v880 = vunpack.c.l.b16 %v129
  %v881 = vunpack.c.l.b16 %v130
  %v882 = vunpack.c.l.b16 %v131
  %v883 = vunpack.c.l.b16 %v132
  %v884 = vunpack.c.l.b16 %v133
  %v885 = vunpack.c.l.b16 %v134
  %v886 = vunpack.c.l.b16 %v135
  %v887 = vunpack.c.l.b16 %v136
  %v888 = vunpack.c.l.b16 %v137
  %v889 = vunpack.c.l.b16 %v138
  %v890 = vunpack.c.l.b16 %v139
  %v891 = vunpack.c.l.b16 %v140
  %v892 = vunpack.c.l.b16 %v141
  %v893 = vunpack.c.l.b16 %v142
  %v894 = vunpack.c.l.b16 %v143
  %v895 = vunpack.c.l.b16 %v144
  %v896 = vunpack.c.l.b16 %v145
  %v897 = vunpack.c.l.b16 %v146
  %v898 = vunpack.c.l.b16 %v147
  %v899 = vunpack.c.l.b16 %v148
  %v900 = vunpack.c.l.b16 %v149
  %v901 = vunpack.c.l.b16 %v150
  %v902 = vunpack.c.l.b16 %v151
  %v903 = vunpack.c.l.b16 %v152
  %v904 = vunpack.c.l.b16 %v153
  %v905 = vunpack.c.l.b16 %v154
  %v906 = vunpack.c.l.b16 %v155
  %v907 = vunpack.c.l.b16 %v156
  %v908 = vunpack.c.l.b16 %v157
  %v909 = vunpack.c.l.b16 %v158
  %v910 = vunpack.c.l.b16 %v159
  %v911 = vunpack.c.l.b16 %v160
  %v912 = vunpack.c.l.b16 %v161
  %v913 = vunpack.c.l.b16 %v162
  %v914 = vunpack.c.l.b16 %v163
  %v915 = vunpack.c.l.b16 %v164
  %v916 = vunpack.c.l.b16 %v165
  %v917 = vunpack.c.l.b16 %v166
  %v918 = vunpack.c.l.b16 %v167
  %v919 = vunpack.c.l.b16 %v168
  %v920 = vunpack.c.l.b16 %v169
  %v921 = vunpack.c.l.b16 %v170
  %v922 = vunpack.c.l.b16 %v171
  %v923 = vunpack.c.l.b16 %v172
  %v924 = vunpack.c.l.b16 %v173
  %v925 = vunpack.c.l.b16 %v174
  %v926 = vunpack.c.l.b16 %v175
  %v927 = vunpack.c.l.b16 %v176
  %v928 = vunpack.c.l.b16 %v177
  %v929 = vunpack.c.l.b16 %v178
  %v930 = vunpack.c.l.b16 %v179
  %v931 = vunpack.c.l.b16 %v180
  %v932 = vunpack.c.l.b16 %v181
  %v933 = vunpack.c.l.b16 %v182
  %v934 = vunpack.c.l.b16 %v183
  %v935 = vunpack.c.l.b16 %v184
  %v936 = vunpack.c.l.b16 %v185
  %v937 = vunpack.c.l.b16 %v186
  %v938 = vunpack.c.l.b16 %v187
  %v939 = vunpack.c.l.b16 %v188
  %v940 = vunpack.c.l.b16 %v189
  %v941 = vunpack.c.l.b16 %v190
  %v942 = vunpack.c.l.b16 %v191
  %v943 = vunpack.c.l.b16 %v192
  %v944 = vunpack.c.l.b16 %v193
  %v945 = vunpack.c.l.b16 %v194
  %v946 = vunpack.c.l.b16 %v195
  %v947 = vunpack.c.l.b16 %v196
  %v948 = vunpack.c.l.b16 %v197
  %v949 = vunpack.c.l.b16 %v198
  %v950 = vunpack.c.l.b16 %v199
  %v951 = vunpack.c.l.b16 %v200
  %v952 = vunpack.c.l.b16 %v201
  %v953 = vunpack.c.l.b16 %v202
  %v954 = vunpack.c.l.b16 %v203
  %v955 = vunpack.c.l.b16 %v204
  %v956 = vunpack.c.l.b16 %v205
  %v957 = vunpack.c.l.b16 %v206
  %v958 = vunpack.c.l.b16 %v207
  %v959 = vunpack.c.l.b16 %v208
  %v960 = vunpack.c.l.b16 %v209
  %v961 = vunpack.c.l.b16 %v210
  %v962 = vunpack.c.l.b16 %v211
  %v963 = vunpack.c.l.b16 %v212
  %v964 = vunpack.c.l.b16 %v213
  %v965 = vunpack.c.l.b16 %v214
  %v966 = vunpack.c.l.b16 %v215
  %v967 = vunpack.c.l.b16 %v216
  %v968 = vunpack.c.l.b16 %v217
  %v969 = vunpack.c.l.b16 %v218
  %v970 = vunpack.c.l.b16 %v219
  %v971 = vunpack.c.l.b16 %v220
  %v972 = vunpack.c.l.b16 %v221
  %v973 = vunpack.c.l.b16 %v222
  %v974 = vunpack.c.l.b16 %v223
  %v975 = vunpack.c.l.b16 %v224
  %v976 = vunpack.c.l.b16 %v225
  %v977 = vunpack.c.l.b16 %v226
  %v978 = vunpack.c.l.b16 %v227
  %v979 = vunpack.c.l.b16 %v228
  %v980 = vunpack.c.l.b16 %v229
  %v981 = vunpack.c.l.b16 %v230
  %v982 = vunpack.c.l.b16 %v231
  %v983 = vunpack.c.l.b16 %v232
  %v984 = vunpack.c.l.b16 %v233
  %v985 = vunpack.c.l.b16 %v234
  %v986 = vunpack.c.l.b16 %v235
  %v987 = vunpack.c.l.b16 %v236
  %v988 = vunpack.c.l.b16 %v237
  %v989 = vunpack.c.l.b16 %v238
  %v990 = vunpack.c.l.b16 %v239
  %v991 = vunpack.c.l.b16 %v240
  %v992 = vunpack.c.l.b16 %v241
  %v993 = vunpack.c.l.b16 %v242
  %v994 = vunpack.c.l.b16 %v243
  %v995 = vunpack.c.l.b16 %v244
  %v996 = vunpack.c.l.b16 %v245
  %v997 = vunpack.c.l.b16 %v246
  %v998 = vunpack.c.l.b16 %v247
  %v999 = vunpack.c.l.b16 %v248
  %v1000 = vunpack.c.l.b16 %v249
  %v1001 = vunpack.c.l.b16 %v250
  %v1002 = vunpack.c.l.b16 %v251
  %v1003 = vunpack.c.l.b16 %v252
  %v1004 = vunpack.c.l.b16 %v253
  %v1005 = vunpack.c.l.b16 %v254
  %v1006 = vunpack.c.l.b16 %v255
  %v1007 = vunpack.c.l.b16 %v256
  %v1008 = vunpack.c.l.b16 %v257
  %v1009 = vunpack.c.l.b16 %v258
  %v1010 = vunpack.c.l.b16 %v259
  %v1011 = vunpack.c.l.b16 %v260
  %v1012 = vunpack.c.l.b16 %v261
  %v1013 = vunpack.c.l.b16 %v262
  %v1014 = vunpack.c.l.b16 %v263
  %v1015 = vunpack.c.l.b16 %v264
  %v1016 = vunpack.c.l.b16 %v265
  %v1017 = vunpack.c.l.b16 %v266
  %v1018 = vunpack.c.l.b16 %v267
  %v1019 = vunpack.c.l.b16 %v268
  %v1020 = vunpack.c.l.b16 %v269
  %v1021 = vunpack.c.l.b16 %v270
  %v1022 = vunpack.c.l.b16 %v271
  %v1023 = vunpack.c.l.b16 %v272
  %v1024 = vunpack.c.l.b16 %v273
  %v1025 = vunpack.c.l.b16 %v274
  %v1026 = vunpack.c.l.b16 %v275
  %v1027 = vunpack.c.l.b16 %v276
  %v1028 = vunpack.c.l.b16 %v277
  %v1029 = vunpack.c.l.b16 %v278
  %v1030 = vunpack.c.l.b16 %v279
  %v1031 = vunpack.c.l.b16 %v280
  %v1032 = vunpack.c.l.b16 %v281
  %v1033 = vunpack.c.l.b16 %v282
  %v1034 = vunpack.c.l.b16 %v283
  %v1035 = vunpack.c.l.b16 %v284
  %v1036 = vunpack.c.l.b16 %v285
  %v1037 = vunpack.c.l.b16 %v286
  %v1038 = vunpack.c.l.b16 %v287
  %v1039 = vunpack.c.l.b16 %v288
  %v1040 = vunpack.c.l.b16 %v289
  %v1041 = vunpack.c.l.b16 %v290
  %v1042 = vunpack.c.l.b16 %v291
  %v1043 = vunpack.c.l.b16 %v292
  %v1044 = vunpack.c.l.b16 %v293
  %v1045 = vunpack.c.l.b16 %v294
  %v1046 = vunpack.c.l.b16 %v295
  %v1047 = vunpack.c.l.b16 %v296
  %v1048 = vunpack.c.l.b16 %v297
  %v1049 = vunpack.c.l.b16 %v298
  %v1050 = vunpack.c.l.b16 %v299
  %v1051 = vunpack.c.l.b16 %v300
  %v1052 = vunpack.c.l.b16 %v301
  %v1053 = vunpack.c.l.b16 %v302
  %v1054 = vunpack.c.l.b16 %v303
  %v1055 = vunpack.c.l.b16 %v304
  %v1056 = vunpack.c.l.b16 %v305
  %v1057 = vunpack.c.l.b16 %v306
  %v1058 = vunpack.c.l.b16 %v307
  %v1059 = vunpack.c.l.b16 %v308
  %v1060 = vunpack.c.l.b16 %v309
  %v1061 = vunpack.c.l.b16 %v310
  %v1062 = vunpack.c.l.b16 %v311
  %v1063 = vunpack.c.l.b16 %v312
  %v1064 = vunpack.c.l.b16 %v313
  %v1065 = vunpack.c.l.b16 %v314
  %v1066 = vunpack.c.l.b16 %v315
  %v1067 = vunpack.c.l.b16 %v316
  %v1068 = vunpack.c.l.b16 %v317
  %v1069 = vunpack.c.l.b16 %v318
  %v1070 = vunpack.c.l.b16 %v319
  %v1071 = vunpack.c.l.b16 %v320
  %v1072 = vunpack.c.l.b16 %v321
  %v1073 = vunpack.c.l.b16 %v322
  %v1074 = vunpack.c.l.b16 %v323
  %v1075 = vunpack.c.l.b16 %v324
  %v1076 = vunpack.c.l.b16 %v325
  %v1077 = vunpack.c.l.b16 %v326
  %v1078 = vunpack.c.l.b16 %v327
  %v1079 = vunpack.c.l.b16 %v328
  %v1080 = vunpack.c.l.b16 %v329
  %v1081 = vunpack.c.l.b16 %v330
  %v1082 = vunpack.c.l.b16 %v331
  %v1083 = vunpack.c.l.b16 %v332
  %v1084 = vunpack.c.l.b16 %v333
  %v1085 = vunpack.c.l.b16 %v334
  %v1086 = vunpack.c.l.b16 %v335
  %v1087 = vunpack.c.l.b16 %v336
  %v1088 = vunpack.c.l.b16 %v337
  %v1089 = vunpack.c.l.b16 %v338
  %v1090 = vunpack.c.l.b16 %v339
  %v1091 = vunpack.c.l.b16 %v340
  %v1092 = vunpack.c.l.b16 %v341
  %v1093 = vunpack.c.l.b16 %v342
  %v1094 = vunpack.c.l.b16 %v343
  %v1095 = vunpack.c.l.b16 %v344
  %v1096 = vunpack.c.l.b16 %v345
  %v1097 = vunpack.c.l.b16 %v346
  %v1098 = vunpack.c.l.b16 %v347
  %v1099 = vunpack.c.l.b16 %v348
  %v1100 = vunpack.c.l.b16 %v349
  %v1101 = vunpack.c.l.b16 %v350
  %v1102 = vunpack.c.l.b16 %v351
  %v1103 = vunpack.c.l.b16 %v352
  %v1104 = vunpack.c.l.b16 %v353
  %v1105 = vunpack.c.l.b16 %v354
  %v1106 = vunpack.c.l.b16 %v355
  %v1107 = vunpack.c.l.b16 %v356
  %v1108 = vunpack.c.l.b16 %v357
  %v1109 = vunpack.c.l.b16 %v358
  %v1110 = vunpack.c.l.b16 %v359
  %v1111 = vunpack.c.l.b16 %v360
  %v1112 = vunpack.c.l.b16 %v361
  %v1113 = vunpack.c.l.b16 %v362
  %v1114 = vunpack.c.l.b16 %v363
  %v1115 = vunpack.c.l.b16 %v364
  %v1116 = vunpack.c.l.b16 %v365
  %v1117 = vunpack.c.l.b16 %v366
  %v1118 = vunpack.c.l.b16 %v367
  %v1119 = vunpack.c.l.b16 %v368
  %v1120 = vunpack.c.l.b16 %v369
  %v1121 = vunpack.c.l.b16 %v370
  %v1122 = vunpack.c.l.b16 %v371
  %v1123 = vunpack.c.l.b16 %v372
  %v1124 = vunpack.c.l.b16 %v373
  %v1125 = vunpack.c.l.b16 %v374
  %v1126 = vunpack.c.l.b16 %v375
  %v1127 = vunpack.c.l.b16 %v376
  %v1128 = vunpack.c.l.b16 %v377
  %v1129 = vunpack.c.l.b16 %v378
  %v1130 = vunpack.c.l.b16 %v379
  %v1131 = vunpack.c.l.b16 %v380
  %v1132 = vunpack.c.l.b16 %v381
  %v1133 = vunpack.c.l.b16 %v382
  %v1134 = vpack.c.b16 %v767, %v766
  %v1135 = vpack.c.b16 %v769, %v768
  %v1136 = vpack.c.b16 %v771, %v770
  %v1137 = vpack.c.b16 %v773, %v772
  %v1138 = vpack.c.b16 %v775, %v774
  %v1139 = vpack.c.b16 %v777, %v776
  %v1140 = vpack.c.b16 %v779, %v778
  %v1141 = vpack.c.b16 %v781, %v780
  %v1142 = vpack.c.b16 %v783, %v782
  %v1143 = vpack.c.b16 %v785, %v784
  %v1144 = vpack.c.b16 %v787, %v786
  %v1145 = vpack.c.b16 %v789, %v788
  %v1146 = vpack.c.b16 %v791, %v790
  %v1147 = vpack.c.b16 %v793, %v792
  %v1148 = vpack.c.b16 %v795, %v794
  %v1149 = vpack.c.b16 %v797, %v796
  %v1150 = vpack.c.b16 %v799, %v798
  %v1151 = vpack.c.b16 %v801, %v800
  %v1152 = vpack.c.b16 %v803, %v802
  %v1153 = vpack.c.b16 %v805, %v804
  %v1154 = vpack.c.b16 %v807, %v806
  %v1155 = vpack.c.b16 %v809, %v808
  %v1156 = vpack.c.b16 %v811, %v810
  %v1157 = vpack.c.b16 %v813, %v812
  %v1158 = vpack.c.b16 %v815, %v814
  %v1159 = vpack.c.b16 %v817, %v816
  %v1160 = vpack.c.b16 %v819, %v818
  %v1161 = vpack.c.b16 %v821, %v820
  %v1162 = vpack.c.b16 %v823, %v822
  %v1163 = vpack.c.b16 %v825, %v824
  %v1164 = vpack.c.b16 %v827, %v826
  %v1165 = vpack.c.b16 %v829, %v828
  %v1166 = vpack.c.b16 %v831, %v830
  %v1167 = vpack.c.b16 %v833, %v832
  %v1168 = vpack.c.b16 %v835, %v834
  %v1169 = vpack.c.b16 %v837, %v836
  %v1170 = vpack.c.b16 %v839, %v838
  %v1171 = vpack.c.b16 %v841, %v840
  %v1172 = vpack.c.b16 %v843, %v842
  %v1173 = vpack.c.b16 %v845, %v844
  %v1174 = vpack.c.b16 %v847, %v846
  %v1175 = vpack.c.b16 %v849, %v848
  %v1176 = vpack.c.b16 %v851, %v850
  %v1177 = vpack.c.b16 %v853, %v852
  %v1178 = vpack.c.b16 %v855, %v854
  %v1179 = vpack.c.b16 %v857, %v856
  %v1180 = vpack.c.b16 %v859, %v858
  %v1181 = vpack.c.b16 %v861, %v860
  %v1182 = vpack.c.b16 %v863, %v862
  %v1183 = vpack.c.b16 %v865, %v864
  %v1184 = vpack.c.b16 %v867, %v866
  %v1185 = vpack.c.b16 %v869, %v868
  %v1186 = vpack.c.b16 %v871, %v870
  %v1187 = vpack.c.b16 %v873, %v872
  %v1188 = vpack.c.b16 %v875, %v874
  %v1189 = vpack.c.b16 %v877, %v876
  %v1190 = vpack.c.b16 %v879, %v878
  %v1191 = vpack.c.b16 %v881, %v880
  %v1192 = vpack.c.b16 %v883, %v882
  %v1193 = vpack.c.b16 %v885, %v884
  %v1194 = vpack.c.b16 %v887, %v886
  %v1195 = vpack.c.b16 %v889, %v888
  %v1196 = vpack.c.b16 %v891, %v890
  %v1197 = vpack.c.b16 %v893, %v892
  %v1198 = vpack.c.b16 %v895, %v894
  %v1199 = vpack.c.b16 %v897, %v896
  %v1200 = vpack.c.b16 %v899, %v898
  %v1201 = vpack.c.b16 %v901, %v900
  %v1202 = vpack.c.b16 %v903, %v902
  %v1203 = vpack.c.b16 %v905, %v904
  %v1204 = vpack.c.b16 %v907, %v906
  %v1205 = vpack.c.b16 %v909, %v908
  %v1206 = vpack.c.b16 %v911, %v910
  %v1207 = vpack.c.b16 %v913, %v912
  %v1208 = vpack.c.b16 %v915, %v914
  %v1209 = vpack.c.b16 %v917, %v916
  %v1210 = vpack.c.b16 %v919, %v918
  %v1211 = vpack.c.b16 %v921, %v920
  %v1212 = vpack.c.b16 %v923, %v922
  %v1213 = vpack.c.b16 %v925, %v924
  %v1214 = vpack.c.b16 %v927, %v926
  %v1215 = vpack.c.b16 %v929, %v928
  %v1216 = vpack.c.b16 %v931, %v930
  %v1217 = vpack.c.b16 %v933, %v932
  %v1218 = vpack.c.b16 %v935, %v934
  %v1219 = vpack.c.b16 %v937, %v936
  %v1220 = vpack.c.b16 %v939, %v938
  %v1221 = vpack.c.b16 %v941, %v940
  %v1222 = vpack.c.b16 %v943, %v942
  %v1223 = vpack.c.b16 %v945, %v944
  %v1224 = vpack.c.b16 %v947, %v946
  %v1225 = vpack.c.b16 %v949, %v948
  %v1226 = vpack.c.b16 %v951, %v950
  %v1227 = vpack.c.b16 %v953, %v952
  %v1228 = vpack.c.b16 %v955, %v954
  %v1229 = vpack.c.b16 %v957, %v956
  %v1230 = vpack.c.b16 %v959, %v958
  %v1231 = vpack.c.b16 %v961, %v960
  %v1232 = vpack.c.b16 %v963, %v962
  %v1233 = vpack.c.b16 %v965, %v964
  %v1234 = vpack.c.b16 %v967, %v966
  %v1235 = vpack.c.b16 %v969, %v968
  %v1236 = vpack.c.b16 %v971, %v970
  %v1237 = vpack.c.b16 %v973, %v972
  %v1238 = vpack.c.b16 %v975, %v974
  %v1239 = vpack.c.b16 %v977, %v976
  %v1240 = vpack.c.b16 %v979, %v978
  %v1241 = vpack.c.b16 %v981, %v980
  %v1242 = vpack.c.b16 %v983, %v982
  %v1243 = vpack.c.b16 %v985, %v984
  %v1244 = vpack.c.b16 %v987, %v986
  %v1245 = vpack.c.b16 %v989, %v988
  %v1246 = vpack.c.b16 %v991, %v990
  %v1247 = vpack.c.b16 %v993, %v992
  %v1248 = vpack.c.b16 %v995, %v994
  %v1249 = vpack.c.b16 %v997, %v996
  %v1250 = vpack.c.b16 %v999, %v998
  %v1251 = vpack.c.b16 %v1001, %v1000
  %v1252 = vpack.c.b16 %v1003, %v1002
  %v1253 = vpack.c.b16 %v1005, %v1004
  %v1254 = vpack.c.b16 %v1007, %v1006
  %v1255 = vpack.c.b16 %v1009, %v1008
  %v1256 = vpack.c.b16 %v1011, %v1010
  %v1257 = vpack.c.b16 %v1013, %v1012
  %v1258 = vpack.c.b16 %v1015, %v1014
  %v1259 = vpack.c.b16 %v1017, %v1016
  %v1260 = vpack.c.b16 %v1019, %v1018
  %v1261 = vpack.c.b16 %v1021, %v1020
  %v1262 = vpack.c.b16 %v1023, %v1022
  %v1263 = vpack.c.b16 %v1025, %v1024
  %v1264 = vpack.c.b16 %v1027, %v1026
  %v1265 = vpack.c.b16 %v1029, %v1028
  %v1266 = vpack.c.b16 %v1031, %v1030
  %v1267 = vpack.c.b16 %v1033, %v1032
  %v1268 = vpack.c.b16 %v1035, %v1034
  %v1269 = vpack.c.b16 %v1037, %v1036
  %v1270 = vpack.c.b16 %v1039, %v1038
  %v1271 = vpack.c.b16 %v1041, %v1040
  %v1272 = vpack.c.b16 %v1043, %v1042
  %v1273 = vpack.c.b16 %v1045, %v1044
  %v1274 = vpack.c.b16 %v1047, %v1046
  %v1275 = vpack.c.b16 %v1049, %v1048
  %v1276 = vpack.c.b16 %v1051, %v1050
  %v1277 = vpack.c.b16 %v1053, %v1052
  %v1278 = vpack.c.b16 %v1055, %v1054
  %v1279 = vpack.c.b16 %v1057, %v1056
  %v1280 = vpack.c.b16 %v1059, %v1058
  %v1281 = vpack.c.b16 %v1061, %v1060
  %v1282 = vpack.c.b16 %v1063, %v1062
  %v1283 = vpack.c.b16 %v1065, %v1064
  %v1284 = vpack.c.b16 %v1067, %v1066
  %v1285 = vpack.c.b16 %v1069, %v1068
  %v1286 = vpack.c.b16 %v1071, %v1070
  %v1287 = vpack.c.b16 %v1073, %v1072
  %v1288 = vpack.c.b16 %v1075, %v1074
  %v1289 = vpack.c.b16 %v1077, %v1076
  %v1290 = vpack.c.b16 %v1079, %v1078
  %v1291 = vpack.c.b16 %v1081, %v1080
  %v1292 = vpack.c.b16 %v1083, %v1082
  %v1293 = vpack.c.b16 %v1085, %v1084
  %v1294 = vpack.c.b16 %v1087, %v1086
  %v1295 = vpack.c.b16 %v1089, %v1088
  %v1296 = vpack.c.b16 %v1091, %v1090
  %v1297 = vpack.c.b16 %v1093, %v1092
  %v1298 = vpack.c.b16 %v1095, %v1094
  %v1299 = vpack.c.b16 %v1097, %v1096
  %v1300 = vpack.c.b16 %v1099, %v1098
  %v1301 = vpack.c.b16 %v1101, %v1100
  %v1302 = vpack.c.b16 %v1103, %v1102
  %v1303 = vpack.c.b16 %v1105, %v1104
  %v1304 = vpack.c.b16 %v1107, %v1106
  %v1305 = vpack.c.b16 %v1109, %v1108
  %v1306 = vpack.c.b16 %v1111, %v1110
  %v1307 = vpack.c.b16 %v1113, %v1112
  %v1308 = vpack.c.b16 %v1115, %v1114
  %v1309 = vpack.c.b16 %v1117, %v1116
  %v1310 = vpack.c.b16 %v1119, %v1118
  %v1311 = vpack.c.b16 %v1121, %v1120
  %v1312 = vpack.c.b16 %v1123, %v1122
  %v1313 = vpack.c.b16 %v1125, %v1124
  %v1314 = vpack.c.b16 %v1127, %v1126
  %v1315 = vpack.c.b16 %v1129, %v1128
  %v1316 = vpack.c.b16 %v1131, %v1130
  %v1317 = vpack.c.b16 %v1133, %v1132
  %v1326 = vunpack.c.l.b16 %v383
  %v1327 = vunpack.c.l.b16 %v384
  %v1328 = vunpack.c.l.b16 %v385
  %v1329 = vunpack.c.l.b16 %v386
  %v1330 = vunpack.c.l.b16 %v387
  %v1331 = vunpack.c.l.b16 %v388
  %v1332 = vunpack.c.l.b16 %v389
  %v1333 = vunpack.c.l.b16 %v390
  %v1334 = vpack.c.b16 %v1327, %v1326
  %v1335 = vpack.c.b16 %v1329, %v1328
  %v1336 = vpack.c.b16 %v1331, %v1330
  %v1337 = vpack.c.b16 %v1333, %v1332
  %vm1342 = vcmask 523264
  %v1344 = vsel %vm1342, %v1134, 0
  %v1347 = vsel %vm1342, %v1135, 0
  %v1350 = vsel %vm1342, %v1136, 0
  %v1353 = vsel %vm1342, %v1137, 0
  %v1356 = vsel %vm1342, %v1138, 0
  %v1359 = vsel %vm1342, %v1139, 0
  %v1362 = vsel %vm1342, %v1140, 0
  %v1365 = vsel %vm1342, %v1141, 0
  %v1368 = vsel %vm1342, %v1142, 0
  %v1371 = vsel %vm1342, %v1143, 0
  %v1374 = vsel %vm1342, %v1144, 0
  %v1377 = vsel %vm1342, %v1145, 0
  %v1380 = vsel %vm1342, %v1146, 0
  %v1383 = vsel %vm1342, %v1147, 0
  %v1386 = vsel %vm1342, %v1148, 0
  %v1389 = vsel %vm1342, %v1149, 0
  %v1392 = vsel %vm1342, %v1150, 0
  %v1395 = vsel %vm1342, %v1151, 0
  %v1398 = vsel %vm1342, %v1152, 0
  %v1401 = vsel %vm1342, %v1153, 0
  %v1404 = vsel %vm1342, %v1154, 0
  %v1407 = vsel %vm1342, %v1155, 0
  %v1410 = vsel %vm1342, %v1156, 0
  %v1413 = vsel %vm1342, %v1157, 0
  %v1416 = vsel %vm1342, %v1158, 0
  %v1419 = vsel %vm1342, %v1159, 0
  %v1422 = vsel %vm1342, %v1160, 0
  %v1425 = vsel %vm1342, %v1161, 0
  %v1428 = vsel %vm1342, %v1162, 0
  %v1431 = vsel %vm1342, %v1163, 0
  %v1434 = vsel %vm1342, %v1164, 0
  %v1437 = vsel %vm1342, %v1165, 0
  %v1440 = vsel %vm1342, %v1166, 0
  %v1443 = vsel %vm1342, %v1167, 0
  %v1446 = vsel %vm1342, %v1168, 0
  %v1449 = vsel %vm1342, %v1169, 0
  %v1452 = vsel %vm1342, %v1170, 0
  %v1455 = vsel %vm1342, %v1171, 0
  %v1458 = vsel %vm1342, %v1172, 0
  %v1461 = vsel %vm1342, %v1173, 0
  %v1464 = vsel %vm1342, %v1174, 0
  %v1467 = vsel %vm1342, %v1175, 0
  %v1470 = vsel %vm1342, %v1176, 0
  %v1473 = vsel %vm1342, %v1177, 0
  %v1476 = vsel %vm1342, %v1178, 0
  %v1479 = vsel %vm1342, %v1179, 0
  %v1482 = vsel %vm1342, %v1180, 0
  %v1485 = vsel %vm1342, %v1181, 0
  %v1488 = vsel %vm1342, %v1182, 0
  %v1491 = vsel %vm1342, %v1183, 0
  %v1494 = vsel %vm1342, %v1184, 0
  %v1497 = vsel %vm1342, %v1185, 0
  %v1500 = vsel %vm1342, %v1186, 0
  %v1503 = vsel %vm1342, %v1187, 0
  %v1506 = vsel %vm1342, %v1188, 0
  %v1509 = vsel %vm1342, %v1189, 0
  %v1512 = vsel %vm1342, %v1190, 0
  %v1515 = vsel %vm1342, %v1191, 0
  %v1518 = vsel %vm1342, %v1192, 0
  %v1521 = vsel %vm1342, %v1193, 0
  %v1524 = vsel %vm1342, %v1194, 0
  %v1527 = vsel %vm1342, %v1195, 0
  %v1530 = vsel %vm1342, %v1196, 0
  %v1533 = vsel %vm1342, %v1197, 0
  %v1536 = vsel %vm1342, %v1198, 0
  %v1539 = vsel %vm1342, %v1199, 0
  %v1542 = vsel %vm1342, %v1200, 0
  %v1545 = vsel %vm1342, %v1201, 0
  %v1548 = vsel %vm1342, %v1202, 0
  %v1551 = vsel %vm1342, %v1203, 0
  %v1554 = vsel %vm1342, %v1204, 0
  %v1557 = vsel %vm1342, %v1205, 0
  %v1560 = vsel %vm1342, %v1206, 0
  %v1563 = vsel %vm1342, %v1207, 0
  %v1566 = vsel %vm1342, %v1208, 0
  %v1569 = vsel %vm1342, %v1209, 0
  %v1572 = vsel %vm1342, %v1210, 0
  %v1575 = vsel %vm1342, %v1211, 0
  %v1578 = vsel %vm1342, %v1212, 0
  %v1581 = vsel %vm1342, %v1213, 0
  %v1584 = vsel %vm1342, %v1214, 0
  %v1587 = vsel %vm1342, %v1215, 0
  %v1590 = vsel %vm1342, %v1216, 0
  %v1593 = vsel %vm1342, %v1217, 0
  %v1596 = vsel %vm1342, %v1218, 0
  %v1599 = vsel %vm1342, %v1219, 0
  %v1602 = vsel %vm1342, %v1220, 0
  %v1605 = vsel %vm1342, %v1221, 0
  %v1608 = vsel %vm1342, %v1222, 0
  %v1611 = vsel %vm1342, %v1223, 0
  %v1614 = vsel %vm1342, %v1224, 0
  %v1617 = vsel %vm1342, %v1225, 0
  %v1620 = vsel %vm1342, %v1226, 0
  %v1623 = vsel %vm1342, %v1227, 0
  %v1626 = vsel %vm1342, %v1228, 0
  %v1629 = vsel %vm1342, %v1229, 0
  %v1632 = vsel %vm1342, %v1230, 0
  %v1635 = vsel %vm1342, %v1231, 0
  %v1638 = vsel %vm1342, %v1232, 0
  %v1641 = vsel %vm1342, %v1233, 0
  %v1644 = vsel %vm1342, %v1234, 0
  %v1647 = vsel %vm1342, %v1235, 0
  %v1650 = vsel %vm1342, %v1236, 0
  %v1653 = vsel %vm1342, %v1237, 0
  %v1656 = vsel %vm1342, %v1238, 0
  %v1659 = vsel %vm1342, %v1239, 0
  %v1662 = vsel %vm1342, %v1240, 0
  %v1665 = vsel %vm1342, %v1241, 0
  %v1668 = vsel %vm1342, %v1242, 0
  %v1671 = vsel %vm1342, %v1243, 0
  %v1674 = vsel %vm1342, %v1244, 0
  %v1677 = vsel %vm1342, %v1245, 0
  %v1680 = vsel %vm1342, %v1246, 0
  %v1683 = vsel %vm1342, %v1247, 0
  %v1686 = vsel %vm1342, %v1248, 0
  %v1689 = vsel %vm1342, %v1249, 0
  %v1692 = vsel %vm1342, %v1250, 0
  %v1695 = vsel %vm1342, %v1251, 0
  %v1698 = vsel %vm1342, %v1252, 0
  %v1701 = vsel %vm1342, %v1253, 0
  %v1704 = vsel %vm1342, %v1254, 0
  %v1707 = vsel %vm1342, %v1255, 0
  %v1710 = vsel %vm1342, %v1256, 0
  %v1713 = vsel %vm1342, %v1257, 0
  %v1716 = vsel %vm1342, %v1258, 0
  %v1719 = vsel %vm1342, %v1259, 0
  %v1722 = vsel %vm1342, %v1260, 0
  %v1725 = vsel %vm1342, %v1261, 0
  %v1728 = vsel %vm1342, %v1262, 0
  %v1731 = vsel %vm1342, %v1263, 0
  %v1734 = vsel %vm1342, %v1264, 0
  %v1737 = vsel %vm1342, %v1265, 0
  %v1740 = vsel %vm1342, %v1266, 0
  %v1743 = vsel %vm1342, %v1267, 0
  %v1746 = vsel %vm1342, %v1268, 0
  %v1749 = vsel %vm1342, %v1269, 0
  %v1752 = vsel %vm1342, %v1270, 0
  %v1755 = vsel %vm1342, %v1271, 0
  %v1758 = vsel %vm1342, %v1272, 0
  %v1761 = vsel %vm1342, %v1273, 0
  %v1764 = vsel %vm1342, %v1274, 0
  %v1767 = vsel %vm1342, %v1275, 0
  %v1770 = vsel %vm1342, %v1276, 0
  %v1773 = vsel %vm1342, %v1277, 0
  %v1776 = vsel %vm1342, %v1278, 0
  %v1779 = vsel %vm1342, %v1279, 0
  %v1782 = vsel %vm1342, %v1280, 0
  %v1785 = vsel %vm1342, %v1281, 0
  %v1788 = vsel %vm1342, %v1282, 0
  %v1791 = vsel %vm1342, %v1283, 0
  %v1794 = vsel %vm1342, %v1284, 0
  %v1797 = vsel %vm1342, %v1285, 0
  %v1800 = vsel %vm1342, %v1286, 0
  %v1803 = vsel %vm1342, %v1287, 0
  %v1806 = vsel %vm1342, %v1288, 0
  %v1809 = vsel %vm1342, %v1289, 0
  %v1812 = vsel %vm1342, %v1290, 0
  %v1815 = vsel %vm1342, %v1291, 0
  %v1818 = vsel %vm1342, %v1292, 0
  %v1821 = vsel %vm1342, %v1293, 0
  %v1824 = vsel %vm1342, %v1294, 0
  %v1827 = vsel %vm1342, %v1295, 0
  %v1830 = vsel %vm1342, %v1296, 0
  %v1833 = vsel %vm1342, %v1297, 0
  %v1836 = vsel %vm1342, %v1298, 0
  %v1839 = vsel %vm1342, %v1299, 0
  %v1842 = vsel %vm1342, %v1300, 0
  %v1845 = vsel %vm1342, %v1301, 0
  %v1848 = vsel %vm1342, %v1302, 0
  %v1851 = vsel %vm1342, %v1303, 0
  %v1854 = vsel %vm1342, %v1304, 0
  %v1857 = vsel %vm1342, %v1305, 0
  %v1860 = vsel %vm1342, %v1306, 0
  %v1863 = vsel %vm1342, %v1307, 0
  %v1866 = vsel %vm1342, %v1308, 0
  %v1869 = vsel %vm1342, %v1309, 0
  %v1872 = vsel %vm1342, %v1310, 0
  %v1875 = vsel %vm1342, %v1311, 0
  %v1878 = vsel %vm1342, %v1312, 0
  %v1881 = vsel %vm1342, %v1313, 0
  %v1884 = vsel %vm1342, %v1314, 0
  %v1887 = vsel %vm1342, %v1315, 0
  %v1890 = vsel %vm1342, %v1316, 0
  %v1893 = vsel %vm1342, %v1317, 0
  %1895 = vmatprep.subr.bf16.mxu0 0
  %1896 = vmatpush1.bf16.msra.mxu0 0
  %1897 = vmatprep.subr.bf16.mxu0 0
  %1898 = vmatpush1.bf16.msra.mxu0 0
  %1899 = vmatprep.subr.bf16.mxu0 0
  %1900 = vmatpush1.bf16.msra.mxu0 0
  %1901 = vmatprep.subr.bf16.mxu0 0
  %1902 = vmatpush1.bf16.msra.mxu0 0
  %1903 = vmatprep.subr.bf16.mxu0 0
  %1904 = vmatpush1.bf16.msra.mxu0 %v1337
  %1905 = vmatprep.subr.bf16.mxu0 0
  %1906 = vmatpush1.bf16.msra.mxu0 %v1336
  %1907 = vmatprep.subr.bf16.mxu0 0
  %1908 = vmatpush1.bf16.msra.mxu0 %v1335
  %1909 = vmatprep.subr.bf16.mxu0 0
  %1910 = vmatpush1.bf16.msra.mxu0 %v1334
  %1911 = vmatprep.subr.bf16.mxu0 0
  %1912 = vmatpush2.bf16.msra.mxu0 0
  %1913 = vmatprep.subr.bf16.mxu0 0
  %1914 = vmatpush2.bf16.msra.mxu0 0
  %1915 = vmatprep.subr.bf16.mxu0 0
  %1916 = vmatpush2.bf16.msra.mxu0 0
  %1917 = vmatprep.subr.bf16.mxu0 0
  %1918 = vmatpush2.bf16.msra.mxu0 0
  %1919 = vmatprep.subr.bf16.mxu0 0
  %1920 = vmatpush2.bf16.msra.mxu0 0
  %1921 = vmatprep.subr.bf16.mxu0 0
  %1922 = vmatpush2.bf16.msra.mxu0 0
  %1923 = vmatprep.subr.bf16.mxu0 0
  %1924 = vmatpush2.bf16.msra.mxu0 0
  %1925 = vmatprep.subr.bf16.mxu0 0
  %1926 = vmatpush2.bf16.msra.mxu0 0
  %1927 = vmatprep.mubr.bf16.mxu0 0
  %1928 = vmatmul.mubr.bf16.gmra.mxu0 %v1344
  %v1929 = vpop.f32.mrf.mxu0
  %v1930 = vadd.f32 %v396, %v1929
  %v1931 = vpop.f32.mrf.mxu0
  %v1932 = vpop.f32.mrf.mxu0
  %v1933 = vadd.f32 %v396, %v1932
  %v1934 = vpop.f32.mrf.mxu0
  %1935 = vmatprep.mubr.bf16.mxu0 0
  %1936 = vmatmul.mubr.bf16.gmra.mxu0 %v1347
  %v1937 = vpop.f32.mrf.mxu0
  %v1938 = vadd.f32 %v396, %v1937
  %v1939 = vpop.f32.mrf.mxu0
  %v1940 = vpop.f32.mrf.mxu0
  %v1941 = vadd.f32 %v396, %v1940
  %v1942 = vpop.f32.mrf.mxu0
  %1943 = vmatprep.mubr.bf16.mxu0 0
  %1944 = vmatmul.mubr.bf16.gmra.mxu0 %v1350
  %v1945 = vpop.f32.mrf.mxu0
  %v1946 = vadd.f32 %v396, %v1945
  %v1947 = vpop.f32.mrf.mxu0
  %v1948 = vpop.f32.mrf.mxu0
  %v1949 = vadd.f32 %v396, %v1948
  %v1950 = vpop.f32.mrf.mxu0
  %1951 = vmatprep.mubr.bf16.mxu0 0
  %1952 = vmatmul.mubr.bf16.gmra.mxu0 %v1353
  %v1953 = vpop.f32.mrf.mxu0
  %v1954 = vadd.f32 %v396, %v1953
  %v1955 = vpop.f32.mrf.mxu0
  %v1956 = vpop.f32.mrf.mxu0
  %v1957 = vadd.f32 %v396, %v1956
  %v1958 = vpop.f32.mrf.mxu0
  %1959 = vmatprep.mubr.bf16.mxu0 0
  %1960 = vmatmul.mubr.bf16.gmra.mxu0 %v1356
  %v1961 = vpop.f32.mrf.mxu0
  %v1962 = vadd.f32 %v396, %v1961
  %v1963 = vpop.f32.mrf.mxu0
  %v1964 = vpop.f32.mrf.mxu0
  %v1965 = vadd.f32 %v396, %v1964
  %v1966 = vpop.f32.mrf.mxu0
  %1967 = vmatprep.mubr.bf16.mxu0 0
  %1968 = vmatmul.mubr.bf16.gmra.mxu0 %v1359
  %v1969 = vpop.f32.mrf.mxu0
  %v1970 = vadd.f32 %v396, %v1969
  %v1971 = vpop.f32.mrf.mxu0
  %v1972 = vpop.f32.mrf.mxu0
  %v1973 = vadd.f32 %v396, %v1972
  %v1974 = vpop.f32.mrf.mxu0
  %1975 = vmatprep.mubr.bf16.mxu0 0
  %1976 = vmatmul.mubr.bf16.gmra.mxu0 %v1362
  %v1977 = vpop.f32.mrf.mxu0
  %v1978 = vadd.f32 %v396, %v1977
  %v1979 = vpop.f32.mrf.mxu0
  %v1980 = vpop.f32.mrf.mxu0
  %v1981 = vadd.f32 %v396, %v1980
  %v1982 = vpop.f32.mrf.mxu0
  %1983 = vmatprep.mubr.bf16.mxu0 0
  %1984 = vmatmul.mubr.bf16.gmra.mxu0 %v1365
  %v1985 = vpop.f32.mrf.mxu0
  %v1986 = vadd.f32 %v396, %v1985
  %v1987 = vpop.f32.mrf.mxu0
  %v1988 = vpop.f32.mrf.mxu0
  %v1989 = vadd.f32 %v396, %v1988
  %v1990 = vpop.f32.mrf.mxu0
  %1991 = vmatprep.mubr.bf16.mxu0 0
  %1992 = vmatmul.mubr.bf16.gmra.mxu0 %v1368
  %v1993 = vpop.f32.mrf.mxu0
  %v1994 = vadd.f32 %v396, %v1993
  %v1995 = vpop.f32.mrf.mxu0
  %v1996 = vpop.f32.mrf.mxu0
  %v1997 = vadd.f32 %v396, %v1996
  %v1998 = vpop.f32.mrf.mxu0
  %1999 = vmatprep.mubr.bf16.mxu0 0
  %2000 = vmatmul.mubr.bf16.gmra.mxu0 %v1371
  %v2001 = vpop.f32.mrf.mxu0
  %v2002 = vadd.f32 %v396, %v2001
  %v2003 = vpop.f32.mrf.mxu0
  %v2004 = vpop.f32.mrf.mxu0
  %v2005 = vadd.f32 %v396, %v2004
  %v2006 = vpop.f32.mrf.mxu0
  %2007 = vmatprep.mubr.bf16.mxu0 0
  %2008 = vmatmul.mubr.bf16.gmra.mxu0 %v1374
  %v2009 = vpop.f32.mrf.mxu0
  %v2010 = vadd.f32 %v396, %v2009
  %v2011 = vpop.f32.mrf.mxu0
  %v2012 = vpop.f32.mrf.mxu0
  %v2013 = vadd.f32 %v396, %v2012
  %v2014 = vpop.f32.mrf.mxu0
  %2015 = vmatprep.mubr.bf16.mxu0 0
  %2016 = vmatmul.mubr.bf16.gmra.mxu0 %v1377
  %v2017 = vpop.f32.mrf.mxu0
  %v2018 = vadd.f32 %v396, %v2017
  %v2019 = vpop.f32.mrf.mxu0
  %v2020 = vpop.f32.mrf.mxu0
  %v2021 = vadd.f32 %v396, %v2020
  %v2022 = vpop.f32.mrf.mxu0
  %2023 = vmatprep.mubr.bf16.mxu0 0
  %2024 = vmatmul.mubr.bf16.gmra.mxu0 %v1380
  %v2025 = vpop.f32.mrf.mxu0
  %v2026 = vadd.f32 %v396, %v2025
  %v2027 = vpop.f32.mrf.mxu0
  %v2028 = vpop.f32.mrf.mxu0
  %v2029 = vadd.f32 %v396, %v2028
  %v2030 = vpop.f32.mrf.mxu0
  %2031 = vmatprep.mubr.bf16.mxu0 0
  %2032 = vmatmul.mubr.bf16.gmra.mxu0 %v1383
  %v2033 = vpop.f32.mrf.mxu0
  %v2034 = vadd.f32 %v396, %v2033
  %v2035 = vpop.f32.mrf.mxu0
  %v2036 = vpop.f32.mrf.mxu0
  %v2037 = vadd.f32 %v396, %v2036
  %v2038 = vpop.f32.mrf.mxu0
  %2039 = vmatprep.mubr.bf16.mxu0 0
  %2040 = vmatmul.mubr.bf16.gmra.mxu0 %v1386
  %v2041 = vpop.f32.mrf.mxu0
  %v2042 = vadd.f32 %v396, %v2041
  %v2043 = vpop.f32.mrf.mxu0
  %v2044 = vpop.f32.mrf.mxu0
  %v2045 = vadd.f32 %v396, %v2044
  %v2046 = vpop.f32.mrf.mxu0
  %2047 = vmatprep.mubr.bf16.mxu0 0
  %2048 = vmatmul.mubr.bf16.gmra.mxu0 %v1389
  %v2049 = vpop.f32.mrf.mxu0
  %v2050 = vadd.f32 %v396, %v2049
  %v2051 = vpop.f32.mrf.mxu0
  %v2052 = vpop.f32.mrf.mxu0
  %v2053 = vadd.f32 %v396, %v2052
  %v2054 = vpop.f32.mrf.mxu0
  %2055 = vmatprep.mubr.bf16.mxu0 0
  %2056 = vmatmul.mubr.bf16.gmra.mxu0 %v1392
  %v2057 = vpop.f32.mrf.mxu0
  %v2058 = vadd.f32 %v396, %v2057
  %v2059 = vpop.f32.mrf.mxu0
  %v2060 = vpop.f32.mrf.mxu0
  %v2061 = vadd.f32 %v396, %v2060
  %v2062 = vpop.f32.mrf.mxu0
  %2063 = vmatprep.mubr.bf16.mxu0 0
  %2064 = vmatmul.mubr.bf16.gmra.mxu0 %v1395
  %v2065 = vpop.f32.mrf.mxu0
  %v2066 = vadd.f32 %v396, %v2065
  %v2067 = vpop.f32.mrf.mxu0
  %v2068 = vpop.f32.mrf.mxu0
  %v2069 = vadd.f32 %v396, %v2068
  %v2070 = vpop.f32.mrf.mxu0
  %2071 = vmatprep.mubr.bf16.mxu0 0
  %2072 = vmatmul.mubr.bf16.gmra.mxu0 %v1398
  %v2073 = vpop.f32.mrf.mxu0
  %v2074 = vadd.f32 %v396, %v2073
  %v2075 = vpop.f32.mrf.mxu0
  %v2076 = vpop.f32.mrf.mxu0
  %v2077 = vadd.f32 %v396, %v2076
  %v2078 = vpop.f32.mrf.mxu0
  %2079 = vmatprep.mubr.bf16.mxu0 0
  %2080 = vmatmul.mubr.bf16.gmra.mxu0 %v1401
  %v2081 = vpop.f32.mrf.mxu0
  %v2082 = vadd.f32 %v396, %v2081
  %v2083 = vpop.f32.mrf.mxu0
  %v2084 = vpop.f32.mrf.mxu0
  %v2085 = vadd.f32 %v396, %v2084
  %v2086 = vpop.f32.mrf.mxu0
  %2087 = vmatprep.mubr.bf16.mxu0 0
  %2088 = vmatmul.mubr.bf16.gmra.mxu0 %v1404
  %v2089 = vpop.f32.mrf.mxu0
  %v2090 = vadd.f32 %v396, %v2089
  %v2091 = vpop.f32.mrf.mxu0
  %v2092 = vpop.f32.mrf.mxu0
  %v2093 = vadd.f32 %v396, %v2092
  %v2094 = vpop.f32.mrf.mxu0
  %2095 = vmatprep.mubr.bf16.mxu0 0
  %2096 = vmatmul.mubr.bf16.gmra.mxu0 %v1407
  %v2097 = vpop.f32.mrf.mxu0
  %v2098 = vadd.f32 %v396, %v2097
  %v2099 = vpop.f32.mrf.mxu0
  %v2100 = vpop.f32.mrf.mxu0
  %v2101 = vadd.f32 %v396, %v2100
  %v2102 = vpop.f32.mrf.mxu0
  %2103 = vmatprep.mubr.bf16.mxu0 0
  %2104 = vmatmul.mubr.bf16.gmra.mxu0 %v1410
  %v2105 = vpop.f32.mrf.mxu0
  %v2106 = vadd.f32 %v396, %v2105
  %v2107 = vpop.f32.mrf.mxu0
  %v2108 = vpop.f32.mrf.mxu0
  %v2109 = vadd.f32 %v396, %v2108
  %v2110 = vpop.f32.mrf.mxu0
  %2111 = vmatprep.mubr.bf16.mxu0 0
  %2112 = vmatmul.mubr.bf16.gmra.mxu0 %v1413
  %v2113 = vpop.f32.mrf.mxu0
  %v2114 = vadd.f32 %v396, %v2113
  %v2115 = vpop.f32.mrf.mxu0
  %v2116 = vpop.f32.mrf.mxu0
  %v2117 = vadd.f32 %v396, %v2116
  %v2118 = vpop.f32.mrf.mxu0
  %2119 = vmatprep.mubr.bf16.mxu0 0
  %2120 = vmatmul.mubr.bf16.gmra.mxu0 %v1416
  %v2121 = vpop.f32.mrf.mxu0
  %v2122 = vadd.f32 %v396, %v2121
  %v2123 = vpop.f32.mrf.mxu0
  %v2124 = vpop.f32.mrf.mxu0
  %v2125 = vadd.f32 %v396, %v2124
  %v2126 = vpop.f32.mrf.mxu0
  %2127 = vmatprep.mubr.bf16.mxu0 0
  %2128 = vmatmul.mubr.bf16.gmra.mxu0 %v1419
  %v2129 = vpop.f32.mrf.mxu0
  %v2130 = vadd.f32 %v396, %v2129
  %v2131 = vpop.f32.mrf.mxu0
  %v2132 = vpop.f32.mrf.mxu0
  %v2133 = vadd.f32 %v396, %v2132
  %v2134 = vpop.f32.mrf.mxu0
  %2135 = vmatprep.mubr.bf16.mxu0 0
  %2136 = vmatmul.mubr.bf16.gmra.mxu0 %v1422
  %v2137 = vpop.f32.mrf.mxu0
  %v2138 = vadd.f32 %v396, %v2137
  %v2139 = vpop.f32.mrf.mxu0
  %v2140 = vpop.f32.mrf.mxu0
  %v2141 = vadd.f32 %v396, %v2140
  %v2142 = vpop.f32.mrf.mxu0
  %2143 = vmatprep.mubr.bf16.mxu0 0
  %2144 = vmatmul.mubr.bf16.gmra.mxu0 %v1425
  %v2145 = vpop.f32.mrf.mxu0
  %v2146 = vadd.f32 %v396, %v2145
  %v2147 = vpop.f32.mrf.mxu0
  %v2148 = vpop.f32.mrf.mxu0
  %v2149 = vadd.f32 %v396, %v2148
  %v2150 = vpop.f32.mrf.mxu0
  %2151 = vmatprep.mubr.bf16.mxu0 0
  %2152 = vmatmul.mubr.bf16.gmra.mxu0 %v1428
  %v2153 = vpop.f32.mrf.mxu0
  %v2154 = vadd.f32 %v396, %v2153
  %v2155 = vpop.f32.mrf.mxu0
  %v2156 = vpop.f32.mrf.mxu0
  %v2157 = vadd.f32 %v396, %v2156
  %v2158 = vpop.f32.mrf.mxu0
  %2159 = vmatprep.mubr.bf16.mxu0 0
  %2160 = vmatmul.mubr.bf16.gmra.mxu0 %v1431
  %v2161 = vpop.f32.mrf.mxu0
  %v2162 = vadd.f32 %v396, %v2161
  %v2163 = vpop.f32.mrf.mxu0
  %v2164 = vpop.f32.mrf.mxu0
  %v2165 = vadd.f32 %v396, %v2164
  %v2166 = vpop.f32.mrf.mxu0
  %2167 = vmatprep.mubr.bf16.mxu0 0
  %2168 = vmatmul.mubr.bf16.gmra.mxu0 %v1434
  %v2169 = vpop.f32.mrf.mxu0
  %v2170 = vadd.f32 %v396, %v2169
  %v2171 = vpop.f32.mrf.mxu0
  %v2172 = vpop.f32.mrf.mxu0
  %v2173 = vadd.f32 %v396, %v2172
  %v2174 = vpop.f32.mrf.mxu0
  %2175 = vmatprep.mubr.bf16.mxu0 0
  %2176 = vmatmul.mubr.bf16.gmra.mxu0 %v1437
  %v2177 = vpop.f32.mrf.mxu0
  %v2178 = vadd.f32 %v396, %v2177
  %v2179 = vpop.f32.mrf.mxu0
  %v2180 = vpop.f32.mrf.mxu0
  %v2181 = vadd.f32 %v396, %v2180
  %v2182 = vpop.f32.mrf.mxu0
  %2183 = vmatprep.mubr.bf16.mxu0 0
  %2184 = vmatmul.mubr.bf16.gmra.mxu0 %v1440
  %v2185 = vpop.f32.mrf.mxu0
  %v2186 = vadd.f32 %v396, %v2185
  %v2187 = vpop.f32.mrf.mxu0
  %v2188 = vpop.f32.mrf.mxu0
  %v2189 = vadd.f32 %v396, %v2188
  %v2190 = vpop.f32.mrf.mxu0
  %2191 = vmatprep.mubr.bf16.mxu0 0
  %2192 = vmatmul.mubr.bf16.gmra.mxu0 %v1443
  %v2193 = vpop.f32.mrf.mxu0
  %v2194 = vadd.f32 %v396, %v2193
  %v2195 = vpop.f32.mrf.mxu0
  %v2196 = vpop.f32.mrf.mxu0
  %v2197 = vadd.f32 %v396, %v2196
  %v2198 = vpop.f32.mrf.mxu0
  %2199 = vmatprep.mubr.bf16.mxu0 0
  %2200 = vmatmul.mubr.bf16.gmra.mxu0 %v1446
  %v2201 = vpop.f32.mrf.mxu0
  %v2202 = vadd.f32 %v396, %v2201
  %v2203 = vpop.f32.mrf.mxu0
  %v2204 = vpop.f32.mrf.mxu0
  %v2205 = vadd.f32 %v396, %v2204
  %v2206 = vpop.f32.mrf.mxu0
  %2207 = vmatprep.mubr.bf16.mxu0 0
  %2208 = vmatmul.mubr.bf16.gmra.mxu0 %v1449
  %v2209 = vpop.f32.mrf.mxu0
  %v2210 = vadd.f32 %v396, %v2209
  %v2211 = vpop.f32.mrf.mxu0
  %v2212 = vpop.f32.mrf.mxu0
  %v2213 = vadd.f32 %v396, %v2212
  %v2214 = vpop.f32.mrf.mxu0
  %2215 = vmatprep.mubr.bf16.mxu0 0
  %2216 = vmatmul.mubr.bf16.gmra.mxu0 %v1452
  %v2217 = vpop.f32.mrf.mxu0
  %v2218 = vadd.f32 %v396, %v2217
  %v2219 = vpop.f32.mrf.mxu0
  %v2220 = vpop.f32.mrf.mxu0
  %v2221 = vadd.f32 %v396, %v2220
  %v2222 = vpop.f32.mrf.mxu0
  %2223 = vmatprep.mubr.bf16.mxu0 0
  %2224 = vmatmul.mubr.bf16.gmra.mxu0 %v1455
  %v2225 = vpop.f32.mrf.mxu0
  %v2226 = vadd.f32 %v396, %v2225
  %v2227 = vpop.f32.mrf.mxu0
  %v2228 = vpop.f32.mrf.mxu0
  %v2229 = vadd.f32 %v396, %v2228
  %v2230 = vpop.f32.mrf.mxu0
  %2231 = vmatprep.mubr.bf16.mxu0 0
  %2232 = vmatmul.mubr.bf16.gmra.mxu0 %v1458
  %v2233 = vpop.f32.mrf.mxu0
  %v2234 = vadd.f32 %v396, %v2233
  %v2235 = vpop.f32.mrf.mxu0
  %v2236 = vpop.f32.mrf.mxu0
  %v2237 = vadd.f32 %v396, %v2236
  %v2238 = vpop.f32.mrf.mxu0
  %2239 = vmatprep.mubr.bf16.mxu0 0
  %2240 = vmatmul.mubr.bf16.gmra.mxu0 %v1461
  %v2241 = vpop.f32.mrf.mxu0
  %v2242 = vadd.f32 %v396, %v2241
  %v2243 = vpop.f32.mrf.mxu0
  %v2244 = vpop.f32.mrf.mxu0
  %v2245 = vadd.f32 %v396, %v2244
  %v2246 = vpop.f32.mrf.mxu0
  %2247 = vmatprep.mubr.bf16.mxu0 0
  %2248 = vmatmul.mubr.bf16.gmra.mxu0 %v1464
  %v2249 = vpop.f32.mrf.mxu0
  %v2250 = vadd.f32 %v396, %v2249
  %v2251 = vpop.f32.mrf.mxu0
  %v2252 = vpop.f32.mrf.mxu0
  %v2253 = vadd.f32 %v396, %v2252
  %v2254 = vpop.f32.mrf.mxu0
  %2255 = vmatprep.mubr.bf16.mxu0 0
  %2256 = vmatmul.mubr.bf16.gmra.mxu0 %v1467
  %v2257 = vpop.f32.mrf.mxu0
  %v2258 = vadd.f32 %v396, %v2257
  %v2259 = vpop.f32.mrf.mxu0
  %v2260 = vpop.f32.mrf.mxu0
  %v2261 = vadd.f32 %v396, %v2260
  %v2262 = vpop.f32.mrf.mxu0
  %2263 = vmatprep.mubr.bf16.mxu0 0
  %2264 = vmatmul.mubr.bf16.gmra.mxu0 %v1470
  %v2265 = vpop.f32.mrf.mxu0
  %v2266 = vadd.f32 %v396, %v2265
  %v2267 = vpop.f32.mrf.mxu0
  %v2268 = vpop.f32.mrf.mxu0
  %v2269 = vadd.f32 %v396, %v2268
  %v2270 = vpop.f32.mrf.mxu0
  %2271 = vmatprep.mubr.bf16.mxu0 0
  %2272 = vmatmul.mubr.bf16.gmra.mxu0 %v1473
  %v2273 = vpop.f32.mrf.mxu0
  %v2274 = vadd.f32 %v396, %v2273
  %v2275 = vpop.f32.mrf.mxu0
  %v2276 = vpop.f32.mrf.mxu0
  %v2277 = vadd.f32 %v396, %v2276
  %v2278 = vpop.f32.mrf.mxu0
  %2279 = vmatprep.mubr.bf16.mxu0 0
  %2280 = vmatmul.mubr.bf16.gmra.mxu0 %v1476
  %v2281 = vpop.f32.mrf.mxu0
  %v2282 = vadd.f32 %v396, %v2281
  %v2283 = vpop.f32.mrf.mxu0
  %v2284 = vpop.f32.mrf.mxu0
  %v2285 = vadd.f32 %v396, %v2284
  %v2286 = vpop.f32.mrf.mxu0
  %2287 = vmatprep.mubr.bf16.mxu0 0
  %2288 = vmatmul.mubr.bf16.gmra.mxu0 %v1479
  %v2289 = vpop.f32.mrf.mxu0
  %v2290 = vadd.f32 %v396, %v2289
  %v2291 = vpop.f32.mrf.mxu0
  %v2292 = vpop.f32.mrf.mxu0
  %v2293 = vadd.f32 %v396, %v2292
  %v2294 = vpop.f32.mrf.mxu0
  %2295 = vmatprep.mubr.bf16.mxu0 0
  %2296 = vmatmul.mubr.bf16.gmra.mxu0 %v1482
  %v2297 = vpop.f32.mrf.mxu0
  %v2298 = vadd.f32 %v396, %v2297
  %v2299 = vpop.f32.mrf.mxu0
  %v2300 = vpop.f32.mrf.mxu0
  %v2301 = vadd.f32 %v396, %v2300
  %v2302 = vpop.f32.mrf.mxu0
  %2303 = vmatprep.mubr.bf16.mxu0 0
  %2304 = vmatmul.mubr.bf16.gmra.mxu0 %v1485
  %v2305 = vpop.f32.mrf.mxu0
  %v2306 = vadd.f32 %v396, %v2305
  %v2307 = vpop.f32.mrf.mxu0
  %v2308 = vpop.f32.mrf.mxu0
  %v2309 = vadd.f32 %v396, %v2308
  %v2310 = vpop.f32.mrf.mxu0
  %2311 = vmatprep.mubr.bf16.mxu0 0
  %2312 = vmatmul.mubr.bf16.gmra.mxu0 %v1488
  %v2313 = vpop.f32.mrf.mxu0
  %v2314 = vadd.f32 %v396, %v2313
  %v2315 = vpop.f32.mrf.mxu0
  %v2316 = vpop.f32.mrf.mxu0
  %v2317 = vadd.f32 %v396, %v2316
  %v2318 = vpop.f32.mrf.mxu0
  %2319 = vmatprep.mubr.bf16.mxu0 0
  %2320 = vmatmul.mubr.bf16.gmra.mxu0 %v1491
  %v2321 = vpop.f32.mrf.mxu0
  %v2322 = vadd.f32 %v396, %v2321
  %v2323 = vpop.f32.mrf.mxu0
  %v2324 = vpop.f32.mrf.mxu0
  %v2325 = vadd.f32 %v396, %v2324
  %v2326 = vpop.f32.mrf.mxu0
  %2327 = vmatprep.mubr.bf16.mxu0 0
  %2328 = vmatmul.mubr.bf16.gmra.mxu0 %v1494
  %v2329 = vpop.f32.mrf.mxu0
  %v2330 = vadd.f32 %v396, %v2329
  %v2331 = vpop.f32.mrf.mxu0
  %v2332 = vpop.f32.mrf.mxu0
  %v2333 = vadd.f32 %v396, %v2332
  %v2334 = vpop.f32.mrf.mxu0
  %2335 = vmatprep.mubr.bf16.mxu0 0
  %2336 = vmatmul.mubr.bf16.gmra.mxu0 %v1497
  %v2337 = vpop.f32.mrf.mxu0
  %v2338 = vadd.f32 %v396, %v2337
  %v2339 = vpop.f32.mrf.mxu0
  %v2340 = vpop.f32.mrf.mxu0
  %v2341 = vadd.f32 %v396, %v2340
  %v2342 = vpop.f32.mrf.mxu0
  %2343 = vmatprep.mubr.bf16.mxu0 0
  %2344 = vmatmul.mubr.bf16.gmra.mxu0 %v1500
  %v2345 = vpop.f32.mrf.mxu0
  %v2346 = vadd.f32 %v396, %v2345
  %v2347 = vpop.f32.mrf.mxu0
  %v2348 = vpop.f32.mrf.mxu0
  %v2349 = vadd.f32 %v396, %v2348
  %v2350 = vpop.f32.mrf.mxu0
  %2351 = vmatprep.mubr.bf16.mxu0 0
  %2352 = vmatmul.mubr.bf16.gmra.mxu0 %v1503
  %v2353 = vpop.f32.mrf.mxu0
  %v2354 = vadd.f32 %v396, %v2353
  %v2355 = vpop.f32.mrf.mxu0
  %v2356 = vpop.f32.mrf.mxu0
  %v2357 = vadd.f32 %v396, %v2356
  %v2358 = vpop.f32.mrf.mxu0
  %2359 = vmatprep.mubr.bf16.mxu0 0
  %2360 = vmatmul.mubr.bf16.gmra.mxu0 %v1506
  %v2361 = vpop.f32.mrf.mxu0
  %v2362 = vadd.f32 %v396, %v2361
  %v2363 = vpop.f32.mrf.mxu0
  %v2364 = vpop.f32.mrf.mxu0
  %v2365 = vadd.f32 %v396, %v2364
  %v2366 = vpop.f32.mrf.mxu0
  %2367 = vmatprep.mubr.bf16.mxu0 0
  %2368 = vmatmul.mubr.bf16.gmra.mxu0 %v1509
  %v2369 = vpop.f32.mrf.mxu0
  %v2370 = vadd.f32 %v396, %v2369
  %v2371 = vpop.f32.mrf.mxu0
  %v2372 = vpop.f32.mrf.mxu0
  %v2373 = vadd.f32 %v396, %v2372
  %v2374 = vpop.f32.mrf.mxu0
  %2375 = vmatprep.mubr.bf16.mxu0 0
  %2376 = vmatmul.mubr.bf16.gmra.mxu0 %v1512
  %v2377 = vpop.f32.mrf.mxu0
  %v2378 = vadd.f32 %v396, %v2377
  %v2379 = vpop.f32.mrf.mxu0
  %v2380 = vpop.f32.mrf.mxu0
  %v2381 = vadd.f32 %v396, %v2380
  %v2382 = vpop.f32.mrf.mxu0
  %2383 = vmatprep.mubr.bf16.mxu0 0
  %2384 = vmatmul.mubr.bf16.gmra.mxu0 %v1515
  %v2385 = vpop.f32.mrf.mxu0
  %v2386 = vadd.f32 %v396, %v2385
  %v2387 = vpop.f32.mrf.mxu0
  %v2388 = vpop.f32.mrf.mxu0
  %v2389 = vadd.f32 %v396, %v2388
  %v2390 = vpop.f32.mrf.mxu0
  %2391 = vmatprep.mubr.bf16.mxu0 0
  %2392 = vmatmul.mubr.bf16.gmra.mxu0 %v1518
  %v2393 = vpop.f32.mrf.mxu0
  %v2394 = vadd.f32 %v396, %v2393
  %v2395 = vpop.f32.mrf.mxu0
  %v2396 = vpop.f32.mrf.mxu0
  %v2397 = vadd.f32 %v396, %v2396
  %v2398 = vpop.f32.mrf.mxu0
  %2399 = vmatprep.mubr.bf16.mxu0 0
  %2400 = vmatmul.mubr.bf16.gmra.mxu0 %v1521
  %v2401 = vpop.f32.mrf.mxu0
  %v2402 = vadd.f32 %v396, %v2401
  %v2403 = vpop.f32.mrf.mxu0
  %v2404 = vpop.f32.mrf.mxu0
  %v2405 = vadd.f32 %v396, %v2404
  %v2406 = vpop.f32.mrf.mxu0
  %2407 = vmatprep.mubr.bf16.mxu0 0
  %2408 = vmatmul.mubr.bf16.gmra.mxu0 %v1524
  %v2409 = vpop.f32.mrf.mxu0
  %v2410 = vadd.f32 %v396, %v2409
  %v2411 = vpop.f32.mrf.mxu0
  %v2412 = vpop.f32.mrf.mxu0
  %v2413 = vadd.f32 %v396, %v2412
  %v2414 = vpop.f32.mrf.mxu0
  %2415 = vmatprep.mubr.bf16.mxu0 0
  %2416 = vmatmul.mubr.bf16.gmra.mxu0 %v1527
  %v2417 = vpop.f32.mrf.mxu0
  %v2418 = vadd.f32 %v396, %v2417
  %v2419 = vpop.f32.mrf.mxu0
  %v2420 = vpop.f32.mrf.mxu0
  %v2421 = vadd.f32 %v396, %v2420
  %v2422 = vpop.f32.mrf.mxu0
  %2423 = vmatprep.mubr.bf16.mxu0 0
  %2424 = vmatmul.mubr.bf16.gmra.mxu0 %v1530
  %v2425 = vpop.f32.mrf.mxu0
  %v2426 = vadd.f32 %v396, %v2425
  %v2427 = vpop.f32.mrf.mxu0
  %v2428 = vpop.f32.mrf.mxu0
  %v2429 = vadd.f32 %v396, %v2428
  %v2430 = vpop.f32.mrf.mxu0
  %2431 = vmatprep.mubr.bf16.mxu0 0
  %2432 = vmatmul.mubr.bf16.gmra.mxu0 %v1533
  %v2433 = vpop.f32.mrf.mxu0
  %v2434 = vadd.f32 %v396, %v2433
  %v2435 = vpop.f32.mrf.mxu0
  %v2436 = vpop.f32.mrf.mxu0
  %v2437 = vadd.f32 %v396, %v2436
  %v2438 = vpop.f32.mrf.mxu0
  %2439 = vmatprep.mubr.bf16.mxu0 0
  %2440 = vmatmul.mubr.bf16.gmra.mxu0 %v1536
  %v2441 = vpop.f32.mrf.mxu0
  %v2442 = vadd.f32 %v396, %v2441
  %v2443 = vpop.f32.mrf.mxu0
  %v2444 = vpop.f32.mrf.mxu0
  %v2445 = vadd.f32 %v396, %v2444
  %v2446 = vpop.f32.mrf.mxu0
  %2447 = vmatprep.mubr.bf16.mxu0 0
  %2448 = vmatmul.mubr.bf16.gmra.mxu0 %v1539
  %v2449 = vpop.f32.mrf.mxu0
  %v2450 = vadd.f32 %v396, %v2449
  %v2451 = vpop.f32.mrf.mxu0
  %v2452 = vpop.f32.mrf.mxu0
  %v2453 = vadd.f32 %v396, %v2452
  %v2454 = vpop.f32.mrf.mxu0
  %2455 = vmatprep.mubr.bf16.mxu0 0
  %2456 = vmatmul.mubr.bf16.gmra.mxu0 %v1542
  %v2457 = vpop.f32.mrf.mxu0
  %v2458 = vadd.f32 %v396, %v2457
  %v2459 = vpop.f32.mrf.mxu0
  %v2460 = vpop.f32.mrf.mxu0
  %v2461 = vadd.f32 %v396, %v2460
  %v2462 = vpop.f32.mrf.mxu0
  %2463 = vmatprep.mubr.bf16.mxu0 0
  %2464 = vmatmul.mubr.bf16.gmra.mxu0 %v1545
  %v2465 = vpop.f32.mrf.mxu0
  %v2466 = vadd.f32 %v396, %v2465
  %v2467 = vpop.f32.mrf.mxu0
  %v2468 = vpop.f32.mrf.mxu0
  %v2469 = vadd.f32 %v396, %v2468
  %v2470 = vpop.f32.mrf.mxu0
  %2471 = vmatprep.mubr.bf16.mxu0 0
  %2472 = vmatmul.mubr.bf16.gmra.mxu0 %v1548
  %v2473 = vpop.f32.mrf.mxu0
  %v2474 = vadd.f32 %v396, %v2473
  %v2475 = vpop.f32.mrf.mxu0
  %v2476 = vpop.f32.mrf.mxu0
  %v2477 = vadd.f32 %v396, %v2476
  %v2478 = vpop.f32.mrf.mxu0
  %2479 = vmatprep.mubr.bf16.mxu0 0
  %2480 = vmatmul.mubr.bf16.gmra.mxu0 %v1551
  %v2481 = vpop.f32.mrf.mxu0
  %v2482 = vadd.f32 %v396, %v2481
  %v2483 = vpop.f32.mrf.mxu0
  %v2484 = vpop.f32.mrf.mxu0
  %v2485 = vadd.f32 %v396, %v2484
  %v2486 = vpop.f32.mrf.mxu0
  %2487 = vmatprep.mubr.bf16.mxu0 0
  %2488 = vmatmul.mubr.bf16.gmra.mxu0 %v1554
  %v2489 = vpop.f32.mrf.mxu0
  %v2490 = vadd.f32 %v396, %v2489
  %v2491 = vpop.f32.mrf.mxu0
  %v2492 = vpop.f32.mrf.mxu0
  %v2493 = vadd.f32 %v396, %v2492
  %v2494 = vpop.f32.mrf.mxu0
  %2495 = vmatprep.mubr.bf16.mxu0 0
  %2496 = vmatmul.mubr.bf16.gmra.mxu0 %v1557
  %v2497 = vpop.f32.mrf.mxu0
  %v2498 = vadd.f32 %v396, %v2497
  %v2499 = vpop.f32.mrf.mxu0
  %v2500 = vpop.f32.mrf.mxu0
  %v2501 = vadd.f32 %v396, %v2500
  %v2502 = vpop.f32.mrf.mxu0
  %2503 = vmatprep.mubr.bf16.mxu0 0
  %2504 = vmatmul.mubr.bf16.gmra.mxu0 %v1560
  %v2505 = vpop.f32.mrf.mxu0
  %v2506 = vadd.f32 %v396, %v2505
  %v2507 = vpop.f32.mrf.mxu0
  %v2508 = vpop.f32.mrf.mxu0
  %v2509 = vadd.f32 %v396, %v2508
  %v2510 = vpop.f32.mrf.mxu0
  %2511 = vmatprep.mubr.bf16.mxu0 0
  %2512 = vmatmul.mubr.bf16.gmra.mxu0 %v1563
  %v2513 = vpop.f32.mrf.mxu0
  %v2514 = vadd.f32 %v396, %v2513
  %v2515 = vpop.f32.mrf.mxu0
  %v2516 = vpop.f32.mrf.mxu0
  %v2517 = vadd.f32 %v396, %v2516
  %v2518 = vpop.f32.mrf.mxu0
  %2519 = vmatprep.mubr.bf16.mxu0 0
  %2520 = vmatmul.mubr.bf16.gmra.mxu0 %v1566
  %v2521 = vpop.f32.mrf.mxu0
  %v2522 = vadd.f32 %v396, %v2521
  %v2523 = vpop.f32.mrf.mxu0
  %v2524 = vpop.f32.mrf.mxu0
  %v2525 = vadd.f32 %v396, %v2524
  %v2526 = vpop.f32.mrf.mxu0
  %2527 = vmatprep.mubr.bf16.mxu0 0
  %2528 = vmatmul.mubr.bf16.gmra.mxu0 %v1569
  %v2529 = vpop.f32.mrf.mxu0
  %v2530 = vadd.f32 %v396, %v2529
  %v2531 = vpop.f32.mrf.mxu0
  %v2532 = vpop.f32.mrf.mxu0
  %v2533 = vadd.f32 %v396, %v2532
  %v2534 = vpop.f32.mrf.mxu0
  %2535 = vmatprep.mubr.bf16.mxu0 0
  %2536 = vmatmul.mubr.bf16.gmra.mxu0 %v1572
  %v2537 = vpop.f32.mrf.mxu0
  %v2538 = vadd.f32 %v396, %v2537
  %v2539 = vpop.f32.mrf.mxu0
  %v2540 = vpop.f32.mrf.mxu0
  %v2541 = vadd.f32 %v396, %v2540
  %v2542 = vpop.f32.mrf.mxu0
  %2543 = vmatprep.mubr.bf16.mxu0 0
  %2544 = vmatmul.mubr.bf16.gmra.mxu0 %v1575
  %v2545 = vpop.f32.mrf.mxu0
  %v2546 = vadd.f32 %v396, %v2545
  %v2547 = vpop.f32.mrf.mxu0
  %v2548 = vpop.f32.mrf.mxu0
  %v2549 = vadd.f32 %v396, %v2548
  %v2550 = vpop.f32.mrf.mxu0
  %2551 = vmatprep.mubr.bf16.mxu0 0
  %2552 = vmatmul.mubr.bf16.gmra.mxu0 %v1578
  %v2553 = vpop.f32.mrf.mxu0
  %v2554 = vadd.f32 %v396, %v2553
  %v2555 = vpop.f32.mrf.mxu0
  %v2556 = vpop.f32.mrf.mxu0
  %v2557 = vadd.f32 %v396, %v2556
  %v2558 = vpop.f32.mrf.mxu0
  %2559 = vmatprep.mubr.bf16.mxu0 0
  %2560 = vmatmul.mubr.bf16.gmra.mxu0 %v1581
  %v2561 = vpop.f32.mrf.mxu0
  %v2562 = vadd.f32 %v396, %v2561
  %v2563 = vpop.f32.mrf.mxu0
  %v2564 = vpop.f32.mrf.mxu0
  %v2565 = vadd.f32 %v396, %v2564
  %v2566 = vpop.f32.mrf.mxu0
  %2567 = vmatprep.mubr.bf16.mxu0 0
  %2568 = vmatmul.mubr.bf16.gmra.mxu0 %v1584
  %v2569 = vpop.f32.mrf.mxu0
  %v2570 = vadd.f32 %v396, %v2569
  %v2571 = vpop.f32.mrf.mxu0
  %v2572 = vpop.f32.mrf.mxu0
  %v2573 = vadd.f32 %v396, %v2572
  %v2574 = vpop.f32.mrf.mxu0
  %2575 = vmatprep.mubr.bf16.mxu0 0
  %2576 = vmatmul.mubr.bf16.gmra.mxu0 %v1587
  %v2577 = vpop.f32.mrf.mxu0
  %v2578 = vadd.f32 %v396, %v2577
  %v2579 = vpop.f32.mrf.mxu0
  %v2580 = vpop.f32.mrf.mxu0
  %v2581 = vadd.f32 %v396, %v2580
  %v2582 = vpop.f32.mrf.mxu0
  %2583 = vmatprep.mubr.bf16.mxu0 0
  %2584 = vmatmul.mubr.bf16.gmra.mxu0 %v1590
  %v2585 = vpop.f32.mrf.mxu0
  %v2586 = vadd.f32 %v396, %v2585
  %v2587 = vpop.f32.mrf.mxu0
  %v2588 = vpop.f32.mrf.mxu0
  %v2589 = vadd.f32 %v396, %v2588
  %v2590 = vpop.f32.mrf.mxu0
  %2591 = vmatprep.mubr.bf16.mxu0 0
  %2592 = vmatmul.mubr.bf16.gmra.mxu0 %v1593
  %v2593 = vpop.f32.mrf.mxu0
  %v2594 = vadd.f32 %v396, %v2593
  %v2595 = vpop.f32.mrf.mxu0
  %v2596 = vpop.f32.mrf.mxu0
  %v2597 = vadd.f32 %v396, %v2596
  %v2598 = vpop.f32.mrf.mxu0
  %2599 = vmatprep.mubr.bf16.mxu0 0
  %2600 = vmatmul.mubr.bf16.gmra.mxu0 %v1596
  %v2601 = vpop.f32.mrf.mxu0
  %v2602 = vadd.f32 %v396, %v2601
  %v2603 = vpop.f32.mrf.mxu0
  %v2604 = vpop.f32.mrf.mxu0
  %v2605 = vadd.f32 %v396, %v2604
  %v2606 = vpop.f32.mrf.mxu0
  %2607 = vmatprep.mubr.bf16.mxu0 0
  %2608 = vmatmul.mubr.bf16.gmra.mxu0 %v1599
  %v2609 = vpop.f32.mrf.mxu0
  %v2610 = vadd.f32 %v396, %v2609
  %v2611 = vpop.f32.mrf.mxu0
  %v2612 = vpop.f32.mrf.mxu0
  %v2613 = vadd.f32 %v396, %v2612
  %v2614 = vpop.f32.mrf.mxu0
  %2615 = vmatprep.mubr.bf16.mxu0 0
  %2616 = vmatmul.mubr.bf16.gmra.mxu0 %v1602
  %v2617 = vpop.f32.mrf.mxu0
  %v2618 = vadd.f32 %v396, %v2617
  %v2619 = vpop.f32.mrf.mxu0
  %v2620 = vpop.f32.mrf.mxu0
  %v2621 = vadd.f32 %v396, %v2620
  %v2622 = vpop.f32.mrf.mxu0
  %2623 = vmatprep.mubr.bf16.mxu0 0
  %2624 = vmatmul.mubr.bf16.gmra.mxu0 %v1605
  %v2625 = vpop.f32.mrf.mxu0
  %v2626 = vadd.f32 %v396, %v2625
  %v2627 = vpop.f32.mrf.mxu0
  %v2628 = vpop.f32.mrf.mxu0
  %v2629 = vadd.f32 %v396, %v2628
  %v2630 = vpop.f32.mrf.mxu0
  %2631 = vmatprep.mubr.bf16.mxu0 0
  %2632 = vmatmul.mubr.bf16.gmra.mxu0 %v1608
  %v2633 = vpop.f32.mrf.mxu0
  %v2634 = vadd.f32 %v396, %v2633
  %v2635 = vpop.f32.mrf.mxu0
  %v2636 = vpop.f32.mrf.mxu0
  %v2637 = vadd.f32 %v396, %v2636
  %v2638 = vpop.f32.mrf.mxu0
  %2639 = vmatprep.mubr.bf16.mxu0 0
  %2640 = vmatmul.mubr.bf16.gmra.mxu0 %v1611
  %v2641 = vpop.f32.mrf.mxu0
  %v2642 = vadd.f32 %v396, %v2641
  %v2643 = vpop.f32.mrf.mxu0
  %v2644 = vpop.f32.mrf.mxu0
  %v2645 = vadd.f32 %v396, %v2644
  %v2646 = vpop.f32.mrf.mxu0
  %2647 = vmatprep.mubr.bf16.mxu0 0
  %2648 = vmatmul.mubr.bf16.gmra.mxu0 %v1614
  %v2649 = vpop.f32.mrf.mxu0
  %v2650 = vadd.f32 %v396, %v2649
  %v2651 = vpop.f32.mrf.mxu0
  %v2652 = vpop.f32.mrf.mxu0
  %v2653 = vadd.f32 %v396, %v2652
  %v2654 = vpop.f32.mrf.mxu0
  %2655 = vmatprep.mubr.bf16.mxu0 0
  %2656 = vmatmul.mubr.bf16.gmra.mxu0 %v1617
  %v2657 = vpop.f32.mrf.mxu0
  %v2658 = vadd.f32 %v396, %v2657
  %v2659 = vpop.f32.mrf.mxu0
  %v2660 = vpop.f32.mrf.mxu0
  %v2661 = vadd.f32 %v396, %v2660
  %v2662 = vpop.f32.mrf.mxu0
  %2663 = vmatprep.mubr.bf16.mxu0 0
  %2664 = vmatmul.mubr.bf16.gmra.mxu0 %v1620
  %v2665 = vpop.f32.mrf.mxu0
  %v2666 = vadd.f32 %v396, %v2665
  %v2667 = vpop.f32.mrf.mxu0
  %v2668 = vpop.f32.mrf.mxu0
  %v2669 = vadd.f32 %v396, %v2668
  %v2670 = vpop.f32.mrf.mxu0
  %2671 = vmatprep.mubr.bf16.mxu0 0
  %2672 = vmatmul.mubr.bf16.gmra.mxu0 %v1623
  %v2673 = vpop.f32.mrf.mxu0
  %v2674 = vadd.f32 %v396, %v2673
  %v2675 = vpop.f32.mrf.mxu0
  %v2676 = vpop.f32.mrf.mxu0
  %v2677 = vadd.f32 %v396, %v2676
  %v2678 = vpop.f32.mrf.mxu0
  %2679 = vmatprep.mubr.bf16.mxu0 0
  %2680 = vmatmul.mubr.bf16.gmra.mxu0 %v1626
  %v2681 = vpop.f32.mrf.mxu0
  %v2682 = vadd.f32 %v396, %v2681
  %v2683 = vpop.f32.mrf.mxu0
  %v2684 = vpop.f32.mrf.mxu0
  %v2685 = vadd.f32 %v396, %v2684
  %v2686 = vpop.f32.mrf.mxu0
  %2687 = vmatprep.mubr.bf16.mxu0 0
  %2688 = vmatmul.mubr.bf16.gmra.mxu0 %v1629
  %v2689 = vpop.f32.mrf.mxu0
  %v2690 = vadd.f32 %v396, %v2689
  %v2691 = vpop.f32.mrf.mxu0
  %v2692 = vpop.f32.mrf.mxu0
  %v2693 = vadd.f32 %v396, %v2692
  %v2694 = vpop.f32.mrf.mxu0
  %2695 = vmatprep.mubr.bf16.mxu0 0
  %2696 = vmatmul.mubr.bf16.gmra.mxu0 %v1632
  %v2697 = vpop.f32.mrf.mxu0
  %v2698 = vadd.f32 %v396, %v2697
  %v2699 = vpop.f32.mrf.mxu0
  %v2700 = vpop.f32.mrf.mxu0
  %v2701 = vadd.f32 %v396, %v2700
  %v2702 = vpop.f32.mrf.mxu0
  %2703 = vmatprep.mubr.bf16.mxu0 0
  %2704 = vmatmul.mubr.bf16.gmra.mxu0 %v1635
  %v2705 = vpop.f32.mrf.mxu0
  %v2706 = vadd.f32 %v396, %v2705
  %v2707 = vpop.f32.mrf.mxu0
  %v2708 = vpop.f32.mrf.mxu0
  %v2709 = vadd.f32 %v396, %v2708
  %v2710 = vpop.f32.mrf.mxu0
  %2711 = vmatprep.mubr.bf16.mxu0 0
  %2712 = vmatmul.mubr.bf16.gmra.mxu0 %v1638
  %v2713 = vpop.f32.mrf.mxu0
  %v2714 = vadd.f32 %v396, %v2713
  %v2715 = vpop.f32.mrf.mxu0
  %v2716 = vpop.f32.mrf.mxu0
  %v2717 = vadd.f32 %v396, %v2716
  %v2718 = vpop.f32.mrf.mxu0
  %2719 = vmatprep.mubr.bf16.mxu0 0
  %2720 = vmatmul.mubr.bf16.gmra.mxu0 %v1641
  %v2721 = vpop.f32.mrf.mxu0
  %v2722 = vadd.f32 %v396, %v2721
  %v2723 = vpop.f32.mrf.mxu0
  %v2724 = vpop.f32.mrf.mxu0
  %v2725 = vadd.f32 %v396, %v2724
  %v2726 = vpop.f32.mrf.mxu0
  %2727 = vmatprep.mubr.bf16.mxu0 0
  %2728 = vmatmul.mubr.bf16.gmra.mxu0 %v1644
  %v2729 = vpop.f32.mrf.mxu0
  %v2730 = vadd.f32 %v396, %v2729
  %v2731 = vpop.f32.mrf.mxu0
  %v2732 = vpop.f32.mrf.mxu0
  %v2733 = vadd.f32 %v396, %v2732
  %v2734 = vpop.f32.mrf.mxu0
  %2735 = vmatprep.mubr.bf16.mxu0 0
  %2736 = vmatmul.mubr.bf16.gmra.mxu0 %v1647
  %v2737 = vpop.f32.mrf.mxu0
  %v2738 = vadd.f32 %v396, %v2737
  %v2739 = vpop.f32.mrf.mxu0
  %v2740 = vpop.f32.mrf.mxu0
  %v2741 = vadd.f32 %v396, %v2740
  %v2742 = vpop.f32.mrf.mxu0
  %2743 = vmatprep.mubr.bf16.mxu0 0
  %2744 = vmatmul.mubr.bf16.gmra.mxu0 %v1650
  %v2745 = vpop.f32.mrf.mxu0
  %v2746 = vadd.f32 %v396, %v2745
  %v2747 = vpop.f32.mrf.mxu0
  %v2748 = vpop.f32.mrf.mxu0
  %v2749 = vadd.f32 %v396, %v2748
  %v2750 = vpop.f32.mrf.mxu0
  %2751 = vmatprep.mubr.bf16.mxu0 0
  %2752 = vmatmul.mubr.bf16.gmra.mxu0 %v1653
  %v2753 = vpop.f32.mrf.mxu0
  %v2754 = vadd.f32 %v396, %v2753
  %v2755 = vpop.f32.mrf.mxu0
  %v2756 = vpop.f32.mrf.mxu0
  %v2757 = vadd.f32 %v396, %v2756
  %v2758 = vpop.f32.mrf.mxu0
  %2759 = vmatprep.mubr.bf16.mxu0 0
  %2760 = vmatmul.mubr.bf16.gmra.mxu0 %v1656
  %v2761 = vpop.f32.mrf.mxu0
  %v2762 = vadd.f32 %v396, %v2761
  %v2763 = vpop.f32.mrf.mxu0
  %v2764 = vpop.f32.mrf.mxu0
  %v2765 = vadd.f32 %v396, %v2764
  %v2766 = vpop.f32.mrf.mxu0
  %2767 = vmatprep.mubr.bf16.mxu0 0
  %2768 = vmatmul.mubr.bf16.gmra.mxu0 %v1659
  %v2769 = vpop.f32.mrf.mxu0
  %v2770 = vadd.f32 %v396, %v2769
  %v2771 = vpop.f32.mrf.mxu0
  %v2772 = vpop.f32.mrf.mxu0
  %v2773 = vadd.f32 %v396, %v2772
  %v2774 = vpop.f32.mrf.mxu0
  %2775 = vmatprep.mubr.bf16.mxu0 0
  %2776 = vmatmul.mubr.bf16.gmra.mxu0 %v1662
  %v2777 = vpop.f32.mrf.mxu0
  %v2778 = vadd.f32 %v396, %v2777
  %v2779 = vpop.f32.mrf.mxu0
  %v2780 = vpop.f32.mrf.mxu0
  %v2781 = vadd.f32 %v396, %v2780
  %v2782 = vpop.f32.mrf.mxu0
  %2783 = vmatprep.mubr.bf16.mxu0 0
  %2784 = vmatmul.mubr.bf16.gmra.mxu0 %v1665
  %v2785 = vpop.f32.mrf.mxu0
  %v2786 = vadd.f32 %v396, %v2785
  %v2787 = vpop.f32.mrf.mxu0
  %v2788 = vpop.f32.mrf.mxu0
  %v2789 = vadd.f32 %v396, %v2788
  %v2790 = vpop.f32.mrf.mxu0
  %2791 = vmatprep.mubr.bf16.mxu0 0
  %2792 = vmatmul.mubr.bf16.gmra.mxu0 %v1668
  %v2793 = vpop.f32.mrf.mxu0
  %v2794 = vadd.f32 %v396, %v2793
  %v2795 = vpop.f32.mrf.mxu0
  %v2796 = vpop.f32.mrf.mxu0
  %v2797 = vadd.f32 %v396, %v2796
  %v2798 = vpop.f32.mrf.mxu0
  %2799 = vmatprep.mubr.bf16.mxu0 0
  %2800 = vmatmul.mubr.bf16.gmra.mxu0 %v1671
  %v2801 = vpop.f32.mrf.mxu0
  %v2802 = vadd.f32 %v396, %v2801
  %v2803 = vpop.f32.mrf.mxu0
  %v2804 = vpop.f32.mrf.mxu0
  %v2805 = vadd.f32 %v396, %v2804
  %v2806 = vpop.f32.mrf.mxu0
  %2807 = vmatprep.mubr.bf16.mxu0 0
  %2808 = vmatmul.mubr.bf16.gmra.mxu0 %v1674
  %v2809 = vpop.f32.mrf.mxu0
  %v2810 = vadd.f32 %v396, %v2809
  %v2811 = vpop.f32.mrf.mxu0
  %v2812 = vpop.f32.mrf.mxu0
  %v2813 = vadd.f32 %v396, %v2812
  %v2814 = vpop.f32.mrf.mxu0
  %2815 = vmatprep.mubr.bf16.mxu0 0
  %2816 = vmatmul.mubr.bf16.gmra.mxu0 %v1677
  %v2817 = vpop.f32.mrf.mxu0
  %v2818 = vadd.f32 %v396, %v2817
  %v2819 = vpop.f32.mrf.mxu0
  %v2820 = vpop.f32.mrf.mxu0
  %v2821 = vadd.f32 %v396, %v2820
  %v2822 = vpop.f32.mrf.mxu0
  %2823 = vmatprep.mubr.bf16.mxu0 0
  %2824 = vmatmul.mubr.bf16.gmra.mxu0 %v1680
  %v2825 = vpop.f32.mrf.mxu0
  %v2826 = vadd.f32 %v396, %v2825
  %v2827 = vpop.f32.mrf.mxu0
  %v2828 = vpop.f32.mrf.mxu0
  %v2829 = vadd.f32 %v396, %v2828
  %v2830 = vpop.f32.mrf.mxu0
  %2831 = vmatprep.mubr.bf16.mxu0 0
  %2832 = vmatmul.mubr.bf16.gmra.mxu0 %v1683
  %v2833 = vpop.f32.mrf.mxu0
  %v2834 = vadd.f32 %v396, %v2833
  %v2835 = vpop.f32.mrf.mxu0
  %v2836 = vpop.f32.mrf.mxu0
  %v2837 = vadd.f32 %v396, %v2836
  %v2838 = vpop.f32.mrf.mxu0
  %2839 = vmatprep.mubr.bf16.mxu0 0
  %2840 = vmatmul.mubr.bf16.gmra.mxu0 %v1686
  %v2841 = vpop.f32.mrf.mxu0
  %v2842 = vadd.f32 %v396, %v2841
  %v2843 = vpop.f32.mrf.mxu0
  %v2844 = vpop.f32.mrf.mxu0
  %v2845 = vadd.f32 %v396, %v2844
  %v2846 = vpop.f32.mrf.mxu0
  %2847 = vmatprep.mubr.bf16.mxu0 0
  %2848 = vmatmul.mubr.bf16.gmra.mxu0 %v1689
  %v2849 = vpop.f32.mrf.mxu0
  %v2850 = vadd.f32 %v396, %v2849
  %v2851 = vpop.f32.mrf.mxu0
  %v2852 = vpop.f32.mrf.mxu0
  %v2853 = vadd.f32 %v396, %v2852
  %v2854 = vpop.f32.mrf.mxu0
  %2855 = vmatprep.mubr.bf16.mxu0 0
  %2856 = vmatmul.mubr.bf16.gmra.mxu0 %v1692
  %v2857 = vpop.f32.mrf.mxu0
  %v2858 = vadd.f32 %v396, %v2857
  %v2859 = vpop.f32.mrf.mxu0
  %v2860 = vpop.f32.mrf.mxu0
  %v2861 = vadd.f32 %v396, %v2860
  %v2862 = vpop.f32.mrf.mxu0
  %2863 = vmatprep.mubr.bf16.mxu0 0
  %2864 = vmatmul.mubr.bf16.gmra.mxu0 %v1695
  %v2865 = vpop.f32.mrf.mxu0
  %v2866 = vadd.f32 %v396, %v2865
  %v2867 = vpop.f32.mrf.mxu0
  %v2868 = vpop.f32.mrf.mxu0
  %v2869 = vadd.f32 %v396, %v2868
  %v2870 = vpop.f32.mrf.mxu0
  %2871 = vmatprep.mubr.bf16.mxu0 0
  %2872 = vmatmul.mubr.bf16.gmra.mxu0 %v1698
  %v2873 = vpop.f32.mrf.mxu0
  %v2874 = vadd.f32 %v396, %v2873
  %v2875 = vpop.f32.mrf.mxu0
  %v2876 = vpop.f32.mrf.mxu0
  %v2877 = vadd.f32 %v396, %v2876
  %v2878 = vpop.f32.mrf.mxu0
  %2879 = vmatprep.mubr.bf16.mxu0 0
  %2880 = vmatmul.mubr.bf16.gmra.mxu0 %v1701
  %v2881 = vpop.f32.mrf.mxu0
  %v2882 = vadd.f32 %v396, %v2881
  %v2883 = vpop.f32.mrf.mxu0
  %v2884 = vpop.f32.mrf.mxu0
  %v2885 = vadd.f32 %v396, %v2884
  %v2886 = vpop.f32.mrf.mxu0
  %2887 = vmatprep.mubr.bf16.mxu0 0
  %2888 = vmatmul.mubr.bf16.gmra.mxu0 %v1704
  %v2889 = vpop.f32.mrf.mxu0
  %v2890 = vadd.f32 %v396, %v2889
  %v2891 = vpop.f32.mrf.mxu0
  %v2892 = vpop.f32.mrf.mxu0
  %v2893 = vadd.f32 %v396, %v2892
  %v2894 = vpop.f32.mrf.mxu0
  %2895 = vmatprep.mubr.bf16.mxu0 0
  %2896 = vmatmul.mubr.bf16.gmra.mxu0 %v1707
  %v2897 = vpop.f32.mrf.mxu0
  %v2898 = vadd.f32 %v396, %v2897
  %v2899 = vpop.f32.mrf.mxu0
  %v2900 = vpop.f32.mrf.mxu0
  %v2901 = vadd.f32 %v396, %v2900
  %v2902 = vpop.f32.mrf.mxu0
  %2903 = vmatprep.mubr.bf16.mxu0 0
  %2904 = vmatmul.mubr.bf16.gmra.mxu0 %v1710
  %v2905 = vpop.f32.mrf.mxu0
  %v2906 = vadd.f32 %v396, %v2905
  %v2907 = vpop.f32.mrf.mxu0
  %v2908 = vpop.f32.mrf.mxu0
  %v2909 = vadd.f32 %v396, %v2908
  %v2910 = vpop.f32.mrf.mxu0
  %2911 = vmatprep.mubr.bf16.mxu0 0
  %2912 = vmatmul.mubr.bf16.gmra.mxu0 %v1713
  %v2913 = vpop.f32.mrf.mxu0
  %v2914 = vadd.f32 %v396, %v2913
  %v2915 = vpop.f32.mrf.mxu0
  %v2916 = vpop.f32.mrf.mxu0
  %v2917 = vadd.f32 %v396, %v2916
  %v2918 = vpop.f32.mrf.mxu0
  %2919 = vmatprep.mubr.bf16.mxu0 0
  %2920 = vmatmul.mubr.bf16.gmra.mxu0 %v1716
  %v2921 = vpop.f32.mrf.mxu0
  %v2922 = vadd.f32 %v396, %v2921
  %v2923 = vpop.f32.mrf.mxu0
  %v2924 = vpop.f32.mrf.mxu0
  %v2925 = vadd.f32 %v396, %v2924
  %v2926 = vpop.f32.mrf.mxu0
  %2927 = vmatprep.mubr.bf16.mxu0 0
  %2928 = vmatmul.mubr.bf16.gmra.mxu0 %v1719
  %v2929 = vpop.f32.mrf.mxu0
  %v2930 = vadd.f32 %v396, %v2929
  %v2931 = vpop.f32.mrf.mxu0
  %v2932 = vpop.f32.mrf.mxu0
  %v2933 = vadd.f32 %v396, %v2932
  %v2934 = vpop.f32.mrf.mxu0
  %2935 = vmatprep.mubr.bf16.mxu0 0
  %2936 = vmatmul.mubr.bf16.gmra.mxu0 %v1722
  %v2937 = vpop.f32.mrf.mxu0
  %v2938 = vadd.f32 %v396, %v2937
  %v2939 = vpop.f32.mrf.mxu0
  %v2940 = vpop.f32.mrf.mxu0
  %v2941 = vadd.f32 %v396, %v2940
  %v2942 = vpop.f32.mrf.mxu0
  %2943 = vmatprep.mubr.bf16.mxu0 0
  %2944 = vmatmul.mubr.bf16.gmra.mxu0 %v1725
  %v2945 = vpop.f32.mrf.mxu0
  %v2946 = vadd.f32 %v396, %v2945
  %v2947 = vpop.f32.mrf.mxu0
  %v2948 = vpop.f32.mrf.mxu0
  %v2949 = vadd.f32 %v396, %v2948
  %v2950 = vpop.f32.mrf.mxu0
  %2951 = vmatprep.mubr.bf16.mxu0 0
  %2952 = vmatmul.mubr.bf16.gmra.mxu0 %v1728
  %v2953 = vpop.f32.mrf.mxu0
  %v2954 = vadd.f32 %v396, %v2953
  %v2955 = vpop.f32.mrf.mxu0
  %v2956 = vpop.f32.mrf.mxu0
  %v2957 = vadd.f32 %v396, %v2956
  %v2958 = vpop.f32.mrf.mxu0
  %2959 = vmatprep.mubr.bf16.mxu0 0
  %2960 = vmatmul.mubr.bf16.gmra.mxu0 %v1731
  %v2961 = vpop.f32.mrf.mxu0
  %v2962 = vadd.f32 %v396, %v2961
  %v2963 = vpop.f32.mrf.mxu0
  %v2964 = vpop.f32.mrf.mxu0
  %v2965 = vadd.f32 %v396, %v2964
  %v2966 = vpop.f32.mrf.mxu0
  %2967 = vmatprep.mubr.bf16.mxu0 0
  %2968 = vmatmul.mubr.bf16.gmra.mxu0 %v1734
  %v2969 = vpop.f32.mrf.mxu0
  %v2970 = vadd.f32 %v396, %v2969
  %v2971 = vpop.f32.mrf.mxu0
  %v2972 = vpop.f32.mrf.mxu0
  %v2973 = vadd.f32 %v396, %v2972
  %v2974 = vpop.f32.mrf.mxu0
  %2975 = vmatprep.mubr.bf16.mxu0 0
  %2976 = vmatmul.mubr.bf16.gmra.mxu0 %v1737
  %v2977 = vpop.f32.mrf.mxu0
  %v2978 = vadd.f32 %v396, %v2977
  %v2979 = vpop.f32.mrf.mxu0
  %v2980 = vpop.f32.mrf.mxu0
  %v2981 = vadd.f32 %v396, %v2980
  %v2982 = vpop.f32.mrf.mxu0
  %2983 = vmatprep.mubr.bf16.mxu0 0
  %2984 = vmatmul.mubr.bf16.gmra.mxu0 %v1740
  %v2985 = vpop.f32.mrf.mxu0
  %v2986 = vadd.f32 %v396, %v2985
  %v2987 = vpop.f32.mrf.mxu0
  %v2988 = vpop.f32.mrf.mxu0
  %v2989 = vadd.f32 %v396, %v2988
  %v2990 = vpop.f32.mrf.mxu0
  %2991 = vmatprep.mubr.bf16.mxu0 0
  %2992 = vmatmul.mubr.bf16.gmra.mxu0 %v1743
  %v2993 = vpop.f32.mrf.mxu0
  %v2994 = vadd.f32 %v396, %v2993
  %v2995 = vpop.f32.mrf.mxu0
  %v2996 = vpop.f32.mrf.mxu0
  %v2997 = vadd.f32 %v396, %v2996
  %v2998 = vpop.f32.mrf.mxu0
  %2999 = vmatprep.mubr.bf16.mxu0 0
  %3000 = vmatmul.mubr.bf16.gmra.mxu0 %v1746
  %v3001 = vpop.f32.mrf.mxu0
  %v3002 = vadd.f32 %v396, %v3001
  %v3003 = vpop.f32.mrf.mxu0
  %v3004 = vpop.f32.mrf.mxu0
  %v3005 = vadd.f32 %v396, %v3004
  %v3006 = vpop.f32.mrf.mxu0
  %3007 = vmatprep.mubr.bf16.mxu0 0
  %3008 = vmatmul.mubr.bf16.gmra.mxu0 %v1749
  %v3009 = vpop.f32.mrf.mxu0
  %v3010 = vadd.f32 %v396, %v3009
  %v3011 = vpop.f32.mrf.mxu0
  %v3012 = vpop.f32.mrf.mxu0
  %v3013 = vadd.f32 %v396, %v3012
  %v3014 = vpop.f32.mrf.mxu0
  %3015 = vmatprep.mubr.bf16.mxu0 0
  %3016 = vmatmul.mubr.bf16.gmra.mxu0 %v1752
  %v3017 = vpop.f32.mrf.mxu0
  %v3018 = vadd.f32 %v396, %v3017
  %v3019 = vpop.f32.mrf.mxu0
  %v3020 = vpop.f32.mrf.mxu0
  %v3021 = vadd.f32 %v396, %v3020
  %v3022 = vpop.f32.mrf.mxu0
  %3023 = vmatprep.mubr.bf16.mxu0 0
  %3024 = vmatmul.mubr.bf16.gmra.mxu0 %v1755
  %v3025 = vpop.f32.mrf.mxu0
  %v3026 = vadd.f32 %v396, %v3025
  %v3027 = vpop.f32.mrf.mxu0
  %v3028 = vpop.f32.mrf.mxu0
  %v3029 = vadd.f32 %v396, %v3028
  %v3030 = vpop.f32.mrf.mxu0
  %3031 = vmatprep.mubr.bf16.mxu0 0
  %3032 = vmatmul.mubr.bf16.gmra.mxu0 %v1758
  %v3033 = vpop.f32.mrf.mxu0
  %v3034 = vadd.f32 %v396, %v3033
  %v3035 = vpop.f32.mrf.mxu0
  %v3036 = vpop.f32.mrf.mxu0
  %v3037 = vadd.f32 %v396, %v3036
  %v3038 = vpop.f32.mrf.mxu0
  %3039 = vmatprep.mubr.bf16.mxu0 0
  %3040 = vmatmul.mubr.bf16.gmra.mxu0 %v1761
  %v3041 = vpop.f32.mrf.mxu0
  %v3042 = vadd.f32 %v396, %v3041
  %v3043 = vpop.f32.mrf.mxu0
  %v3044 = vpop.f32.mrf.mxu0
  %v3045 = vadd.f32 %v396, %v3044
  %v3046 = vpop.f32.mrf.mxu0
  %3047 = vmatprep.mubr.bf16.mxu0 0
  %3048 = vmatmul.mubr.bf16.gmra.mxu0 %v1764
  %v3049 = vpop.f32.mrf.mxu0
  %v3050 = vadd.f32 %v396, %v3049
  %v3051 = vpop.f32.mrf.mxu0
  %v3052 = vpop.f32.mrf.mxu0
  %v3053 = vadd.f32 %v396, %v3052
  %v3054 = vpop.f32.mrf.mxu0
  %3055 = vmatprep.mubr.bf16.mxu0 0
  %3056 = vmatmul.mubr.bf16.gmra.mxu0 %v1767
  %v3057 = vpop.f32.mrf.mxu0
  %v3058 = vadd.f32 %v396, %v3057
  %v3059 = vpop.f32.mrf.mxu0
  %v3060 = vpop.f32.mrf.mxu0
  %v3061 = vadd.f32 %v396, %v3060
  %v3062 = vpop.f32.mrf.mxu0
  %3063 = vmatprep.mubr.bf16.mxu0 0
  %3064 = vmatmul.mubr.bf16.gmra.mxu0 %v1770
  %v3065 = vpop.f32.mrf.mxu0
  %v3066 = vadd.f32 %v396, %v3065
  %v3067 = vpop.f32.mrf.mxu0
  %v3068 = vpop.f32.mrf.mxu0
  %v3069 = vadd.f32 %v396, %v3068
  %v3070 = vpop.f32.mrf.mxu0
  %3071 = vmatprep.mubr.bf16.mxu0 0
  %3072 = vmatmul.mubr.bf16.gmra.mxu0 %v1773
  %v3073 = vpop.f32.mrf.mxu0
  %v3074 = vadd.f32 %v396, %v3073
  %v3075 = vpop.f32.mrf.mxu0
  %v3076 = vpop.f32.mrf.mxu0
  %v3077 = vadd.f32 %v396, %v3076
  %v3078 = vpop.f32.mrf.mxu0
  %3079 = vmatprep.mubr.bf16.mxu0 0
  %3080 = vmatmul.mubr.bf16.gmra.mxu0 %v1776
  %v3081 = vpop.f32.mrf.mxu0
  %v3082 = vadd.f32 %v396, %v3081
  %v3083 = vpop.f32.mrf.mxu0
  %v3084 = vpop.f32.mrf.mxu0
  %v3085 = vadd.f32 %v396, %v3084
  %v3086 = vpop.f32.mrf.mxu0
  %3087 = vmatprep.mubr.bf16.mxu0 0
  %3088 = vmatmul.mubr.bf16.gmra.mxu0 %v1779
  %v3089 = vpop.f32.mrf.mxu0
  %v3090 = vadd.f32 %v396, %v3089
  %v3091 = vpop.f32.mrf.mxu0
  %v3092 = vpop.f32.mrf.mxu0
  %v3093 = vadd.f32 %v396, %v3092
  %v3094 = vpop.f32.mrf.mxu0
  %3095 = vmatprep.mubr.bf16.mxu0 0
  %3096 = vmatmul.mubr.bf16.gmra.mxu0 %v1782
  %v3097 = vpop.f32.mrf.mxu0
  %v3098 = vadd.f32 %v396, %v3097
  %v3099 = vpop.f32.mrf.mxu0
  %v3100 = vpop.f32.mrf.mxu0
  %v3101 = vadd.f32 %v396, %v3100
  %v3102 = vpop.f32.mrf.mxu0
  %3103 = vmatprep.mubr.bf16.mxu0 0
  %3104 = vmatmul.mubr.bf16.gmra.mxu0 %v1785
  %v3105 = vpop.f32.mrf.mxu0
  %v3106 = vadd.f32 %v396, %v3105
  %v3107 = vpop.f32.mrf.mxu0
  %v3108 = vpop.f32.mrf.mxu0
  %v3109 = vadd.f32 %v396, %v3108
  %v3110 = vpop.f32.mrf.mxu0
  %3111 = vmatprep.mubr.bf16.mxu0 0
  %3112 = vmatmul.mubr.bf16.gmra.mxu0 %v1788
  %v3113 = vpop.f32.mrf.mxu0
  %v3114 = vadd.f32 %v396, %v3113
  %v3115 = vpop.f32.mrf.mxu0
  %v3116 = vpop.f32.mrf.mxu0
  %v3117 = vadd.f32 %v396, %v3116
  %v3118 = vpop.f32.mrf.mxu0
  %3119 = vmatprep.mubr.bf16.mxu0 0
  %3120 = vmatmul.mubr.bf16.gmra.mxu0 %v1791
  %v3121 = vpop.f32.mrf.mxu0
  %v3122 = vadd.f32 %v396, %v3121
  %v3123 = vpop.f32.mrf.mxu0
  %v3124 = vpop.f32.mrf.mxu0
  %v3125 = vadd.f32 %v396, %v3124
  %v3126 = vpop.f32.mrf.mxu0
  %3127 = vmatprep.mubr.bf16.mxu0 0
  %3128 = vmatmul.mubr.bf16.gmra.mxu0 %v1794
  %v3129 = vpop.f32.mrf.mxu0
  %v3130 = vadd.f32 %v396, %v3129
  %v3131 = vpop.f32.mrf.mxu0
  %v3132 = vpop.f32.mrf.mxu0
  %v3133 = vadd.f32 %v396, %v3132
  %v3134 = vpop.f32.mrf.mxu0
  %3135 = vmatprep.mubr.bf16.mxu0 0
  %3136 = vmatmul.mubr.bf16.gmra.mxu0 %v1797
  %v3137 = vpop.f32.mrf.mxu0
  %v3138 = vadd.f32 %v396, %v3137
  %v3139 = vpop.f32.mrf.mxu0
  %v3140 = vpop.f32.mrf.mxu0
  %v3141 = vadd.f32 %v396, %v3140
  %v3142 = vpop.f32.mrf.mxu0
  %3143 = vmatprep.mubr.bf16.mxu0 0
  %3144 = vmatmul.mubr.bf16.gmra.mxu0 %v1800
  %v3145 = vpop.f32.mrf.mxu0
  %v3146 = vadd.f32 %v396, %v3145
  %v3147 = vpop.f32.mrf.mxu0
  %v3148 = vpop.f32.mrf.mxu0
  %v3149 = vadd.f32 %v396, %v3148
  %v3150 = vpop.f32.mrf.mxu0
  %3151 = vmatprep.mubr.bf16.mxu0 0
  %3152 = vmatmul.mubr.bf16.gmra.mxu0 %v1803
  %v3153 = vpop.f32.mrf.mxu0
  %v3154 = vadd.f32 %v396, %v3153
  %v3155 = vpop.f32.mrf.mxu0
  %v3156 = vpop.f32.mrf.mxu0
  %v3157 = vadd.f32 %v396, %v3156
  %v3158 = vpop.f32.mrf.mxu0
  %3159 = vmatprep.mubr.bf16.mxu0 0
  %3160 = vmatmul.mubr.bf16.gmra.mxu0 %v1806
  %v3161 = vpop.f32.mrf.mxu0
  %v3162 = vadd.f32 %v396, %v3161
  %v3163 = vpop.f32.mrf.mxu0
  %v3164 = vpop.f32.mrf.mxu0
  %v3165 = vadd.f32 %v396, %v3164
  %v3166 = vpop.f32.mrf.mxu0
  %3167 = vmatprep.mubr.bf16.mxu0 0
  %3168 = vmatmul.mubr.bf16.gmra.mxu0 %v1809
  %v3169 = vpop.f32.mrf.mxu0
  %v3170 = vadd.f32 %v396, %v3169
  %v3171 = vpop.f32.mrf.mxu0
  %v3172 = vpop.f32.mrf.mxu0
  %v3173 = vadd.f32 %v396, %v3172
  %v3174 = vpop.f32.mrf.mxu0
  %3175 = vmatprep.mubr.bf16.mxu0 0
  %3176 = vmatmul.mubr.bf16.gmra.mxu0 %v1812
  %v3177 = vpop.f32.mrf.mxu0
  %v3178 = vadd.f32 %v396, %v3177
  %v3179 = vpop.f32.mrf.mxu0
  %v3180 = vpop.f32.mrf.mxu0
  %v3181 = vadd.f32 %v396, %v3180
  %v3182 = vpop.f32.mrf.mxu0
  %3183 = vmatprep.mubr.bf16.mxu0 0
  %3184 = vmatmul.mubr.bf16.gmra.mxu0 %v1815
  %v3185 = vpop.f32.mrf.mxu0
  %v3186 = vadd.f32 %v396, %v3185
  %v3187 = vpop.f32.mrf.mxu0
  %v3188 = vpop.f32.mrf.mxu0
  %v3189 = vadd.f32 %v396, %v3188
  %v3190 = vpop.f32.mrf.mxu0
  %3191 = vmatprep.mubr.bf16.mxu0 0
  %3192 = vmatmul.mubr.bf16.gmra.mxu0 %v1818
  %v3193 = vpop.f32.mrf.mxu0
  %v3194 = vadd.f32 %v396, %v3193
  %v3195 = vpop.f32.mrf.mxu0
  %v3196 = vpop.f32.mrf.mxu0
  %v3197 = vadd.f32 %v396, %v3196
  %v3198 = vpop.f32.mrf.mxu0
  %3199 = vmatprep.mubr.bf16.mxu0 0
  %3200 = vmatmul.mubr.bf16.gmra.mxu0 %v1821
  %v3201 = vpop.f32.mrf.mxu0
  %v3202 = vadd.f32 %v396, %v3201
  %v3203 = vpop.f32.mrf.mxu0
  %v3204 = vpop.f32.mrf.mxu0
  %v3205 = vadd.f32 %v396, %v3204
  %v3206 = vpop.f32.mrf.mxu0
  %3207 = vmatprep.mubr.bf16.mxu0 0
  %3208 = vmatmul.mubr.bf16.gmra.mxu0 %v1824
  %v3209 = vpop.f32.mrf.mxu0
  %v3210 = vadd.f32 %v396, %v3209
  %v3211 = vpop.f32.mrf.mxu0
  %v3212 = vpop.f32.mrf.mxu0
  %v3213 = vadd.f32 %v396, %v3212
  %v3214 = vpop.f32.mrf.mxu0
  %3215 = vmatprep.mubr.bf16.mxu0 0
  %3216 = vmatmul.mubr.bf16.gmra.mxu0 %v1827
  %v3217 = vpop.f32.mrf.mxu0
  %v3218 = vadd.f32 %v396, %v3217
  %v3219 = vpop.f32.mrf.mxu0
  %v3220 = vpop.f32.mrf.mxu0
  %v3221 = vadd.f32 %v396, %v3220
  %v3222 = vpop.f32.mrf.mxu0
  %3223 = vmatprep.mubr.bf16.mxu0 0
  %3224 = vmatmul.mubr.bf16.gmra.mxu0 %v1830
  %v3225 = vpop.f32.mrf.mxu0
  %v3226 = vadd.f32 %v396, %v3225
  %v3227 = vpop.f32.mrf.mxu0
  %v3228 = vpop.f32.mrf.mxu0
  %v3229 = vadd.f32 %v396, %v3228
  %v3230 = vpop.f32.mrf.mxu0
  %3231 = vmatprep.mubr.bf16.mxu0 0
  %3232 = vmatmul.mubr.bf16.gmra.mxu0 %v1833
  %v3233 = vpop.f32.mrf.mxu0
  %v3234 = vadd.f32 %v396, %v3233
  %v3235 = vpop.f32.mrf.mxu0
  %v3236 = vpop.f32.mrf.mxu0
  %v3237 = vadd.f32 %v396, %v3236
  %v3238 = vpop.f32.mrf.mxu0
  %3239 = vmatprep.mubr.bf16.mxu0 0
  %3240 = vmatmul.mubr.bf16.gmra.mxu0 %v1836
  %v3241 = vpop.f32.mrf.mxu0
  %v3242 = vadd.f32 %v396, %v3241
  %v3243 = vpop.f32.mrf.mxu0
  %v3244 = vpop.f32.mrf.mxu0
  %v3245 = vadd.f32 %v396, %v3244
  %v3246 = vpop.f32.mrf.mxu0
  %3247 = vmatprep.mubr.bf16.mxu0 0
  %3248 = vmatmul.mubr.bf16.gmra.mxu0 %v1839
  %v3249 = vpop.f32.mrf.mxu0
  %v3250 = vadd.f32 %v396, %v3249
  %v3251 = vpop.f32.mrf.mxu0
  %v3252 = vpop.f32.mrf.mxu0
  %v3253 = vadd.f32 %v396, %v3252
  %v3254 = vpop.f32.mrf.mxu0
  %3255 = vmatprep.mubr.bf16.mxu0 0
  %3256 = vmatmul.mubr.bf16.gmra.mxu0 %v1842
  %v3257 = vpop.f32.mrf.mxu0
  %v3258 = vadd.f32 %v396, %v3257
  %v3259 = vpop.f32.mrf.mxu0
  %v3260 = vpop.f32.mrf.mxu0
  %v3261 = vadd.f32 %v396, %v3260
  %v3262 = vpop.f32.mrf.mxu0
  %3263 = vmatprep.mubr.bf16.mxu0 0
  %3264 = vmatmul.mubr.bf16.gmra.mxu0 %v1845
  %v3265 = vpop.f32.mrf.mxu0
  %v3266 = vadd.f32 %v396, %v3265
  %v3267 = vpop.f32.mrf.mxu0
  %v3268 = vpop.f32.mrf.mxu0
  %v3269 = vadd.f32 %v396, %v3268
  %v3270 = vpop.f32.mrf.mxu0
  %3271 = vmatprep.mubr.bf16.mxu0 0
  %3272 = vmatmul.mubr.bf16.gmra.mxu0 %v1848
  %v3273 = vpop.f32.mrf.mxu0
  %v3274 = vadd.f32 %v396, %v3273
  %v3275 = vpop.f32.mrf.mxu0
  %v3276 = vpop.f32.mrf.mxu0
  %v3277 = vadd.f32 %v396, %v3276
  %v3278 = vpop.f32.mrf.mxu0
  %3279 = vmatprep.mubr.bf16.mxu0 0
  %3280 = vmatmul.mubr.bf16.gmra.mxu0 %v1851
  %v3281 = vpop.f32.mrf.mxu0
  %v3282 = vadd.f32 %v396, %v3281
  %v3283 = vpop.f32.mrf.mxu0
  %v3284 = vpop.f32.mrf.mxu0
  %v3285 = vadd.f32 %v396, %v3284
  %v3286 = vpop.f32.mrf.mxu0
  %3287 = vmatprep.mubr.bf16.mxu0 0
  %3288 = vmatmul.mubr.bf16.gmra.mxu0 %v1854
  %v3289 = vpop.f32.mrf.mxu0
  %v3290 = vadd.f32 %v396, %v3289
  %v3291 = vpop.f32.mrf.mxu0
  %v3292 = vpop.f32.mrf.mxu0
  %v3293 = vadd.f32 %v396, %v3292
  %v3294 = vpop.f32.mrf.mxu0
  %3295 = vmatprep.mubr.bf16.mxu0 0
  %3296 = vmatmul.mubr.bf16.gmra.mxu0 %v1857
  %v3297 = vpop.f32.mrf.mxu0
  %v3298 = vadd.f32 %v396, %v3297
  %v3299 = vpop.f32.mrf.mxu0
  %v3300 = vpop.f32.mrf.mxu0
  %v3301 = vadd.f32 %v396, %v3300
  %v3302 = vpop.f32.mrf.mxu0
  %3303 = vmatprep.mubr.bf16.mxu0 0
  %3304 = vmatmul.mubr.bf16.gmra.mxu0 %v1860
  %v3305 = vpop.f32.mrf.mxu0
  %v3306 = vadd.f32 %v396, %v3305
  %v3307 = vpop.f32.mrf.mxu0
  %v3308 = vpop.f32.mrf.mxu0
  %v3309 = vadd.f32 %v396, %v3308
  %v3310 = vpop.f32.mrf.mxu0
  %3311 = vmatprep.mubr.bf16.mxu0 0
  %3312 = vmatmul.mubr.bf16.gmra.mxu0 %v1863
  %v3313 = vpop.f32.mrf.mxu0
  %v3314 = vadd.f32 %v396, %v3313
  %v3315 = vpop.f32.mrf.mxu0
  %v3316 = vpop.f32.mrf.mxu0
  %v3317 = vadd.f32 %v396, %v3316
  %v3318 = vpop.f32.mrf.mxu0
  %3319 = vmatprep.mubr.bf16.mxu0 0
  %3320 = vmatmul.mubr.bf16.gmra.mxu0 %v1866
  %v3321 = vpop.f32.mrf.mxu0
  %v3322 = vadd.f32 %v396, %v3321
  %v3323 = vpop.f32.mrf.mxu0
  %v3324 = vpop.f32.mrf.mxu0
  %v3325 = vadd.f32 %v396, %v3324
  %v3326 = vpop.f32.mrf.mxu0
  %3327 = vmatprep.mubr.bf16.mxu0 0
  %3328 = vmatmul.mubr.bf16.gmra.mxu0 %v1869
  %v3329 = vpop.f32.mrf.mxu0
  %v3330 = vadd.f32 %v396, %v3329
  %v3331 = vpop.f32.mrf.mxu0
  %v3332 = vpop.f32.mrf.mxu0
  %v3333 = vadd.f32 %v396, %v3332
  %v3334 = vpop.f32.mrf.mxu0
  %3335 = vmatprep.mubr.bf16.mxu0 0
  %3336 = vmatmul.mubr.bf16.gmra.mxu0 %v1872
  %v3337 = vpop.f32.mrf.mxu0
  %v3338 = vadd.f32 %v396, %v3337
  %v3339 = vpop.f32.mrf.mxu0
  %v3340 = vpop.f32.mrf.mxu0
  %v3341 = vadd.f32 %v396, %v3340
  %v3342 = vpop.f32.mrf.mxu0
  %3343 = vmatprep.mubr.bf16.mxu0 0
  %3344 = vmatmul.mubr.bf16.gmra.mxu0 %v1875
  %v3345 = vpop.f32.mrf.mxu0
  %v3346 = vadd.f32 %v396, %v3345
  %v3347 = vpop.f32.mrf.mxu0
  %v3348 = vpop.f32.mrf.mxu0
  %v3349 = vadd.f32 %v396, %v3348
  %v3350 = vpop.f32.mrf.mxu0
  %3351 = vmatprep.mubr.bf16.mxu0 0
  %3352 = vmatmul.mubr.bf16.gmra.mxu0 %v1878
  %v3353 = vpop.f32.mrf.mxu0
  %v3354 = vadd.f32 %v396, %v3353
  %v3355 = vpop.f32.mrf.mxu0
  %v3356 = vpop.f32.mrf.mxu0
  %v3357 = vadd.f32 %v396, %v3356
  %v3358 = vpop.f32.mrf.mxu0
  %3359 = vmatprep.mubr.bf16.mxu0 0
  %3360 = vmatmul.mubr.bf16.gmra.mxu0 %v1881
  %v3361 = vpop.f32.mrf.mxu0
  %v3362 = vadd.f32 %v396, %v3361
  %v3363 = vpop.f32.mrf.mxu0
  %v3364 = vpop.f32.mrf.mxu0
  %v3365 = vadd.f32 %v396, %v3364
  %v3366 = vpop.f32.mrf.mxu0
  %3367 = vmatprep.mubr.bf16.mxu0 0
  %3368 = vmatmul.mubr.bf16.gmra.mxu0 %v1884
  %v3369 = vpop.f32.mrf.mxu0
  %v3370 = vadd.f32 %v396, %v3369
  %v3371 = vpop.f32.mrf.mxu0
  %v3372 = vpop.f32.mrf.mxu0
  %v3373 = vadd.f32 %v396, %v3372
  %v3374 = vpop.f32.mrf.mxu0
  %3375 = vmatprep.mubr.bf16.mxu0 0
  %3376 = vmatmul.mubr.bf16.gmra.mxu0 %v1887
  %v3377 = vpop.f32.mrf.mxu0
  %v3378 = vadd.f32 %v396, %v3377
  %v3379 = vpop.f32.mrf.mxu0
  %v3380 = vpop.f32.mrf.mxu0
  %v3381 = vadd.f32 %v396, %v3380
  %v3382 = vpop.f32.mrf.mxu0
  %3383 = vmatprep.mubr.bf16.mxu0 0
  %3384 = vmatmul.mubr.bf16.gmra.mxu0 %v1890
  %v3385 = vpop.f32.mrf.mxu0
  %v3386 = vadd.f32 %v396, %v3385
  %v3387 = vpop.f32.mrf.mxu0
  %v3388 = vpop.f32.mrf.mxu0
  %v3389 = vadd.f32 %v396, %v3388
  %v3390 = vpop.f32.mrf.mxu0
  %3391 = vmatprep.mubr.bf16.mxu0 0
  %3392 = vmatmul.mubr.bf16.gmra.mxu0 %v1893
  %v3393 = vpop.f32.mrf.mxu0
  %v3394 = vadd.f32 %v396, %v3393
  %v3395 = vpop.f32.mrf.mxu0
  %v3396 = vpop.f32.mrf.mxu0
  %v3397 = vadd.f32 %v396, %v3396
  %v3398 = vpop.f32.mrf.mxu0
  %3399 = vdwg.mxu0
  %v3400 = vmax.f32 %v1930, 0.0
  %v3401 = vmax.f32 %v1933, 0.0
  %v3402 = vmax.f32 %v1938, 0.0
  %v3403 = vmax.f32 %v1941, 0.0
  %v3404 = vmax.f32 %v1946, 0.0
  %v3405 = vmax.f32 %v1949, 0.0
  %v3406 = vmax.f32 %v1954, 0.0
  %v3407 = vmax.f32 %v1957, 0.0
  %v3408 = vmax.f32 %v1962, 0.0
  %v3409 = vmax.f32 %v1965, 0.0
  %v3410 = vmax.f32 %v1970, 0.0
  %v3411 = vmax.f32 %v1973, 0.0
  %v3412 = vmax.f32 %v1978, 0.0
  %v3413 = vmax.f32 %v1981, 0.0
  %v3414 = vmax.f32 %v1986, 0.0
  %v3415 = vmax.f32 %v1989, 0.0
  %v3416 = vmax.f32 %v1994, 0.0
  %v3417 = vmax.f32 %v1997, 0.0
  %v3418 = vmax.f32 %v2002, 0.0
  %v3419 = vmax.f32 %v2005, 0.0
  %v3420 = vmax.f32 %v2010, 0.0
  %v3421 = vmax.f32 %v2013, 0.0
  %v3422 = vmax.f32 %v2018, 0.0
  %v3423 = vmax.f32 %v2021, 0.0
  %v3424 = vmax.f32 %v2026, 0.0
  %v3425 = vmax.f32 %v2029, 0.0
  %v3426 = vmax.f32 %v2034, 0.0
  %v3427 = vmax.f32 %v2037, 0.0
  %v3428 = vmax.f32 %v2042, 0.0
  %v3429 = vmax.f32 %v2045, 0.0
  %v3430 = vmax.f32 %v2050, 0.0
  %v3431 = vmax.f32 %v2053, 0.0
  %v3432 = vmax.f32 %v2058, 0.0
  %v3433 = vmax.f32 %v2061, 0.0
  %v3434 = vmax.f32 %v2066, 0.0
  %v3435 = vmax.f32 %v2069, 0.0
  %v3436 = vmax.f32 %v2074, 0.0
  %v3437 = vmax.f32 %v2077, 0.0
  %v3438 = vmax.f32 %v2082, 0.0
  %v3439 = vmax.f32 %v2085, 0.0
  %v3440 = vmax.f32 %v2090, 0.0
  %v3441 = vmax.f32 %v2093, 0.0
  %v3442 = vmax.f32 %v2098, 0.0
  %v3443 = vmax.f32 %v2101, 0.0
  %v3444 = vmax.f32 %v2106, 0.0
  %v3445 = vmax.f32 %v2109, 0.0
  %v3446 = vmax.f32 %v2114, 0.0
  %v3447 = vmax.f32 %v2117, 0.0
  %v3448 = vmax.f32 %v2122, 0.0
  %v3449 = vmax.f32 %v2125, 0.0
  %v3450 = vmax.f32 %v2130, 0.0
  %v3451 = vmax.f32 %v2133, 0.0
  %v3452 = vmax.f32 %v2138, 0.0
  %v3453 = vmax.f32 %v2141, 0.0
  %v3454 = vmax.f32 %v2146, 0.0
  %v3455 = vmax.f32 %v2149, 0.0
  %v3456 = vmax.f32 %v2154, 0.0
  %v3457 = vmax.f32 %v2157, 0.0
  %v3458 = vmax.f32 %v2162, 0.0
  %v3459 = vmax.f32 %v2165, 0.0
  %v3460 = vmax.f32 %v2170, 0.0
  %v3461 = vmax.f32 %v2173, 0.0
  %v3462 = vmax.f32 %v2178, 0.0
  %v3463 = vmax.f32 %v2181, 0.0
  %v3464 = vmax.f32 %v2186, 0.0
  %v3465 = vmax.f32 %v2189, 0.0
  %v3466 = vmax.f32 %v2194, 0.0
  %v3467 = vmax.f32 %v2197, 0.0
  %v3468 = vmax.f32 %v2202, 0.0
  %v3469 = vmax.f32 %v2205, 0.0
  %v3470 = vmax.f32 %v2210, 0.0
  %v3471 = vmax.f32 %v2213, 0.0
  %v3472 = vmax.f32 %v2218, 0.0
  %v3473 = vmax.f32 %v2221, 0.0
  %v3474 = vmax.f32 %v2226, 0.0
  %v3475 = vmax.f32 %v2229, 0.0
  %v3476 = vmax.f32 %v2234, 0.0
  %v3477 = vmax.f32 %v2237, 0.0
  %v3478 = vmax.f32 %v2242, 0.0
  %v3479 = vmax.f32 %v2245, 0.0
  %v3480 = vmax.f32 %v2250, 0.0
  %v3481 = vmax.f32 %v2253, 0.0
  %v3482 = vmax.f32 %v2258, 0.0
  %v3483 = vmax.f32 %v2261, 0.0
  %v3484 = vmax.f32 %v2266, 0.0
  %v3485 = vmax.f32 %v2269, 0.0
  %v3486 = vmax.f32 %v2274, 0.0
  %v3487 = vmax.f32 %v2277, 0.0
  %v3488 = vmax.f32 %v2282, 0.0
  %v3489 = vmax.f32 %v2285, 0.0
  %v3490 = vmax.f32 %v2290, 0.0
  %v3491 = vmax.f32 %v2293, 0.0
  %v3492 = vmax.f32 %v2298, 0.0
  %v3493 = vmax.f32 %v2301, 0.0
  %v3494 = vmax.f32 %v2306, 0.0
  %v3495 = vmax.f32 %v2309, 0.0
  %v3496 = vmax.f32 %v2314, 0.0
  %v3497 = vmax.f32 %v2317, 0.0
  %v3498 = vmax.f32 %v2322, 0.0
  %v3499 = vmax.f32 %v2325, 0.0
  %v3500 = vmax.f32 %v2330, 0.0
  %v3501 = vmax.f32 %v2333, 0.0
  %v3502 = vmax.f32 %v2338, 0.0
  %v3503 = vmax.f32 %v2341, 0.0
  %v3504 = vmax.f32 %v2346, 0.0
  %v3505 = vmax.f32 %v2349, 0.0
  %v3506 = vmax.f32 %v2354, 0.0
  %v3507 = vmax.f32 %v2357, 0.0
  %v3508 = vmax.f32 %v2362, 0.0
  %v3509 = vmax.f32 %v2365, 0.0
  %v3510 = vmax.f32 %v2370, 0.0
  %v3511 = vmax.f32 %v2373, 0.0
  %v3512 = vmax.f32 %v2378, 0.0
  %v3513 = vmax.f32 %v2381, 0.0
  %v3514 = vmax.f32 %v2386, 0.0
  %v3515 = vmax.f32 %v2389, 0.0
  %v3516 = vmax.f32 %v2394, 0.0
  %v3517 = vmax.f32 %v2397, 0.0
  %v3518 = vmax.f32 %v2402, 0.0
  %v3519 = vmax.f32 %v2405, 0.0
  %v3520 = vmax.f32 %v2410, 0.0
  %v3521 = vmax.f32 %v2413, 0.0
  %v3522 = vmax.f32 %v2418, 0.0
  %v3523 = vmax.f32 %v2421, 0.0
  %v3524 = vmax.f32 %v2426, 0.0
  %v3525 = vmax.f32 %v2429, 0.0
  %v3526 = vmax.f32 %v2434, 0.0
  %v3527 = vmax.f32 %v2437, 0.0
  %v3528 = vmax.f32 %v2442, 0.0
  %v3529 = vmax.f32 %v2445, 0.0
  %v3530 = vmax.f32 %v2450, 0.0
  %v3531 = vmax.f32 %v2453, 0.0
  %v3532 = vmax.f32 %v2458, 0.0
  %v3533 = vmax.f32 %v2461, 0.0
  %v3534 = vmax.f32 %v2466, 0.0
  %v3535 = vmax.f32 %v2469, 0.0
  %v3536 = vmax.f32 %v2474, 0.0
  %v3537 = vmax.f32 %v2477, 0.0
  %v3538 = vmax.f32 %v2482, 0.0
  %v3539 = vmax.f32 %v2485, 0.0
  %v3540 = vmax.f32 %v2490, 0.0
  %v3541 = vmax.f32 %v2493, 0.0
  %v3542 = vmax.f32 %v2498, 0.0
  %v3543 = vmax.f32 %v2501, 0.0
  %v3544 = vmax.f32 %v2506, 0.0
  %v3545 = vmax.f32 %v2509, 0.0
  %v3546 = vmax.f32 %v2514, 0.0
  %v3547 = vmax.f32 %v2517, 0.0
  %v3548 = vmax.f32 %v2522, 0.0
  %v3549 = vmax.f32 %v2525, 0.0
  %v3550 = vmax.f32 %v2530, 0.0
  %v3551 = vmax.f32 %v2533, 0.0
  %v3552 = vmax.f32 %v2538, 0.0
  %v3553 = vmax.f32 %v2541, 0.0
  %v3554 = vmax.f32 %v2546, 0.0
  %v3555 = vmax.f32 %v2549, 0.0
  %v3556 = vmax.f32 %v2554, 0.0
  %v3557 = vmax.f32 %v2557, 0.0
  %v3558 = vmax.f32 %v2562, 0.0
  %v3559 = vmax.f32 %v2565, 0.0
  %v3560 = vmax.f32 %v2570, 0.0
  %v3561 = vmax.f32 %v2573, 0.0
  %v3562 = vmax.f32 %v2578, 0.0
  %v3563 = vmax.f32 %v2581, 0.0
  %v3564 = vmax.f32 %v2586, 0.0
  %v3565 = vmax.f32 %v2589, 0.0
  %v3566 = vmax.f32 %v2594, 0.0
  %v3567 = vmax.f32 %v2597, 0.0
  %v3568 = vmax.f32 %v2602, 0.0
  %v3569 = vmax.f32 %v2605, 0.0
  %v3570 = vmax.f32 %v2610, 0.0
  %v3571 = vmax.f32 %v2613, 0.0
  %v3572 = vmax.f32 %v2618, 0.0
  %v3573 = vmax.f32 %v2621, 0.0
  %v3574 = vmax.f32 %v2626, 0.0
  %v3575 = vmax.f32 %v2629, 0.0
  %v3576 = vmax.f32 %v2634, 0.0
  %v3577 = vmax.f32 %v2637, 0.0
  %v3578 = vmax.f32 %v2642, 0.0
  %v3579 = vmax.f32 %v2645, 0.0
  %v3580 = vmax.f32 %v2650, 0.0
  %v3581 = vmax.f32 %v2653, 0.0
  %v3582 = vmax.f32 %v2658, 0.0
  %v3583 = vmax.f32 %v2661, 0.0
  %v3584 = vmax.f32 %v2666, 0.0
  %v3585 = vmax.f32 %v2669, 0.0
  %v3586 = vmax.f32 %v2674, 0.0
  %v3587 = vmax.f32 %v2677, 0.0
  %v3588 = vmax.f32 %v2682, 0.0
  %v3589 = vmax.f32 %v2685, 0.0
  %v3590 = vmax.f32 %v2690, 0.0
  %v3591 = vmax.f32 %v2693, 0.0
  %v3592 = vmax.f32 %v2698, 0.0
  %v3593 = vmax.f32 %v2701, 0.0
  %v3594 = vmax.f32 %v2706, 0.0
  %v3595 = vmax.f32 %v2709, 0.0
  %v3596 = vmax.f32 %v2714, 0.0
  %v3597 = vmax.f32 %v2717, 0.0
  %v3598 = vmax.f32 %v2722, 0.0
  %v3599 = vmax.f32 %v2725, 0.0
  %v3600 = vmax.f32 %v2730, 0.0
  %v3601 = vmax.f32 %v2733, 0.0
  %v3602 = vmax.f32 %v2738, 0.0
  %v3603 = vmax.f32 %v2741, 0.0
  %v3604 = vmax.f32 %v2746, 0.0
  %v3605 = vmax.f32 %v2749, 0.0
  %v3606 = vmax.f32 %v2754, 0.0
  %v3607 = vmax.f32 %v2757, 0.0
  %v3608 = vmax.f32 %v2762, 0.0
  %v3609 = vmax.f32 %v2765, 0.0
  %v3610 = vmax.f32 %v2770, 0.0
  %v3611 = vmax.f32 %v2773, 0.0
  %v3612 = vmax.f32 %v2778, 0.0
  %v3613 = vmax.f32 %v2781, 0.0
  %v3614 = vmax.f32 %v2786, 0.0
  %v3615 = vmax.f32 %v2789, 0.0
  %v3616 = vmax.f32 %v2794, 0.0
  %v3617 = vmax.f32 %v2797, 0.0
  %v3618 = vmax.f32 %v2802, 0.0
  %v3619 = vmax.f32 %v2805, 0.0
  %v3620 = vmax.f32 %v2810, 0.0
  %v3621 = vmax.f32 %v2813, 0.0
  %v3622 = vmax.f32 %v2818, 0.0
  %v3623 = vmax.f32 %v2821, 0.0
  %v3624 = vmax.f32 %v2826, 0.0
  %v3625 = vmax.f32 %v2829, 0.0
  %v3626 = vmax.f32 %v2834, 0.0
  %v3627 = vmax.f32 %v2837, 0.0
  %v3628 = vmax.f32 %v2842, 0.0
  %v3629 = vmax.f32 %v2845, 0.0
  %v3630 = vmax.f32 %v2850, 0.0
  %v3631 = vmax.f32 %v2853, 0.0
  %v3632 = vmax.f32 %v2858, 0.0
  %v3633 = vmax.f32 %v2861, 0.0
  %v3634 = vmax.f32 %v2866, 0.0
  %v3635 = vmax.f32 %v2869, 0.0
  %v3636 = vmax.f32 %v2874, 0.0
  %v3637 = vmax.f32 %v2877, 0.0
  %v3638 = vmax.f32 %v2882, 0.0
  %v3639 = vmax.f32 %v2885, 0.0
  %v3640 = vmax.f32 %v2890, 0.0
  %v3641 = vmax.f32 %v2893, 0.0
  %v3642 = vmax.f32 %v2898, 0.0
  %v3643 = vmax.f32 %v2901, 0.0
  %v3644 = vmax.f32 %v2906, 0.0
  %v3645 = vmax.f32 %v2909, 0.0
  %v3646 = vmax.f32 %v2914, 0.0
  %v3647 = vmax.f32 %v2917, 0.0
  %v3648 = vmax.f32 %v2922, 0.0
  %v3649 = vmax.f32 %v2925, 0.0
  %v3650 = vmax.f32 %v2930, 0.0
  %v3651 = vmax.f32 %v2933, 0.0
  %v3652 = vmax.f32 %v2938, 0.0
  %v3653 = vmax.f32 %v2941, 0.0
  %v3654 = vmax.f32 %v2946, 0.0
  %v3655 = vmax.f32 %v2949, 0.0
  %v3656 = vmax.f32 %v2954, 0.0
  %v3657 = vmax.f32 %v2957, 0.0
  %v3658 = vmax.f32 %v2962, 0.0
  %v3659 = vmax.f32 %v2965, 0.0
  %v3660 = vmax.f32 %v2970, 0.0
  %v3661 = vmax.f32 %v2973, 0.0
  %v3662 = vmax.f32 %v2978, 0.0
  %v3663 = vmax.f32 %v2981, 0.0
  %v3664 = vmax.f32 %v2986, 0.0
  %v3665 = vmax.f32 %v2989, 0.0
  %v3666 = vmax.f32 %v2994, 0.0
  %v3667 = vmax.f32 %v2997, 0.0
  %v3668 = vmax.f32 %v3002, 0.0
  %v3669 = vmax.f32 %v3005, 0.0
  %v3670 = vmax.f32 %v3010, 0.0
  %v3671 = vmax.f32 %v3013, 0.0
  %v3672 = vmax.f32 %v3018, 0.0
  %v3673 = vmax.f32 %v3021, 0.0
  %v3674 = vmax.f32 %v3026, 0.0
  %v3675 = vmax.f32 %v3029, 0.0
  %v3676 = vmax.f32 %v3034, 0.0
  %v3677 = vmax.f32 %v3037, 0.0
  %v3678 = vmax.f32 %v3042, 0.0
  %v3679 = vmax.f32 %v3045, 0.0
  %v3680 = vmax.f32 %v3050, 0.0
  %v3681 = vmax.f32 %v3053, 0.0
  %v3682 = vmax.f32 %v3058, 0.0
  %v3683 = vmax.f32 %v3061, 0.0
  %v3684 = vmax.f32 %v3066, 0.0
  %v3685 = vmax.f32 %v3069, 0.0
  %v3686 = vmax.f32 %v3074, 0.0
  %v3687 = vmax.f32 %v3077, 0.0
  %v3688 = vmax.f32 %v3082, 0.0
  %v3689 = vmax.f32 %v3085, 0.0
  %v3690 = vmax.f32 %v3090, 0.0
  %v3691 = vmax.f32 %v3093, 0.0
  %v3692 = vmax.f32 %v3098, 0.0
  %v3693 = vmax.f32 %v3101, 0.0
  %v3694 = vmax.f32 %v3106, 0.0
  %v3695 = vmax.f32 %v3109, 0.0
  %v3696 = vmax.f32 %v3114, 0.0
  %v3697 = vmax.f32 %v3117, 0.0
  %v3698 = vmax.f32 %v3122, 0.0
  %v3699 = vmax.f32 %v3125, 0.0
  %v3700 = vmax.f32 %v3130, 0.0
  %v3701 = vmax.f32 %v3133, 0.0
  %v3702 = vmax.f32 %v3138, 0.0
  %v3703 = vmax.f32 %v3141, 0.0
  %v3704 = vmax.f32 %v3146, 0.0
  %v3705 = vmax.f32 %v3149, 0.0
  %v3706 = vmax.f32 %v3154, 0.0
  %v3707 = vmax.f32 %v3157, 0.0
  %v3708 = vmax.f32 %v3162, 0.0
  %v3709 = vmax.f32 %v3165, 0.0
  %v3710 = vmax.f32 %v3170, 0.0
  %v3711 = vmax.f32 %v3173, 0.0
  %v3712 = vmax.f32 %v3178, 0.0
  %v3713 = vmax.f32 %v3181, 0.0
  %v3714 = vmax.f32 %v3186, 0.0
  %v3715 = vmax.f32 %v3189, 0.0
  %v3716 = vmax.f32 %v3194, 0.0
  %v3717 = vmax.f32 %v3197, 0.0
  %v3718 = vmax.f32 %v3202, 0.0
  %v3719 = vmax.f32 %v3205, 0.0
  %v3720 = vmax.f32 %v3210, 0.0
  %v3721 = vmax.f32 %v3213, 0.0
  %v3722 = vmax.f32 %v3218, 0.0
  %v3723 = vmax.f32 %v3221, 0.0
  %v3724 = vmax.f32 %v3226, 0.0
  %v3725 = vmax.f32 %v3229, 0.0
  %v3726 = vmax.f32 %v3234, 0.0
  %v3727 = vmax.f32 %v3237, 0.0
  %v3728 = vmax.f32 %v3242, 0.0
  %v3729 = vmax.f32 %v3245, 0.0
  %v3730 = vmax.f32 %v3250, 0.0
  %v3731 = vmax.f32 %v3253, 0.0
  %v3732 = vmax.f32 %v3258, 0.0
  %v3733 = vmax.f32 %v3261, 0.0
  %v3734 = vmax.f32 %v3266, 0.0
  %v3735 = vmax.f32 %v3269, 0.0
  %v3736 = vmax.f32 %v3274, 0.0
  %v3737 = vmax.f32 %v3277, 0.0
  %v3738 = vmax.f32 %v3282, 0.0
  %v3739 = vmax.f32 %v3285, 0.0
  %v3740 = vmax.f32 %v3290, 0.0
  %v3741 = vmax.f32 %v3293, 0.0
  %v3742 = vmax.f32 %v3298, 0.0
  %v3743 = vmax.f32 %v3301, 0.0
  %v3744 = vmax.f32 %v3306, 0.0
  %v3745 = vmax.f32 %v3309, 0.0
  %v3746 = vmax.f32 %v3314, 0.0
  %v3747 = vmax.f32 %v3317, 0.0
  %v3748 = vmax.f32 %v3322, 0.0
  %v3749 = vmax.f32 %v3325, 0.0
  %v3750 = vmax.f32 %v3330, 0.0
  %v3751 = vmax.f32 %v3333, 0.0
  %v3752 = vmax.f32 %v3338, 0.0
  %v3753 = vmax.f32 %v3341, 0.0
  %v3754 = vmax.f32 %v3346, 0.0
  %v3755 = vmax.f32 %v3349, 0.0
  %v3756 = vmax.f32 %v3354, 0.0
  %v3757 = vmax.f32 %v3357, 0.0
  %v3758 = vmax.f32 %v3362, 0.0
  %v3759 = vmax.f32 %v3365, 0.0
  %v3760 = vmax.f32 %v3370, 0.0
  %v3761 = vmax.f32 %v3373, 0.0
  %v3762 = vmax.f32 %v3378, 0.0
  %v3763 = vmax.f32 %v3381, 0.0
  %v3764 = vmax.f32 %v3386, 0.0
  %v3765 = vmax.f32 %v3389, 0.0
  %v3766 = vmax.f32 %v3394, 0.0
  %v3767 = vmax.f32 %v3397, 0.0
  %v3768 = vpack.c.bf16 %v3401, %v3400
  %v3769 = vpack.c.bf16 %v3403, %v3402
  %v3770 = vpack.c.bf16 %v3405, %v3404
  %v3771 = vpack.c.bf16 %v3407, %v3406
  %v3772 = vpack.c.bf16 %v3409, %v3408
  %v3773 = vpack.c.bf16 %v3411, %v3410
  %v3774 = vpack.c.bf16 %v3413, %v3412
  %v3775 = vpack.c.bf16 %v3415, %v3414
  %v3776 = vpack.c.bf16 %v3417, %v3416
  %v3777 = vpack.c.bf16 %v3419, %v3418
  %v3778 = vpack.c.bf16 %v3421, %v3420
  %v3779 = vpack.c.bf16 %v3423, %v3422
  %v3780 = vpack.c.bf16 %v3425, %v3424
  %v3781 = vpack.c.bf16 %v3427, %v3426
  %v3782 = vpack.c.bf16 %v3429, %v3428
  %v3783 = vpack.c.bf16 %v3431, %v3430
  %v3784 = vpack.c.bf16 %v3433, %v3432
  %v3785 = vpack.c.bf16 %v3435, %v3434
  %v3786 = vpack.c.bf16 %v3437, %v3436
  %v3787 = vpack.c.bf16 %v3439, %v3438
  %v3788 = vpack.c.bf16 %v3441, %v3440
  %v3789 = vpack.c.bf16 %v3443, %v3442
  %v3790 = vpack.c.bf16 %v3445, %v3444
  %v3791 = vpack.c.bf16 %v3447, %v3446
  %v3792 = vpack.c.bf16 %v3449, %v3448
  %v3793 = vpack.c.bf16 %v3451, %v3450
  %v3794 = vpack.c.bf16 %v3453, %v3452
  %v3795 = vpack.c.bf16 %v3455, %v3454
  %v3796 = vpack.c.bf16 %v3457, %v3456
  %v3797 = vpack.c.bf16 %v3459, %v3458
  %v3798 = vpack.c.bf16 %v3461, %v3460
  %v3799 = vpack.c.bf16 %v3463, %v3462
  %v3800 = vpack.c.bf16 %v3465, %v3464
  %v3801 = vpack.c.bf16 %v3467, %v3466
  %v3802 = vpack.c.bf16 %v3469, %v3468
  %v3803 = vpack.c.bf16 %v3471, %v3470
  %v3804 = vpack.c.bf16 %v3473, %v3472
  %v3805 = vpack.c.bf16 %v3475, %v3474
  %v3806 = vpack.c.bf16 %v3477, %v3476
  %v3807 = vpack.c.bf16 %v3479, %v3478
  %v3808 = vpack.c.bf16 %v3481, %v3480
  %v3809 = vpack.c.bf16 %v3483, %v3482
  %v3810 = vpack.c.bf16 %v3485, %v3484
  %v3811 = vpack.c.bf16 %v3487, %v3486
  %v3812 = vpack.c.bf16 %v3489, %v3488
  %v3813 = vpack.c.bf16 %v3491, %v3490
  %v3814 = vpack.c.bf16 %v3493, %v3492
  %v3815 = vpack.c.bf16 %v3495, %v3494
  %v3816 = vpack.c.bf16 %v3497, %v3496
  %v3817 = vpack.c.bf16 %v3499, %v3498
  %v3818 = vpack.c.bf16 %v3501, %v3500
  %v3819 = vpack.c.bf16 %v3503, %v3502
  %v3820 = vpack.c.bf16 %v3505, %v3504
  %v3821 = vpack.c.bf16 %v3507, %v3506
  %v3822 = vpack.c.bf16 %v3509, %v3508
  %v3823 = vpack.c.bf16 %v3511, %v3510
  %v3824 = vpack.c.bf16 %v3513, %v3512
  %v3825 = vpack.c.bf16 %v3515, %v3514
  %v3826 = vpack.c.bf16 %v3517, %v3516
  %v3827 = vpack.c.bf16 %v3519, %v3518
  %v3828 = vpack.c.bf16 %v3521, %v3520
  %v3829 = vpack.c.bf16 %v3523, %v3522
  %v3830 = vpack.c.bf16 %v3525, %v3524
  %v3831 = vpack.c.bf16 %v3527, %v3526
  %v3832 = vpack.c.bf16 %v3529, %v3528
  %v3833 = vpack.c.bf16 %v3531, %v3530
  %v3834 = vpack.c.bf16 %v3533, %v3532
  %v3835 = vpack.c.bf16 %v3535, %v3534
  %v3836 = vpack.c.bf16 %v3537, %v3536
  %v3837 = vpack.c.bf16 %v3539, %v3538
  %v3838 = vpack.c.bf16 %v3541, %v3540
  %v3839 = vpack.c.bf16 %v3543, %v3542
  %v3840 = vpack.c.bf16 %v3545, %v3544
  %v3841 = vpack.c.bf16 %v3547, %v3546
  %v3842 = vpack.c.bf16 %v3549, %v3548
  %v3843 = vpack.c.bf16 %v3551, %v3550
  %v3844 = vpack.c.bf16 %v3553, %v3552
  %v3845 = vpack.c.bf16 %v3555, %v3554
  %v3846 = vpack.c.bf16 %v3557, %v3556
  %v3847 = vpack.c.bf16 %v3559, %v3558
  %v3848 = vpack.c.bf16 %v3561, %v3560
  %v3849 = vpack.c.bf16 %v3563, %v3562
  %v3850 = vpack.c.bf16 %v3565, %v3564
  %v3851 = vpack.c.bf16 %v3567, %v3566
  %v3852 = vpack.c.bf16 %v3569, %v3568
  %v3853 = vpack.c.bf16 %v3571, %v3570
  %v3854 = vpack.c.bf16 %v3573, %v3572
  %v3855 = vpack.c.bf16 %v3575, %v3574
  %v3856 = vpack.c.bf16 %v3577, %v3576
  %v3857 = vpack.c.bf16 %v3579, %v3578
  %v3858 = vpack.c.bf16 %v3581, %v3580
  %v3859 = vpack.c.bf16 %v3583, %v3582
  %v3860 = vpack.c.bf16 %v3585, %v3584
  %v3861 = vpack.c.bf16 %v3587, %v3586
  %v3862 = vpack.c.bf16 %v3589, %v3588
  %v3863 = vpack.c.bf16 %v3591, %v3590
  %v3864 = vpack.c.bf16 %v3593, %v3592
  %v3865 = vpack.c.bf16 %v3595, %v3594
  %v3866 = vpack.c.bf16 %v3597, %v3596
  %v3867 = vpack.c.bf16 %v3599, %v3598
  %v3868 = vpack.c.bf16 %v3601, %v3600
  %v3869 = vpack.c.bf16 %v3603, %v3602
  %v3870 = vpack.c.bf16 %v3605, %v3604
  %v3871 = vpack.c.bf16 %v3607, %v3606
  %v3872 = vpack.c.bf16 %v3609, %v3608
  %v3873 = vpack.c.bf16 %v3611, %v3610
  %v3874 = vpack.c.bf16 %v3613, %v3612
  %v3875 = vpack.c.bf16 %v3615, %v3614
  %v3876 = vpack.c.bf16 %v3617, %v3616
  %v3877 = vpack.c.bf16 %v3619, %v3618
  %v3878 = vpack.c.bf16 %v3621, %v3620
  %v3879 = vpack.c.bf16 %v3623, %v3622
  %v3880 = vpack.c.bf16 %v3625, %v3624
  %v3881 = vpack.c.bf16 %v3627, %v3626
  %v3882 = vpack.c.bf16 %v3629, %v3628
  %v3883 = vpack.c.bf16 %v3631, %v3630
  %v3884 = vpack.c.bf16 %v3633, %v3632
  %v3885 = vpack.c.bf16 %v3635, %v3634
  %v3886 = vpack.c.bf16 %v3637, %v3636
  %v3887 = vpack.c.bf16 %v3639, %v3638
  %v3888 = vpack.c.bf16 %v3641, %v3640
  %v3889 = vpack.c.bf16 %v3643, %v3642
  %v3890 = vpack.c.bf16 %v3645, %v3644
  %v3891 = vpack.c.bf16 %v3647, %v3646
  %v3892 = vpack.c.bf16 %v3649, %v3648
  %v3893 = vpack.c.bf16 %v3651, %v3650
  %v3894 = vpack.c.bf16 %v3653, %v3652
  %v3895 = vpack.c.bf16 %v3655, %v3654
  %v3896 = vpack.c.bf16 %v3657, %v3656
  %v3897 = vpack.c.bf16 %v3659, %v3658
  %v3898 = vpack.c.bf16 %v3661, %v3660
  %v3899 = vpack.c.bf16 %v3663, %v3662
  %v3900 = vpack.c.bf16 %v3665, %v3664
  %v3901 = vpack.c.bf16 %v3667, %v3666
  %v3902 = vpack.c.bf16 %v3669, %v3668
  %v3903 = vpack.c.bf16 %v3671, %v3670
  %v3904 = vpack.c.bf16 %v3673, %v3672
  %v3905 = vpack.c.bf16 %v3675, %v3674
  %v3906 = vpack.c.bf16 %v3677, %v3676
  %v3907 = vpack.c.bf16 %v3679, %v3678
  %v3908 = vpack.c.bf16 %v3681, %v3680
  %v3909 = vpack.c.bf16 %v3683, %v3682
  %v3910 = vpack.c.bf16 %v3685, %v3684
  %v3911 = vpack.c.bf16 %v3687, %v3686
  %v3912 = vpack.c.bf16 %v3689, %v3688
  %v3913 = vpack.c.bf16 %v3691, %v3690
  %v3914 = vpack.c.bf16 %v3693, %v3692
  %v3915 = vpack.c.bf16 %v3695, %v3694
  %v3916 = vpack.c.bf16 %v3697, %v3696
  %v3917 = vpack.c.bf16 %v3699, %v3698
  %v3918 = vpack.c.bf16 %v3701, %v3700
  %v3919 = vpack.c.bf16 %v3703, %v3702
  %v3920 = vpack.c.bf16 %v3705, %v3704
  %v3921 = vpack.c.bf16 %v3707, %v3706
  %v3922 = vpack.c.bf16 %v3709, %v3708
  %v3923 = vpack.c.bf16 %v3711, %v3710
  %v3924 = vpack.c.bf16 %v3713, %v3712
  %v3925 = vpack.c.bf16 %v3715, %v3714
  %v3926 = vpack.c.bf16 %v3717, %v3716
  %v3927 = vpack.c.bf16 %v3719, %v3718
  %v3928 = vpack.c.bf16 %v3721, %v3720
  %v3929 = vpack.c.bf16 %v3723, %v3722
  %v3930 = vpack.c.bf16 %v3725, %v3724
  %v3931 = vpack.c.bf16 %v3727, %v3726
  %v3932 = vpack.c.bf16 %v3729, %v3728
  %v3933 = vpack.c.bf16 %v3731, %v3730
  %v3934 = vpack.c.bf16 %v3733, %v3732
  %v3935 = vpack.c.bf16 %v3735, %v3734
  %v3936 = vpack.c.bf16 %v3737, %v3736
  %v3937 = vpack.c.bf16 %v3739, %v3738
  %v3938 = vpack.c.bf16 %v3741, %v3740
  %v3939 = vpack.c.bf16 %v3743, %v3742
  %v3940 = vpack.c.bf16 %v3745, %v3744
  %v3941 = vpack.c.bf16 %v3747, %v3746
  %v3942 = vpack.c.bf16 %v3749, %v3748
  %v3943 = vpack.c.bf16 %v3751, %v3750
  %v3944 = vpack.c.bf16 %v3753, %v3752
  %v3945 = vpack.c.bf16 %v3755, %v3754
  %v3946 = vpack.c.bf16 %v3757, %v3756
  %v3947 = vpack.c.bf16 %v3759, %v3758
  %v3948 = vpack.c.bf16 %v3761, %v3760
  %v3949 = vpack.c.bf16 %v3763, %v3762
  %v3950 = vpack.c.bf16 %v3765, %v3764
  %v3951 = vpack.c.bf16 %v3767, %v3766
  %v4136 = vunpack.c.l.b16 %v3768
  %v4137 = vunpack.c.h.b16 %v3768
  %v4138 = vunpack.c.l.b16 %v3769
  %v4139 = vunpack.c.h.b16 %v3769
  %v4140 = vunpack.c.l.b16 %v3770
  %v4141 = vunpack.c.h.b16 %v3770
  %v4142 = vunpack.c.l.b16 %v3771
  %v4143 = vunpack.c.h.b16 %v3771
  %v4144 = vunpack.c.l.b16 %v3772
  %v4145 = vunpack.c.h.b16 %v3772
  %v4146 = vunpack.c.l.b16 %v3773
  %v4147 = vunpack.c.h.b16 %v3773
  %v4148 = vunpack.c.l.b16 %v3774
  %v4149 = vunpack.c.h.b16 %v3774
  %v4150 = vunpack.c.l.b16 %v3775
  %v4151 = vunpack.c.h.b16 %v3775
  %v4152 = vunpack.c.l.b16 %v3776
  %v4153 = vunpack.c.h.b16 %v3776
  %v4154 = vunpack.c.l.b16 %v3777
  %v4155 = vunpack.c.h.b16 %v3777
  %v4156 = vunpack.c.l.b16 %v3778
  %v4157 = vunpack.c.h.b16 %v3778
  %v4158 = vunpack.c.l.b16 %v3779
  %v4159 = vunpack.c.h.b16 %v3779
  %v4160 = vunpack.c.l.b16 %v3780
  %v4161 = vunpack.c.h.b16 %v3780
  %v4162 = vunpack.c.l.b16 %v3781
  %v4163 = vunpack.c.h.b16 %v3781
  %v4164 = vunpack.c.l.b16 %v3782
  %v4165 = vunpack.c.h.b16 %v3782
  %v4166 = vunpack.c.l.b16 %v3783
  %v4167 = vunpack.c.h.b16 %v3783
  %v4168 = vunpack.c.l.b16 %v3784
  %v4169 = vunpack.c.h.b16 %v3784
  %v4170 = vunpack.c.l.b16 %v3785
  %v4171 = vunpack.c.h.b16 %v3785
  %v4172 = vunpack.c.l.b16 %v3786
  %v4173 = vunpack.c.h.b16 %v3786
  %v4174 = vunpack.c.l.b16 %v3787
  %v4175 = vunpack.c.h.b16 %v3787
  %v4176 = vunpack.c.l.b16 %v3788
  %v4177 = vunpack.c.h.b16 %v3788
  %v4178 = vunpack.c.l.b16 %v3789
  %v4179 = vunpack.c.h.b16 %v3789
  %v4180 = vunpack.c.l.b16 %v3790
  %v4181 = vunpack.c.h.b16 %v3790
  %v4182 = vunpack.c.l.b16 %v3791
  %v4183 = vunpack.c.h.b16 %v3791
  %v4184 = vunpack.c.l.b16 %v3792
  %v4185 = vunpack.c.h.b16 %v3792
  %v4186 = vunpack.c.l.b16 %v3793
  %v4187 = vunpack.c.h.b16 %v3793
  %v4188 = vunpack.c.l.b16 %v3794
  %v4189 = vunpack.c.h.b16 %v3794
  %v4190 = vunpack.c.l.b16 %v3795
  %v4191 = vunpack.c.h.b16 %v3795
  %v4192 = vunpack.c.l.b16 %v3796
  %v4193 = vunpack.c.h.b16 %v3796
  %v4194 = vunpack.c.l.b16 %v3797
  %v4195 = vunpack.c.h.b16 %v3797
  %v4196 = vunpack.c.l.b16 %v3798
  %v4197 = vunpack.c.h.b16 %v3798
  %v4198 = vunpack.c.l.b16 %v3799
  %v4199 = vunpack.c.h.b16 %v3799
  %v4200 = vunpack.c.l.b16 %v3800
  %v4201 = vunpack.c.h.b16 %v3800
  %v4202 = vunpack.c.l.b16 %v3801
  %v4203 = vunpack.c.h.b16 %v3801
  %v4204 = vunpack.c.l.b16 %v3802
  %v4205 = vunpack.c.h.b16 %v3802
  %v4206 = vunpack.c.l.b16 %v3803
  %v4207 = vunpack.c.h.b16 %v3803
  %v4208 = vunpack.c.l.b16 %v3804
  %v4209 = vunpack.c.h.b16 %v3804
  %v4210 = vunpack.c.l.b16 %v3805
  %v4211 = vunpack.c.h.b16 %v3805
  %v4212 = vunpack.c.l.b16 %v3806
  %v4213 = vunpack.c.h.b16 %v3806
  %v4214 = vunpack.c.l.b16 %v3807
  %v4215 = vunpack.c.h.b16 %v3807
  %v4216 = vunpack.c.l.b16 %v3808
  %v4217 = vunpack.c.h.b16 %v3808
  %v4218 = vunpack.c.l.b16 %v3809
  %v4219 = vunpack.c.h.b16 %v3809
  %v4220 = vunpack.c.l.b16 %v3810
  %v4221 = vunpack.c.h.b16 %v3810
  %v4222 = vunpack.c.l.b16 %v3811
  %v4223 = vunpack.c.h.b16 %v3811
  %v4224 = vunpack.c.l.b16 %v3812
  %v4225 = vunpack.c.h.b16 %v3812
  %v4226 = vunpack.c.l.b16 %v3813
  %v4227 = vunpack.c.h.b16 %v3813
  %v4228 = vunpack.c.l.b16 %v3814
  %v4229 = vunpack.c.h.b16 %v3814
  %v4230 = vunpack.c.l.b16 %v3815
  %v4231 = vunpack.c.h.b16 %v3815
  %v4232 = vunpack.c.l.b16 %v3816
  %v4233 = vunpack.c.h.b16 %v3816
  %v4234 = vunpack.c.l.b16 %v3817
  %v4235 = vunpack.c.h.b16 %v3817
  %v4236 = vunpack.c.l.b16 %v3818
  %v4237 = vunpack.c.h.b16 %v3818
  %v4238 = vunpack.c.l.b16 %v3819
  %v4239 = vunpack.c.h.b16 %v3819
  %v4240 = vunpack.c.l.b16 %v3820
  %v4241 = vunpack.c.h.b16 %v3820
  %v4242 = vunpack.c.l.b16 %v3821
  %v4243 = vunpack.c.h.b16 %v3821
  %v4244 = vunpack.c.l.b16 %v3822
  %v4245 = vunpack.c.h.b16 %v3822
  %v4246 = vunpack.c.l.b16 %v3823
  %v4247 = vunpack.c.h.b16 %v3823
  %v4248 = vunpack.c.l.b16 %v3824
  %v4249 = vunpack.c.h.b16 %v3824
  %v4250 = vunpack.c.l.b16 %v3825
  %v4251 = vunpack.c.h.b16 %v3825
  %v4252 = vunpack.c.l.b16 %v3826
  %v4253 = vunpack.c.h.b16 %v3826
  %v4254 = vunpack.c.l.b16 %v3827
  %v4255 = vunpack.c.h.b16 %v3827
  %v4256 = vunpack.c.l.b16 %v3828
  %v4257 = vunpack.c.h.b16 %v3828
  %v4258 = vunpack.c.l.b16 %v3829
  %v4259 = vunpack.c.h.b16 %v3829
  %v4260 = vunpack.c.l.b16 %v3830
  %v4261 = vunpack.c.h.b16 %v3830
  %v4262 = vunpack.c.l.b16 %v3831
  %v4263 = vunpack.c.h.b16 %v3831
  %v4264 = vunpack.c.l.b16 %v3832
  %v4265 = vunpack.c.h.b16 %v3832
  %v4266 = vunpack.c.l.b16 %v3833
  %v4267 = vunpack.c.h.b16 %v3833
  %v4268 = vunpack.c.l.b16 %v3834
  %v4269 = vunpack.c.h.b16 %v3834
  %v4270 = vunpack.c.l.b16 %v3835
  %v4271 = vunpack.c.h.b16 %v3835
  %v4272 = vunpack.c.l.b16 %v3836
  %v4273 = vunpack.c.h.b16 %v3836
  %v4274 = vunpack.c.l.b16 %v3837
  %v4275 = vunpack.c.h.b16 %v3837
  %v4276 = vunpack.c.l.b16 %v3838
  %v4277 = vunpack.c.h.b16 %v3838
  %v4278 = vunpack.c.l.b16 %v3839
  %v4279 = vunpack.c.h.b16 %v3839
  %v4280 = vunpack.c.l.b16 %v3840
  %v4281 = vunpack.c.h.b16 %v3840
  %v4282 = vunpack.c.l.b16 %v3841
  %v4283 = vunpack.c.h.b16 %v3841
  %v4284 = vunpack.c.l.b16 %v3842
  %v4285 = vunpack.c.h.b16 %v3842
  %v4286 = vunpack.c.l.b16 %v3843
  %v4287 = vunpack.c.h.b16 %v3843
  %v4288 = vunpack.c.l.b16 %v3844
  %v4289 = vunpack.c.h.b16 %v3844
  %v4290 = vunpack.c.l.b16 %v3845
  %v4291 = vunpack.c.h.b16 %v3845
  %v4292 = vunpack.c.l.b16 %v3846
  %v4293 = vunpack.c.h.b16 %v3846
  %v4294 = vunpack.c.l.b16 %v3847
  %v4295 = vunpack.c.h.b16 %v3847
  %v4296 = vunpack.c.l.b16 %v3848
  %v4297 = vunpack.c.h.b16 %v3848
  %v4298 = vunpack.c.l.b16 %v3849
  %v4299 = vunpack.c.h.b16 %v3849
  %v4300 = vunpack.c.l.b16 %v3850
  %v4301 = vunpack.c.h.b16 %v3850
  %v4302 = vunpack.c.l.b16 %v3851
  %v4303 = vunpack.c.h.b16 %v3851
  %v4304 = vunpack.c.l.b16 %v3852
  %v4305 = vunpack.c.h.b16 %v3852
  %v4306 = vunpack.c.l.b16 %v3853
  %v4307 = vunpack.c.h.b16 %v3853
  %v4308 = vunpack.c.l.b16 %v3854
  %v4309 = vunpack.c.h.b16 %v3854
  %v4310 = vunpack.c.l.b16 %v3855
  %v4311 = vunpack.c.h.b16 %v3855
  %v4312 = vunpack.c.l.b16 %v3856
  %v4313 = vunpack.c.h.b16 %v3856
  %v4314 = vunpack.c.l.b16 %v3857
  %v4315 = vunpack.c.h.b16 %v3857
  %v4316 = vunpack.c.l.b16 %v3858
  %v4317 = vunpack.c.h.b16 %v3858
  %v4318 = vunpack.c.l.b16 %v3859
  %v4319 = vunpack.c.h.b16 %v3859
  %v4320 = vunpack.c.l.b16 %v3860
  %v4321 = vunpack.c.h.b16 %v3860
  %v4322 = vunpack.c.l.b16 %v3861
  %v4323 = vunpack.c.h.b16 %v3861
  %v4324 = vunpack.c.l.b16 %v3862
  %v4325 = vunpack.c.h.b16 %v3862
  %v4326 = vunpack.c.l.b16 %v3863
  %v4327 = vunpack.c.h.b16 %v3863
  %v4328 = vunpack.c.l.b16 %v3864
  %v4329 = vunpack.c.h.b16 %v3864
  %v4330 = vunpack.c.l.b16 %v3865
  %v4331 = vunpack.c.h.b16 %v3865
  %v4332 = vunpack.c.l.b16 %v3866
  %v4333 = vunpack.c.h.b16 %v3866
  %v4334 = vunpack.c.l.b16 %v3867
  %v4335 = vunpack.c.h.b16 %v3867
  %v4336 = vunpack.c.l.b16 %v3868
  %v4337 = vunpack.c.h.b16 %v3868
  %v4338 = vunpack.c.l.b16 %v3869
  %v4339 = vunpack.c.h.b16 %v3869
  %v4340 = vunpack.c.l.b16 %v3870
  %v4341 = vunpack.c.h.b16 %v3870
  %v4342 = vunpack.c.l.b16 %v3871
  %v4343 = vunpack.c.h.b16 %v3871
  %v4344 = vunpack.c.l.b16 %v3872
  %v4345 = vunpack.c.h.b16 %v3872
  %v4346 = vunpack.c.l.b16 %v3873
  %v4347 = vunpack.c.h.b16 %v3873
  %v4348 = vunpack.c.l.b16 %v3874
  %v4349 = vunpack.c.h.b16 %v3874
  %v4350 = vunpack.c.l.b16 %v3875
  %v4351 = vunpack.c.h.b16 %v3875
  %v4352 = vunpack.c.l.b16 %v3876
  %v4353 = vunpack.c.h.b16 %v3876
  %v4354 = vunpack.c.l.b16 %v3877
  %v4355 = vunpack.c.h.b16 %v3877
  %v4356 = vunpack.c.l.b16 %v3878
  %v4357 = vunpack.c.h.b16 %v3878
  %v4358 = vunpack.c.l.b16 %v3879
  %v4359 = vunpack.c.h.b16 %v3879
  %v4360 = vunpack.c.l.b16 %v3880
  %v4361 = vunpack.c.h.b16 %v3880
  %v4362 = vunpack.c.l.b16 %v3881
  %v4363 = vunpack.c.h.b16 %v3881
  %v4364 = vunpack.c.l.b16 %v3882
  %v4365 = vunpack.c.h.b16 %v3882
  %v4366 = vunpack.c.l.b16 %v3883
  %v4367 = vunpack.c.h.b16 %v3883
  %v4368 = vunpack.c.l.b16 %v3884
  %v4369 = vunpack.c.h.b16 %v3884
  %v4370 = vunpack.c.l.b16 %v3885
  %v4371 = vunpack.c.h.b16 %v3885
  %v4372 = vunpack.c.l.b16 %v3886
  %v4373 = vunpack.c.h.b16 %v3886
  %v4374 = vunpack.c.l.b16 %v3887
  %v4375 = vunpack.c.h.b16 %v3887
  %v4376 = vunpack.c.l.b16 %v3888
  %v4377 = vunpack.c.h.b16 %v3888
  %v4378 = vunpack.c.l.b16 %v3889
  %v4379 = vunpack.c.h.b16 %v3889
  %v4380 = vunpack.c.l.b16 %v3890
  %v4381 = vunpack.c.h.b16 %v3890
  %v4382 = vunpack.c.l.b16 %v3891
  %v4383 = vunpack.c.h.b16 %v3891
  %v4384 = vunpack.c.l.b16 %v3892
  %v4385 = vunpack.c.h.b16 %v3892
  %v4386 = vunpack.c.l.b16 %v3893
  %v4387 = vunpack.c.h.b16 %v3893
  %v4388 = vunpack.c.l.b16 %v3894
  %v4389 = vunpack.c.h.b16 %v3894
  %v4390 = vunpack.c.l.b16 %v3895
  %v4391 = vunpack.c.h.b16 %v3895
  %v4392 = vunpack.c.l.b16 %v3896
  %v4393 = vunpack.c.h.b16 %v3896
  %v4394 = vunpack.c.l.b16 %v3897
  %v4395 = vunpack.c.h.b16 %v3897
  %v4396 = vunpack.c.l.b16 %v3898
  %v4397 = vunpack.c.h.b16 %v3898
  %v4398 = vunpack.c.l.b16 %v3899
  %v4399 = vunpack.c.h.b16 %v3899
  %v4400 = vunpack.c.l.b16 %v3900
  %v4401 = vunpack.c.h.b16 %v3900
  %v4402 = vunpack.c.l.b16 %v3901
  %v4403 = vunpack.c.h.b16 %v3901
  %v4404 = vunpack.c.l.b16 %v3902
  %v4405 = vunpack.c.h.b16 %v3902
  %v4406 = vunpack.c.l.b16 %v3903
  %v4407 = vunpack.c.h.b16 %v3903
  %v4408 = vunpack.c.l.b16 %v3904
  %v4409 = vunpack.c.h.b16 %v3904
  %v4410 = vunpack.c.l.b16 %v3905
  %v4411 = vunpack.c.h.b16 %v3905
  %v4412 = vunpack.c.l.b16 %v3906
  %v4413 = vunpack.c.h.b16 %v3906
  %v4414 = vunpack.c.l.b16 %v3907
  %v4415 = vunpack.c.h.b16 %v3907
  %v4416 = vunpack.c.l.b16 %v3908
  %v4417 = vunpack.c.h.b16 %v3908
  %v4418 = vunpack.c.l.b16 %v3909
  %v4419 = vunpack.c.h.b16 %v3909
  %v4420 = vunpack.c.l.b16 %v3910
  %v4421 = vunpack.c.h.b16 %v3910
  %v4422 = vunpack.c.l.b16 %v3911
  %v4423 = vunpack.c.h.b16 %v3911
  %v4424 = vunpack.c.l.b16 %v3912
  %v4425 = vunpack.c.h.b16 %v3912
  %v4426 = vunpack.c.l.b16 %v3913
  %v4427 = vunpack.c.h.b16 %v3913
  %v4428 = vunpack.c.l.b16 %v3914
  %v4429 = vunpack.c.h.b16 %v3914
  %v4430 = vunpack.c.l.b16 %v3915
  %v4431 = vunpack.c.h.b16 %v3915
  %v4432 = vunpack.c.l.b16 %v3916
  %v4433 = vunpack.c.h.b16 %v3916
  %v4434 = vunpack.c.l.b16 %v3917
  %v4435 = vunpack.c.h.b16 %v3917
  %v4436 = vunpack.c.l.b16 %v3918
  %v4437 = vunpack.c.h.b16 %v3918
  %v4438 = vunpack.c.l.b16 %v3919
  %v4439 = vunpack.c.h.b16 %v3919
  %v4440 = vunpack.c.l.b16 %v3920
  %v4441 = vunpack.c.h.b16 %v3920
  %v4442 = vunpack.c.l.b16 %v3921
  %v4443 = vunpack.c.h.b16 %v3921
  %v4444 = vunpack.c.l.b16 %v3922
  %v4445 = vunpack.c.h.b16 %v3922
  %v4446 = vunpack.c.l.b16 %v3923
  %v4447 = vunpack.c.h.b16 %v3923
  %v4448 = vunpack.c.l.b16 %v3924
  %v4449 = vunpack.c.h.b16 %v3924
  %v4450 = vunpack.c.l.b16 %v3925
  %v4451 = vunpack.c.h.b16 %v3925
  %v4452 = vunpack.c.l.b16 %v3926
  %v4453 = vunpack.c.h.b16 %v3926
  %v4454 = vunpack.c.l.b16 %v3927
  %v4455 = vunpack.c.h.b16 %v3927
  %v4456 = vunpack.c.l.b16 %v3928
  %v4457 = vunpack.c.h.b16 %v3928
  %v4458 = vunpack.c.l.b16 %v3929
  %v4459 = vunpack.c.h.b16 %v3929
  %v4460 = vunpack.c.l.b16 %v3930
  %v4461 = vunpack.c.h.b16 %v3930
  %v4462 = vunpack.c.l.b16 %v3931
  %v4463 = vunpack.c.h.b16 %v3931
  %v4464 = vunpack.c.l.b16 %v3932
  %v4465 = vunpack.c.h.b16 %v3932
  %v4466 = vunpack.c.l.b16 %v3933
  %v4467 = vunpack.c.h.b16 %v3933
  %v4468 = vunpack.c.l.b16 %v3934
  %v4469 = vunpack.c.h.b16 %v3934
  %v4470 = vunpack.c.l.b16 %v3935
  %v4471 = vunpack.c.h.b16 %v3935
  %v4472 = vunpack.c.l.b16 %v3936
  %v4473 = vunpack.c.h.b16 %v3936
  %v4474 = vunpack.c.l.b16 %v3937
  %v4475 = vunpack.c.h.b16 %v3937
  %v4476 = vunpack.c.l.b16 %v3938
  %v4477 = vunpack.c.h.b16 %v3938
  %v4478 = vunpack.c.l.b16 %v3939
  %v4479 = vunpack.c.h.b16 %v3939
  %v4480 = vunpack.c.l.b16 %v3940
  %v4481 = vunpack.c.h.b16 %v3940
  %v4482 = vunpack.c.l.b16 %v3941
  %v4483 = vunpack.c.h.b16 %v3941
  %v4484 = vunpack.c.l.b16 %v3942
  %v4485 = vunpack.c.h.b16 %v3942
  %v4486 = vunpack.c.l.b16 %v3943
  %v4487 = vunpack.c.h.b16 %v3943
  %v4488 = vunpack.c.l.b16 %v3944
  %v4489 = vunpack.c.h.b16 %v3944
  %v4490 = vunpack.c.l.b16 %v3945
  %v4491 = vunpack.c.h.b16 %v3945
  %v4492 = vunpack.c.l.b16 %v3946
  %v4493 = vunpack.c.h.b16 %v3946
  %v4494 = vunpack.c.l.b16 %v3947
  %v4495 = vunpack.c.h.b16 %v3947
  %v4496 = vunpack.c.l.b16 %v3948
  %v4497 = vunpack.c.h.b16 %v3948
  %v4498 = vunpack.c.l.b16 %v3949
  %v4499 = vunpack.c.h.b16 %v3949
  %v4500 = vunpack.c.l.b16 %v3950
  %v4501 = vunpack.c.h.b16 %v3950
  %v4502 = vunpack.c.l.b16 %v3951
  %v4503 = vunpack.c.h.b16 %v3951
  %v4504 = vpack.c.b16 %v4136, %v4136
  %v4505 = vpack.c.b16 %v4137, %v4137
  %v4506 = vpack.c.b16 %v4138, %v4138
  %v4507 = vpack.c.b16 %v4139, %v4139
  %v4508 = vpack.c.b16 %v4140, %v4140
  %v4509 = vpack.c.b16 %v4141, %v4141
  %v4510 = vpack.c.b16 %v4142, %v4142
  %v4511 = vpack.c.b16 %v4143, %v4143
  %v4512 = vpack.c.b16 %v4144, %v4144
  %v4513 = vpack.c.b16 %v4145, %v4145
  %v4514 = vpack.c.b16 %v4146, %v4146
  %v4515 = vpack.c.b16 %v4147, %v4147
  %v4516 = vpack.c.b16 %v4148, %v4148
  %v4517 = vpack.c.b16 %v4149, %v4149
  %v4518 = vpack.c.b16 %v4150, %v4150
  %v4519 = vpack.c.b16 %v4151, %v4151
  %v4520 = vpack.c.b16 %v4152, %v4152
  %v4521 = vpack.c.b16 %v4153, %v4153
  %v4522 = vpack.c.b16 %v4154, %v4154
  %v4523 = vpack.c.b16 %v4155, %v4155
  %v4524 = vpack.c.b16 %v4156, %v4156
  %v4525 = vpack.c.b16 %v4157, %v4157
  %v4526 = vpack.c.b16 %v4158, %v4158
  %v4527 = vpack.c.b16 %v4159, %v4159
  %v4528 = vpack.c.b16 %v4160, %v4160
  %v4529 = vpack.c.b16 %v4161, %v4161
  %v4530 = vpack.c.b16 %v4162, %v4162
  %v4531 = vpack.c.b16 %v4163, %v4163
  %v4532 = vpack.c.b16 %v4164, %v4164
  %v4533 = vpack.c.b16 %v4165, %v4165
  %v4534 = vpack.c.b16 %v4166, %v4166
  %v4535 = vpack.c.b16 %v4167, %v4167
  %v4536 = vpack.c.b16 %v4168, %v4168
  %v4537 = vpack.c.b16 %v4169, %v4169
  %v4538 = vpack.c.b16 %v4170, %v4170
  %v4539 = vpack.c.b16 %v4171, %v4171
  %v4540 = vpack.c.b16 %v4172, %v4172
  %v4541 = vpack.c.b16 %v4173, %v4173
  %v4542 = vpack.c.b16 %v4174, %v4174
  %v4543 = vpack.c.b16 %v4175, %v4175
  %v4544 = vpack.c.b16 %v4176, %v4176
  %v4545 = vpack.c.b16 %v4177, %v4177
  %v4546 = vpack.c.b16 %v4178, %v4178
  %v4547 = vpack.c.b16 %v4179, %v4179
  %v4548 = vpack.c.b16 %v4180, %v4180
  %v4549 = vpack.c.b16 %v4181, %v4181
  %v4550 = vpack.c.b16 %v4182, %v4182
  %v4551 = vpack.c.b16 %v4183, %v4183
  %v4552 = vpack.c.b16 %v4184, %v4184
  %v4553 = vpack.c.b16 %v4185, %v4185
  %v4554 = vpack.c.b16 %v4186, %v4186
  %v4555 = vpack.c.b16 %v4187, %v4187
  %v4556 = vpack.c.b16 %v4188, %v4188
  %v4557 = vpack.c.b16 %v4189, %v4189
  %v4558 = vpack.c.b16 %v4190, %v4190
  %v4559 = vpack.c.b16 %v4191, %v4191
  %v4560 = vpack.c.b16 %v4192, %v4192
  %v4561 = vpack.c.b16 %v4193, %v4193
  %v4562 = vpack.c.b16 %v4194, %v4194
  %v4563 = vpack.c.b16 %v4195, %v4195
  %v4564 = vpack.c.b16 %v4196, %v4196
  %v4565 = vpack.c.b16 %v4197, %v4197
  %v4566 = vpack.c.b16 %v4198, %v4198
  %v4567 = vpack.c.b16 %v4199, %v4199
  %v4568 = vpack.c.b16 %v4200, %v4200
  %v4569 = vpack.c.b16 %v4201, %v4201
  %v4570 = vpack.c.b16 %v4202, %v4202
  %v4571 = vpack.c.b16 %v4203, %v4203
  %v4572 = vpack.c.b16 %v4204, %v4204
  %v4573 = vpack.c.b16 %v4205, %v4205
  %v4574 = vpack.c.b16 %v4206, %v4206
  %v4575 = vpack.c.b16 %v4207, %v4207
  %v4576 = vpack.c.b16 %v4208, %v4208
  %v4577 = vpack.c.b16 %v4209, %v4209
  %v4578 = vpack.c.b16 %v4210, %v4210
  %v4579 = vpack.c.b16 %v4211, %v4211
  %v4580 = vpack.c.b16 %v4212, %v4212
  %v4581 = vpack.c.b16 %v4213, %v4213
  %v4582 = vpack.c.b16 %v4214, %v4214
  %v4583 = vpack.c.b16 %v4215, %v4215
  %v4584 = vpack.c.b16 %v4216, %v4216
  %v4585 = vpack.c.b16 %v4217, %v4217
  %v4586 = vpack.c.b16 %v4218, %v4218
  %v4587 = vpack.c.b16 %v4219, %v4219
  %v4588 = vpack.c.b16 %v4220, %v4220
  %v4589 = vpack.c.b16 %v4221, %v4221
  %v4590 = vpack.c.b16 %v4222, %v4222
  %v4591 = vpack.c.b16 %v4223, %v4223
  %v4592 = vpack.c.b16 %v4224, %v4224
  %v4593 = vpack.c.b16 %v4225, %v4225
  %v4594 = vpack.c.b16 %v4226, %v4226
  %v4595 = vpack.c.b16 %v4227, %v4227
  %v4596 = vpack.c.b16 %v4228, %v4228
  %v4597 = vpack.c.b16 %v4229, %v4229
  %v4598 = vpack.c.b16 %v4230, %v4230
  %v4599 = vpack.c.b16 %v4231, %v4231
  %v4600 = vpack.c.b16 %v4232, %v4232
  %v4601 = vpack.c.b16 %v4233, %v4233
  %v4602 = vpack.c.b16 %v4234, %v4234
  %v4603 = vpack.c.b16 %v4235, %v4235
  %v4604 = vpack.c.b16 %v4236, %v4236
  %v4605 = vpack.c.b16 %v4237, %v4237
  %v4606 = vpack.c.b16 %v4238, %v4238
  %v4607 = vpack.c.b16 %v4239, %v4239
  %v4608 = vpack.c.b16 %v4240, %v4240
  %v4609 = vpack.c.b16 %v4241, %v4241
  %v4610 = vpack.c.b16 %v4242, %v4242
  %v4611 = vpack.c.b16 %v4243, %v4243
  %v4612 = vpack.c.b16 %v4244, %v4244
  %v4613 = vpack.c.b16 %v4245, %v4245
  %v4614 = vpack.c.b16 %v4246, %v4246
  %v4615 = vpack.c.b16 %v4247, %v4247
  %v4616 = vpack.c.b16 %v4248, %v4248
  %v4617 = vpack.c.b16 %v4249, %v4249
  %v4618 = vpack.c.b16 %v4250, %v4250
  %v4619 = vpack.c.b16 %v4251, %v4251
  %v4620 = vpack.c.b16 %v4252, %v4252
  %v4621 = vpack.c.b16 %v4253, %v4253
  %v4622 = vpack.c.b16 %v4254, %v4254
  %v4623 = vpack.c.b16 %v4255, %v4255
  %v4624 = vpack.c.b16 %v4256, %v4256
  %v4625 = vpack.c.b16 %v4257, %v4257
  %v4626 = vpack.c.b16 %v4258, %v4258
  %v4627 = vpack.c.b16 %v4259, %v4259
  %v4628 = vpack.c.b16 %v4260, %v4260
  %v4629 = vpack.c.b16 %v4261, %v4261
  %v4630 = vpack.c.b16 %v4262, %v4262
  %v4631 = vpack.c.b16 %v4263, %v4263
  %v4632 = vpack.c.b16 %v4264, %v4264
  %v4633 = vpack.c.b16 %v4265, %v4265
  %v4634 = vpack.c.b16 %v4266, %v4266
  %v4635 = vpack.c.b16 %v4267, %v4267
  %v4636 = vpack.c.b16 %v4268, %v4268
  %v4637 = vpack.c.b16 %v4269, %v4269
  %v4638 = vpack.c.b16 %v4270, %v4270
  %v4639 = vpack.c.b16 %v4271, %v4271
  %v4640 = vpack.c.b16 %v4272, %v4272
  %v4641 = vpack.c.b16 %v4273, %v4273
  %v4642 = vpack.c.b16 %v4274, %v4274
  %v4643 = vpack.c.b16 %v4275, %v4275
  %v4644 = vpack.c.b16 %v4276, %v4276
  %v4645 = vpack.c.b16 %v4277, %v4277
  %v4646 = vpack.c.b16 %v4278, %v4278
  %v4647 = vpack.c.b16 %v4279, %v4279
  %v4648 = vpack.c.b16 %v4280, %v4280
  %v4649 = vpack.c.b16 %v4281, %v4281
  %v4650 = vpack.c.b16 %v4282, %v4282
  %v4651 = vpack.c.b16 %v4283, %v4283
  %v4652 = vpack.c.b16 %v4284, %v4284
  %v4653 = vpack.c.b16 %v4285, %v4285
  %v4654 = vpack.c.b16 %v4286, %v4286
  %v4655 = vpack.c.b16 %v4287, %v4287
  %v4656 = vpack.c.b16 %v4288, %v4288
  %v4657 = vpack.c.b16 %v4289, %v4289
  %v4658 = vpack.c.b16 %v4290, %v4290
  %v4659 = vpack.c.b16 %v4291, %v4291
  %v4660 = vpack.c.b16 %v4292, %v4292
  %v4661 = vpack.c.b16 %v4293, %v4293
  %v4662 = vpack.c.b16 %v4294, %v4294
  %v4663 = vpack.c.b16 %v4295, %v4295
  %v4664 = vpack.c.b16 %v4296, %v4296
  %v4665 = vpack.c.b16 %v4297, %v4297
  %v4666 = vpack.c.b16 %v4298, %v4298
  %v4667 = vpack.c.b16 %v4299, %v4299
  %v4668 = vpack.c.b16 %v4300, %v4300
  %v4669 = vpack.c.b16 %v4301, %v4301
  %v4670 = vpack.c.b16 %v4302, %v4302
  %v4671 = vpack.c.b16 %v4303, %v4303
  %v4672 = vpack.c.b16 %v4304, %v4304
  %v4673 = vpack.c.b16 %v4305, %v4305
  %v4674 = vpack.c.b16 %v4306, %v4306
  %v4675 = vpack.c.b16 %v4307, %v4307
  %v4676 = vpack.c.b16 %v4308, %v4308
  %v4677 = vpack.c.b16 %v4309, %v4309
  %v4678 = vpack.c.b16 %v4310, %v4310
  %v4679 = vpack.c.b16 %v4311, %v4311
  %v4680 = vpack.c.b16 %v4312, %v4312
  %v4681 = vpack.c.b16 %v4313, %v4313
  %v4682 = vpack.c.b16 %v4314, %v4314
  %v4683 = vpack.c.b16 %v4315, %v4315
  %v4684 = vpack.c.b16 %v4316, %v4316
  %v4685 = vpack.c.b16 %v4317, %v4317
  %v4686 = vpack.c.b16 %v4318, %v4318
  %v4687 = vpack.c.b16 %v4319, %v4319
  %v4688 = vpack.c.b16 %v4320, %v4320
  %v4689 = vpack.c.b16 %v4321, %v4321
  %v4690 = vpack.c.b16 %v4322, %v4322
  %v4691 = vpack.c.b16 %v4323, %v4323
  %v4692 = vpack.c.b16 %v4324, %v4324
  %v4693 = vpack.c.b16 %v4325, %v4325
  %v4694 = vpack.c.b16 %v4326, %v4326
  %v4695 = vpack.c.b16 %v4327, %v4327
  %v4696 = vpack.c.b16 %v4328, %v4328
  %v4697 = vpack.c.b16 %v4329, %v4329
  %v4698 = vpack.c.b16 %v4330, %v4330
  %v4699 = vpack.c.b16 %v4331, %v4331
  %v4700 = vpack.c.b16 %v4332, %v4332
  %v4701 = vpack.c.b16 %v4333, %v4333
  %v4702 = vpack.c.b16 %v4334, %v4334
  %v4703 = vpack.c.b16 %v4335, %v4335
  %v4704 = vpack.c.b16 %v4336, %v4336
  %v4705 = vpack.c.b16 %v4337, %v4337
  %v4706 = vpack.c.b16 %v4338, %v4338
  %v4707 = vpack.c.b16 %v4339, %v4339
  %v4708 = vpack.c.b16 %v4340, %v4340
  %v4709 = vpack.c.b16 %v4341, %v4341
  %v4710 = vpack.c.b16 %v4342, %v4342
  %v4711 = vpack.c.b16 %v4343, %v4343
  %v4712 = vpack.c.b16 %v4344, %v4344
  %v4713 = vpack.c.b16 %v4345, %v4345
  %v4714 = vpack.c.b16 %v4346, %v4346
  %v4715 = vpack.c.b16 %v4347, %v4347
  %v4716 = vpack.c.b16 %v4348, %v4348
  %v4717 = vpack.c.b16 %v4349, %v4349
  %v4718 = vpack.c.b16 %v4350, %v4350
  %v4719 = vpack.c.b16 %v4351, %v4351
  %v4720 = vpack.c.b16 %v4352, %v4352
  %v4721 = vpack.c.b16 %v4353, %v4353
  %v4722 = vpack.c.b16 %v4354, %v4354
  %v4723 = vpack.c.b16 %v4355, %v4355
  %v4724 = vpack.c.b16 %v4356, %v4356
  %v4725 = vpack.c.b16 %v4357, %v4357
  %v4726 = vpack.c.b16 %v4358, %v4358
  %v4727 = vpack.c.b16 %v4359, %v4359
  %v4728 = vpack.c.b16 %v4360, %v4360
  %v4729 = vpack.c.b16 %v4361, %v4361
  %v4730 = vpack.c.b16 %v4362, %v4362
  %v4731 = vpack.c.b16 %v4363, %v4363
  %v4732 = vpack.c.b16 %v4364, %v4364
  %v4733 = vpack.c.b16 %v4365, %v4365
  %v4734 = vpack.c.b16 %v4366, %v4366
  %v4735 = vpack.c.b16 %v4367, %v4367
  %v4736 = vpack.c.b16 %v4368, %v4368
  %v4737 = vpack.c.b16 %v4369, %v4369
  %v4738 = vpack.c.b16 %v4370, %v4370
  %v4739 = vpack.c.b16 %v4371, %v4371
  %v4740 = vpack.c.b16 %v4372, %v4372
  %v4741 = vpack.c.b16 %v4373, %v4373
  %v4742 = vpack.c.b16 %v4374, %v4374
  %v4743 = vpack.c.b16 %v4375, %v4375
  %v4744 = vpack.c.b16 %v4376, %v4376
  %v4745 = vpack.c.b16 %v4377, %v4377
  %v4746 = vpack.c.b16 %v4378, %v4378
  %v4747 = vpack.c.b16 %v4379, %v4379
  %v4748 = vpack.c.b16 %v4380, %v4380
  %v4749 = vpack.c.b16 %v4381, %v4381
  %v4750 = vpack.c.b16 %v4382, %v4382
  %v4751 = vpack.c.b16 %v4383, %v4383
  %v4752 = vpack.c.b16 %v4384, %v4384
  %v4753 = vpack.c.b16 %v4385, %v4385
  %v4754 = vpack.c.b16 %v4386, %v4386
  %v4755 = vpack.c.b16 %v4387, %v4387
  %v4756 = vpack.c.b16 %v4388, %v4388
  %v4757 = vpack.c.b16 %v4389, %v4389
  %v4758 = vpack.c.b16 %v4390, %v4390
  %v4759 = vpack.c.b16 %v4391, %v4391
  %v4760 = vpack.c.b16 %v4392, %v4392
  %v4761 = vpack.c.b16 %v4393, %v4393
  %v4762 = vpack.c.b16 %v4394, %v4394
  %v4763 = vpack.c.b16 %v4395, %v4395
  %v4764 = vpack.c.b16 %v4396, %v4396
  %v4765 = vpack.c.b16 %v4397, %v4397
  %v4766 = vpack.c.b16 %v4398, %v4398
  %v4767 = vpack.c.b16 %v4399, %v4399
  %v4768 = vpack.c.b16 %v4400, %v4400
  %v4769 = vpack.c.b16 %v4401, %v4401
  %v4770 = vpack.c.b16 %v4402, %v4402
  %v4771 = vpack.c.b16 %v4403, %v4403
  %v4772 = vpack.c.b16 %v4404, %v4404
  %v4773 = vpack.c.b16 %v4405, %v4405
  %v4774 = vpack.c.b16 %v4406, %v4406
  %v4775 = vpack.c.b16 %v4407, %v4407
  %v4776 = vpack.c.b16 %v4408, %v4408
  %v4777 = vpack.c.b16 %v4409, %v4409
  %v4778 = vpack.c.b16 %v4410, %v4410
  %v4779 = vpack.c.b16 %v4411, %v4411
  %v4780 = vpack.c.b16 %v4412, %v4412
  %v4781 = vpack.c.b16 %v4413, %v4413
  %v4782 = vpack.c.b16 %v4414, %v4414
  %v4783 = vpack.c.b16 %v4415, %v4415
  %v4784 = vpack.c.b16 %v4416, %v4416
  %v4785 = vpack.c.b16 %v4417, %v4417
  %v4786 = vpack.c.b16 %v4418, %v4418
  %v4787 = vpack.c.b16 %v4419, %v4419
  %v4788 = vpack.c.b16 %v4420, %v4420
  %v4789 = vpack.c.b16 %v4421, %v4421
  %v4790 = vpack.c.b16 %v4422, %v4422
  %v4791 = vpack.c.b16 %v4423, %v4423
  %v4792 = vpack.c.b16 %v4424, %v4424
  %v4793 = vpack.c.b16 %v4425, %v4425
  %v4794 = vpack.c.b16 %v4426, %v4426
  %v4795 = vpack.c.b16 %v4427, %v4427
  %v4796 = vpack.c.b16 %v4428, %v4428
  %v4797 = vpack.c.b16 %v4429, %v4429
  %v4798 = vpack.c.b16 %v4430, %v4430
  %v4799 = vpack.c.b16 %v4431, %v4431
  %v4800 = vpack.c.b16 %v4432, %v4432
  %v4801 = vpack.c.b16 %v4433, %v4433
  %v4802 = vpack.c.b16 %v4434, %v4434
  %v4803 = vpack.c.b16 %v4435, %v4435
  %v4804 = vpack.c.b16 %v4436, %v4436
  %v4805 = vpack.c.b16 %v4437, %v4437
  %v4806 = vpack.c.b16 %v4438, %v4438
  %v4807 = vpack.c.b16 %v4439, %v4439
  %v4808 = vpack.c.b16 %v4440, %v4440
  %v4809 = vpack.c.b16 %v4441, %v4441
  %v4810 = vpack.c.b16 %v4442, %v4442
  %v4811 = vpack.c.b16 %v4443, %v4443
  %v4812 = vpack.c.b16 %v4444, %v4444
  %v4813 = vpack.c.b16 %v4445, %v4445
  %v4814 = vpack.c.b16 %v4446, %v4446
  %v4815 = vpack.c.b16 %v4447, %v4447
  %v4816 = vpack.c.b16 %v4448, %v4448
  %v4817 = vpack.c.b16 %v4449, %v4449
  %v4818 = vpack.c.b16 %v4450, %v4450
  %v4819 = vpack.c.b16 %v4451, %v4451
  %v4820 = vpack.c.b16 %v4452, %v4452
  %v4821 = vpack.c.b16 %v4453, %v4453
  %v4822 = vpack.c.b16 %v4454, %v4454
  %v4823 = vpack.c.b16 %v4455, %v4455
  %v4824 = vpack.c.b16 %v4456, %v4456
  %v4825 = vpack.c.b16 %v4457, %v4457
  %v4826 = vpack.c.b16 %v4458, %v4458
  %v4827 = vpack.c.b16 %v4459, %v4459
  %v4828 = vpack.c.b16 %v4460, %v4460
  %v4829 = vpack.c.b16 %v4461, %v4461
  %v4830 = vpack.c.b16 %v4462, %v4462
  %v4831 = vpack.c.b16 %v4463, %v4463
  %v4832 = vpack.c.b16 %v4464, %v4464
  %v4833 = vpack.c.b16 %v4465, %v4465
  %v4834 = vpack.c.b16 %v4466, %v4466
  %v4835 = vpack.c.b16 %v4467, %v4467
  %v4836 = vpack.c.b16 %v4468, %v4468
  %v4837 = vpack.c.b16 %v4469, %v4469
  %v4838 = vpack.c.b16 %v4470, %v4470
  %v4839 = vpack.c.b16 %v4471, %v4471
  %v4840 = vpack.c.b16 %v4472, %v4472
  %v4841 = vpack.c.b16 %v4473, %v4473
  %v4842 = vpack.c.b16 %v4474, %v4474
  %v4843 = vpack.c.b16 %v4475, %v4475
  %v4844 = vpack.c.b16 %v4476, %v4476
  %v4845 = vpack.c.b16 %v4477, %v4477
  %v4846 = vpack.c.b16 %v4478, %v4478
  %v4847 = vpack.c.b16 %v4479, %v4479
  %v4848 = vpack.c.b16 %v4480, %v4480
  %v4849 = vpack.c.b16 %v4481, %v4481
  %v4850 = vpack.c.b16 %v4482, %v4482
  %v4851 = vpack.c.b16 %v4483, %v4483
  %v4852 = vpack.c.b16 %v4484, %v4484
  %v4853 = vpack.c.b16 %v4485, %v4485
  %v4854 = vpack.c.b16 %v4486, %v4486
  %v4855 = vpack.c.b16 %v4487, %v4487
  %v4856 = vpack.c.b16 %v4488, %v4488
  %v4857 = vpack.c.b16 %v4489, %v4489
  %v4858 = vpack.c.b16 %v4490, %v4490
  %v4859 = vpack.c.b16 %v4491, %v4491
  %v4860 = vpack.c.b16 %v4492, %v4492
  %v4861 = vpack.c.b16 %v4493, %v4493
  %v4862 = vpack.c.b16 %v4494, %v4494
  %v4863 = vpack.c.b16 %v4495, %v4495
  %v4864 = vpack.c.b16 %v4496, %v4496
  %v4865 = vpack.c.b16 %v4497, %v4497
  %v4866 = vpack.c.b16 %v4498, %v4498
  %v4867 = vpack.c.b16 %v4499, %v4499
  %v4868 = vpack.c.b16 %v4500, %v4500
  %v4869 = vpack.c.b16 %v4501, %v4501
  %v4870 = vpack.c.b16 %v4502, %v4502
  %v4871 = vpack.c.b16 %v4503, %v4503
  %vm5240 = vcmask 125952
  %5241 = vst.msk [vmem:[%s3] sm:$0xf] %vm5240, %v4504
  %5242 = vst.msk [vmem:[%s3 + $0x4] sm:$0xf] %vm5240, %v4505
  %5243 = vst.msk [vmem:[%s3 + $0x8] sm:$0xf] %vm5240, %v4506
  %5244 = vst.msk [vmem:[%s3 + $0xc] sm:$0xf] %vm5240, %v4507
  %5245 = vst.msk [vmem:[%s3 + $0x10] sm:$0xf] %vm5240, %v4508
  %5246 = vst.msk [vmem:[%s3 + $0x14] sm:$0xf] %vm5240, %v4509
  %5247 = vst.msk [vmem:[%s3 + $0x18] sm:$0xf] %vm5240, %v4510
  %5248 = vst.msk [vmem:[%s3 + $0x1c] sm:$0xf] %vm5240, %v4511
  %5249 = vst.msk [vmem:[%s3 + $0x20] sm:$0xf] %vm5240, %v4512
  %5250 = vst.msk [vmem:[%s3 + $0x24] sm:$0xf] %vm5240, %v4513
  %5251 = vst.msk [vmem:[%s3 + $0x28] sm:$0xf] %vm5240, %v4514
  %5252 = vst.msk [vmem:[%s3 + $0x2c] sm:$0xf] %vm5240, %v4515
  %5253 = vst.msk [vmem:[%s3 + $0x30] sm:$0xf] %vm5240, %v4516
  %5254 = vst.msk [vmem:[%s3 + $0x34] sm:$0xf] %vm5240, %v4517
  %5255 = vst.msk [vmem:[%s3 + $0x38] sm:$0xf] %vm5240, %v4518
  %5256 = vst.msk [vmem:[%s3 + $0x3c] sm:$0xf] %vm5240, %v4519
  %5257 = vst.msk [vmem:[%s3 + $0x40] sm:$0xf] %vm5240, %v4520
  %5258 = vst.msk [vmem:[%s3 + $0x44] sm:$0xf] %vm5240, %v4521
  %5259 = vst.msk [vmem:[%s3 + $0x48] sm:$0xf] %vm5240, %v4522
  %5260 = vst.msk [vmem:[%s3 + $0x4c] sm:$0xf] %vm5240, %v4523
  %5261 = vst.msk [vmem:[%s3 + $0x50] sm:$0xf] %vm5240, %v4524
  %5262 = vst.msk [vmem:[%s3 + $0x54] sm:$0xf] %vm5240, %v4525
  %5263 = vst.msk [vmem:[%s3 + $0x58] sm:$0xf] %vm5240, %v4526
  %5264 = vst.msk [vmem:[%s3 + $0x5c] sm:$0xf] %vm5240, %v4527
  %5265 = vst.msk [vmem:[%s3 + $0x60] sm:$0xf] %vm5240, %v4528
  %5266 = vst.msk [vmem:[%s3 + $0x64] sm:$0xf] %vm5240, %v4529
  %5267 = vst.msk [vmem:[%s3 + $0x68] sm:$0xf] %vm5240, %v4530
  %5268 = vst.msk [vmem:[%s3 + $0x6c] sm:$0xf] %vm5240, %v4531
  %5269 = vst.msk [vmem:[%s3 + $0x70] sm:$0xf] %vm5240, %v4532
  %5270 = vst.msk [vmem:[%s3 + $0x74] sm:$0xf] %vm5240, %v4533
  %5271 = vst.msk [vmem:[%s3 + $0x78] sm:$0xf] %vm5240, %v4534
  %5272 = vst.msk [vmem:[%s3 + $0x7c] sm:$0xf] %vm5240, %v4535
  %5273 = vst.msk [vmem:[%s3 + $0x80] sm:$0xf] %vm5240, %v4536
  %5274 = vst.msk [vmem:[%s3 + $0x84] sm:$0xf] %vm5240, %v4537
  %5275 = vst.msk [vmem:[%s3 + $0x88] sm:$0xf] %vm5240, %v4538
  %5276 = vst.msk [vmem:[%s3 + $0x8c] sm:$0xf] %vm5240, %v4539
  %5277 = vst.msk [vmem:[%s3 + $0x90] sm:$0xf] %vm5240, %v4540
  %5278 = vst.msk [vmem:[%s3 + $0x94] sm:$0xf] %vm5240, %v4541
  %5279 = vst.msk [vmem:[%s3 + $0x98] sm:$0xf] %vm5240, %v4542
  %5280 = vst.msk [vmem:[%s3 + $0x9c] sm:$0xf] %vm5240, %v4543
  %5281 = vst.msk [vmem:[%s3 + $0xa0] sm:$0xf] %vm5240, %v4544
  %5282 = vst.msk [vmem:[%s3 + $0xa4] sm:$0xf] %vm5240, %v4545
  %5283 = vst.msk [vmem:[%s3 + $0xa8] sm:$0xf] %vm5240, %v4546
  %5284 = vst.msk [vmem:[%s3 + $0xac] sm:$0xf] %vm5240, %v4547
  %5285 = vst.msk [vmem:[%s3 + $0xb0] sm:$0xf] %vm5240, %v4548
  %5286 = vst.msk [vmem:[%s3 + $0xb4] sm:$0xf] %vm5240, %v4549
  %5287 = vst.msk [vmem:[%s3 + $0xb8] sm:$0xf] %vm5240, %v4550
  %5288 = vst.msk [vmem:[%s3 + $0xbc] sm:$0xf] %vm5240, %v4551
  %5289 = vst.msk [vmem:[%s3 + $0xc0] sm:$0xf] %vm5240, %v4552
  %5290 = vst.msk [vmem:[%s3 + $0xc4] sm:$0xf] %vm5240, %v4553
  %5291 = vst.msk [vmem:[%s3 + $0xc8] sm:$0xf] %vm5240, %v4554
  %5292 = vst.msk [vmem:[%s3 + $0xcc] sm:$0xf] %vm5240, %v4555
  %5293 = vst.msk [vmem:[%s3 + $0xd0] sm:$0xf] %vm5240, %v4556
  %5294 = vst.msk [vmem:[%s3 + $0xd4] sm:$0xf] %vm5240, %v4557
  %5295 = vst.msk [vmem:[%s3 + $0xd8] sm:$0xf] %vm5240, %v4558
  %5296 = vst.msk [vmem:[%s3 + $0xdc] sm:$0xf] %vm5240, %v4559
  %5297 = vst.msk [vmem:[%s3 + $0xe0] sm:$0xf] %vm5240, %v4560
  %5298 = vst.msk [vmem:[%s3 + $0xe4] sm:$0xf] %vm5240, %v4561
  %5299 = vst.msk [vmem:[%s3 + $0xe8] sm:$0xf] %vm5240, %v4562
  %5300 = vst.msk [vmem:[%s3 + $0xec] sm:$0xf] %vm5240, %v4563
  %5301 = vst.msk [vmem:[%s3 + $0xf0] sm:$0xf] %vm5240, %v4564
  %5302 = vst.msk [vmem:[%s3 + $0xf4] sm:$0xf] %vm5240, %v4565
  %5303 = vst.msk [vmem:[%s3 + $0xf8] sm:$0xf] %vm5240, %v4566
  %5304 = vst.msk [vmem:[%s3 + $0xfc] sm:$0xf] %vm5240, %v4567
  %5305 = vst.msk [vmem:[%s3 + $0x100] sm:$0xf] %vm5240, %v4568
  %5306 = vst.msk [vmem:[%s3 + $0x104] sm:$0xf] %vm5240, %v4569
  %5307 = vst.msk [vmem:[%s3 + $0x108] sm:$0xf] %vm5240, %v4570
  %5308 = vst.msk [vmem:[%s3 + $0x10c] sm:$0xf] %vm5240, %v4571
  %5309 = vst.msk [vmem:[%s3 + $0x110] sm:$0xf] %vm5240, %v4572
  %5310 = vst.msk [vmem:[%s3 + $0x114] sm:$0xf] %vm5240, %v4573
  %5311 = vst.msk [vmem:[%s3 + $0x118] sm:$0xf] %vm5240, %v4574
  %5312 = vst.msk [vmem:[%s3 + $0x11c] sm:$0xf] %vm5240, %v4575
  %5313 = vst.msk [vmem:[%s3 + $0x120] sm:$0xf] %vm5240, %v4576
  %5314 = vst.msk [vmem:[%s3 + $0x124] sm:$0xf] %vm5240, %v4577
  %5315 = vst.msk [vmem:[%s3 + $0x128] sm:$0xf] %vm5240, %v4578
  %5316 = vst.msk [vmem:[%s3 + $0x12c] sm:$0xf] %vm5240, %v4579
  %5317 = vst.msk [vmem:[%s3 + $0x130] sm:$0xf] %vm5240, %v4580
  %5318 = vst.msk [vmem:[%s3 + $0x134] sm:$0xf] %vm5240, %v4581
  %5319 = vst.msk [vmem:[%s3 + $0x138] sm:$0xf] %vm5240, %v4582
  %5320 = vst.msk [vmem:[%s3 + $0x13c] sm:$0xf] %vm5240, %v4583
  %5321 = vst.msk [vmem:[%s3 + $0x140] sm:$0xf] %vm5240, %v4584
  %5322 = vst.msk [vmem:[%s3 + $0x144] sm:$0xf] %vm5240, %v4585
  %5323 = vst.msk [vmem:[%s3 + $0x148] sm:$0xf] %vm5240, %v4586
  %5324 = vst.msk [vmem:[%s3 + $0x14c] sm:$0xf] %vm5240, %v4587
  %5325 = vst.msk [vmem:[%s3 + $0x150] sm:$0xf] %vm5240, %v4588
  %5326 = vst.msk [vmem:[%s3 + $0x154] sm:$0xf] %vm5240, %v4589
  %5327 = vst.msk [vmem:[%s3 + $0x158] sm:$0xf] %vm5240, %v4590
  %5328 = vst.msk [vmem:[%s3 + $0x15c] sm:$0xf] %vm5240, %v4591
  %5329 = vst.msk [vmem:[%s3 + $0x160] sm:$0xf] %vm5240, %v4592
  %5330 = vst.msk [vmem:[%s3 + $0x164] sm:$0xf] %vm5240, %v4593
  %5331 = vst.msk [vmem:[%s3 + $0x168] sm:$0xf] %vm5240, %v4594
  %5332 = vst.msk [vmem:[%s3 + $0x16c] sm:$0xf] %vm5240, %v4595
  %5333 = vst.msk [vmem:[%s3 + $0x170] sm:$0xf] %vm5240, %v4596
  %5334 = vst.msk [vmem:[%s3 + $0x174] sm:$0xf] %vm5240, %v4597
  %5335 = vst.msk [vmem:[%s3 + $0x178] sm:$0xf] %vm5240, %v4598
  %5336 = vst.msk [vmem:[%s3 + $0x17c] sm:$0xf] %vm5240, %v4599
  %5337 = vst.msk [vmem:[%s3 + $0x180] sm:$0xf] %vm5240, %v4600
  %5338 = vst.msk [vmem:[%s3 + $0x184] sm:$0xf] %vm5240, %v4601
  %5339 = vst.msk [vmem:[%s3 + $0x188] sm:$0xf] %vm5240, %v4602
  %5340 = vst.msk [vmem:[%s3 + $0x18c] sm:$0xf] %vm5240, %v4603
  %5341 = vst.msk [vmem:[%s3 + $0x190] sm:$0xf] %vm5240, %v4604
  %5342 = vst.msk [vmem:[%s3 + $0x194] sm:$0xf] %vm5240, %v4605
  %5343 = vst.msk [vmem:[%s3 + $0x198] sm:$0xf] %vm5240, %v4606
  %5344 = vst.msk [vmem:[%s3 + $0x19c] sm:$0xf] %vm5240, %v4607
  %5345 = vst.msk [vmem:[%s3 + $0x1a0] sm:$0xf] %vm5240, %v4608
  %5346 = vst.msk [vmem:[%s3 + $0x1a4] sm:$0xf] %vm5240, %v4609
  %5347 = vst.msk [vmem:[%s3 + $0x1a8] sm:$0xf] %vm5240, %v4610
  %5348 = vst.msk [vmem:[%s3 + $0x1ac] sm:$0xf] %vm5240, %v4611
  %5349 = vst.msk [vmem:[%s3 + $0x1b0] sm:$0xf] %vm5240, %v4612
  %5350 = vst.msk [vmem:[%s3 + $0x1b4] sm:$0xf] %vm5240, %v4613
  %5351 = vst.msk [vmem:[%s3 + $0x1b8] sm:$0xf] %vm5240, %v4614
  %5352 = vst.msk [vmem:[%s3 + $0x1bc] sm:$0xf] %vm5240, %v4615
  %5353 = vst.msk [vmem:[%s3 + $0x1c0] sm:$0xf] %vm5240, %v4616
  %5354 = vst.msk [vmem:[%s3 + $0x1c4] sm:$0xf] %vm5240, %v4617
  %5355 = vst.msk [vmem:[%s3 + $0x1c8] sm:$0xf] %vm5240, %v4618
  %5356 = vst.msk [vmem:[%s3 + $0x1cc] sm:$0xf] %vm5240, %v4619
  %5357 = vst.msk [vmem:[%s3 + $0x1d0] sm:$0xf] %vm5240, %v4620
  %5358 = vst.msk [vmem:[%s3 + $0x1d4] sm:$0xf] %vm5240, %v4621
  %5359 = vst.msk [vmem:[%s3 + $0x1d8] sm:$0xf] %vm5240, %v4622
  %5360 = vst.msk [vmem:[%s3 + $0x1dc] sm:$0xf] %vm5240, %v4623
  %5361 = vst.msk [vmem:[%s3 + $0x1e0] sm:$0xf] %vm5240, %v4624
  %5362 = vst.msk [vmem:[%s3 + $0x1e4] sm:$0xf] %vm5240, %v4625
  %5363 = vst.msk [vmem:[%s3 + $0x1e8] sm:$0xf] %vm5240, %v4626
  %5364 = vst.msk [vmem:[%s3 + $0x1ec] sm:$0xf] %vm5240, %v4627
  %5365 = vst.msk [vmem:[%s3 + $0x1f0] sm:$0xf] %vm5240, %v4628
  %5366 = vst.msk [vmem:[%s3 + $0x1f4] sm:$0xf] %vm5240, %v4629
  %5367 = vst.msk [vmem:[%s3 + $0x1f8] sm:$0xf] %vm5240, %v4630
  %5368 = vst.msk [vmem:[%s3 + $0x1fc] sm:$0xf] %vm5240, %v4631
  %5369 = vst.msk [vmem:[%s3 + $0x200] sm:$0xf] %vm5240, %v4632
  %5370 = vst.msk [vmem:[%s3 + $0x204] sm:$0xf] %vm5240, %v4633
  %5371 = vst.msk [vmem:[%s3 + $0x208] sm:$0xf] %vm5240, %v4634
  %5372 = vst.msk [vmem:[%s3 + $0x20c] sm:$0xf] %vm5240, %v4635
  %5373 = vst.msk [vmem:[%s3 + $0x210] sm:$0xf] %vm5240, %v4636
  %5374 = vst.msk [vmem:[%s3 + $0x214] sm:$0xf] %vm5240, %v4637
  %5375 = vst.msk [vmem:[%s3 + $0x218] sm:$0xf] %vm5240, %v4638
  %5376 = vst.msk [vmem:[%s3 + $0x21c] sm:$0xf] %vm5240, %v4639
  %5377 = vst.msk [vmem:[%s3 + $0x220] sm:$0xf] %vm5240, %v4640
  %5378 = vst.msk [vmem:[%s3 + $0x224] sm:$0xf] %vm5240, %v4641
  %5379 = vst.msk [vmem:[%s3 + $0x228] sm:$0xf] %vm5240, %v4642
  %5380 = vst.msk [vmem:[%s3 + $0x22c] sm:$0xf] %vm5240, %v4643
  %5381 = vst.msk [vmem:[%s3 + $0x230] sm:$0xf] %vm5240, %v4644
  %5382 = vst.msk [vmem:[%s3 + $0x234] sm:$0xf] %vm5240, %v4645
  %5383 = vst.msk [vmem:[%s3 + $0x238] sm:$0xf] %vm5240, %v4646
  %5384 = vst.msk [vmem:[%s3 + $0x23c] sm:$0xf] %vm5240, %v4647
  %5385 = vst.msk [vmem:[%s3 + $0x240] sm:$0xf] %vm5240, %v4648
  %5386 = vst.msk [vmem:[%s3 + $0x244] sm:$0xf] %vm5240, %v4649
  %5387 = vst.msk [vmem:[%s3 + $0x248] sm:$0xf] %vm5240, %v4650
  %5388 = vst.msk [vmem:[%s3 + $0x24c] sm:$0xf] %vm5240, %v4651
  %5389 = vst.msk [vmem:[%s3 + $0x250] sm:$0xf] %vm5240, %v4652
  %5390 = vst.msk [vmem:[%s3 + $0x254] sm:$0xf] %vm5240, %v4653
  %5391 = vst.msk [vmem:[%s3 + $0x258] sm:$0xf] %vm5240, %v4654
  %5392 = vst.msk [vmem:[%s3 + $0x25c] sm:$0xf] %vm5240, %v4655
  %5393 = vst.msk [vmem:[%s3 + $0x260] sm:$0xf] %vm5240, %v4656
  %5394 = vst.msk [vmem:[%s3 + $0x264] sm:$0xf] %vm5240, %v4657
  %5395 = vst.msk [vmem:[%s3 + $0x268] sm:$0xf] %vm5240, %v4658
  %5396 = vst.msk [vmem:[%s3 + $0x26c] sm:$0xf] %vm5240, %v4659
  %5397 = vst.msk [vmem:[%s3 + $0x270] sm:$0xf] %vm5240, %v4660
  %5398 = vst.msk [vmem:[%s3 + $0x274] sm:$0xf] %vm5240, %v4661
  %5399 = vst.msk [vmem:[%s3 + $0x278] sm:$0xf] %vm5240, %v4662
  %5400 = vst.msk [vmem:[%s3 + $0x27c] sm:$0xf] %vm5240, %v4663
  %5401 = vst.msk [vmem:[%s3 + $0x280] sm:$0xf] %vm5240, %v4664
  %5402 = vst.msk [vmem:[%s3 + $0x284] sm:$0xf] %vm5240, %v4665
  %5403 = vst.msk [vmem:[%s3 + $0x288] sm:$0xf] %vm5240, %v4666
  %5404 = vst.msk [vmem:[%s3 + $0x28c] sm:$0xf] %vm5240, %v4667
  %5405 = vst.msk [vmem:[%s3 + $0x290] sm:$0xf] %vm5240, %v4668
  %5406 = vst.msk [vmem:[%s3 + $0x294] sm:$0xf] %vm5240, %v4669
  %5407 = vst.msk [vmem:[%s3 + $0x298] sm:$0xf] %vm5240, %v4670
  %5408 = vst.msk [vmem:[%s3 + $0x29c] sm:$0xf] %vm5240, %v4671
  %5409 = vst.msk [vmem:[%s3 + $0x2a0] sm:$0xf] %vm5240, %v4672
  %5410 = vst.msk [vmem:[%s3 + $0x2a4] sm:$0xf] %vm5240, %v4673
  %5411 = vst.msk [vmem:[%s3 + $0x2a8] sm:$0xf] %vm5240, %v4674
  %5412 = vst.msk [vmem:[%s3 + $0x2ac] sm:$0xf] %vm5240, %v4675
  %5413 = vst.msk [vmem:[%s3 + $0x2b0] sm:$0xf] %vm5240, %v4676
  %5414 = vst.msk [vmem:[%s3 + $0x2b4] sm:$0xf] %vm5240, %v4677
  %5415 = vst.msk [vmem:[%s3 + $0x2b8] sm:$0xf] %vm5240, %v4678
  %5416 = vst.msk [vmem:[%s3 + $0x2bc] sm:$0xf] %vm5240, %v4679
  %5417 = vst.msk [vmem:[%s3 + $0x2c0] sm:$0xf] %vm5240, %v4680
  %5418 = vst.msk [vmem:[%s3 + $0x2c4] sm:$0xf] %vm5240, %v4681
  %5419 = vst.msk [vmem:[%s3 + $0x2c8] sm:$0xf] %vm5240, %v4682
  %5420 = vst.msk [vmem:[%s3 + $0x2cc] sm:$0xf] %vm5240, %v4683
  %5421 = vst.msk [vmem:[%s3 + $0x2d0] sm:$0xf] %vm5240, %v4684
  %5422 = vst.msk [vmem:[%s3 + $0x2d4] sm:$0xf] %vm5240, %v4685
  %5423 = vst.msk [vmem:[%s3 + $0x2d8] sm:$0xf] %vm5240, %v4686
  %5424 = vst.msk [vmem:[%s3 + $0x2dc] sm:$0xf] %vm5240, %v4687
  %5425 = vst.msk [vmem:[%s3 + $0x2e0] sm:$0xf] %vm5240, %v4688
  %5426 = vst.msk [vmem:[%s3 + $0x2e4] sm:$0xf] %vm5240, %v4689
  %5427 = vst.msk [vmem:[%s3 + $0x2e8] sm:$0xf] %vm5240, %v4690
  %5428 = vst.msk [vmem:[%s3 + $0x2ec] sm:$0xf] %vm5240, %v4691
  %5429 = vst.msk [vmem:[%s3 + $0x2f0] sm:$0xf] %vm5240, %v4692
  %5430 = vst.msk [vmem:[%s3 + $0x2f4] sm:$0xf] %vm5240, %v4693
  %5431 = vst.msk [vmem:[%s3 + $0x2f8] sm:$0xf] %vm5240, %v4694
  %5432 = vst.msk [vmem:[%s3 + $0x2fc] sm:$0xf] %vm5240, %v4695
  %5433 = vst.msk [vmem:[%s3 + $0x300] sm:$0xf] %vm5240, %v4696
  %5434 = vst.msk [vmem:[%s3 + $0x304] sm:$0xf] %vm5240, %v4697
  %5435 = vst.msk [vmem:[%s3 + $0x308] sm:$0xf] %vm5240, %v4698
  %5436 = vst.msk [vmem:[%s3 + $0x30c] sm:$0xf] %vm5240, %v4699
  %5437 = vst.msk [vmem:[%s3 + $0x310] sm:$0xf] %vm5240, %v4700
  %5438 = vst.msk [vmem:[%s3 + $0x314] sm:$0xf] %vm5240, %v4701
  %5439 = vst.msk [vmem:[%s3 + $0x318] sm:$0xf] %vm5240, %v4702
  %5440 = vst.msk [vmem:[%s3 + $0x31c] sm:$0xf] %vm5240, %v4703
  %5441 = vst.msk [vmem:[%s3 + $0x320] sm:$0xf] %vm5240, %v4704
  %5442 = vst.msk [vmem:[%s3 + $0x324] sm:$0xf] %vm5240, %v4705
  %5443 = vst.msk [vmem:[%s3 + $0x328] sm:$0xf] %vm5240, %v4706
  %5444 = vst.msk [vmem:[%s3 + $0x32c] sm:$0xf] %vm5240, %v4707
  %5445 = vst.msk [vmem:[%s3 + $0x330] sm:$0xf] %vm5240, %v4708
  %5446 = vst.msk [vmem:[%s3 + $0x334] sm:$0xf] %vm5240, %v4709
  %5447 = vst.msk [vmem:[%s3 + $0x338] sm:$0xf] %vm5240, %v4710
  %5448 = vst.msk [vmem:[%s3 + $0x33c] sm:$0xf] %vm5240, %v4711
  %5449 = vst.msk [vmem:[%s3 + $0x340] sm:$0xf] %vm5240, %v4712
  %5450 = vst.msk [vmem:[%s3 + $0x344] sm:$0xf] %vm5240, %v4713
  %5451 = vst.msk [vmem:[%s3 + $0x348] sm:$0xf] %vm5240, %v4714
  %5452 = vst.msk [vmem:[%s3 + $0x34c] sm:$0xf] %vm5240, %v4715
  %5453 = vst.msk [vmem:[%s3 + $0x350] sm:$0xf] %vm5240, %v4716
  %5454 = vst.msk [vmem:[%s3 + $0x354] sm:$0xf] %vm5240, %v4717
  %5455 = vst.msk [vmem:[%s3 + $0x358] sm:$0xf] %vm5240, %v4718
  %5456 = vst.msk [vmem:[%s3 + $0x35c] sm:$0xf] %vm5240, %v4719
  %5457 = vst.msk [vmem:[%s3 + $0x360] sm:$0xf] %vm5240, %v4720
  %5458 = vst.msk [vmem:[%s3 + $0x364] sm:$0xf] %vm5240, %v4721
  %5459 = vst.msk [vmem:[%s3 + $0x368] sm:$0xf] %vm5240, %v4722
  %5460 = vst.msk [vmem:[%s3 + $0x36c] sm:$0xf] %vm5240, %v4723
  %5461 = vst.msk [vmem:[%s3 + $0x370] sm:$0xf] %vm5240, %v4724
  %5462 = vst.msk [vmem:[%s3 + $0x374] sm:$0xf] %vm5240, %v4725
  %5463 = vst.msk [vmem:[%s3 + $0x378] sm:$0xf] %vm5240, %v4726
  %5464 = vst.msk [vmem:[%s3 + $0x37c] sm:$0xf] %vm5240, %v4727
  %5465 = vst.msk [vmem:[%s3 + $0x380] sm:$0xf] %vm5240, %v4728
  %5466 = vst.msk [vmem:[%s3 + $0x384] sm:$0xf] %vm5240, %v4729
  %5467 = vst.msk [vmem:[%s3 + $0x388] sm:$0xf] %vm5240, %v4730
  %5468 = vst.msk [vmem:[%s3 + $0x38c] sm:$0xf] %vm5240, %v4731
  %5469 = vst.msk [vmem:[%s3 + $0x390] sm:$0xf] %vm5240, %v4732
  %5470 = vst.msk [vmem:[%s3 + $0x394] sm:$0xf] %vm5240, %v4733
  %5471 = vst.msk [vmem:[%s3 + $0x398] sm:$0xf] %vm5240, %v4734
  %5472 = vst.msk [vmem:[%s3 + $0x39c] sm:$0xf] %vm5240, %v4735
  %5473 = vst.msk [vmem:[%s3 + $0x3a0] sm:$0xf] %vm5240, %v4736
  %5474 = vst.msk [vmem:[%s3 + $0x3a4] sm:$0xf] %vm5240, %v4737
  %5475 = vst.msk [vmem:[%s3 + $0x3a8] sm:$0xf] %vm5240, %v4738
  %5476 = vst.msk [vmem:[%s3 + $0x3ac] sm:$0xf] %vm5240, %v4739
  %5477 = vst.msk [vmem:[%s3 + $0x3b0] sm:$0xf] %vm5240, %v4740
  %5478 = vst.msk [vmem:[%s3 + $0x3b4] sm:$0xf] %vm5240, %v4741
  %5479 = vst.msk [vmem:[%s3 + $0x3b8] sm:$0xf] %vm5240, %v4742
  %5480 = vst.msk [vmem:[%s3 + $0x3bc] sm:$0xf] %vm5240, %v4743
  %5481 = vst.msk [vmem:[%s3 + $0x3c0] sm:$0xf] %vm5240, %v4744
  %5482 = vst.msk [vmem:[%s3 + $0x3c4] sm:$0xf] %vm5240, %v4745
  %5483 = vst.msk [vmem:[%s3 + $0x3c8] sm:$0xf] %vm5240, %v4746
  %5484 = vst.msk [vmem:[%s3 + $0x3cc] sm:$0xf] %vm5240, %v4747
  %5485 = vst.msk [vmem:[%s3 + $0x3d0] sm:$0xf] %vm5240, %v4748
  %5486 = vst.msk [vmem:[%s3 + $0x3d4] sm:$0xf] %vm5240, %v4749
  %5487 = vst.msk [vmem:[%s3 + $0x3d8] sm:$0xf] %vm5240, %v4750
  %5488 = vst.msk [vmem:[%s3 + $0x3dc] sm:$0xf] %vm5240, %v4751
  %5489 = vst.msk [vmem:[%s3 + $0x3e0] sm:$0xf] %vm5240, %v4752
  %5490 = vst.msk [vmem:[%s3 + $0x3e4] sm:$0xf] %vm5240, %v4753
  %5491 = vst.msk [vmem:[%s3 + $0x3e8] sm:$0xf] %vm5240, %v4754
  %5492 = vst.msk [vmem:[%s3 + $0x3ec] sm:$0xf] %vm5240, %v4755
  %5493 = vst.msk [vmem:[%s3 + $0x3f0] sm:$0xf] %vm5240, %v4756
  %5494 = vst.msk [vmem:[%s3 + $0x3f4] sm:$0xf] %vm5240, %v4757
  %5495 = vst.msk [vmem:[%s3 + $0x3f8] sm:$0xf] %vm5240, %v4758
  %5496 = vst.msk [vmem:[%s3 + $0x3fc] sm:$0xf] %vm5240, %v4759
  %5497 = vst.msk [vmem:[%s3 + $0x400] sm:$0xf] %vm5240, %v4760
  %5498 = vst.msk [vmem:[%s3 + $0x404] sm:$0xf] %vm5240, %v4761
  %5499 = vst.msk [vmem:[%s3 + $0x408] sm:$0xf] %vm5240, %v4762
  %5500 = vst.msk [vmem:[%s3 + $0x40c] sm:$0xf] %vm5240, %v4763
  %5501 = vst.msk [vmem:[%s3 + $0x410] sm:$0xf] %vm5240, %v4764
  %5502 = vst.msk [vmem:[%s3 + $0x414] sm:$0xf] %vm5240, %v4765
  %5503 = vst.msk [vmem:[%s3 + $0x418] sm:$0xf] %vm5240, %v4766
  %5504 = vst.msk [vmem:[%s3 + $0x41c] sm:$0xf] %vm5240, %v4767
  %5505 = vst.msk [vmem:[%s3 + $0x420] sm:$0xf] %vm5240, %v4768
  %5506 = vst.msk [vmem:[%s3 + $0x424] sm:$0xf] %vm5240, %v4769
  %5507 = vst.msk [vmem:[%s3 + $0x428] sm:$0xf] %vm5240, %v4770
  %5508 = vst.msk [vmem:[%s3 + $0x42c] sm:$0xf] %vm5240, %v4771
  %5509 = vst.msk [vmem:[%s3 + $0x430] sm:$0xf] %vm5240, %v4772
  %5510 = vst.msk [vmem:[%s3 + $0x434] sm:$0xf] %vm5240, %v4773
  %5511 = vst.msk [vmem:[%s3 + $0x438] sm:$0xf] %vm5240, %v4774
  %5512 = vst.msk [vmem:[%s3 + $0x43c] sm:$0xf] %vm5240, %v4775
  %5513 = vst.msk [vmem:[%s3 + $0x440] sm:$0xf] %vm5240, %v4776
  %5514 = vst.msk [vmem:[%s3 + $0x444] sm:$0xf] %vm5240, %v4777
  %5515 = vst.msk [vmem:[%s3 + $0x448] sm:$0xf] %vm5240, %v4778
  %5516 = vst.msk [vmem:[%s3 + $0x44c] sm:$0xf] %vm5240, %v4779
  %5517 = vst.msk [vmem:[%s3 + $0x450] sm:$0xf] %vm5240, %v4780
  %5518 = vst.msk [vmem:[%s3 + $0x454] sm:$0xf] %vm5240, %v4781
  %5519 = vst.msk [vmem:[%s3 + $0x458] sm:$0xf] %vm5240, %v4782
  %5520 = vst.msk [vmem:[%s3 + $0x45c] sm:$0xf] %vm5240, %v4783
  %5521 = vst.msk [vmem:[%s3 + $0x460] sm:$0xf] %vm5240, %v4784
  %5522 = vst.msk [vmem:[%s3 + $0x464] sm:$0xf] %vm5240, %v4785
  %5523 = vst.msk [vmem:[%s3 + $0x468] sm:$0xf] %vm5240, %v4786
  %5524 = vst.msk [vmem:[%s3 + $0x46c] sm:$0xf] %vm5240, %v4787
  %5525 = vst.msk [vmem:[%s3 + $0x470] sm:$0xf] %vm5240, %v4788
  %5526 = vst.msk [vmem:[%s3 + $0x474] sm:$0xf] %vm5240, %v4789
  %5527 = vst.msk [vmem:[%s3 + $0x478] sm:$0xf] %vm5240, %v4790
  %5528 = vst.msk [vmem:[%s3 + $0x47c] sm:$0xf] %vm5240, %v4791
  %5529 = vst.msk [vmem:[%s3 + $0x480] sm:$0xf] %vm5240, %v4792
  %5530 = vst.msk [vmem:[%s3 + $0x484] sm:$0xf] %vm5240, %v4793
  %5531 = vst.msk [vmem:[%s3 + $0x488] sm:$0xf] %vm5240, %v4794
  %5532 = vst.msk [vmem:[%s3 + $0x48c] sm:$0xf] %vm5240, %v4795
  %5533 = vst.msk [vmem:[%s3 + $0x490] sm:$0xf] %vm5240, %v4796
  %5534 = vst.msk [vmem:[%s3 + $0x494] sm:$0xf] %vm5240, %v4797
  %5535 = vst.msk [vmem:[%s3 + $0x498] sm:$0xf] %vm5240, %v4798
  %5536 = vst.msk [vmem:[%s3 + $0x49c] sm:$0xf] %vm5240, %v4799
  %5537 = vst.msk [vmem:[%s3 + $0x4a0] sm:$0xf] %vm5240, %v4800
  %5538 = vst.msk [vmem:[%s3 + $0x4a4] sm:$0xf] %vm5240, %v4801
  %5539 = vst.msk [vmem:[%s3 + $0x4a8] sm:$0xf] %vm5240, %v4802
  %5540 = vst.msk [vmem:[%s3 + $0x4ac] sm:$0xf] %vm5240, %v4803
  %5541 = vst.msk [vmem:[%s3 + $0x4b0] sm:$0xf] %vm5240, %v4804
  %5542 = vst.msk [vmem:[%s3 + $0x4b4] sm:$0xf] %vm5240, %v4805
  %5543 = vst.msk [vmem:[%s3 + $0x4b8] sm:$0xf] %vm5240, %v4806
  %5544 = vst.msk [vmem:[%s3 + $0x4bc] sm:$0xf] %vm5240, %v4807
  %5545 = vst.msk [vmem:[%s3 + $0x4c0] sm:$0xf] %vm5240, %v4808
  %5546 = vst.msk [vmem:[%s3 + $0x4c4] sm:$0xf] %vm5240, %v4809
  %5547 = vst.msk [vmem:[%s3 + $0x4c8] sm:$0xf] %vm5240, %v4810
  %5548 = vst.msk [vmem:[%s3 + $0x4cc] sm:$0xf] %vm5240, %v4811
  %5549 = vst.msk [vmem:[%s3 + $0x4d0] sm:$0xf] %vm5240, %v4812
  %5550 = vst.msk [vmem:[%s3 + $0x4d4] sm:$0xf] %vm5240, %v4813
  %5551 = vst.msk [vmem:[%s3 + $0x4d8] sm:$0xf] %vm5240, %v4814
  %5552 = vst.msk [vmem:[%s3 + $0x4dc] sm:$0xf] %vm5240, %v4815
  %5553 = vst.msk [vmem:[%s3 + $0x4e0] sm:$0xf] %vm5240, %v4816
  %5554 = vst.msk [vmem:[%s3 + $0x4e4] sm:$0xf] %vm5240, %v4817
  %5555 = vst.msk [vmem:[%s3 + $0x4e8] sm:$0xf] %vm5240, %v4818
  %5556 = vst.msk [vmem:[%s3 + $0x4ec] sm:$0xf] %vm5240, %v4819
  %5557 = vst.msk [vmem:[%s3 + $0x4f0] sm:$0xf] %vm5240, %v4820
  %5558 = vst.msk [vmem:[%s3 + $0x4f4] sm:$0xf] %vm5240, %v4821
  %5559 = vst.msk [vmem:[%s3 + $0x4f8] sm:$0xf] %vm5240, %v4822
  %5560 = vst.msk [vmem:[%s3 + $0x4fc] sm:$0xf] %vm5240, %v4823
  %5561 = vst.msk [vmem:[%s3 + $0x500] sm:$0xf] %vm5240, %v4824
  %5562 = vst.msk [vmem:[%s3 + $0x504] sm:$0xf] %vm5240, %v4825
  %5563 = vst.msk [vmem:[%s3 + $0x508] sm:$0xf] %vm5240, %v4826
  %5564 = vst.msk [vmem:[%s3 + $0x50c] sm:$0xf] %vm5240, %v4827
  %5565 = vst.msk [vmem:[%s3 + $0x510] sm:$0xf] %vm5240, %v4828
  %5566 = vst.msk [vmem:[%s3 + $0x514] sm:$0xf] %vm5240, %v4829
  %5567 = vst.msk [vmem:[%s3 + $0x518] sm:$0xf] %vm5240, %v4830
  %5568 = vst.msk [vmem:[%s3 + $0x51c] sm:$0xf] %vm5240, %v4831
  %5569 = vst.msk [vmem:[%s3 + $0x520] sm:$0xf] %vm5240, %v4832
  %5570 = vst.msk [vmem:[%s3 + $0x524] sm:$0xf] %vm5240, %v4833
  %5571 = vst.msk [vmem:[%s3 + $0x528] sm:$0xf] %vm5240, %v4834
  %5572 = vst.msk [vmem:[%s3 + $0x52c] sm:$0xf] %vm5240, %v4835
  %5573 = vst.msk [vmem:[%s3 + $0x530] sm:$0xf] %vm5240, %v4836
  %5574 = vst.msk [vmem:[%s3 + $0x534] sm:$0xf] %vm5240, %v4837
  %5575 = vst.msk [vmem:[%s3 + $0x538] sm:$0xf] %vm5240, %v4838
  %5576 = vst.msk [vmem:[%s3 + $0x53c] sm:$0xf] %vm5240, %v4839
  %5577 = vst.msk [vmem:[%s3 + $0x540] sm:$0xf] %vm5240, %v4840
  %5578 = vst.msk [vmem:[%s3 + $0x544] sm:$0xf] %vm5240, %v4841
  %5579 = vst.msk [vmem:[%s3 + $0x548] sm:$0xf] %vm5240, %v4842
  %5580 = vst.msk [vmem:[%s3 + $0x54c] sm:$0xf] %vm5240, %v4843
  %5581 = vst.msk [vmem:[%s3 + $0x550] sm:$0xf] %vm5240, %v4844
  %5582 = vst.msk [vmem:[%s3 + $0x554] sm:$0xf] %vm5240, %v4845
  %5583 = vst.msk [vmem:[%s3 + $0x558] sm:$0xf] %vm5240, %v4846
  %5584 = vst.msk [vmem:[%s3 + $0x55c] sm:$0xf] %vm5240, %v4847
  %5585 = vst.msk [vmem:[%s3 + $0x560] sm:$0xf] %vm5240, %v4848
  %5586 = vst.msk [vmem:[%s3 + $0x564] sm:$0xf] %vm5240, %v4849
  %5587 = vst.msk [vmem:[%s3 + $0x568] sm:$0xf] %vm5240, %v4850
  %5588 = vst.msk [vmem:[%s3 + $0x56c] sm:$0xf] %vm5240, %v4851
  %5589 = vst.msk [vmem:[%s3 + $0x570] sm:$0xf] %vm5240, %v4852
  %5590 = vst.msk [vmem:[%s3 + $0x574] sm:$0xf] %vm5240, %v4853
  %5591 = vst.msk [vmem:[%s3 + $0x578] sm:$0xf] %vm5240, %v4854
  %5592 = vst.msk [vmem:[%s3 + $0x57c] sm:$0xf] %vm5240, %v4855
  %5593 = vst.msk [vmem:[%s3 + $0x580] sm:$0xf] %vm5240, %v4856
  %5594 = vst.msk [vmem:[%s3 + $0x584] sm:$0xf] %vm5240, %v4857
  %5595 = vst.msk [vmem:[%s3 + $0x588] sm:$0xf] %vm5240, %v4858
  %5596 = vst.msk [vmem:[%s3 + $0x58c] sm:$0xf] %vm5240, %v4859
  %5597 = vst.msk [vmem:[%s3 + $0x590] sm:$0xf] %vm5240, %v4860
  %5598 = vst.msk [vmem:[%s3 + $0x594] sm:$0xf] %vm5240, %v4861
  %5599 = vst.msk [vmem:[%s3 + $0x598] sm:$0xf] %vm5240, %v4862
  %5600 = vst.msk [vmem:[%s3 + $0x59c] sm:$0xf] %vm5240, %v4863
  %5601 = vst.msk [vmem:[%s3 + $0x5a0] sm:$0xf] %vm5240, %v4864
  %5602 = vst.msk [vmem:[%s3 + $0x5a4] sm:$0xf] %vm5240, %v4865
  %5603 = vst.msk [vmem:[%s3 + $0x5a8] sm:$0xf] %vm5240, %v4866
  %5604 = vst.msk [vmem:[%s3 + $0x5ac] sm:$0xf] %vm5240, %v4867
  %5605 = vst.msk [vmem:[%s3 + $0x5b0] sm:$0xf] %vm5240, %v4868
  %5606 = vst.msk [vmem:[%s3 + $0x5b4] sm:$0xf] %vm5240, %v4869
  %5607 = vst.msk [vmem:[%s3 + $0x5b8] sm:$0xf] %vm5240, %v4870
  %5608 = vst.msk [vmem:[%s3 + $0x5bc] sm:$0xf] %vm5240, %v4871
  // Predicated region
  $region14: #{policy_forward.2} parent=0 // pred_check
    _
  $region15: #{policy_forward.2} parent=0 // pred_check_branch
    %5610 = sbr.rel (0) target = $region17
  $region16: #{policy_forward.2} parent=0 // pred_region
    _
  $region17: #{policy_forward.2} parent=0 // pred_fallthru
    _
  // Predicated region
  $region18: #{policy_forward.2} parent=0 // pred_check
    _
  $region19: #{policy_forward.2} parent=0 // pred_check_branch
    %5612 = sbr.rel (0) target = $region21
  $region20: #{policy_forward.2} parent=0 // pred_region
    _
  $region21: #{policy_forward.2} parent=0 // pred_fallthru
    _

// kernel: policy_forward.3
$region0: #{policy_forward.3}
  #allocation0 [shape = 'u32[]', space=smem, size = 0x4, offset = 0x4, fixed_abs, tag = 'smem constant byte address 0x4 - core index']
  #allocation1 [shape = 'u32[144,128]{1,0:T(1,128)}', space=vmem, size = 0x12000, scoped, tag = 'internal scratch']
  %s0 = inlined_call_operand.vmem [shape: bf16[8,8,2048], index: 0, kind: input, shape index: {}]
  %s1 = inlined_call_operand.vmem [shape: bf16[2048,256], index: 1, kind: input, shape index: {}]
  %s2 = inlined_call_operand.vmem [shape: f32[1,256], index: 2, kind: input, shape index: {}]
  %s3 = inlined_call_operand.vmem [shape: bf16[8,256,128], index: 3, kind: input, shape index: {}]
  %s4 = inlined_call_operand.vmem [shape: f32[1,128], index: 4, kind: input, shape index: {}]
  %s5 = inlined_call_operand.vmem [shape: bf16[128,6], index: 5, kind: input, shape index: {}]
  %s6 = inlined_call_operand.vmem [shape: f32[1,6], index: 6, kind: input, shape index: {}]
  %s7 = inlined_call_operand.vmem [shape: f32[8,6], index: 7, kind: output, shape index: {}]
  %s8 = sld [smem:[#allocation0]]
  $region38: #{policy_forward.3} parent=0
    _
  %s10 = ssub.s32 1, %s8
  %s11 = scalar_select 0, %s10, %s8
  // Predicated region
  $region2: #{policy_forward.3} parent=0 // pred_check
    _
  $region3: #{policy_forward.3} parent=0 // pred_check_branch
    %13 = sbr.rel (0) target = $region5
  $region4: #{policy_forward.3} parent=0 // pred_region
    _
  $region5: #{policy_forward.3} parent=0 // pred_fallthru
    _
  // Predicated region
  $region6: #{policy_forward.3} parent=0 // pred_check
    _
  $region7: #{policy_forward.3} parent=0 // pred_check_branch
    %15 = sbr.rel (0) target = $region9
  $region8: #{policy_forward.3} parent=0 // pred_region
    _
  $region9: #{policy_forward.3} parent=0 // pred_fallthru
    _
  // Predicated region
  $region10: #{policy_forward.3} parent=0 // pred_check
    _
  $region11: #{policy_forward.3} parent=0 // pred_check_branch
    %17 = sbr.rel (0) target = $region13
  $region12: #{policy_forward.3} parent=0 // pred_region
    _
  $region13: #{policy_forward.3} parent=0 // pred_fallthru
    _
  // Predicated region
  $region14: #{policy_forward.3} parent=0 // pred_check
    _
  $region15: #{policy_forward.3} parent=0 // pred_check_branch
    %19 = sbr.rel (0) target = $region17
  $region16: #{policy_forward.3} parent=0 // pred_region
    _
  $region17: #{policy_forward.3} parent=0 // pred_fallthru
    _
  // Predicated region
  $region18: #{policy_forward.3} parent=0 // pred_check
    _
  $region19: #{policy_forward.3} parent=0 // pred_check_branch
    %21 = sbr.rel (0) target = $region21
  $region20: #{policy_forward.3} parent=0 // pred_region
    _
  $region21: #{policy_forward.3} parent=0 // pred_fallthru
    _
  // Predicated region
  $region22: #{policy_forward.3} parent=0 // pred_check
    _
  $region23: #{policy_forward.3} parent=0 // pred_check_branch
    %23 = sbr.rel (0) target = $region25
  $region24: #{policy_forward.3} parent=0 // pred_region
    _
  $region25: #{policy_forward.3} parent=0 // pred_fallthru
    _
  // Predicated region
  $region26: #{policy_forward.3} parent=0 // pred_check
    _
  $region27: #{policy_forward.3} parent=0 // pred_check_branch
    %25 = sbr.rel (0) target = $region29
  $region28: #{policy_forward.3} parent=0 // pred_region
    _
  $region29: #{policy_forward.3} parent=0 // pred_fallthru
    _
  %v27 = vld [vmem:[%s1] sm:$0xff]
  %v28 = vld [vmem:[%s1 + $0x8] sm:$0xff]
  %v29 = vld [vmem:[%s1 + $0x10] sm:$0xff]
  %v30 = vld [vmem:[%s1 + $0x18] sm:$0xff]
  %v31 = vld [vmem:[%s1 + $0x20] sm:$0xff]
  %v32 = vld [vmem:[%s1 + $0x28] sm:$0xff]
  %v33 = vld [vmem:[%s1 + $0x30] sm:$0xff]
  %v34 = vld [vmem:[%s1 + $0x38] sm:$0xff]
  %v35 = vld [vmem:[%s1 + $0x40] sm:$0xff]
  %v36 = vld [vmem:[%s1 + $0x48] sm:$0xff]
  %v37 = vld [vmem:[%s1 + $0x50] sm:$0xff]
  %v38 = vld [vmem:[%s1 + $0x58] sm:$0xff]
  %v39 = vld [vmem:[%s1 + $0x60] sm:$0xff]
  %v40 = vld [vmem:[%s1 + $0x68] sm:$0xff]
  %v41 = vld [vmem:[%s1 + $0x70] sm:$0xff]
  %v42 = vld [vmem:[%s1 + $0x78] sm:$0xff]
  %v43 = vld [vmem:[%s1 + $0x80] sm:$0xff]
  %v44 = vld [vmem:[%s1 + $0x88] sm:$0xff]
  %v45 = vld [vmem:[%s1 + $0x90] sm:$0xff]
  %v46 = vld [vmem:[%s1 + $0x98] sm:$0xff]
  %v47 = vld [vmem:[%s1 + $0xa0] sm:$0xff]
  %v48 = vld [vmem:[%s1 + $0xa8] sm:$0xff]
  %v49 = vld [vmem:[%s1 + $0xb0] sm:$0xff]
  %v50 = vld [vmem:[%s1 + $0xb8] sm:$0xff]
  %v51 = vld [vmem:[%s1 + $0xc0] sm:$0xff]
  %v52 = vld [vmem:[%s1 + $0xc8] sm:$0xff]
  %v53 = vld [vmem:[%s1 + $0xd0] sm:$0xff]
  %v54 = vld [vmem:[%s1 + $0xd8] sm:$0xff]
  %v55 = vld [vmem:[%s1 + $0xe0] sm:$0xff]
  %v56 = vld [vmem:[%s1 + $0xe8] sm:$0xff]
  %v57 = vld [vmem:[%s1 + $0xf0] sm:$0xff]
  %v58 = vld [vmem:[%s1 + $0xf8] sm:$0xff]
  %v59 = vld [vmem:[%s1 + $0x100] sm:$0xff]
  %v60 = vld [vmem:[%s1 + $0x108] sm:$0xff]
  %v61 = vld [vmem:[%s1 + $0x110] sm:$0xff]
  %v62 = vld [vmem:[%s1 + $0x118] sm:$0xff]
  %v63 = vld [vmem:[%s1 + $0x120] sm:$0xff]
  %v64 = vld [vmem:[%s1 + $0x128] sm:$0xff]
  %v65 = vld [vmem:[%s1 + $0x130] sm:$0xff]
  %v66 = vld [vmem:[%s1 + $0x138] sm:$0xff]
  %v67 = vld [vmem:[%s1 + $0x140] sm:$0xff]
  %v68 = vld [vmem:[%s1 + $0x148] sm:$0xff]
  %v69 = vld [vmem:[%s1 + $0x150] sm:$0xff]
  %v70 = vld [vmem:[%s1 + $0x158] sm:$0xff]
  %v71 = vld [vmem:[%s1 + $0x160] sm:$0xff]
  %v72 = vld [vmem:[%s1 + $0x168] sm:$0xff]
  %v73 = vld [vmem:[%s1 + $0x170] sm:$0xff]
  %v74 = vld [vmem:[%s1 + $0x178] sm:$0xff]
  %v75 = vld [vmem:[%s1 + $0x180] sm:$0xff]
  %v76 = vld [vmem:[%s1 + $0x188] sm:$0xff]
  %v77 = vld [vmem:[%s1 + $0x190] sm:$0xff]
  %v78 = vld [vmem:[%s1 + $0x198] sm:$0xff]
  %v79 = vld [vmem:[%s1 + $0x1a0] sm:$0xff]
  %v80 = vld [vmem:[%s1 + $0x1a8] sm:$0xff]
  %v81 = vld [vmem:[%s1 + $0x1b0] sm:$0xff]
  %v82 = vld [vmem:[%s1 + $0x1b8] sm:$0xff]
  %v83 = vld [vmem:[%s1 + $0x1c0] sm:$0xff]
  %v84 = vld [vmem:[%s1 + $0x1c8] sm:$0xff]
  %v85 = vld [vmem:[%s1 + $0x1d0] sm:$0xff]
  %v86 = vld [vmem:[%s1 + $0x1d8] sm:$0xff]
  %v87 = vld [vmem:[%s1 + $0x1e0] sm:$0xff]
  %v88 = vld [vmem:[%s1 + $0x1e8] sm:$0xff]
  %v89 = vld [vmem:[%s1 + $0x1f0] sm:$0xff]
  %v90 = vld [vmem:[%s1 + $0x1f8] sm:$0xff]
  %v91 = vld [vmem:[%s1 + $0x200] sm:$0xff]
  %v92 = vld [vmem:[%s1 + $0x208] sm:$0xff]
  %v93 = vld [vmem:[%s1 + $0x210] sm:$0xff]
  %v94 = vld [vmem:[%s1 + $0x218] sm:$0xff]
  %v95 = vld [vmem:[%s1 + $0x220] sm:$0xff]
  %v96 = vld [vmem:[%s1 + $0x228] sm:$0xff]
  %v97 = vld [vmem:[%s1 + $0x230] sm:$0xff]
  %v98 = vld [vmem:[%s1 + $0x238] sm:$0xff]
  %v99 = vld [vmem:[%s1 + $0x240] sm:$0xff]
  %v100 = vld [vmem:[%s1 + $0x248] sm:$0xff]
  %v101 = vld [vmem:[%s1 + $0x250] sm:$0xff]
  %v102 = vld [vmem:[%s1 + $0x258] sm:$0xff]
  %v103 = vld [vmem:[%s1 + $0x260] sm:$0xff]
  %v104 = vld [vmem:[%s1 + $0x268] sm:$0xff]
  %v105 = vld [vmem:[%s1 + $0x270] sm:$0xff]
  %v106 = vld [vmem:[%s1 + $0x278] sm:$0xff]
  %v107 = vld [vmem:[%s1 + $0x280] sm:$0xff]
  %v108 = vld [vmem:[%s1 + $0x288] sm:$0xff]
  %v109 = vld [vmem:[%s1 + $0x290] sm:$0xff]
  %v110 = vld [vmem:[%s1 + $0x298] sm:$0xff]
  %v111 = vld [vmem:[%s1 + $0x2a0] sm:$0xff]
  %v112 = vld [vmem:[%s1 + $0x2a8] sm:$0xff]
  %v113 = vld [vmem:[%s1 + $0x2b0] sm:$0xff]
  %v114 = vld [vmem:[%s1 + $0x2b8] sm:$0xff]
  %v115 = vld [vmem:[%s1 + $0x2c0] sm:$0xff]
  %v116 = vld [vmem:[%s1 + $0x2c8] sm:$0xff]
  %v117 = vld [vmem:[%s1 + $0x2d0] sm:$0xff]
  %v118 = vld [vmem:[%s1 + $0x2d8] sm:$0xff]
  %v119 = vld [vmem:[%s1 + $0x2e0] sm:$0xff]
  %v120 = vld [vmem:[%s1 + $0x2e8] sm:$0xff]
  %v121 = vld [vmem:[%s1 + $0x2f0] sm:$0xff]
  %v122 = vld [vmem:[%s1 + $0x2f8] sm:$0xff]
  %v123 = vld [vmem:[%s1 + $0x300] sm:$0xff]
  %v124 = vld [vmem:[%s1 + $0x308] sm:$0xff]
  %v125 = vld [vmem:[%s1 + $0x310] sm:$0xff]
  %v126 = vld [vmem:[%s1 + $0x318] sm:$0xff]
  %v127 = vld [vmem:[%s1 + $0x320] sm:$0xff]
  %v128 = vld [vmem:[%s1 + $0x328] sm:$0xff]
  %v129 = vld [vmem:[%s1 + $0x330] sm:$0xff]
  %v130 = vld [vmem:[%s1 + $0x338] sm:$0xff]
  %v131 = vld [vmem:[%s1 + $0x340] sm:$0xff]
  %v132 = vld [vmem:[%s1 + $0x348] sm:$0xff]
  %v133 = vld [vmem:[%s1 + $0x350] sm:$0xff]
  %v134 = vld [vmem:[%s1 + $0x358] sm:$0xff]
  %v135 = vld [vmem:[%s1 + $0x360] sm:$0xff]
  %v136 = vld [vmem:[%s1 + $0x368] sm:$0xff]
  %v137 = vld [vmem:[%s1 + $0x370] sm:$0xff]
  %v138 = vld [vmem:[%s1 + $0x378] sm:$0xff]
  %v139 = vld [vmem:[%s1 + $0x380] sm:$0xff]
  %v140 = vld [vmem:[%s1 + $0x388] sm:$0xff]
  %v141 = vld [vmem:[%s1 + $0x390] sm:$0xff]
  %v142 = vld [vmem:[%s1 + $0x398] sm:$0xff]
  %v143 = vld [vmem:[%s1 + $0x3a0] sm:$0xff]
  %v144 = vld [vmem:[%s1 + $0x3a8] sm:$0xff]
  %v145 = vld [vmem:[%s1 + $0x3b0] sm:$0xff]
  %v146 = vld [vmem:[%s1 + $0x3b8] sm:$0xff]
  %v147 = vld [vmem:[%s1 + $0x3c0] sm:$0xff]
  %v148 = vld [vmem:[%s1 + $0x3c8] sm:$0xff]
  %v149 = vld [vmem:[%s1 + $0x3d0] sm:$0xff]
  %v150 = vld [vmem:[%s1 + $0x3d8] sm:$0xff]
  %v151 = vld [vmem:[%s1 + $0x3e0] sm:$0xff]
  %v152 = vld [vmem:[%s1 + $0x3e8] sm:$0xff]
  %v153 = vld [vmem:[%s1 + $0x3f0] sm:$0xff]
  %v154 = vld [vmem:[%s1 + $0x3f8] sm:$0xff]
  %v155 = vld [vmem:[%s1 + $0x400] sm:$0xff]
  %v156 = vld [vmem:[%s1 + $0x408] sm:$0xff]
  %v157 = vld [vmem:[%s1 + $0x410] sm:$0xff]
  %v158 = vld [vmem:[%s1 + $0x418] sm:$0xff]
  %v159 = vld [vmem:[%s1 + $0x420] sm:$0xff]
  %v160 = vld [vmem:[%s1 + $0x428] sm:$0xff]
  %v161 = vld [vmem:[%s1 + $0x430] sm:$0xff]
  %v162 = vld [vmem:[%s1 + $0x438] sm:$0xff]
  %v163 = vld [vmem:[%s1 + $0x440] sm:$0xff]
  %v164 = vld [vmem:[%s1 + $0x448] sm:$0xff]
  %v165 = vld [vmem:[%s1 + $0x450] sm:$0xff]
  %v166 = vld [vmem:[%s1 + $0x458] sm:$0xff]
  %v167 = vld [vmem:[%s1 + $0x460] sm:$0xff]
  %v168 = vld [vmem:[%s1 + $0x468] sm:$0xff]
  %v169 = vld [vmem:[%s1 + $0x470] sm:$0xff]
  %v170 = vld [vmem:[%s1 + $0x478] sm:$0xff]
  %v171 = vld [vmem:[%s1 + $0x480] sm:$0xff]
  %v172 = vld [vmem:[%s1 + $0x488] sm:$0xff]
  %v173 = vld [vmem:[%s1 + $0x490] sm:$0xff]
  %v174 = vld [vmem:[%s1 + $0x498] sm:$0xff]
  %v175 = vld [vmem:[%s1 + $0x4a0] sm:$0xff]
  %v176 = vld [vmem:[%s1 + $0x4a8] sm:$0xff]
  %v177 = vld [vmem:[%s1 + $0x4b0] sm:$0xff]
  %v178 = vld [vmem:[%s1 + $0x4b8] sm:$0xff]
  %v179 = vld [vmem:[%s1 + $0x4c0] sm:$0xff]
  %v180 = vld [vmem:[%s1 + $0x4c8] sm:$0xff]
  %v181 = vld [vmem:[%s1 + $0x4d0] sm:$0xff]
  %v182 = vld [vmem:[%s1 + $0x4d8] sm:$0xff]
  %v183 = vld [vmem:[%s1 + $0x4e0] sm:$0xff]
  %v184 = vld [vmem:[%s1 + $0x4e8] sm:$0xff]
  %v185 = vld [vmem:[%s1 + $0x4f0] sm:$0xff]
  %v186 = vld [vmem:[%s1 + $0x4f8] sm:$0xff]
  %v187 = vld [vmem:[%s1 + $0x500] sm:$0xff]
  %v188 = vld [vmem:[%s1 + $0x508] sm:$0xff]
  %v189 = vld [vmem:[%s1 + $0x510] sm:$0xff]
  %v190 = vld [vmem:[%s1 + $0x518] sm:$0xff]
  %v191 = vld [vmem:[%s1 + $0x520] sm:$0xff]
  %v192 = vld [vmem:[%s1 + $0x528] sm:$0xff]
  %v193 = vld [vmem:[%s1 + $0x530] sm:$0xff]
  %v194 = vld [vmem:[%s1 + $0x538] sm:$0xff]
  %v195 = vld [vmem:[%s1 + $0x540] sm:$0xff]
  %v196 = vld [vmem:[%s1 + $0x548] sm:$0xff]
  %v197 = vld [vmem:[%s1 + $0x550] sm:$0xff]
  %v198 = vld [vmem:[%s1 + $0x558] sm:$0xff]
  %v199 = vld [vmem:[%s1 + $0x560] sm:$0xff]
  %v200 = vld [vmem:[%s1 + $0x568] sm:$0xff]
  %v201 = vld [vmem:[%s1 + $0x570] sm:$0xff]
  %v202 = vld [vmem:[%s1 + $0x578] sm:$0xff]
  %v203 = vld [vmem:[%s1 + $0x580] sm:$0xff]
  %v204 = vld [vmem:[%s1 + $0x588] sm:$0xff]
  %v205 = vld [vmem:[%s1 + $0x590] sm:$0xff]
  %v206 = vld [vmem:[%s1 + $0x598] sm:$0xff]
  %v207 = vld [vmem:[%s1 + $0x5a0] sm:$0xff]
  %v208 = vld [vmem:[%s1 + $0x5a8] sm:$0xff]
  %v209 = vld [vmem:[%s1 + $0x5b0] sm:$0xff]
  %v210 = vld [vmem:[%s1 + $0x5b8] sm:$0xff]
  %v211 = vld [vmem:[%s1 + $0x5c0] sm:$0xff]
  %v212 = vld [vmem:[%s1 + $0x5c8] sm:$0xff]
  %v213 = vld [vmem:[%s1 + $0x5d0] sm:$0xff]
  %v214 = vld [vmem:[%s1 + $0x5d8] sm:$0xff]
  %v215 = vld [vmem:[%s1 + $0x5e0] sm:$0xff]
  %v216 = vld [vmem:[%s1 + $0x5e8] sm:$0xff]
  %v217 = vld [vmem:[%s1 + $0x5f0] sm:$0xff]
  %v218 = vld [vmem:[%s1 + $0x5f8] sm:$0xff]
  %v219 = vld [vmem:[%s1 + $0x600] sm:$0xff]
  %v220 = vld [vmem:[%s1 + $0x608] sm:$0xff]
  %v221 = vld [vmem:[%s1 + $0x610] sm:$0xff]
  %v222 = vld [vmem:[%s1 + $0x618] sm:$0xff]
  %v223 = vld [vmem:[%s1 + $0x620] sm:$0xff]
  %v224 = vld [vmem:[%s1 + $0x628] sm:$0xff]
  %v225 = vld [vmem:[%s1 + $0x630] sm:$0xff]
  %v226 = vld [vmem:[%s1 + $0x638] sm:$0xff]
  %v227 = vld [vmem:[%s1 + $0x640] sm:$0xff]
  %v228 = vld [vmem:[%s1 + $0x648] sm:$0xff]
  %v229 = vld [vmem:[%s1 + $0x650] sm:$0xff]
  %v230 = vld [vmem:[%s1 + $0x658] sm:$0xff]
  %v231 = vld [vmem:[%s1 + $0x660] sm:$0xff]
  %v232 = vld [vmem:[%s1 + $0x668] sm:$0xff]
  %v233 = vld [vmem:[%s1 + $0x670] sm:$0xff]
  %v234 = vld [vmem:[%s1 + $0x678] sm:$0xff]
  %v235 = vld [vmem:[%s1 + $0x680] sm:$0xff]
  %v236 = vld [vmem:[%s1 + $0x688] sm:$0xff]
  %v237 = vld [vmem:[%s1 + $0x690] sm:$0xff]
  %v238 = vld [vmem:[%s1 + $0x698] sm:$0xff]
  %v239 = vld [vmem:[%s1 + $0x6a0] sm:$0xff]
  %v240 = vld [vmem:[%s1 + $0x6a8] sm:$0xff]
  %v241 = vld [vmem:[%s1 + $0x6b0] sm:$0xff]
  %v242 = vld [vmem:[%s1 + $0x6b8] sm:$0xff]
  %v243 = vld [vmem:[%s1 + $0x6c0] sm:$0xff]
  %v244 = vld [vmem:[%s1 + $0x6c8] sm:$0xff]
  %v245 = vld [vmem:[%s1 + $0x6d0] sm:$0xff]
  %v246 = vld [vmem:[%s1 + $0x6d8] sm:$0xff]
  %v247 = vld [vmem:[%s1 + $0x6e0] sm:$0xff]
  %v248 = vld [vmem:[%s1 + $0x6e8] sm:$0xff]
  %v249 = vld [vmem:[%s1 + $0x6f0] sm:$0xff]
  %v250 = vld [vmem:[%s1 + $0x6f8] sm:$0xff]
  %v251 = vld [vmem:[%s1 + $0x700] sm:$0xff]
  %v252 = vld [vmem:[%s1 + $0x708] sm:$0xff]
  %v253 = vld [vmem:[%s1 + $0x710] sm:$0xff]
  %v254 = vld [vmem:[%s1 + $0x718] sm:$0xff]
  %v255 = vld [vmem:[%s1 + $0x720] sm:$0xff]
  %v256 = vld [vmem:[%s1 + $0x728] sm:$0xff]
  %v257 = vld [vmem:[%s1 + $0x730] sm:$0xff]
  %v258 = vld [vmem:[%s1 + $0x738] sm:$0xff]
  %v259 = vld [vmem:[%s1 + $0x740] sm:$0xff]
  %v260 = vld [vmem:[%s1 + $0x748] sm:$0xff]
  %v261 = vld [vmem:[%s1 + $0x750] sm:$0xff]
  %v262 = vld [vmem:[%s1 + $0x758] sm:$0xff]
  %v263 = vld [vmem:[%s1 + $0x760] sm:$0xff]
  %v264 = vld [vmem:[%s1 + $0x768] sm:$0xff]
  %v265 = vld [vmem:[%s1 + $0x770] sm:$0xff]
  %v266 = vld [vmem:[%s1 + $0x778] sm:$0xff]
  %v267 = vld [vmem:[%s1 + $0x780] sm:$0xff]
  %v268 = vld [vmem:[%s1 + $0x788] sm:$0xff]
  %v269 = vld [vmem:[%s1 + $0x790] sm:$0xff]
  %v270 = vld [vmem:[%s1 + $0x798] sm:$0xff]
  %v271 = vld [vmem:[%s1 + $0x7a0] sm:$0xff]
  %v272 = vld [vmem:[%s1 + $0x7a8] sm:$0xff]
  %v273 = vld [vmem:[%s1 + $0x7b0] sm:$0xff]
  %v274 = vld [vmem:[%s1 + $0x7b8] sm:$0xff]
  %v275 = vld [vmem:[%s1 + $0x7c0] sm:$0xff]
  %v276 = vld [vmem:[%s1 + $0x7c8] sm:$0xff]
  %v277 = vld [vmem:[%s1 + $0x7d0] sm:$0xff]
  %v278 = vld [vmem:[%s1 + $0x7d8] sm:$0xff]
  %v279 = vld [vmem:[%s1 + $0x7e0] sm:$0xff]
  %v280 = vld [vmem:[%s1 + $0x7e8] sm:$0xff]
  %v281 = vld [vmem:[%s1 + $0x7f0] sm:$0xff]
  %v282 = vld [vmem:[%s1 + $0x7f8] sm:$0xff]
  %v283 = vld [vmem:[%s2] sm:$0x3]
  %v284 = vld [vmem:[%s4] sm:$0x1]
  %v286 = vlaneseq
  %v287 = vshrl.u32 %v286, 7
  %v288 = vsub.s32 0, %v287
  %v289 = vrot.slane %v284, %v288
  %v291 = vadd.f32 %v289, 0.0
  %v292 = vld [vmem:[%s0] sm:$0xff]
  %v293 = vld [vmem:[%s0 + $0x8] sm:$0xff]
  %v294 = vld [vmem:[%s0 + $0x10] sm:$0xff]
  %v295 = vld [vmem:[%s0 + $0x18] sm:$0xff]
  %v296 = vld [vmem:[%s0 + $0x20] sm:$0xff]
  %v297 = vld [vmem:[%s0 + $0x28] sm:$0xff]
  %v298 = vld [vmem:[%s0 + $0x30] sm:$0xff]
  %v299 = vld [vmem:[%s0 + $0x38] sm:$0xff]
  %v301 = vlaneseq
  %v302 = vshrl.u32 %v301, 7
  %v303 = vsub.s32 0, %v302
  %v304 = vrot.slane %v283, %v303
  %v305 = vlaneseq
  %v306 = vshrl.u32 %v305, 7
  %v307 = vsub.s32 1, %v306
  %v308 = vrot.slane %v283, %v307
  %v319 = vunpack.c.l.b16 %v292
  %v320 = vunpack.c.h.b16 %v292
  %v321 = vunpack.c.l.b16 %v293
  %v322 = vunpack.c.h.b16 %v293
  %v323 = vunpack.c.l.b16 %v294
  %v324 = vunpack.c.h.b16 %v294
  %v325 = vunpack.c.l.b16 %v295
  %v326 = vunpack.c.h.b16 %v295
  %v327 = vunpack.c.l.b16 %v296
  %v328 = vunpack.c.h.b16 %v296
  %v329 = vunpack.c.l.b16 %v297
  %v330 = vunpack.c.h.b16 %v297
  %v331 = vunpack.c.l.b16 %v298
  %v332 = vunpack.c.h.b16 %v298
  %v333 = vunpack.c.l.b16 %v299
  %v334 = vunpack.c.h.b16 %v299
  %v335 = vpack.c.b16 %v319, %v319
  %v336 = vpack.c.b16 %v320, %v320
  %v337 = vpack.c.b16 %v321, %v321
  %v338 = vpack.c.b16 %v322, %v322
  %v339 = vpack.c.b16 %v323, %v323
  %v340 = vpack.c.b16 %v324, %v324
  %v341 = vpack.c.b16 %v325, %v325
  %v342 = vpack.c.b16 %v326, %v326
  %v343 = vpack.c.b16 %v327, %v327
  %v344 = vpack.c.b16 %v328, %v328
  %v345 = vpack.c.b16 %v329, %v329
  %v346 = vpack.c.b16 %v330, %v330
  %v347 = vpack.c.b16 %v331, %v331
  %v348 = vpack.c.b16 %v332, %v332
  %v349 = vpack.c.b16 %v333, %v333
  %v350 = vpack.c.b16 %v334, %v334
  %v623 = vunpack.c.l.b16 %v27
  %v624 = vunpack.c.h.b16 %v27
  %v625 = vunpack.c.l.b16 %v28
  %v626 = vunpack.c.h.b16 %v28
  %v627 = vunpack.c.l.b16 %v29
  %v628 = vunpack.c.h.b16 %v29
  %v629 = vunpack.c.l.b16 %v30
  %v630 = vunpack.c.h.b16 %v30
  %v631 = vunpack.c.l.b16 %v31
  %v632 = vunpack.c.h.b16 %v31
  %v633 = vunpack.c.l.b16 %v32
  %v634 = vunpack.c.h.b16 %v32
  %v635 = vunpack.c.l.b16 %v33
  %v636 = vunpack.c.h.b16 %v33
  %v637 = vunpack.c.l.b16 %v34
  %v638 = vunpack.c.h.b16 %v34
  %v639 = vunpack.c.l.b16 %v35
  %v640 = vunpack.c.h.b16 %v35
  %v641 = vunpack.c.l.b16 %v36
  %v642 = vunpack.c.h.b16 %v36
  %v643 = vunpack.c.l.b16 %v37
  %v644 = vunpack.c.h.b16 %v37
  %v645 = vunpack.c.l.b16 %v38
  %v646 = vunpack.c.h.b16 %v38
  %v647 = vunpack.c.l.b16 %v39
  %v648 = vunpack.c.h.b16 %v39
  %v649 = vunpack.c.l.b16 %v40
  %v650 = vunpack.c.h.b16 %v40
  %v651 = vunpack.c.l.b16 %v41
  %v652 = vunpack.c.h.b16 %v41
  %v653 = vunpack.c.l.b16 %v42
  %v654 = vunpack.c.h.b16 %v42
  %v655 = vunpack.c.l.b16 %v43
  %v656 = vunpack.c.h.b16 %v43
  %v657 = vunpack.c.l.b16 %v44
  %v658 = vunpack.c.h.b16 %v44
  %v659 = vunpack.c.l.b16 %v45
  %v660 = vunpack.c.h.b16 %v45
  %v661 = vunpack.c.l.b16 %v46
  %v662 = vunpack.c.h.b16 %v46
  %v663 = vunpack.c.l.b16 %v47
  %v664 = vunpack.c.h.b16 %v47
  %v665 = vunpack.c.l.b16 %v48
  %v666 = vunpack.c.h.b16 %v48
  %v667 = vunpack.c.l.b16 %v49
  %v668 = vunpack.c.h.b16 %v49
  %v669 = vunpack.c.l.b16 %v50
  %v670 = vunpack.c.h.b16 %v50
  %v671 = vunpack.c.l.b16 %v51
  %v672 = vunpack.c.h.b16 %v51
  %v673 = vunpack.c.l.b16 %v52
  %v674 = vunpack.c.h.b16 %v52
  %v675 = vunpack.c.l.b16 %v53
  %v676 = vunpack.c.h.b16 %v53
  %v677 = vunpack.c.l.b16 %v54
  %v678 = vunpack.c.h.b16 %v54
  %v679 = vunpack.c.l.b16 %v55
  %v680 = vunpack.c.h.b16 %v55
  %v681 = vunpack.c.l.b16 %v56
  %v682 = vunpack.c.h.b16 %v56
  %v683 = vunpack.c.l.b16 %v57
  %v684 = vunpack.c.h.b16 %v57
  %v685 = vunpack.c.l.b16 %v58
  %v686 = vunpack.c.h.b16 %v58
  %v687 = vunpack.c.l.b16 %v59
  %v688 = vunpack.c.h.b16 %v59
  %v689 = vunpack.c.l.b16 %v60
  %v690 = vunpack.c.h.b16 %v60
  %v691 = vunpack.c.l.b16 %v61
  %v692 = vunpack.c.h.b16 %v61
  %v693 = vunpack.c.l.b16 %v62
  %v694 = vunpack.c.h.b16 %v62
  %v695 = vunpack.c.l.b16 %v63
  %v696 = vunpack.c.h.b16 %v63
  %v697 = vunpack.c.l.b16 %v64
  %v698 = vunpack.c.h.b16 %v64
  %v699 = vunpack.c.l.b16 %v65
  %v700 = vunpack.c.h.b16 %v65
  %v701 = vunpack.c.l.b16 %v66
  %v702 = vunpack.c.h.b16 %v66
  %v703 = vunpack.c.l.b16 %v67
  %v704 = vunpack.c.h.b16 %v67
  %v705 = vunpack.c.l.b16 %v68
  %v706 = vunpack.c.h.b16 %v68
  %v707 = vunpack.c.l.b16 %v69
  %v708 = vunpack.c.h.b16 %v69
  %v709 = vunpack.c.l.b16 %v70
  %v710 = vunpack.c.h.b16 %v70
  %v711 = vunpack.c.l.b16 %v71
  %v712 = vunpack.c.h.b16 %v71
  %v713 = vunpack.c.l.b16 %v72
  %v714 = vunpack.c.h.b16 %v72
  %v715 = vunpack.c.l.b16 %v73
  %v716 = vunpack.c.h.b16 %v73
  %v717 = vunpack.c.l.b16 %v74
  %v718 = vunpack.c.h.b16 %v74
  %v719 = vunpack.c.l.b16 %v75
  %v720 = vunpack.c.h.b16 %v75
  %v721 = vunpack.c.l.b16 %v76
  %v722 = vunpack.c.h.b16 %v76
  %v723 = vunpack.c.l.b16 %v77
  %v724 = vunpack.c.h.b16 %v77
  %v725 = vunpack.c.l.b16 %v78
  %v726 = vunpack.c.h.b16 %v78
  %v727 = vunpack.c.l.b16 %v79
  %v728 = vunpack.c.h.b16 %v79
  %v729 = vunpack.c.l.b16 %v80
  %v730 = vunpack.c.h.b16 %v80
  %v731 = vunpack.c.l.b16 %v81
  %v732 = vunpack.c.h.b16 %v81
  %v733 = vunpack.c.l.b16 %v82
  %v734 = vunpack.c.h.b16 %v82
  %v735 = vunpack.c.l.b16 %v83
  %v736 = vunpack.c.h.b16 %v83
  %v737 = vunpack.c.l.b16 %v84
  %v738 = vunpack.c.h.b16 %v84
  %v739 = vunpack.c.l.b16 %v85
  %v740 = vunpack.c.h.b16 %v85
  %v741 = vunpack.c.l.b16 %v86
  %v742 = vunpack.c.h.b16 %v86
  %v743 = vunpack.c.l.b16 %v87
  %v744 = vunpack.c.h.b16 %v87
  %v745 = vunpack.c.l.b16 %v88
  %v746 = vunpack.c.h.b16 %v88
  %v747 = vunpack.c.l.b16 %v89
  %v748 = vunpack.c.h.b16 %v89
  %v749 = vunpack.c.l.b16 %v90
  %v750 = vunpack.c.h.b16 %v90
  %v751 = vunpack.c.l.b16 %v91
  %v752 = vunpack.c.h.b16 %v91
  %v753 = vunpack.c.l.b16 %v92
  %v754 = vunpack.c.h.b16 %v92
  %v755 = vunpack.c.l.b16 %v93
  %v756 = vunpack.c.h.b16 %v93
  %v757 = vunpack.c.l.b16 %v94
  %v758 = vunpack.c.h.b16 %v94
  %v759 = vunpack.c.l.b16 %v95
  %v760 = vunpack.c.h.b16 %v95
  %v761 = vunpack.c.l.b16 %v96
  %v762 = vunpack.c.h.b16 %v96
  %v763 = vunpack.c.l.b16 %v97
  %v764 = vunpack.c.h.b16 %v97
  %v765 = vunpack.c.l.b16 %v98
  %v766 = vunpack.c.h.b16 %v98
  %v767 = vunpack.c.l.b16 %v99
  %v768 = vunpack.c.h.b16 %v99
  %v769 = vunpack.c.l.b16 %v100
  %v770 = vunpack.c.h.b16 %v100
  %v771 = vunpack.c.l.b16 %v101
  %v772 = vunpack.c.h.b16 %v101
  %v773 = vunpack.c.l.b16 %v102
  %v774 = vunpack.c.h.b16 %v102
  %v775 = vunpack.c.l.b16 %v103
  %v776 = vunpack.c.h.b16 %v103
  %v777 = vunpack.c.l.b16 %v104
  %v778 = vunpack.c.h.b16 %v104
  %v779 = vunpack.c.l.b16 %v105
  %v780 = vunpack.c.h.b16 %v105
  %v781 = vunpack.c.l.b16 %v106
  %v782 = vunpack.c.h.b16 %v106
  %v783 = vunpack.c.l.b16 %v107
  %v784 = vunpack.c.h.b16 %v107
  %v785 = vunpack.c.l.b16 %v108
  %v786 = vunpack.c.h.b16 %v108
  %v787 = vunpack.c.l.b16 %v109
  %v788 = vunpack.c.h.b16 %v109
  %v789 = vunpack.c.l.b16 %v110
  %v790 = vunpack.c.h.b16 %v110
  %v791 = vunpack.c.l.b16 %v111
  %v792 = vunpack.c.h.b16 %v111
  %v793 = vunpack.c.l.b16 %v112
  %v794 = vunpack.c.h.b16 %v112
  %v795 = vunpack.c.l.b16 %v113
  %v796 = vunpack.c.h.b16 %v113
  %v797 = vunpack.c.l.b16 %v114
  %v798 = vunpack.c.h.b16 %v114
  %v799 = vunpack.c.l.b16 %v115
  %v800 = vunpack.c.h.b16 %v115
  %v801 = vunpack.c.l.b16 %v116
  %v802 = vunpack.c.h.b16 %v116
  %v803 = vunpack.c.l.b16 %v117
  %v804 = vunpack.c.h.b16 %v117
  %v805 = vunpack.c.l.b16 %v118
  %v806 = vunpack.c.h.b16 %v118
  %v807 = vunpack.c.l.b16 %v119
  %v808 = vunpack.c.h.b16 %v119
  %v809 = vunpack.c.l.b16 %v120
  %v810 = vunpack.c.h.b16 %v120
  %v811 = vunpack.c.l.b16 %v121
  %v812 = vunpack.c.h.b16 %v121
  %v813 = vunpack.c.l.b16 %v122
  %v814 = vunpack.c.h.b16 %v122
  %v815 = vunpack.c.l.b16 %v123
  %v816 = vunpack.c.h.b16 %v123
  %v817 = vunpack.c.l.b16 %v124
  %v818 = vunpack.c.h.b16 %v124
  %v819 = vunpack.c.l.b16 %v125
  %v820 = vunpack.c.h.b16 %v125
  %v821 = vunpack.c.l.b16 %v126
  %v822 = vunpack.c.h.b16 %v126
  %v823 = vunpack.c.l.b16 %v127
  %v824 = vunpack.c.h.b16 %v127
  %v825 = vunpack.c.l.b16 %v128
  %v826 = vunpack.c.h.b16 %v128
  %v827 = vunpack.c.l.b16 %v129
  %v828 = vunpack.c.h.b16 %v129
  %v829 = vunpack.c.l.b16 %v130
  %v830 = vunpack.c.h.b16 %v130
  %v831 = vunpack.c.l.b16 %v131
  %v832 = vunpack.c.h.b16 %v131
  %v833 = vunpack.c.l.b16 %v132
  %v834 = vunpack.c.h.b16 %v132
  %v835 = vunpack.c.l.b16 %v133
  %v836 = vunpack.c.h.b16 %v133
  %v837 = vunpack.c.l.b16 %v134
  %v838 = vunpack.c.h.b16 %v134
  %v839 = vunpack.c.l.b16 %v135
  %v840 = vunpack.c.h.b16 %v135
  %v841 = vunpack.c.l.b16 %v136
  %v842 = vunpack.c.h.b16 %v136
  %v843 = vunpack.c.l.b16 %v137
  %v844 = vunpack.c.h.b16 %v137
  %v845 = vunpack.c.l.b16 %v138
  %v846 = vunpack.c.h.b16 %v138
  %v847 = vunpack.c.l.b16 %v139
  %v848 = vunpack.c.h.b16 %v139
  %v849 = vunpack.c.l.b16 %v140
  %v850 = vunpack.c.h.b16 %v140
  %v851 = vunpack.c.l.b16 %v141
  %v852 = vunpack.c.h.b16 %v141
  %v853 = vunpack.c.l.b16 %v142
  %v854 = vunpack.c.h.b16 %v142
  %v855 = vunpack.c.l.b16 %v143
  %v856 = vunpack.c.h.b16 %v143
  %v857 = vunpack.c.l.b16 %v144
  %v858 = vunpack.c.h.b16 %v144
  %v859 = vunpack.c.l.b16 %v145
  %v860 = vunpack.c.h.b16 %v145
  %v861 = vunpack.c.l.b16 %v146
  %v862 = vunpack.c.h.b16 %v146
  %v863 = vunpack.c.l.b16 %v147
  %v864 = vunpack.c.h.b16 %v147
  %v865 = vunpack.c.l.b16 %v148
  %v866 = vunpack.c.h.b16 %v148
  %v867 = vunpack.c.l.b16 %v149
  %v868 = vunpack.c.h.b16 %v149
  %v869 = vunpack.c.l.b16 %v150
  %v870 = vunpack.c.h.b16 %v150
  %v871 = vunpack.c.l.b16 %v151
  %v872 = vunpack.c.h.b16 %v151
  %v873 = vunpack.c.l.b16 %v152
  %v874 = vunpack.c.h.b16 %v152
  %v875 = vunpack.c.l.b16 %v153
  %v876 = vunpack.c.h.b16 %v153
  %v877 = vunpack.c.l.b16 %v154
  %v878 = vunpack.c.h.b16 %v154
  %v879 = vunpack.c.l.b16 %v155
  %v880 = vunpack.c.h.b16 %v155
  %v881 = vunpack.c.l.b16 %v156
  %v882 = vunpack.c.h.b16 %v156
  %v883 = vunpack.c.l.b16 %v157
  %v884 = vunpack.c.h.b16 %v157
  %v885 = vunpack.c.l.b16 %v158
  %v886 = vunpack.c.h.b16 %v158
  %v887 = vunpack.c.l.b16 %v159
  %v888 = vunpack.c.h.b16 %v159
  %v889 = vunpack.c.l.b16 %v160
  %v890 = vunpack.c.h.b16 %v160
  %v891 = vunpack.c.l.b16 %v161
  %v892 = vunpack.c.h.b16 %v161
  %v893 = vunpack.c.l.b16 %v162
  %v894 = vunpack.c.h.b16 %v162
  %v895 = vunpack.c.l.b16 %v163
  %v896 = vunpack.c.h.b16 %v163
  %v897 = vunpack.c.l.b16 %v164
  %v898 = vunpack.c.h.b16 %v164
  %v899 = vunpack.c.l.b16 %v165
  %v900 = vunpack.c.h.b16 %v165
  %v901 = vunpack.c.l.b16 %v166
  %v902 = vunpack.c.h.b16 %v166
  %v903 = vunpack.c.l.b16 %v167
  %v904 = vunpack.c.h.b16 %v167
  %v905 = vunpack.c.l.b16 %v168
  %v906 = vunpack.c.h.b16 %v168
  %v907 = vunpack.c.l.b16 %v169
  %v908 = vunpack.c.h.b16 %v169
  %v909 = vunpack.c.l.b16 %v170
  %v910 = vunpack.c.h.b16 %v170
  %v911 = vunpack.c.l.b16 %v171
  %v912 = vunpack.c.h.b16 %v171
  %v913 = vunpack.c.l.b16 %v172
  %v914 = vunpack.c.h.b16 %v172
  %v915 = vunpack.c.l.b16 %v173
  %v916 = vunpack.c.h.b16 %v173
  %v917 = vunpack.c.l.b16 %v174
  %v918 = vunpack.c.h.b16 %v174
  %v919 = vunpack.c.l.b16 %v175
  %v920 = vunpack.c.h.b16 %v175
  %v921 = vunpack.c.l.b16 %v176
  %v922 = vunpack.c.h.b16 %v176
  %v923 = vunpack.c.l.b16 %v177
  %v924 = vunpack.c.h.b16 %v177
  %v925 = vunpack.c.l.b16 %v178
  %v926 = vunpack.c.h.b16 %v178
  %v927 = vunpack.c.l.b16 %v179
  %v928 = vunpack.c.h.b16 %v179
  %v929 = vunpack.c.l.b16 %v180
  %v930 = vunpack.c.h.b16 %v180
  %v931 = vunpack.c.l.b16 %v181
  %v932 = vunpack.c.h.b16 %v181
  %v933 = vunpack.c.l.b16 %v182
  %v934 = vunpack.c.h.b16 %v182
  %v935 = vunpack.c.l.b16 %v183
  %v936 = vunpack.c.h.b16 %v183
  %v937 = vunpack.c.l.b16 %v184
  %v938 = vunpack.c.h.b16 %v184
  %v939 = vunpack.c.l.b16 %v185
  %v940 = vunpack.c.h.b16 %v185
  %v941 = vunpack.c.l.b16 %v186
  %v942 = vunpack.c.h.b16 %v186
  %v943 = vunpack.c.l.b16 %v187
  %v944 = vunpack.c.h.b16 %v187
  %v945 = vunpack.c.l.b16 %v188
  %v946 = vunpack.c.h.b16 %v188
  %v947 = vunpack.c.l.b16 %v189
  %v948 = vunpack.c.h.b16 %v189
  %v949 = vunpack.c.l.b16 %v190
  %v950 = vunpack.c.h.b16 %v190
  %v951 = vunpack.c.l.b16 %v191
  %v952 = vunpack.c.h.b16 %v191
  %v953 = vunpack.c.l.b16 %v192
  %v954 = vunpack.c.h.b16 %v192
  %v955 = vunpack.c.l.b16 %v193
  %v956 = vunpack.c.h.b16 %v193
  %v957 = vunpack.c.l.b16 %v194
  %v958 = vunpack.c.h.b16 %v194
  %v959 = vunpack.c.l.b16 %v195
  %v960 = vunpack.c.h.b16 %v195
  %v961 = vunpack.c.l.b16 %v196
  %v962 = vunpack.c.h.b16 %v196
  %v963 = vunpack.c.l.b16 %v197
  %v964 = vunpack.c.h.b16 %v197
  %v965 = vunpack.c.l.b16 %v198
  %v966 = vunpack.c.h.b16 %v198
  %v967 = vunpack.c.l.b16 %v199
  %v968 = vunpack.c.h.b16 %v199
  %v969 = vunpack.c.l.b16 %v200
  %v970 = vunpack.c.h.b16 %v200
  %v971 = vunpack.c.l.b16 %v201
  %v972 = vunpack.c.h.b16 %v201
  %v973 = vunpack.c.l.b16 %v202
  %v974 = vunpack.c.h.b16 %v202
  %v975 = vunpack.c.l.b16 %v203
  %v976 = vunpack.c.h.b16 %v203
  %v977 = vunpack.c.l.b16 %v204
  %v978 = vunpack.c.h.b16 %v204
  %v979 = vunpack.c.l.b16 %v205
  %v980 = vunpack.c.h.b16 %v205
  %v981 = vunpack.c.l.b16 %v206
  %v982 = vunpack.c.h.b16 %v206
  %v983 = vunpack.c.l.b16 %v207
  %v984 = vunpack.c.h.b16 %v207
  %v985 = vunpack.c.l.b16 %v208
  %v986 = vunpack.c.h.b16 %v208
  %v987 = vunpack.c.l.b16 %v209
  %v988 = vunpack.c.h.b16 %v209
  %v989 = vunpack.c.l.b16 %v210
  %v990 = vunpack.c.h.b16 %v210
  %v991 = vunpack.c.l.b16 %v211
  %v992 = vunpack.c.h.b16 %v211
  %v993 = vunpack.c.l.b16 %v212
  %v994 = vunpack.c.h.b16 %v212
  %v995 = vunpack.c.l.b16 %v213
  %v996 = vunpack.c.h.b16 %v213
  %v997 = vunpack.c.l.b16 %v214
  %v998 = vunpack.c.h.b16 %v214
  %v999 = vunpack.c.l.b16 %v215
  %v1000 = vunpack.c.h.b16 %v215
  %v1001 = vunpack.c.l.b16 %v216
  %v1002 = vunpack.c.h.b16 %v216
  %v1003 = vunpack.c.l.b16 %v217
  %v1004 = vunpack.c.h.b16 %v217
  %v1005 = vunpack.c.l.b16 %v218
  %v1006 = vunpack.c.h.b16 %v218
  %v1007 = vunpack.c.l.b16 %v219
  %v1008 = vunpack.c.h.b16 %v219
  %v1009 = vunpack.c.l.b16 %v220
  %v1010 = vunpack.c.h.b16 %v220
  %v1011 = vunpack.c.l.b16 %v221
  %v1012 = vunpack.c.h.b16 %v221
  %v1013 = vunpack.c.l.b16 %v222
  %v1014 = vunpack.c.h.b16 %v222
  %v1015 = vunpack.c.l.b16 %v223
  %v1016 = vunpack.c.h.b16 %v223
  %v1017 = vunpack.c.l.b16 %v224
  %v1018 = vunpack.c.h.b16 %v224
  %v1019 = vunpack.c.l.b16 %v225
  %v1020 = vunpack.c.h.b16 %v225
  %v1021 = vunpack.c.l.b16 %v226
  %v1022 = vunpack.c.h.b16 %v226
  %v1023 = vunpack.c.l.b16 %v227
  %v1024 = vunpack.c.h.b16 %v227
  %v1025 = vunpack.c.l.b16 %v228
  %v1026 = vunpack.c.h.b16 %v228
  %v1027 = vunpack.c.l.b16 %v229
  %v1028 = vunpack.c.h.b16 %v229
  %v1029 = vunpack.c.l.b16 %v230
  %v1030 = vunpack.c.h.b16 %v230
  %v1031 = vunpack.c.l.b16 %v231
  %v1032 = vunpack.c.h.b16 %v231
  %v1033 = vunpack.c.l.b16 %v232
  %v1034 = vunpack.c.h.b16 %v232
  %v1035 = vunpack.c.l.b16 %v233
  %v1036 = vunpack.c.h.b16 %v233
  %v1037 = vunpack.c.l.b16 %v234
  %v1038 = vunpack.c.h.b16 %v234
  %v1039 = vunpack.c.l.b16 %v235
  %v1040 = vunpack.c.h.b16 %v235
  %v1041 = vunpack.c.l.b16 %v236
  %v1042 = vunpack.c.h.b16 %v236
  %v1043 = vunpack.c.l.b16 %v237
  %v1044 = vunpack.c.h.b16 %v237
  %v1045 = vunpack.c.l.b16 %v238
  %v1046 = vunpack.c.h.b16 %v238
  %v1047 = vunpack.c.l.b16 %v239
  %v1048 = vunpack.c.h.b16 %v239
  %v1049 = vunpack.c.l.b16 %v240
  %v1050 = vunpack.c.h.b16 %v240
  %v1051 = vunpack.c.l.b16 %v241
  %v1052 = vunpack.c.h.b16 %v241
  %v1053 = vunpack.c.l.b16 %v242
  %v1054 = vunpack.c.h.b16 %v242
  %v1055 = vunpack.c.l.b16 %v243
  %v1056 = vunpack.c.h.b16 %v243
  %v1057 = vunpack.c.l.b16 %v244
  %v1058 = vunpack.c.h.b16 %v244
  %v1059 = vunpack.c.l.b16 %v245
  %v1060 = vunpack.c.h.b16 %v245
  %v1061 = vunpack.c.l.b16 %v246
  %v1062 = vunpack.c.h.b16 %v246
  %v1063 = vunpack.c.l.b16 %v247
  %v1064 = vunpack.c.h.b16 %v247
  %v1065 = vunpack.c.l.b16 %v248
  %v1066 = vunpack.c.h.b16 %v248
  %v1067 = vunpack.c.l.b16 %v249
  %v1068 = vunpack.c.h.b16 %v249
  %v1069 = vunpack.c.l.b16 %v250
  %v1070 = vunpack.c.h.b16 %v250
  %v1071 = vunpack.c.l.b16 %v251
  %v1072 = vunpack.c.h.b16 %v251
  %v1073 = vunpack.c.l.b16 %v252
  %v1074 = vunpack.c.h.b16 %v252
  %v1075 = vunpack.c.l.b16 %v253
  %v1076 = vunpack.c.h.b16 %v253
  %v1077 = vunpack.c.l.b16 %v254
  %v1078 = vunpack.c.h.b16 %v254
  %v1079 = vunpack.c.l.b16 %v255
  %v1080 = vunpack.c.h.b16 %v255
  %v1081 = vunpack.c.l.b16 %v256
  %v1082 = vunpack.c.h.b16 %v256
  %v1083 = vunpack.c.l.b16 %v257
  %v1084 = vunpack.c.h.b16 %v257
  %v1085 = vunpack.c.l.b16 %v258
  %v1086 = vunpack.c.h.b16 %v258
  %v1087 = vunpack.c.l.b16 %v259
  %v1088 = vunpack.c.h.b16 %v259
  %v1089 = vunpack.c.l.b16 %v260
  %v1090 = vunpack.c.h.b16 %v260
  %v1091 = vunpack.c.l.b16 %v261
  %v1092 = vunpack.c.h.b16 %v261
  %v1093 = vunpack.c.l.b16 %v262
  %v1094 = vunpack.c.h.b16 %v262
  %v1095 = vunpack.c.l.b16 %v263
  %v1096 = vunpack.c.h.b16 %v263
  %v1097 = vunpack.c.l.b16 %v264
  %v1098 = vunpack.c.h.b16 %v264
  %v1099 = vunpack.c.l.b16 %v265
  %v1100 = vunpack.c.h.b16 %v265
  %v1101 = vunpack.c.l.b16 %v266
  %v1102 = vunpack.c.h.b16 %v266
  %v1103 = vunpack.c.l.b16 %v267
  %v1104 = vunpack.c.h.b16 %v267
  %v1105 = vunpack.c.l.b16 %v268
  %v1106 = vunpack.c.h.b16 %v268
  %v1107 = vunpack.c.l.b16 %v269
  %v1108 = vunpack.c.h.b16 %v269
  %v1109 = vunpack.c.l.b16 %v270
  %v1110 = vunpack.c.h.b16 %v270
  %v1111 = vunpack.c.l.b16 %v271
  %v1112 = vunpack.c.h.b16 %v271
  %v1113 = vunpack.c.l.b16 %v272
  %v1114 = vunpack.c.h.b16 %v272
  %v1115 = vunpack.c.l.b16 %v273
  %v1116 = vunpack.c.h.b16 %v273
  %v1117 = vunpack.c.l.b16 %v274
  %v1118 = vunpack.c.h.b16 %v274
  %v1119 = vunpack.c.l.b16 %v275
  %v1120 = vunpack.c.h.b16 %v275
  %v1121 = vunpack.c.l.b16 %v276
  %v1122 = vunpack.c.h.b16 %v276
  %v1123 = vunpack.c.l.b16 %v277
  %v1124 = vunpack.c.h.b16 %v277
  %v1125 = vunpack.c.l.b16 %v278
  %v1126 = vunpack.c.h.b16 %v278
  %v1127 = vunpack.c.l.b16 %v279
  %v1128 = vunpack.c.h.b16 %v279
  %v1129 = vunpack.c.l.b16 %v280
  %v1130 = vunpack.c.h.b16 %v280
  %v1131 = vunpack.c.l.b16 %v281
  %v1132 = vunpack.c.h.b16 %v281
  %v1133 = vunpack.c.l.b16 %v282
  %v1134 = vunpack.c.h.b16 %v282
  %v1135 = vpack.c.b16 %v625, %v623
  %v1136 = vpack.c.b16 %v626, %v624
  %v1137 = vpack.c.b16 %v629, %v627
  %v1138 = vpack.c.b16 %v630, %v628
  %v1139 = vpack.c.b16 %v633, %v631
  %v1140 = vpack.c.b16 %v634, %v632
  %v1141 = vpack.c.b16 %v637, %v635
  %v1142 = vpack.c.b16 %v638, %v636
  %v1143 = vpack.c.b16 %v641, %v639
  %v1144 = vpack.c.b16 %v642, %v640
  %v1145 = vpack.c.b16 %v645, %v643
  %v1146 = vpack.c.b16 %v646, %v644
  %v1147 = vpack.c.b16 %v649, %v647
  %v1148 = vpack.c.b16 %v650, %v648
  %v1149 = vpack.c.b16 %v653, %v651
  %v1150 = vpack.c.b16 %v654, %v652
  %v1151 = vpack.c.b16 %v657, %v655
  %v1152 = vpack.c.b16 %v658, %v656
  %v1153 = vpack.c.b16 %v661, %v659
  %v1154 = vpack.c.b16 %v662, %v660
  %v1155 = vpack.c.b16 %v665, %v663
  %v1156 = vpack.c.b16 %v666, %v664
  %v1157 = vpack.c.b16 %v669, %v667
  %v1158 = vpack.c.b16 %v670, %v668
  %v1159 = vpack.c.b16 %v673, %v671
  %v1160 = vpack.c.b16 %v674, %v672
  %v1161 = vpack.c.b16 %v677, %v675
  %v1162 = vpack.c.b16 %v678, %v676
  %v1163 = vpack.c.b16 %v681, %v679
  %v1164 = vpack.c.b16 %v682, %v680
  %v1165 = vpack.c.b16 %v685, %v683
  %v1166 = vpack.c.b16 %v686, %v684
  %v1167 = vpack.c.b16 %v689, %v687
  %v1168 = vpack.c.b16 %v690, %v688
  %v1169 = vpack.c.b16 %v693, %v691
  %v1170 = vpack.c.b16 %v694, %v692
  %v1171 = vpack.c.b16 %v697, %v695
  %v1172 = vpack.c.b16 %v698, %v696
  %v1173 = vpack.c.b16 %v701, %v699
  %v1174 = vpack.c.b16 %v702, %v700
  %v1175 = vpack.c.b16 %v705, %v703
  %v1176 = vpack.c.b16 %v706, %v704
  %v1177 = vpack.c.b16 %v709, %v707
  %v1178 = vpack.c.b16 %v710, %v708
  %v1179 = vpack.c.b16 %v713, %v711
  %v1180 = vpack.c.b16 %v714, %v712
  %v1181 = vpack.c.b16 %v717, %v715
  %v1182 = vpack.c.b16 %v718, %v716
  %v1183 = vpack.c.b16 %v721, %v719
  %v1184 = vpack.c.b16 %v722, %v720
  %v1185 = vpack.c.b16 %v725, %v723
  %v1186 = vpack.c.b16 %v726, %v724
  %v1187 = vpack.c.b16 %v729, %v727
  %v1188 = vpack.c.b16 %v730, %v728
  %v1189 = vpack.c.b16 %v733, %v731
  %v1190 = vpack.c.b16 %v734, %v732
  %v1191 = vpack.c.b16 %v737, %v735
  %v1192 = vpack.c.b16 %v738, %v736
  %v1193 = vpack.c.b16 %v741, %v739
  %v1194 = vpack.c.b16 %v742, %v740
  %v1195 = vpack.c.b16 %v745, %v743
  %v1196 = vpack.c.b16 %v746, %v744
  %v1197 = vpack.c.b16 %v749, %v747
  %v1198 = vpack.c.b16 %v750, %v748
  %v1199 = vpack.c.b16 %v753, %v751
  %v1200 = vpack.c.b16 %v754, %v752
  %v1201 = vpack.c.b16 %v757, %v755
  %v1202 = vpack.c.b16 %v758, %v756
  %v1203 = vpack.c.b16 %v761, %v759
  %v1204 = vpack.c.b16 %v762, %v760
  %v1205 = vpack.c.b16 %v765, %v763
  %v1206 = vpack.c.b16 %v766, %v764
  %v1207 = vpack.c.b16 %v769, %v767
  %v1208 = vpack.c.b16 %v770, %v768
  %v1209 = vpack.c.b16 %v773, %v771
  %v1210 = vpack.c.b16 %v774, %v772
  %v1211 = vpack.c.b16 %v777, %v775
  %v1212 = vpack.c.b16 %v778, %v776
  %v1213 = vpack.c.b16 %v781, %v779
  %v1214 = vpack.c.b16 %v782, %v780
  %v1215 = vpack.c.b16 %v785, %v783
  %v1216 = vpack.c.b16 %v786, %v784
  %v1217 = vpack.c.b16 %v789, %v787
  %v1218 = vpack.c.b16 %v790, %v788
  %v1219 = vpack.c.b16 %v793, %v791
  %v1220 = vpack.c.b16 %v794, %v792
  %v1221 = vpack.c.b16 %v797, %v795
  %v1222 = vpack.c.b16 %v798, %v796
  %v1223 = vpack.c.b16 %v801, %v799
  %v1224 = vpack.c.b16 %v802, %v800
  %v1225 = vpack.c.b16 %v805, %v803
  %v1226 = vpack.c.b16 %v806, %v804
  %v1227 = vpack.c.b16 %v809, %v807
  %v1228 = vpack.c.b16 %v810, %v808
  %v1229 = vpack.c.b16 %v813, %v811
  %v1230 = vpack.c.b16 %v814, %v812
  %v1231 = vpack.c.b16 %v817, %v815
  %v1232 = vpack.c.b16 %v818, %v816
  %v1233 = vpack.c.b16 %v821, %v819
  %v1234 = vpack.c.b16 %v822, %v820
  %v1235 = vpack.c.b16 %v825, %v823
  %v1236 = vpack.c.b16 %v826, %v824
  %v1237 = vpack.c.b16 %v829, %v827
  %v1238 = vpack.c.b16 %v830, %v828
  %v1239 = vpack.c.b16 %v833, %v831
  %v1240 = vpack.c.b16 %v834, %v832
  %v1241 = vpack.c.b16 %v837, %v835
  %v1242 = vpack.c.b16 %v838, %v836
  %v1243 = vpack.c.b16 %v841, %v839
  %v1244 = vpack.c.b16 %v842, %v840
  %v1245 = vpack.c.b16 %v845, %v843
  %v1246 = vpack.c.b16 %v846, %v844
  %v1247 = vpack.c.b16 %v849, %v847
  %v1248 = vpack.c.b16 %v850, %v848
  %v1249 = vpack.c.b16 %v853, %v851
  %v1250 = vpack.c.b16 %v854, %v852
  %v1251 = vpack.c.b16 %v857, %v855
  %v1252 = vpack.c.b16 %v858, %v856
  %v1253 = vpack.c.b16 %v861, %v859
  %v1254 = vpack.c.b16 %v862, %v860
  %v1255 = vpack.c.b16 %v865, %v863
  %v1256 = vpack.c.b16 %v866, %v864
  %v1257 = vpack.c.b16 %v869, %v867
  %v1258 = vpack.c.b16 %v870, %v868
  %v1259 = vpack.c.b16 %v873, %v871
  %v1260 = vpack.c.b16 %v874, %v872
  %v1261 = vpack.c.b16 %v877, %v875
  %v1262 = vpack.c.b16 %v878, %v876
  %v1263 = vpack.c.b16 %v881, %v879
  %v1264 = vpack.c.b16 %v882, %v880
  %v1265 = vpack.c.b16 %v885, %v883
  %v1266 = vpack.c.b16 %v886, %v884
  %v1267 = vpack.c.b16 %v889, %v887
  %v1268 = vpack.c.b16 %v890, %v888
  %v1269 = vpack.c.b16 %v893, %v891
  %v1270 = vpack.c.b16 %v894, %v892
  %v1271 = vpack.c.b16 %v897, %v895
  %v1272 = vpack.c.b16 %v898, %v896
  %v1273 = vpack.c.b16 %v901, %v899
  %v1274 = vpack.c.b16 %v902, %v900
  %v1275 = vpack.c.b16 %v905, %v903
  %v1276 = vpack.c.b16 %v906, %v904
  %v1277 = vpack.c.b16 %v909, %v907
  %v1278 = vpack.c.b16 %v910, %v908
  %v1279 = vpack.c.b16 %v913, %v911
  %v1280 = vpack.c.b16 %v914, %v912
  %v1281 = vpack.c.b16 %v917, %v915
  %v1282 = vpack.c.b16 %v918, %v916
  %v1283 = vpack.c.b16 %v921, %v919
  %v1284 = vpack.c.b16 %v922, %v920
  %v1285 = vpack.c.b16 %v925, %v923
  %v1286 = vpack.c.b16 %v926, %v924
  %v1287 = vpack.c.b16 %v929, %v927
  %v1288 = vpack.c.b16 %v930, %v928
  %v1289 = vpack.c.b16 %v933, %v931
  %v1290 = vpack.c.b16 %v934, %v932
  %v1291 = vpack.c.b16 %v937, %v935
  %v1292 = vpack.c.b16 %v938, %v936
  %v1293 = vpack.c.b16 %v941, %v939
  %v1294 = vpack.c.b16 %v942, %v940
  %v1295 = vpack.c.b16 %v945, %v943
  %v1296 = vpack.c.b16 %v946, %v944
  %v1297 = vpack.c.b16 %v949, %v947
  %v1298 = vpack.c.b16 %v950, %v948
  %v1299 = vpack.c.b16 %v953, %v951
  %v1300 = vpack.c.b16 %v954, %v952
  %v1301 = vpack.c.b16 %v957, %v955
  %v1302 = vpack.c.b16 %v958, %v956
  %v1303 = vpack.c.b16 %v961, %v959
  %v1304 = vpack.c.b16 %v962, %v960
  %v1305 = vpack.c.b16 %v965, %v963
  %v1306 = vpack.c.b16 %v966, %v964
  %v1307 = vpack.c.b16 %v969, %v967
  %v1308 = vpack.c.b16 %v970, %v968
  %v1309 = vpack.c.b16 %v973, %v971
  %v1310 = vpack.c.b16 %v974, %v972
  %v1311 = vpack.c.b16 %v977, %v975
  %v1312 = vpack.c.b16 %v978, %v976
  %v1313 = vpack.c.b16 %v981, %v979
  %v1314 = vpack.c.b16 %v982, %v980
  %v1315 = vpack.c.b16 %v985, %v983
  %v1316 = vpack.c.b16 %v986, %v984
  %v1317 = vpack.c.b16 %v989, %v987
  %v1318 = vpack.c.b16 %v990, %v988
  %v1319 = vpack.c.b16 %v993, %v991
  %v1320 = vpack.c.b16 %v994, %v992
  %v1321 = vpack.c.b16 %v997, %v995
  %v1322 = vpack.c.b16 %v998, %v996
  %v1323 = vpack.c.b16 %v1001, %v999
  %v1324 = vpack.c.b16 %v1002, %v1000
  %v1325 = vpack.c.b16 %v1005, %v1003
  %v1326 = vpack.c.b16 %v1006, %v1004
  %v1327 = vpack.c.b16 %v1009, %v1007
  %v1328 = vpack.c.b16 %v1010, %v1008
  %v1329 = vpack.c.b16 %v1013, %v1011
  %v1330 = vpack.c.b16 %v1014, %v1012
  %v1331 = vpack.c.b16 %v1017, %v1015
  %v1332 = vpack.c.b16 %v1018, %v1016
  %v1333 = vpack.c.b16 %v1021, %v1019
  %v1334 = vpack.c.b16 %v1022, %v1020
  %v1335 = vpack.c.b16 %v1025, %v1023
  %v1336 = vpack.c.b16 %v1026, %v1024
  %v1337 = vpack.c.b16 %v1029, %v1027
  %v1338 = vpack.c.b16 %v1030, %v1028
  %v1339 = vpack.c.b16 %v1033, %v1031
  %v1340 = vpack.c.b16 %v1034, %v1032
  %v1341 = vpack.c.b16 %v1037, %v1035
  %v1342 = vpack.c.b16 %v1038, %v1036
  %v1343 = vpack.c.b16 %v1041, %v1039
  %v1344 = vpack.c.b16 %v1042, %v1040
  %v1345 = vpack.c.b16 %v1045, %v1043
  %v1346 = vpack.c.b16 %v1046, %v1044
  %v1347 = vpack.c.b16 %v1049, %v1047
  %v1348 = vpack.c.b16 %v1050, %v1048
  %v1349 = vpack.c.b16 %v1053, %v1051
  %v1350 = vpack.c.b16 %v1054, %v1052
  %v1351 = vpack.c.b16 %v1057, %v1055
  %v1352 = vpack.c.b16 %v1058, %v1056
  %v1353 = vpack.c.b16 %v1061, %v1059
  %v1354 = vpack.c.b16 %v1062, %v1060
  %v1355 = vpack.c.b16 %v1065, %v1063
  %v1356 = vpack.c.b16 %v1066, %v1064
  %v1357 = vpack.c.b16 %v1069, %v1067
  %v1358 = vpack.c.b16 %v1070, %v1068
  %v1359 = vpack.c.b16 %v1073, %v1071
  %v1360 = vpack.c.b16 %v1074, %v1072
  %v1361 = vpack.c.b16 %v1077, %v1075
  %v1362 = vpack.c.b16 %v1078, %v1076
  %v1363 = vpack.c.b16 %v1081, %v1079
  %v1364 = vpack.c.b16 %v1082, %v1080
  %v1365 = vpack.c.b16 %v1085, %v1083
  %v1366 = vpack.c.b16 %v1086, %v1084
  %v1367 = vpack.c.b16 %v1089, %v1087
  %v1368 = vpack.c.b16 %v1090, %v1088
  %v1369 = vpack.c.b16 %v1093, %v1091
  %v1370 = vpack.c.b16 %v1094, %v1092
  %v1371 = vpack.c.b16 %v1097, %v1095
  %v1372 = vpack.c.b16 %v1098, %v1096
  %v1373 = vpack.c.b16 %v1101, %v1099
  %v1374 = vpack.c.b16 %v1102, %v1100
  %v1375 = vpack.c.b16 %v1105, %v1103
  %v1376 = vpack.c.b16 %v1106, %v1104
  %v1377 = vpack.c.b16 %v1109, %v1107
  %v1378 = vpack.c.b16 %v1110, %v1108
  %v1379 = vpack.c.b16 %v1113, %v1111
  %v1380 = vpack.c.b16 %v1114, %v1112
  %v1381 = vpack.c.b16 %v1117, %v1115
  %v1382 = vpack.c.b16 %v1118, %v1116
  %v1383 = vpack.c.b16 %v1121, %v1119
  %v1384 = vpack.c.b16 %v1122, %v1120
  %v1385 = vpack.c.b16 %v1125, %v1123
  %v1386 = vpack.c.b16 %v1126, %v1124
  %v1387 = vpack.c.b16 %v1129, %v1127
  %v1388 = vpack.c.b16 %v1130, %v1128
  %v1389 = vpack.c.b16 %v1133, %v1131
  %v1390 = vpack.c.b16 %v1134, %v1132
  %1647 = vmatprep.subr.bf16.mxu0 %v1150
  %1648 = vmatpush1.bf16.msra.mxu0 %v1149
  %1649 = vmatprep.subr.bf16.mxu0 %v1148
  %1650 = vmatpush1.bf16.msra.mxu0 %v1147
  %1651 = vmatprep.subr.bf16.mxu0 %v1146
  %1652 = vmatpush1.bf16.msra.mxu0 %v1145
  %1653 = vmatprep.subr.bf16.mxu0 %v1144
  %1654 = vmatpush1.bf16.msra.mxu0 %v1143
  %1655 = vmatprep.subr.bf16.mxu0 %v1142
  %1656 = vmatpush1.bf16.msra.mxu0 %v1141
  %1657 = vmatprep.subr.bf16.mxu0 %v1140
  %1658 = vmatpush1.bf16.msra.mxu0 %v1139
  %1659 = vmatprep.subr.bf16.mxu0 %v1138
  %1660 = vmatpush1.bf16.msra.mxu0 %v1137
  %1661 = vmatprep.subr.bf16.mxu0 %v1136
  %1662 = vmatpush1.bf16.msra.mxu0 %v1135
  %1663 = vmatprep.subr.bf16.mxu0 %v1166
  %1664 = vmatpush2.bf16.msra.mxu0 %v1165
  %1665 = vmatprep.subr.bf16.mxu0 %v1164
  %1666 = vmatpush2.bf16.msra.mxu0 %v1163
  %1667 = vmatprep.subr.bf16.mxu0 %v1162
  %1668 = vmatpush2.bf16.msra.mxu0 %v1161
  %1669 = vmatprep.subr.bf16.mxu0 %v1160
  %1670 = vmatpush2.bf16.msra.mxu0 %v1159
  %1671 = vmatprep.subr.bf16.mxu0 %v1158
  %1672 = vmatpush2.bf16.msra.mxu0 %v1157
  %1673 = vmatprep.subr.bf16.mxu0 %v1156
  %1674 = vmatpush2.bf16.msra.mxu0 %v1155
  %1675 = vmatprep.subr.bf16.mxu0 %v1154
  %1676 = vmatpush2.bf16.msra.mxu0 %v1153
  %1677 = vmatprep.subr.bf16.mxu0 %v1152
  %1678 = vmatpush2.bf16.msra.mxu0 %v1151
  %1679 = vmatprep.mubr.bf16.mxu0 %v336
  %1680 = vmatmul.mubr.bf16.gmra.mxu0 %v335
  %v1681 = vpop.f32.mrf.mxu0
  %v1682 = vadd.f32 %v304, %v1681
  %v1683 = vpop.f32.mrf.mxu0
  %v1684 = vadd.f32 %v308, %v1683
  %v1685 = vpop.f32.mrf.mxu0
  %v1686 = vpop.f32.mrf.mxu0
  %1687 = vdwg.mxu0
  %1688 = vmatprep.subr.bf16.mxu0 %v1182
  %1689 = vmatpush1.bf16.msra.mxu0 %v1181
  %1690 = vmatprep.subr.bf16.mxu0 %v1180
  %1691 = vmatpush1.bf16.msra.mxu0 %v1179
  %1692 = vmatprep.subr.bf16.mxu0 %v1178
  %1693 = vmatpush1.bf16.msra.mxu0 %v1177
  %1694 = vmatprep.subr.bf16.mxu0 %v1176
  %1695 = vmatpush1.bf16.msra.mxu0 %v1175
  %1696 = vmatprep.subr.bf16.mxu0 %v1174
  %1697 = vmatpush1.bf16.msra.mxu0 %v1173
  %1698 = vmatprep.subr.bf16.mxu0 %v1172
  %1699 = vmatpush1.bf16.msra.mxu0 %v1171
  %1700 = vmatprep.subr.bf16.mxu0 %v1170
  %1701 = vmatpush1.bf16.msra.mxu0 %v1169
  %1702 = vmatprep.subr.bf16.mxu0 %v1168
  %1703 = vmatpush1.bf16.msra.mxu0 %v1167
  %1704 = vmatprep.subr.bf16.mxu0 %v1198
  %1705 = vmatpush2.bf16.msra.mxu0 %v1197
  %1706 = vmatprep.subr.bf16.mxu0 %v1196
  %1707 = vmatpush2.bf16.msra.mxu0 %v1195
  %1708 = vmatprep.subr.bf16.mxu0 %v1194
  %1709 = vmatpush2.bf16.msra.mxu0 %v1193
  %1710 = vmatprep.subr.bf16.mxu0 %v1192
  %1711 = vmatpush2.bf16.msra.mxu0 %v1191
  %1712 = vmatprep.subr.bf16.mxu0 %v1190
  %1713 = vmatpush2.bf16.msra.mxu0 %v1189
  %1714 = vmatprep.subr.bf16.mxu0 %v1188
  %1715 = vmatpush2.bf16.msra.mxu0 %v1187
  %1716 = vmatprep.subr.bf16.mxu0 %v1186
  %1717 = vmatpush2.bf16.msra.mxu0 %v1185
  %1718 = vmatprep.subr.bf16.mxu0 %v1184
  %1719 = vmatpush2.bf16.msra.mxu0 %v1183
  %1720 = vmatprep.mubr.bf16.mxu0 %v338
  %1721 = vmatmul.mubr.bf16.gmra.mxu0 %v337
  %v1722 = vpop.f32.mrf.mxu0
  %v1723 = vadd.f32 %v1682, %v1722
  %v1724 = vpop.f32.mrf.mxu0
  %v1725 = vadd.f32 %v1684, %v1724
  %v1726 = vpop.f32.mrf.mxu0
  %v1727 = vpop.f32.mrf.mxu0
  %1728 = vdwg.mxu0
  %1729 = vmatprep.subr.bf16.mxu0 %v1214
  %1730 = vmatpush1.bf16.msra.mxu0 %v1213
  %1731 = vmatprep.subr.bf16.mxu0 %v1212
  %1732 = vmatpush1.bf16.msra.mxu0 %v1211
  %1733 = vmatprep.subr.bf16.mxu0 %v1210
  %1734 = vmatpush1.bf16.msra.mxu0 %v1209
  %1735 = vmatprep.subr.bf16.mxu0 %v1208
  %1736 = vmatpush1.bf16.msra.mxu0 %v1207
  %1737 = vmatprep.subr.bf16.mxu0 %v1206
  %1738 = vmatpush1.bf16.msra.mxu0 %v1205
  %1739 = vmatprep.subr.bf16.mxu0 %v1204
  %1740 = vmatpush1.bf16.msra.mxu0 %v1203
  %1741 = vmatprep.subr.bf16.mxu0 %v1202
  %1742 = vmatpush1.bf16.msra.mxu0 %v1201
  %1743 = vmatprep.subr.bf16.mxu0 %v1200
  %1744 = vmatpush1.bf16.msra.mxu0 %v1199
  %1745 = vmatprep.subr.bf16.mxu0 %v1230
  %1746 = vmatpush2.bf16.msra.mxu0 %v1229
  %1747 = vmatprep.subr.bf16.mxu0 %v1228
  %1748 = vmatpush2.bf16.msra.mxu0 %v1227
  %1749 = vmatprep.subr.bf16.mxu0 %v1226
  %1750 = vmatpush2.bf16.msra.mxu0 %v1225
  %1751 = vmatprep.subr.bf16.mxu0 %v1224
  %1752 = vmatpush2.bf16.msra.mxu0 %v1223
  %1753 = vmatprep.subr.bf16.mxu0 %v1222
  %1754 = vmatpush2.bf16.msra.mxu0 %v1221
  %1755 = vmatprep.subr.bf16.mxu0 %v1220
  %1756 = vmatpush2.bf16.msra.mxu0 %v1219
  %1757 = vmatprep.subr.bf16.mxu0 %v1218
  %1758 = vmatpush2.bf16.msra.mxu0 %v1217
  %1759 = vmatprep.subr.bf16.mxu0 %v1216
  %1760 = vmatpush2.bf16.msra.mxu0 %v1215
  %1761 = vmatprep.mubr.bf16.mxu0 %v340
  %1762 = vmatmul.mubr.bf16.gmra.mxu0 %v339
  %v1763 = vpop.f32.mrf.mxu0
  %v1764 = vadd.f32 %v1723, %v1763
  %v1765 = vpop.f32.mrf.mxu0
  %v1766 = vadd.f32 %v1725, %v1765
  %v1767 = vpop.f32.mrf.mxu0
  %v1768 = vpop.f32.mrf.mxu0
  %1769 = vdwg.mxu0
  %1770 = vmatprep.subr.bf16.mxu0 %v1246
  %1771 = vmatpush1.bf16.msra.mxu0 %v1245
  %1772 = vmatprep.subr.bf16.mxu0 %v1244
  %1773 = vmatpush1.bf16.msra.mxu0 %v1243
  %1774 = vmatprep.subr.bf16.mxu0 %v1242
  %1775 = vmatpush1.bf16.msra.mxu0 %v1241
  %1776 = vmatprep.subr.bf16.mxu0 %v1240
  %1777 = vmatpush1.bf16.msra.mxu0 %v1239
  %1778 = vmatprep.subr.bf16.mxu0 %v1238
  %1779 = vmatpush1.bf16.msra.mxu0 %v1237
  %1780 = vmatprep.subr.bf16.mxu0 %v1236
  %1781 = vmatpush1.bf16.msra.mxu0 %v1235
  %1782 = vmatprep.subr.bf16.mxu0 %v1234
  %1783 = vmatpush1.bf16.msra.mxu0 %v1233
  %1784 = vmatprep.subr.bf16.mxu0 %v1232
  %1785 = vmatpush1.bf16.msra.mxu0 %v1231
  %1786 = vmatprep.subr.bf16.mxu0 %v1262
  %1787 = vmatpush2.bf16.msra.mxu0 %v1261
  %1788 = vmatprep.subr.bf16.mxu0 %v1260
  %1789 = vmatpush2.bf16.msra.mxu0 %v1259
  %1790 = vmatprep.subr.bf16.mxu0 %v1258
  %1791 = vmatpush2.bf16.msra.mxu0 %v1257
  %1792 = vmatprep.subr.bf16.mxu0 %v1256
  %1793 = vmatpush2.bf16.msra.mxu0 %v1255
  %1794 = vmatprep.subr.bf16.mxu0 %v1254
  %1795 = vmatpush2.bf16.msra.mxu0 %v1253
  %1796 = vmatprep.subr.bf16.mxu0 %v1252
  %1797 = vmatpush2.bf16.msra.mxu0 %v1251
  %1798 = vmatprep.subr.bf16.mxu0 %v1250
  %1799 = vmatpush2.bf16.msra.mxu0 %v1249
  %1800 = vmatprep.subr.bf16.mxu0 %v1248
  %1801 = vmatpush2.bf16.msra.mxu0 %v1247
  %1802 = vmatprep.mubr.bf16.mxu0 %v342
  %1803 = vmatmul.mubr.bf16.gmra.mxu0 %v341
  %v1804 = vpop.f32.mrf.mxu0
  %v1805 = vadd.f32 %v1764, %v1804
  %v1806 = vpop.f32.mrf.mxu0
  %v1807 = vadd.f32 %v1766, %v1806
  %v1808 = vpop.f32.mrf.mxu0
  %v1809 = vpop.f32.mrf.mxu0
  %1810 = vdwg.mxu0
  %1811 = vmatprep.subr.bf16.mxu0 %v1278
  %1812 = vmatpush1.bf16.msra.mxu0 %v1277
  %1813 = vmatprep.subr.bf16.mxu0 %v1276
  %1814 = vmatpush1.bf16.msra.mxu0 %v1275
  %1815 = vmatprep.subr.bf16.mxu0 %v1274
  %1816 = vmatpush1.bf16.msra.mxu0 %v1273
  %1817 = vmatprep.subr.bf16.mxu0 %v1272
  %1818 = vmatpush1.bf16.msra.mxu0 %v1271
  %1819 = vmatprep.subr.bf16.mxu0 %v1270
  %1820 = vmatpush1.bf16.msra.mxu0 %v1269
  %1821 = vmatprep.subr.bf16.mxu0 %v1268
  %1822 = vmatpush1.bf16.msra.mxu0 %v1267
  %1823 = vmatprep.subr.bf16.mxu0 %v1266
  %1824 = vmatpush1.bf16.msra.mxu0 %v1265
  %1825 = vmatprep.subr.bf16.mxu0 %v1264
  %1826 = vmatpush1.bf16.msra.mxu0 %v1263
  %1827 = vmatprep.subr.bf16.mxu0 %v1294
  %1828 = vmatpush2.bf16.msra.mxu0 %v1293
  %1829 = vmatprep.subr.bf16.mxu0 %v1292
  %1830 = vmatpush2.bf16.msra.mxu0 %v1291
  %1831 = vmatprep.subr.bf16.mxu0 %v1290
  %1832 = vmatpush2.bf16.msra.mxu0 %v1289
  %1833 = vmatprep.subr.bf16.mxu0 %v1288
  %1834 = vmatpush2.bf16.msra.mxu0 %v1287
  %1835 = vmatprep.subr.bf16.mxu0 %v1286
  %1836 = vmatpush2.bf16.msra.mxu0 %v1285
  %1837 = vmatprep.subr.bf16.mxu0 %v1284
  %1838 = vmatpush2.bf16.msra.mxu0 %v1283
  %1839 = vmatprep.subr.bf16.mxu0 %v1282
  %1840 = vmatpush2.bf16.msra.mxu0 %v1281
  %1841 = vmatprep.subr.bf16.mxu0 %v1280
  %1842 = vmatpush2.bf16.msra.mxu0 %v1279
  %1843 = vmatprep.mubr.bf16.mxu0 %v344
  %1844 = vmatmul.mubr.bf16.gmra.mxu0 %v343
  %v1845 = vpop.f32.mrf.mxu0
  %v1846 = vadd.f32 %v1805, %v1845
  %v1847 = vpop.f32.mrf.mxu0
  %v1848 = vadd.f32 %v1807, %v1847
  %v1849 = vpop.f32.mrf.mxu0
  %v1850 = vpop.f32.mrf.mxu0
  %1851 = vdwg.mxu0
  %1852 = vmatprep.subr.bf16.mxu0 %v1310
  %1853 = vmatpush1.bf16.msra.mxu0 %v1309
  %1854 = vmatprep.subr.bf16.mxu0 %v1308
  %1855 = vmatpush1.bf16.msra.mxu0 %v1307
  %1856 = vmatprep.subr.bf16.mxu0 %v1306
  %1857 = vmatpush1.bf16.msra.mxu0 %v1305
  %1858 = vmatprep.subr.bf16.mxu0 %v1304
  %1859 = vmatpush1.bf16.msra.mxu0 %v1303
  %1860 = vmatprep.subr.bf16.mxu0 %v1302
  %1861 = vmatpush1.bf16.msra.mxu0 %v1301
  %1862 = vmatprep.subr.bf16.mxu0 %v1300
  %1863 = vmatpush1.bf16.msra.mxu0 %v1299
  %1864 = vmatprep.subr.bf16.mxu0 %v1298
  %1865 = vmatpush1.bf16.msra.mxu0 %v1297
  %1866 = vmatprep.subr.bf16.mxu0 %v1296
  %1867 = vmatpush1.bf16.msra.mxu0 %v1295
  %1868 = vmatprep.subr.bf16.mxu0 %v1326
  %1869 = vmatpush2.bf16.msra.mxu0 %v1325
  %1870 = vmatprep.subr.bf16.mxu0 %v1324
  %1871 = vmatpush2.bf16.msra.mxu0 %v1323
  %1872 = vmatprep.subr.bf16.mxu0 %v1322
  %1873 = vmatpush2.bf16.msra.mxu0 %v1321
  %1874 = vmatprep.subr.bf16.mxu0 %v1320
  %1875 = vmatpush2.bf16.msra.mxu0 %v1319
  %1876 = vmatprep.subr.bf16.mxu0 %v1318
  %1877 = vmatpush2.bf16.msra.mxu0 %v1317
  %1878 = vmatprep.subr.bf16.mxu0 %v1316
  %1879 = vmatpush2.bf16.msra.mxu0 %v1315
  %1880 = vmatprep.subr.bf16.mxu0 %v1314
  %1881 = vmatpush2.bf16.msra.mxu0 %v1313
  %1882 = vmatprep.subr.bf16.mxu0 %v1312
  %1883 = vmatpush2.bf16.msra.mxu0 %v1311
  %1884 = vmatprep.mubr.bf16.mxu0 %v346
  %1885 = vmatmul.mubr.bf16.gmra.mxu0 %v345
  %v1886 = vpop.f32.mrf.mxu0
  %v1887 = vadd.f32 %v1846, %v1886
  %v1888 = vpop.f32.mrf.mxu0
  %v1889 = vadd.f32 %v1848, %v1888
  %v1890 = vpop.f32.mrf.mxu0
  %v1891 = vpop.f32.mrf.mxu0
  %1892 = vdwg.mxu0
  %1893 = vmatprep.subr.bf16.mxu0 %v1342
  %1894 = vmatpush1.bf16.msra.mxu0 %v1341
  %1895 = vmatprep.subr.bf16.mxu0 %v1340
  %1896 = vmatpush1.bf16.msra.mxu0 %v1339
  %1897 = vmatprep.subr.bf16.mxu0 %v1338
  %1898 = vmatpush1.bf16.msra.mxu0 %v1337
  %1899 = vmatprep.subr.bf16.mxu0 %v1336
  %1900 = vmatpush1.bf16.msra.mxu0 %v1335
  %1901 = vmatprep.subr.bf16.mxu0 %v1334
  %1902 = vmatpush1.bf16.msra.mxu0 %v1333
  %1903 = vmatprep.subr.bf16.mxu0 %v1332
  %1904 = vmatpush1.bf16.msra.mxu0 %v1331
  %1905 = vmatprep.subr.bf16.mxu0 %v1330
  %1906 = vmatpush1.bf16.msra.mxu0 %v1329
  %1907 = vmatprep.subr.bf16.mxu0 %v1328
  %1908 = vmatpush1.bf16.msra.mxu0 %v1327
  %1909 = vmatprep.subr.bf16.mxu0 %v1358
  %1910 = vmatpush2.bf16.msra.mxu0 %v1357
  %1911 = vmatprep.subr.bf16.mxu0 %v1356
  %1912 = vmatpush2.bf16.msra.mxu0 %v1355
  %1913 = vmatprep.subr.bf16.mxu0 %v1354
  %1914 = vmatpush2.bf16.msra.mxu0 %v1353
  %1915 = vmatprep.subr.bf16.mxu0 %v1352
  %1916 = vmatpush2.bf16.msra.mxu0 %v1351
  %1917 = vmatprep.subr.bf16.mxu0 %v1350
  %1918 = vmatpush2.bf16.msra.mxu0 %v1349
  %1919 = vmatprep.subr.bf16.mxu0 %v1348
  %1920 = vmatpush2.bf16.msra.mxu0 %v1347
  %1921 = vmatprep.subr.bf16.mxu0 %v1346
  %1922 = vmatpush2.bf16.msra.mxu0 %v1345
  %1923 = vmatprep.subr.bf16.mxu0 %v1344
  %1924 = vmatpush2.bf16.msra.mxu0 %v1343
  %1925 = vmatprep.mubr.bf16.mxu0 %v348
  %1926 = vmatmul.mubr.bf16.gmra.mxu0 %v347
  %v1927 = vpop.f32.mrf.mxu0
  %v1928 = vadd.f32 %v1887, %v1927
  %v1929 = vpop.f32.mrf.mxu0
  %v1930 = vadd.f32 %v1889, %v1929
  %v1931 = vpop.f32.mrf.mxu0
  %v1932 = vpop.f32.mrf.mxu0
  %1933 = vdwg.mxu0
  %1934 = vmatprep.subr.bf16.mxu0 %v1374
  %1935 = vmatpush1.bf16.msra.mxu0 %v1373
  %1936 = vmatprep.subr.bf16.mxu0 %v1372
  %1937 = vmatpush1.bf16.msra.mxu0 %v1371
  %1938 = vmatprep.subr.bf16.mxu0 %v1370
  %1939 = vmatpush1.bf16.msra.mxu0 %v1369
  %1940 = vmatprep.subr.bf16.mxu0 %v1368
  %1941 = vmatpush1.bf16.msra.mxu0 %v1367
  %1942 = vmatprep.subr.bf16.mxu0 %v1366
  %1943 = vmatpush1.bf16.msra.mxu0 %v1365
  %1944 = vmatprep.subr.bf16.mxu0 %v1364
  %1945 = vmatpush1.bf16.msra.mxu0 %v1363
  %1946 = vmatprep.subr.bf16.mxu0 %v1362
  %1947 = vmatpush1.bf16.msra.mxu0 %v1361
  %1948 = vmatprep.subr.bf16.mxu0 %v1360
  %1949 = vmatpush1.bf16.msra.mxu0 %v1359
  %1950 = vmatprep.subr.bf16.mxu0 %v1390
  %1951 = vmatpush2.bf16.msra.mxu0 %v1389
  %1952 = vmatprep.subr.bf16.mxu0 %v1388
  %1953 = vmatpush2.bf16.msra.mxu0 %v1387
  %1954 = vmatprep.subr.bf16.mxu0 %v1386
  %1955 = vmatpush2.bf16.msra.mxu0 %v1385
  %1956 = vmatprep.subr.bf16.mxu0 %v1384
  %1957 = vmatpush2.bf16.msra.mxu0 %v1383
  %1958 = vmatprep.subr.bf16.mxu0 %v1382
  %1959 = vmatpush2.bf16.msra.mxu0 %v1381
  %1960 = vmatprep.subr.bf16.mxu0 %v1380
  %1961 = vmatpush2.bf16.msra.mxu0 %v1379
  %1962 = vmatprep.subr.bf16.mxu0 %v1378
  %1963 = vmatpush2.bf16.msra.mxu0 %v1377
  %1964 = vmatprep.subr.bf16.mxu0 %v1376
  %1965 = vmatpush2.bf16.msra.mxu0 %v1375
  %1966 = vmatprep.mubr.bf16.mxu0 %v350
  %1967 = vmatmul.mubr.bf16.gmra.mxu0 %v349
  %v1968 = vpop.f32.mrf.mxu0
  %v1969 = vadd.f32 %v1928, %v1968
  %v1970 = vpop.f32.mrf.mxu0
  %v1971 = vadd.f32 %v1930, %v1970
  %v1972 = vpop.f32.mrf.mxu0
  %v1973 = vpop.f32.mrf.mxu0
  %1974 = vdwg.mxu0
  %v1975 = vmax.f32 %v1969, 0.0
  %v1976 = vmax.f32 %v1971, 0.0
  %v1977 = vpack.c.bf16 %v1975, %v1975
  %v1978 = vpack.c.bf16 %v1976, %v1976
  %v1979 = vld [vmem:[%s3] sm:$0xf]
  %v1980 = vld [vmem:[%s3 + $0x4] sm:$0xf]
  %v1981 = vld [vmem:[%s3 + $0x8] sm:$0xf]
  %v1982 = vld [vmem:[%s3 + $0xc] sm:$0xf]
  %v1983 = vld [vmem:[%s3 + $0x10] sm:$0xf]
  %v1984 = vld [vmem:[%s3 + $0x14] sm:$0xf]
  %v1985 = vld [vmem:[%s3 + $0x18] sm:$0xf]
  %v1986 = vld [vmem:[%s3 + $0x1c] sm:$0xf]
  %v1987 = vld [vmem:[%s3 + $0x20] sm:$0xf]
  %v1988 = vld [vmem:[%s3 + $0x24] sm:$0xf]
  %v1989 = vld [vmem:[%s3 + $0x28] sm:$0xf]
  %v1990 = vld [vmem:[%s3 + $0x2c] sm:$0xf]
  %v1991 = vld [vmem:[%s3 + $0x30] sm:$0xf]
  %v1992 = vld [vmem:[%s3 + $0x34] sm:$0xf]
  %v1993 = vld [vmem:[%s3 + $0x38] sm:$0xf]
  %v1994 = vld [vmem:[%s3 + $0x3c] sm:$0xf]
  %v1995 = vld [vmem:[%s3 + $0x40] sm:$0xf]
  %v1996 = vld [vmem:[%s3 + $0x44] sm:$0xf]
  %v1997 = vld [vmem:[%s3 + $0x48] sm:$0xf]
  %v1998 = vld [vmem:[%s3 + $0x4c] sm:$0xf]
  %v1999 = vld [vmem:[%s3 + $0x50] sm:$0xf]
  %v2000 = vld [vmem:[%s3 + $0x54] sm:$0xf]
  %v2001 = vld [vmem:[%s3 + $0x58] sm:$0xf]
  %v2002 = vld [vmem:[%s3 + $0x5c] sm:$0xf]
  %v2003 = vld [vmem:[%s3 + $0x60] sm:$0xf]
  %v2004 = vld [vmem:[%s3 + $0x64] sm:$0xf]
  %v2005 = vld [vmem:[%s3 + $0x68] sm:$0xf]
  %v2006 = vld [vmem:[%s3 + $0x6c] sm:$0xf]
  %v2007 = vld [vmem:[%s3 + $0x70] sm:$0xf]
  %v2008 = vld [vmem:[%s3 + $0x74] sm:$0xf]
  %v2009 = vld [vmem:[%s3 + $0x78] sm:$0xf]
  %v2010 = vld [vmem:[%s3 + $0x7c] sm:$0xf]
  %v2043 = vunpack.c.l.b16 %v1979
  %v2044 = vunpack.c.l.b16 %v1980
  %v2045 = vunpack.c.l.b16 %v1981
  %v2046 = vunpack.c.l.b16 %v1982
  %v2047 = vunpack.c.l.b16 %v1983
  %v2048 = vunpack.c.l.b16 %v1984
  %v2049 = vunpack.c.l.b16 %v1985
  %v2050 = vunpack.c.l.b16 %v1986
  %v2051 = vunpack.c.l.b16 %v1987
  %v2052 = vunpack.c.l.b16 %v1988
  %v2053 = vunpack.c.l.b16 %v1989
  %v2054 = vunpack.c.l.b16 %v1990
  %v2055 = vunpack.c.l.b16 %v1991
  %v2056 = vunpack.c.l.b16 %v1992
  %v2057 = vunpack.c.l.b16 %v1993
  %v2058 = vunpack.c.l.b16 %v1994
  %v2059 = vunpack.c.l.b16 %v1995
  %v2060 = vunpack.c.l.b16 %v1996
  %v2061 = vunpack.c.l.b16 %v1997
  %v2062 = vunpack.c.l.b16 %v1998
  %v2063 = vunpack.c.l.b16 %v1999
  %v2064 = vunpack.c.l.b16 %v2000
  %v2065 = vunpack.c.l.b16 %v2001
  %v2066 = vunpack.c.l.b16 %v2002
  %v2067 = vunpack.c.l.b16 %v2003
  %v2068 = vunpack.c.l.b16 %v2004
  %v2069 = vunpack.c.l.b16 %v2005
  %v2070 = vunpack.c.l.b16 %v2006
  %v2071 = vunpack.c.l.b16 %v2007
  %v2072 = vunpack.c.l.b16 %v2008
  %v2073 = vunpack.c.l.b16 %v2009
  %v2074 = vunpack.c.l.b16 %v2010
  %v2075 = vpack.c.b16 %v2044, %v2043
  %v2076 = vpack.c.b16 %v2046, %v2045
  %v2077 = vpack.c.b16 %v2048, %v2047
  %v2078 = vpack.c.b16 %v2050, %v2049
  %v2079 = vpack.c.b16 %v2052, %v2051
  %v2080 = vpack.c.b16 %v2054, %v2053
  %v2081 = vpack.c.b16 %v2056, %v2055
  %v2082 = vpack.c.b16 %v2058, %v2057
  %v2083 = vpack.c.b16 %v2060, %v2059
  %v2084 = vpack.c.b16 %v2062, %v2061
  %v2085 = vpack.c.b16 %v2064, %v2063
  %v2086 = vpack.c.b16 %v2066, %v2065
  %v2087 = vpack.c.b16 %v2068, %v2067
  %v2088 = vpack.c.b16 %v2070, %v2069
  %v2089 = vpack.c.b16 %v2072, %v2071
  %v2090 = vpack.c.b16 %v2074, %v2073
  %2107 = vmatprep.subr.bf16.mxu0 0
  %2108 = vmatpush1.bf16.msra.mxu0 %v2082
  %2109 = vmatprep.subr.bf16.mxu0 0
  %2110 = vmatpush1.bf16.msra.mxu0 %v2081
  %2111 = vmatprep.subr.bf16.mxu0 0
  %2112 = vmatpush1.bf16.msra.mxu0 %v2080
  %2113 = vmatprep.subr.bf16.mxu0 0
  %2114 = vmatpush1.bf16.msra.mxu0 %v2079
  %2115 = vmatprep.subr.bf16.mxu0 0
  %2116 = vmatpush1.bf16.msra.mxu0 %v2078
  %2117 = vmatprep.subr.bf16.mxu0 0
  %2118 = vmatpush1.bf16.msra.mxu0 %v2077
  %2119 = vmatprep.subr.bf16.mxu0 0
  %2120 = vmatpush1.bf16.msra.mxu0 %v2076
  %2121 = vmatprep.subr.bf16.mxu0 0
  %2122 = vmatpush1.bf16.msra.mxu0 %v2075
  %2123 = vmatprep.subr.bf16.mxu0 0
  %2124 = vmatpush2.bf16.msra.mxu0 %v2090
  %2125 = vmatprep.subr.bf16.mxu0 0
  %2126 = vmatpush2.bf16.msra.mxu0 %v2089
  %2127 = vmatprep.subr.bf16.mxu0 0
  %2128 = vmatpush2.bf16.msra.mxu0 %v2088
  %2129 = vmatprep.subr.bf16.mxu0 0
  %2130 = vmatpush2.bf16.msra.mxu0 %v2087
  %2131 = vmatprep.subr.bf16.mxu0 0
  %2132 = vmatpush2.bf16.msra.mxu0 %v2086
  %2133 = vmatprep.subr.bf16.mxu0 0
  %2134 = vmatpush2.bf16.msra.mxu0 %v2085
  %2135 = vmatprep.subr.bf16.mxu0 0
  %2136 = vmatpush2.bf16.msra.mxu0 %v2084
  %2137 = vmatprep.subr.bf16.mxu0 0
  %2138 = vmatpush2.bf16.msra.mxu0 %v2083
  %2139 = vmatprep.mubr.bf16.mxu0 %v1978
  %2140 = vmatmul.mubr.bf16.gmra.mxu0 %v1977
  %v2141 = vpop.f32.mrf.mxu0
  %v2142 = vadd.f32 0.0, %v2141
  %v2143 = vpop.f32.mrf.mxu0
  %v2144 = vpop.f32.mrf.mxu0
  %v2145 = vpop.f32.mrf.mxu0
  %2146 = vdwg.mxu0
  %v2147 = vadd.f32 %v291, %v2142
  %s2148 = scalar_lea.vmem %s0, 64
  %v2149 = vld [vmem:[%s2148] sm:$0xff]
  %v2150 = vld [vmem:[%s2148 + $0x8] sm:$0xff]
  %v2151 = vld [vmem:[%s2148 + $0x10] sm:$0xff]
  %v2152 = vld [vmem:[%s2148 + $0x18] sm:$0xff]
  %v2153 = vld [vmem:[%s2148 + $0x20] sm:$0xff]
  %v2154 = vld [vmem:[%s2148 + $0x28] sm:$0xff]
  %v2155 = vld [vmem:[%s2148 + $0x30] sm:$0xff]
  %v2156 = vld [vmem:[%s2148 + $0x38] sm:$0xff]
  %v2165 = vunpack.c.l.b16 %v2149
  %v2166 = vunpack.c.h.b16 %v2149
  %v2167 = vunpack.c.l.b16 %v2150
  %v2168 = vunpack.c.h.b16 %v2150
  %v2169 = vunpack.c.l.b16 %v2151
  %v2170 = vunpack.c.h.b16 %v2151
  %v2171 = vunpack.c.l.b16 %v2152
  %v2172 = vunpack.c.h.b16 %v2152
  %v2173 = vunpack.c.l.b16 %v2153
  %v2174 = vunpack.c.h.b16 %v2153
  %v2175 = vunpack.c.l.b16 %v2154
  %v2176 = vunpack.c.h.b16 %v2154
  %v2177 = vunpack.c.l.b16 %v2155
  %v2178 = vunpack.c.h.b16 %v2155
  %v2179 = vunpack.c.l.b16 %v2156
  %v2180 = vunpack.c.h.b16 %v2156
  %v2181 = vpack.c.b16 %v2165, %v2165
  %v2182 = vpack.c.b16 %v2166, %v2166
  %v2183 = vpack.c.b16 %v2167, %v2167
  %v2184 = vpack.c.b16 %v2168, %v2168
  %v2185 = vpack.c.b16 %v2169, %v2169
  %v2186 = vpack.c.b16 %v2170, %v2170
  %v2187 = vpack.c.b16 %v2171, %v2171
  %v2188 = vpack.c.b16 %v2172, %v2172
  %v2189 = vpack.c.b16 %v2173, %v2173
  %v2190 = vpack.c.b16 %v2174, %v2174
  %v2191 = vpack.c.b16 %v2175, %v2175
  %v2192 = vpack.c.b16 %v2176, %v2176
  %v2193 = vpack.c.b16 %v2177, %v2177
  %v2194 = vpack.c.b16 %v2178, %v2178
  %v2195 = vpack.c.b16 %v2179, %v2179
  %v2196 = vpack.c.b16 %v2180, %v2180
  %2213 = vmatprep.subr.bf16.mxu0 %v1150
  %2214 = vmatpush1.bf16.msra.mxu0 %v1149
  %2215 = vmatprep.subr.bf16.mxu0 %v1148
  %2216 = vmatpush1.bf16.msra.mxu0 %v1147
  %2217 = vmatprep.subr.bf16.mxu0 %v1146
  %2218 = vmatpush1.bf16.msra.mxu0 %v1145
  %2219 = vmatprep.subr.bf16.mxu0 %v1144
  %2220 = vmatpush1.bf16.msra.mxu0 %v1143
  %2221 = vmatprep.subr.bf16.mxu0 %v1142
  %2222 = vmatpush1.bf16.msra.mxu0 %v1141
  %2223 = vmatprep.subr.bf16.mxu0 %v1140
  %2224 = vmatpush1.bf16.msra.mxu0 %v1139
  %2225 = vmatprep.subr.bf16.mxu0 %v1138
  %2226 = vmatpush1.bf16.msra.mxu0 %v1137
  %2227 = vmatprep.subr.bf16.mxu0 %v1136
  %2228 = vmatpush1.bf16.msra.mxu0 %v1135
  %2229 = vmatprep.subr.bf16.mxu0 %v1166
  %2230 = vmatpush2.bf16.msra.mxu0 %v1165
  %2231 = vmatprep.subr.bf16.mxu0 %v1164
  %2232 = vmatpush2.bf16.msra.mxu0 %v1163
  %2233 = vmatprep.subr.bf16.mxu0 %v1162
  %2234 = vmatpush2.bf16.msra.mxu0 %v1161
  %2235 = vmatprep.subr.bf16.mxu0 %v1160
  %2236 = vmatpush2.bf16.msra.mxu0 %v1159
  %2237 = vmatprep.subr.bf16.mxu0 %v1158
  %2238 = vmatpush2.bf16.msra.mxu0 %v1157
  %2239 = vmatprep.subr.bf16.mxu0 %v1156
  %2240 = vmatpush2.bf16.msra.mxu0 %v1155
  %2241 = vmatprep.subr.bf16.mxu0 %v1154
  %2242 = vmatpush2.bf16.msra.mxu0 %v1153
  %2243 = vmatprep.subr.bf16.mxu0 %v1152
  %2244 = vmatpush2.bf16.msra.mxu0 %v1151
  %2245 = vmatprep.mubr.bf16.mxu0 %v2182
  %2246 = vmatmul.mubr.bf16.gmra.mxu0 %v2181
  %v2247 = vpop.f32.mrf.mxu0
  %v2248 = vadd.f32 %v304, %v2247
  %v2249 = vpop.f32.mrf.mxu0
  %v2250 = vadd.f32 %v308, %v2249
  %v2251 = vpop.f32.mrf.mxu0
  %v2252 = vpop.f32.mrf.mxu0
  %2253 = vdwg.mxu0
  %2254 = vmatprep.subr.bf16.mxu0 %v1182
  %2255 = vmatpush1.bf16.msra.mxu0 %v1181
  %2256 = vmatprep.subr.bf16.mxu0 %v1180
  %2257 = vmatpush1.bf16.msra.mxu0 %v1179
  %2258 = vmatprep.subr.bf16.mxu0 %v1178
  %2259 = vmatpush1.bf16.msra.mxu0 %v1177
  %2260 = vmatprep.subr.bf16.mxu0 %v1176
  %2261 = vmatpush1.bf16.msra.mxu0 %v1175
  %2262 = vmatprep.subr.bf16.mxu0 %v1174
  %2263 = vmatpush1.bf16.msra.mxu0 %v1173
  %2264 = vmatprep.subr.bf16.mxu0 %v1172
  %2265 = vmatpush1.bf16.msra.mxu0 %v1171
  %2266 = vmatprep.subr.bf16.mxu0 %v1170
  %2267 = vmatpush1.bf16.msra.mxu0 %v1169
  %2268 = vmatprep.subr.bf16.mxu0 %v1168
  %2269 = vmatpush1.bf16.msra.mxu0 %v1167
  %2270 = vmatprep.subr.bf16.mxu0 %v1198
  %2271 = vmatpush2.bf16.msra.mxu0 %v1197
  %2272 = vmatprep.subr.bf16.mxu0 %v1196
  %2273 = vmatpush2.bf16.msra.mxu0 %v1195
  %2274 = vmatprep.subr.bf16.mxu0 %v1194
  %2275 = vmatpush2.bf16.msra.mxu0 %v1193
  %2276 = vmatprep.subr.bf16.mxu0 %v1192
  %2277 = vmatpush2.bf16.msra.mxu0 %v1191
  %2278 = vmatprep.subr.bf16.mxu0 %v1190
  %2279 = vmatpush2.bf16.msra.mxu0 %v1189
  %2280 = vmatprep.subr.bf16.mxu0 %v1188
  %2281 = vmatpush2.bf16.msra.mxu0 %v1187
  %2282 = vmatprep.subr.bf16.mxu0 %v1186
  %2283 = vmatpush2.bf16.msra.mxu0 %v1185
  %2284 = vmatprep.subr.bf16.mxu0 %v1184
  %2285 = vmatpush2.bf16.msra.mxu0 %v1183
  %2286 = vmatprep.mubr.bf16.mxu0 %v2184
  %2287 = vmatmul.mubr.bf16.gmra.mxu0 %v2183
  %v2288 = vpop.f32.mrf.mxu0
  %v2289 = vadd.f32 %v2248, %v2288
  %v2290 = vpop.f32.mrf.mxu0
  %v2291 = vadd.f32 %v2250, %v2290
  %v2292 = vpop.f32.mrf.mxu0
  %v2293 = vpop.f32.mrf.mxu0
  %2294 = vdwg.mxu0
  %2295 = vmatprep.subr.bf16.mxu0 %v1214
  %2296 = vmatpush1.bf16.msra.mxu0 %v1213
  %2297 = vmatprep.subr.bf16.mxu0 %v1212
  %2298 = vmatpush1.bf16.msra.mxu0 %v1211
  %2299 = vmatprep.subr.bf16.mxu0 %v1210
  %2300 = vmatpush1.bf16.msra.mxu0 %v1209
  %2301 = vmatprep.subr.bf16.mxu0 %v1208
  %2302 = vmatpush1.bf16.msra.mxu0 %v1207
  %2303 = vmatprep.subr.bf16.mxu0 %v1206
  %2304 = vmatpush1.bf16.msra.mxu0 %v1205
  %2305 = vmatprep.subr.bf16.mxu0 %v1204
  %2306 = vmatpush1.bf16.msra.mxu0 %v1203
  %2307 = vmatprep.subr.bf16.mxu0 %v1202
  %2308 = vmatpush1.bf16.msra.mxu0 %v1201
  %2309 = vmatprep.subr.bf16.mxu0 %v1200
  %2310 = vmatpush1.bf16.msra.mxu0 %v1199
  %2311 = vmatprep.subr.bf16.mxu0 %v1230
  %2312 = vmatpush2.bf16.msra.mxu0 %v1229
  %2313 = vmatprep.subr.bf16.mxu0 %v1228
  %2314 = vmatpush2.bf16.msra.mxu0 %v1227
  %2315 = vmatprep.subr.bf16.mxu0 %v1226
  %2316 = vmatpush2.bf16.msra.mxu0 %v1225
  %2317 = vmatprep.subr.bf16.mxu0 %v1224
  %2318 = vmatpush2.bf16.msra.mxu0 %v1223
  %2319 = vmatprep.subr.bf16.mxu0 %v1222
  %2320 = vmatpush2.bf16.msra.mxu0 %v1221
  %2321 = vmatprep.subr.bf16.mxu0 %v1220
  %2322 = vmatpush2.bf16.msra.mxu0 %v1219
  %2323 = vmatprep.subr.bf16.mxu0 %v1218
  %2324 = vmatpush2.bf16.msra.mxu0 %v1217
  %2325 = vmatprep.subr.bf16.mxu0 %v1216
  %2326 = vmatpush2.bf16.msra.mxu0 %v1215
  %2327 = vmatprep.mubr.bf16.mxu0 %v2186
  %2328 = vmatmul.mubr.bf16.gmra.mxu0 %v2185
  %v2329 = vpop.f32.mrf.mxu0
  %v2330 = vadd.f32 %v2289, %v2329
  %v2331 = vpop.f32.mrf.mxu0
  %v2332 = vadd.f32 %v2291, %v2331
  %v2333 = vpop.f32.mrf.mxu0
  %v2334 = vpop.f32.mrf.mxu0
  %2335 = vdwg.mxu0
  %2336 = vmatprep.subr.bf16.mxu0 %v1246
  %2337 = vmatpush1.bf16.msra.mxu0 %v1245
  %2338 = vmatprep.subr.bf16.mxu0 %v1244
  %2339 = vmatpush1.bf16.msra.mxu0 %v1243
  %2340 = vmatprep.subr.bf16.mxu0 %v1242
  %2341 = vmatpush1.bf16.msra.mxu0 %v1241
  %2342 = vmatprep.subr.bf16.mxu0 %v1240
  %2343 = vmatpush1.bf16.msra.mxu0 %v1239
  %2344 = vmatprep.subr.bf16.mxu0 %v1238
  %2345 = vmatpush1.bf16.msra.mxu0 %v1237
  %2346 = vmatprep.subr.bf16.mxu0 %v1236
  %2347 = vmatpush1.bf16.msra.mxu0 %v1235
  %2348 = vmatprep.subr.bf16.mxu0 %v1234
  %2349 = vmatpush1.bf16.msra.mxu0 %v1233
  %2350 = vmatprep.subr.bf16.mxu0 %v1232
  %2351 = vmatpush1.bf16.msra.mxu0 %v1231
  %2352 = vmatprep.subr.bf16.mxu0 %v1262
  %2353 = vmatpush2.bf16.msra.mxu0 %v1261
  %2354 = vmatprep.subr.bf16.mxu0 %v1260
  %2355 = vmatpush2.bf16.msra.mxu0 %v1259
  %2356 = vmatprep.subr.bf16.mxu0 %v1258
  %2357 = vmatpush2.bf16.msra.mxu0 %v1257
  %2358 = vmatprep.subr.bf16.mxu0 %v1256
  %2359 = vmatpush2.bf16.msra.mxu0 %v1255
  %2360 = vmatprep.subr.bf16.mxu0 %v1254
  %2361 = vmatpush2.bf16.msra.mxu0 %v1253
  %2362 = vmatprep.subr.bf16.mxu0 %v1252
  %2363 = vmatpush2.bf16.msra.mxu0 %v1251
  %2364 = vmatprep.subr.bf16.mxu0 %v1250
  %2365 = vmatpush2.bf16.msra.mxu0 %v1249
  %2366 = vmatprep.subr.bf16.mxu0 %v1248
  %2367 = vmatpush2.bf16.msra.mxu0 %v1247
  %2368 = vmatprep.mubr.bf16.mxu0 %v2188
  %2369 = vmatmul.mubr.bf16.gmra.mxu0 %v2187
  %v2370 = vpop.f32.mrf.mxu0
  %v2371 = vadd.f32 %v2330, %v2370
  %v2372 = vpop.f32.mrf.mxu0
  %v2373 = vadd.f32 %v2332, %v2372
  %v2374 = vpop.f32.mrf.mxu0
  %v2375 = vpop.f32.mrf.mxu0
  %2376 = vdwg.mxu0
  %2377 = vmatprep.subr.bf16.mxu0 %v1278
  %2378 = vmatpush1.bf16.msra.mxu0 %v1277
  %2379 = vmatprep.subr.bf16.mxu0 %v1276
  %2380 = vmatpush1.bf16.msra.mxu0 %v1275
  %2381 = vmatprep.subr.bf16.mxu0 %v1274
  %2382 = vmatpush1.bf16.msra.mxu0 %v1273
  %2383 = vmatprep.subr.bf16.mxu0 %v1272
  %2384 = vmatpush1.bf16.msra.mxu0 %v1271
  %2385 = vmatprep.subr.bf16.mxu0 %v1270
  %2386 = vmatpush1.bf16.msra.mxu0 %v1269
  %2387 = vmatprep.subr.bf16.mxu0 %v1268
  %2388 = vmatpush1.bf16.msra.mxu0 %v1267
  %2389 = vmatprep.subr.bf16.mxu0 %v1266
  %2390 = vmatpush1.bf16.msra.mxu0 %v1265
  %2391 = vmatprep.subr.bf16.mxu0 %v1264
  %2392 = vmatpush1.bf16.msra.mxu0 %v1263
  %2393 = vmatprep.subr.bf16.mxu0 %v1294
  %2394 = vmatpush2.bf16.msra.mxu0 %v1293
  %2395 = vmatprep.subr.bf16.mxu0 %v1292
  %2396 = vmatpush2.bf16.msra.mxu0 %v1291
  %2397 = vmatprep.subr.bf16.mxu0 %v1290
  %2398 = vmatpush2.bf16.msra.mxu0 %v1289
  %2399 = vmatprep.subr.bf16.mxu0 %v1288
  %2400 = vmatpush2.bf16.msra.mxu0 %v1287
  %2401 = vmatprep.subr.bf16.mxu0 %v1286
  %2402 = vmatpush2.bf16.msra.mxu0 %v1285
  %2403 = vmatprep.subr.bf16.mxu0 %v1284
  %2404 = vmatpush2.bf16.msra.mxu0 %v1283
  %2405 = vmatprep.subr.bf16.mxu0 %v1282
  %2406 = vmatpush2.bf16.msra.mxu0 %v1281
  %2407 = vmatprep.subr.bf16.mxu0 %v1280
  %2408 = vmatpush2.bf16.msra.mxu0 %v1279
  %2409 = vmatprep.mubr.bf16.mxu0 %v2190
  %2410 = vmatmul.mubr.bf16.gmra.mxu0 %v2189
  %v2411 = vpop.f32.mrf.mxu0
  %v2412 = vadd.f32 %v2371, %v2411
  %v2413 = vpop.f32.mrf.mxu0
  %v2414 = vadd.f32 %v2373, %v2413
  %v2415 = vpop.f32.mrf.mxu0
  %v2416 = vpop.f32.mrf.mxu0
  %2417 = vdwg.mxu0
  %2418 = vmatprep.subr.bf16.mxu0 %v1310
  %2419 = vmatpush1.bf16.msra.mxu0 %v1309
  %2420 = vmatprep.subr.bf16.mxu0 %v1308
  %2421 = vmatpush1.bf16.msra.mxu0 %v1307
  %2422 = vmatprep.subr.bf16.mxu0 %v1306
  %2423 = vmatpush1.bf16.msra.mxu0 %v1305
  %2424 = vmatprep.subr.bf16.mxu0 %v1304
  %2425 = vmatpush1.bf16.msra.mxu0 %v1303
  %2426 = vmatprep.subr.bf16.mxu0 %v1302
  %2427 = vmatpush1.bf16.msra.mxu0 %v1301
  %2428 = vmatprep.subr.bf16.mxu0 %v1300
  %2429 = vmatpush1.bf16.msra.mxu0 %v1299
  %2430 = vmatprep.subr.bf16.mxu0 %v1298
  %2431 = vmatpush1.bf16.msra.mxu0 %v1297
  %2432 = vmatprep.subr.bf16.mxu0 %v1296
  %2433 = vmatpush1.bf16.msra.mxu0 %v1295
  %2434 = vmatprep.subr.bf16.mxu0 %v1326
  %2435 = vmatpush2.bf16.msra.mxu0 %v1325
  %2436 = vmatprep.subr.bf16.mxu0 %v1324
  %2437 = vmatpush2.bf16.msra.mxu0 %v1323
  %2438 = vmatprep.subr.bf16.mxu0 %v1322
  %2439 = vmatpush2.bf16.msra.mxu0 %v1321
  %2440 = vmatprep.subr.bf16.mxu0 %v1320
  %2441 = vmatpush2.bf16.msra.mxu0 %v1319
  %2442 = vmatprep.subr.bf16.mxu0 %v1318
  %2443 = vmatpush2.bf16.msra.mxu0 %v1317
  %2444 = vmatprep.subr.bf16.mxu0 %v1316
  %2445 = vmatpush2.bf16.msra.mxu0 %v1315
  %2446 = vmatprep.subr.bf16.mxu0 %v1314
  %2447 = vmatpush2.bf16.msra.mxu0 %v1313
  %2448 = vmatprep.subr.bf16.mxu0 %v1312
  %2449 = vmatpush2.bf16.msra.mxu0 %v1311
  %2450 = vmatprep.mubr.bf16.mxu0 %v2192
  %2451 = vmatmul.mubr.bf16.gmra.mxu0 %v2191
  %v2452 = vpop.f32.mrf.mxu0
  %v2453 = vadd.f32 %v2412, %v2452
  %v2454 = vpop.f32.mrf.mxu0
  %v2455 = vadd.f32 %v2414, %v2454
  %v2456 = vpop.f32.mrf.mxu0
  %v2457 = vpop.f32.mrf.mxu0
  %2458 = vdwg.mxu0
  %2459 = vmatprep.subr.bf16.mxu0 %v1342
  %2460 = vmatpush1.bf16.msra.mxu0 %v1341
  %2461 = vmatprep.subr.bf16.mxu0 %v1340
  %2462 = vmatpush1.bf16.msra.mxu0 %v1339
  %2463 = vmatprep.subr.bf16.mxu0 %v1338
  %2464 = vmatpush1.bf16.msra.mxu0 %v1337
  %2465 = vmatprep.subr.bf16.mxu0 %v1336
  %2466 = vmatpush1.bf16.msra.mxu0 %v1335
  %2467 = vmatprep.subr.bf16.mxu0 %v1334
  %2468 = vmatpush1.bf16.msra.mxu0 %v1333
  %2469 = vmatprep.subr.bf16.mxu0 %v1332
  %2470 = vmatpush1.bf16.msra.mxu0 %v1331
  %2471 = vmatprep.subr.bf16.mxu0 %v1330
  %2472 = vmatpush1.bf16.msra.mxu0 %v1329
  %2473 = vmatprep.subr.bf16.mxu0 %v1328
  %2474 = vmatpush1.bf16.msra.mxu0 %v1327
  %2475 = vmatprep.subr.bf16.mxu0 %v1358
  %2476 = vmatpush2.bf16.msra.mxu0 %v1357
  %2477 = vmatprep.subr.bf16.mxu0 %v1356
  %2478 = vmatpush2.bf16.msra.mxu0 %v1355
  %2479 = vmatprep.subr.bf16.mxu0 %v1354
  %2480 = vmatpush2.bf16.msra.mxu0 %v1353
  %2481 = vmatprep.subr.bf16.mxu0 %v1352
  %2482 = vmatpush2.bf16.msra.mxu0 %v1351
  %2483 = vmatprep.subr.bf16.mxu0 %v1350
  %2484 = vmatpush2.bf16.msra.mxu0 %v1349
  %2485 = vmatprep.subr.bf16.mxu0 %v1348
  %2486 = vmatpush2.bf16.msra.mxu0 %v1347
  %2487 = vmatprep.subr.bf16.mxu0 %v1346
  %2488 = vmatpush2.bf16.msra.mxu0 %v1345
  %2489 = vmatprep.subr.bf16.mxu0 %v1344
  %2490 = vmatpush2.bf16.msra.mxu0 %v1343
  %2491 = vmatprep.mubr.bf16.mxu0 %v2194
  %2492 = vmatmul.mubr.bf16.gmra.mxu0 %v2193
  %v2493 = vpop.f32.mrf.mxu0
  %v2494 = vadd.f32 %v2453, %v2493
  %v2495 = vpop.f32.mrf.mxu0
  %v2496 = vadd.f32 %v2455, %v2495
  %v2497 = vpop.f32.mrf.mxu0
  %v2498 = vpop.f32.mrf.mxu0
  %2499 = vdwg.mxu0
  %2500 = vmatprep.subr.bf16.mxu0 %v1374
  %2501 = vmatpush1.bf16.msra.mxu0 %v1373
  %2502 = vmatprep.subr.bf16.mxu0 %v1372
  %2503 = vmatpush1.bf16.msra.mxu0 %v1371
  %2504 = vmatprep.subr.bf16.mxu0 %v1370
  %2505 = vmatpush1.bf16.msra.mxu0 %v1369
  %2506 = vmatprep.subr.bf16.mxu0 %v1368
  %2507 = vmatpush1.bf16.msra.mxu0 %v1367
  %2508 = vmatprep.subr.bf16.mxu0 %v1366
  %2509 = vmatpush1.bf16.msra.mxu0 %v1365
  %2510 = vmatprep.subr.bf16.mxu0 %v1364
  %2511 = vmatpush1.bf16.msra.mxu0 %v1363
  %2512 = vmatprep.subr.bf16.mxu0 %v1362
  %2513 = vmatpush1.bf16.msra.mxu0 %v1361
  %2514 = vmatprep.subr.bf16.mxu0 %v1360
  %2515 = vmatpush1.bf16.msra.mxu0 %v1359
  %2516 = vmatprep.subr.bf16.mxu0 %v1390
  %2517 = vmatpush2.bf16.msra.mxu0 %v1389
  %2518 = vmatprep.subr.bf16.mxu0 %v1388
  %2519 = vmatpush2.bf16.msra.mxu0 %v1387
  %2520 = vmatprep.subr.bf16.mxu0 %v1386
  %2521 = vmatpush2.bf16.msra.mxu0 %v1385
  %2522 = vmatprep.subr.bf16.mxu0 %v1384
  %2523 = vmatpush2.bf16.msra.mxu0 %v1383
  %2524 = vmatprep.subr.bf16.mxu0 %v1382
  %2525 = vmatpush2.bf16.msra.mxu0 %v1381
  %2526 = vmatprep.subr.bf16.mxu0 %v1380
  %2527 = vmatpush2.bf16.msra.mxu0 %v1379
  %2528 = vmatprep.subr.bf16.mxu0 %v1378
  %2529 = vmatpush2.bf16.msra.mxu0 %v1377
  %2530 = vmatprep.subr.bf16.mxu0 %v1376
  %2531 = vmatpush2.bf16.msra.mxu0 %v1375
  %2532 = vmatprep.mubr.bf16.mxu0 %v2196
  %2533 = vmatmul.mubr.bf16.gmra.mxu0 %v2195
  %v2534 = vpop.f32.mrf.mxu0
  %v2535 = vadd.f32 %v2494, %v2534
  %v2536 = vpop.f32.mrf.mxu0
  %v2537 = vadd.f32 %v2496, %v2536
  %v2538 = vpop.f32.mrf.mxu0
  %v2539 = vpop.f32.mrf.mxu0
  %2540 = vdwg.mxu0
  %v2541 = vmax.f32 %v2535, 0.0
  %v2542 = vmax.f32 %v2537, 0.0
  %v2543 = vpack.c.bf16 %v2541, %v2541
  %v2544 = vpack.c.bf16 %v2542, %v2542
  %s2545 = scalar_lea.vmem %s3, 128
  %v2546 = vld [vmem:[%s2545] sm:$0xf]
  %v2547 = vld [vmem:[%s2545 + $0x4] sm:$0xf]
  %v2548 = vld [vmem:[%s2545 + $0x8] sm:$0xf]
  %v2549 = vld [vmem:[%s2545 + $0xc] sm:$0xf]
  %v2550 = vld [vmem:[%s2545 + $0x10] sm:$0xf]
  %v2551 = vld [vmem:[%s2545 + $0x14] sm:$0xf]
  %v2552 = vld [vmem:[%s2545 + $0x18] sm:$0xf]
  %v2553 = vld [vmem:[%s2545 + $0x1c] sm:$0xf]
  %v2554 = vld [vmem:[%s2545 + $0x20] sm:$0xf]
  %v2555 = vld [vmem:[%s2545 + $0x24] sm:$0xf]
  %v2556 = vld [vmem:[%s2545 + $0x28] sm:$0xf]
  %v2557 = vld [vmem:[%s2545 + $0x2c] sm:$0xf]
  %v2558 = vld [vmem:[%s2545 + $0x30] sm:$0xf]
  %v2559 = vld [vmem:[%s2545 + $0x34] sm:$0xf]
  %v2560 = vld [vmem:[%s2545 + $0x38] sm:$0xf]
  %v2561 = vld [vmem:[%s2545 + $0x3c] sm:$0xf]
  %v2562 = vld [vmem:[%s2545 + $0x40] sm:$0xf]
  %v2563 = vld [vmem:[%s2545 + $0x44] sm:$0xf]
  %v2564 = vld [vmem:[%s2545 + $0x48] sm:$0xf]
  %v2565 = vld [vmem:[%s2545 + $0x4c] sm:$0xf]
  %v2566 = vld [vmem:[%s2545 + $0x50] sm:$0xf]
  %v2567 = vld [vmem:[%s2545 + $0x54] sm:$0xf]
  %v2568 = vld [vmem:[%s2545 + $0x58] sm:$0xf]
  %v2569 = vld [vmem:[%s2545 + $0x5c] sm:$0xf]
  %v2570 = vld [vmem:[%s2545 + $0x60] sm:$0xf]
  %v2571 = vld [vmem:[%s2545 + $0x64] sm:$0xf]
  %v2572 = vld [vmem:[%s2545 + $0x68] sm:$0xf]
  %v2573 = vld [vmem:[%s2545 + $0x6c] sm:$0xf]
  %v2574 = vld [vmem:[%s2545 + $0x70] sm:$0xf]
  %v2575 = vld [vmem:[%s2545 + $0x74] sm:$0xf]
  %v2576 = vld [vmem:[%s2545 + $0x78] sm:$0xf]
  %v2577 = vld [vmem:[%s2545 + $0x7c] sm:$0xf]
  %v2610 = vunpack.c.l.b16 %v2546
  %v2611 = vunpack.c.l.b16 %v2547
  %v2612 = vunpack.c.l.b16 %v2548
  %v2613 = vunpack.c.l.b16 %v2549
  %v2614 = vunpack.c.l.b16 %v2550
  %v2615 = vunpack.c.l.b16 %v2551
  %v2616 = vunpack.c.l.b16 %v2552
  %v2617 = vunpack.c.l.b16 %v2553
  %v2618 = vunpack.c.l.b16 %v2554
  %v2619 = vunpack.c.l.b16 %v2555
  %v2620 = vunpack.c.l.b16 %v2556
  %v2621 = vunpack.c.l.b16 %v2557
  %v2622 = vunpack.c.l.b16 %v2558
  %v2623 = vunpack.c.l.b16 %v2559
  %v2624 = vunpack.c.l.b16 %v2560
  %v2625 = vunpack.c.l.b16 %v2561
  %v2626 = vunpack.c.l.b16 %v2562
  %v2627 = vunpack.c.l.b16 %v2563
  %v2628 = vunpack.c.l.b16 %v2564
  %v2629 = vunpack.c.l.b16 %v2565
  %v2630 = vunpack.c.l.b16 %v2566
  %v2631 = vunpack.c.l.b16 %v2567
  %v2632 = vunpack.c.l.b16 %v2568
  %v2633 = vunpack.c.l.b16 %v2569
  %v2634 = vunpack.c.l.b16 %v2570
  %v2635 = vunpack.c.l.b16 %v2571
  %v2636 = vunpack.c.l.b16 %v2572
  %v2637 = vunpack.c.l.b16 %v2573
  %v2638 = vunpack.c.l.b16 %v2574
  %v2639 = vunpack.c.l.b16 %v2575
  %v2640 = vunpack.c.l.b16 %v2576
  %v2641 = vunpack.c.l.b16 %v2577
  %v2642 = vpack.c.b16 %v2611, %v2610
  %v2643 = vpack.c.b16 %v2613, %v2612
  %v2644 = vpack.c.b16 %v2615, %v2614
  %v2645 = vpack.c.b16 %v2617, %v2616
  %v2646 = vpack.c.b16 %v2619, %v2618
  %v2647 = vpack.c.b16 %v2621, %v2620
  %v2648 = vpack.c.b16 %v2623, %v2622
  %v2649 = vpack.c.b16 %v2625, %v2624
  %v2650 = vpack.c.b16 %v2627, %v2626
  %v2651 = vpack.c.b16 %v2629, %v2628
  %v2652 = vpack.c.b16 %v2631, %v2630
  %v2653 = vpack.c.b16 %v2633, %v2632
  %v2654 = vpack.c.b16 %v2635, %v2634
  %v2655 = vpack.c.b16 %v2637, %v2636
  %v2656 = vpack.c.b16 %v2639, %v2638
  %v2657 = vpack.c.b16 %v2641, %v2640
  %2674 = vmatprep.subr.bf16.mxu0 0
  %2675 = vmatpush1.bf16.msra.mxu0 %v2649
  %2676 = vmatprep.subr.bf16.mxu0 0
  %2677 = vmatpush1.bf16.msra.mxu0 %v2648
  %2678 = vmatprep.subr.bf16.mxu0 0
  %2679 = vmatpush1.bf16.msra.mxu0 %v2647
  %2680 = vmatprep.subr.bf16.mxu0 0
  %2681 = vmatpush1.bf16.msra.mxu0 %v2646
  %2682 = vmatprep.subr.bf16.mxu0 0
  %2683 = vmatpush1.bf16.msra.mxu0 %v2645
  %2684 = vmatprep.subr.bf16.mxu0 0
  %2685 = vmatpush1.bf16.msra.mxu0 %v2644
  %2686 = vmatprep.subr.bf16.mxu0 0
  %2687 = vmatpush1.bf16.msra.mxu0 %v2643
  %2688 = vmatprep.subr.bf16.mxu0 0
  %2689 = vmatpush1.bf16.msra.mxu0 %v2642
  %2690 = vmatprep.subr.bf16.mxu0 0
  %2691 = vmatpush2.bf16.msra.mxu0 %v2657
  %2692 = vmatprep.subr.bf16.mxu0 0
  %2693 = vmatpush2.bf16.msra.mxu0 %v2656
  %2694 = vmatprep.subr.bf16.mxu0 0
  %2695 = vmatpush2.bf16.msra.mxu0 %v2655
  %2696 = vmatprep.subr.bf16.mxu0 0
  %2697 = vmatpush2.bf16.msra.mxu0 %v2654
  %2698 = vmatprep.subr.bf16.mxu0 0
  %2699 = vmatpush2.bf16.msra.mxu0 %v2653
  %2700 = vmatprep.subr.bf16.mxu0 0
  %2701 = vmatpush2.bf16.msra.mxu0 %v2652
  %2702 = vmatprep.subr.bf16.mxu0 0
  %2703 = vmatpush2.bf16.msra.mxu0 %v2651
  %2704 = vmatprep.subr.bf16.mxu0 0
  %2705 = vmatpush2.bf16.msra.mxu0 %v2650
  %2706 = vmatprep.mubr.bf16.mxu0 %v2544
  %2707 = vmatmul.mubr.bf16.gmra.mxu0 %v2543
  %v2708 = vpop.f32.mrf.mxu0
  %v2709 = vadd.f32 0.0, %v2708
  %v2710 = vpop.f32.mrf.mxu0
  %v2711 = vpop.f32.mrf.mxu0
  %v2712 = vpop.f32.mrf.mxu0
  %2713 = vdwg.mxu0
  %v2714 = vadd.f32 %v2147, %v2709
  %s2715 = scalar_lea.vmem %s0, 128
  %v2716 = vld [vmem:[%s2715] sm:$0xff]
  %v2717 = vld [vmem:[%s2715 + $0x8] sm:$0xff]
  %v2718 = vld [vmem:[%s2715 + $0x10] sm:$0xff]
  %v2719 = vld [vmem:[%s2715 + $0x18] sm:$0xff]
  %v2720 = vld [vmem:[%s2715 + $0x20] sm:$0xff]
  %v2721 = vld [vmem:[%s2715 + $0x28] sm:$0xff]
  %v2722 = vld [vmem:[%s2715 + $0x30] sm:$0xff]
  %v2723 = vld [vmem:[%s2715 + $0x38] sm:$0xff]
  %v2732 = vunpack.c.l.b16 %v2716
  %v2733 = vunpack.c.h.b16 %v2716
  %v2734 = vunpack.c.l.b16 %v2717
  %v2735 = vunpack.c.h.b16 %v2717
  %v2736 = vunpack.c.l.b16 %v2718
  %v2737 = vunpack.c.h.b16 %v2718
  %v2738 = vunpack.c.l.b16 %v2719
  %v2739 = vunpack.c.h.b16 %v2719
  %v2740 = vunpack.c.l.b16 %v2720
  %v2741 = vunpack.c.h.b16 %v2720
  %v2742 = vunpack.c.l.b16 %v2721
  %v2743 = vunpack.c.h.b16 %v2721
  %v2744 = vunpack.c.l.b16 %v2722
  %v2745 = vunpack.c.h.b16 %v2722
  %v2746 = vunpack.c.l.b16 %v2723
  %v2747 = vunpack.c.h.b16 %v2723
  %v2748 = vpack.c.b16 %v2732, %v2732
  %v2749 = vpack.c.b16 %v2733, %v2733
  %v2750 = vpack.c.b16 %v2734, %v2734
  %v2751 = vpack.c.b16 %v2735, %v2735
  %v2752 = vpack.c.b16 %v2736, %v2736
  %v2753 = vpack.c.b16 %v2737, %v2737
  %v2754 = vpack.c.b16 %v2738, %v2738
  %v2755 = vpack.c.b16 %v2739, %v2739
  %v2756 = vpack.c.b16 %v2740, %v2740
  %v2757 = vpack.c.b16 %v2741, %v2741
  %v2758 = vpack.c.b16 %v2742, %v2742
  %v2759 = vpack.c.b16 %v2743, %v2743
  %v2760 = vpack.c.b16 %v2744, %v2744
  %v2761 = vpack.c.b16 %v2745, %v2745
  %v2762 = vpack.c.b16 %v2746, %v2746
  %v2763 = vpack.c.b16 %v2747, %v2747
  %2780 = vmatprep.subr.bf16.mxu0 %v1150
  %2781 = vmatpush1.bf16.msra.mxu0 %v1149
  %2782 = vmatprep.subr.bf16.mxu0 %v1148
  %2783 = vmatpush1.bf16.msra.mxu0 %v1147
  %2784 = vmatprep.subr.bf16.mxu0 %v1146
  %2785 = vmatpush1.bf16.msra.mxu0 %v1145
  %2786 = vmatprep.subr.bf16.mxu0 %v1144
  %2787 = vmatpush1.bf16.msra.mxu0 %v1143
  %2788 = vmatprep.subr.bf16.mxu0 %v1142
  %2789 = vmatpush1.bf16.msra.mxu0 %v1141
  %2790 = vmatprep.subr.bf16.mxu0 %v1140
  %2791 = vmatpush1.bf16.msra.mxu0 %v1139
  %2792 = vmatprep.subr.bf16.mxu0 %v1138
  %2793 = vmatpush1.bf16.msra.mxu0 %v1137
  %2794 = vmatprep.subr.bf16.mxu0 %v1136
  %2795 = vmatpush1.bf16.msra.mxu0 %v1135
  %2796 = vmatprep.subr.bf16.mxu0 %v1166
  %2797 = vmatpush2.bf16.msra.mxu0 %v1165
  %2798 = vmatprep.subr.bf16.mxu0 %v1164
  %2799 = vmatpush2.bf16.msra.mxu0 %v1163
  %2800 = vmatprep.subr.bf16.mxu0 %v1162
  %2801 = vmatpush2.bf16.msra.mxu0 %v1161
  %2802 = vmatprep.subr.bf16.mxu0 %v1160
  %2803 = vmatpush2.bf16.msra.mxu0 %v1159
  %2804 = vmatprep.subr.bf16.mxu0 %v1158
  %2805 = vmatpush2.bf16.msra.mxu0 %v1157
  %2806 = vmatprep.subr.bf16.mxu0 %v1156
  %2807 = vmatpush2.bf16.msra.mxu0 %v1155
  %2808 = vmatprep.subr.bf16.mxu0 %v1154
  %2809 = vmatpush2.bf16.msra.mxu0 %v1153
  %2810 = vmatprep.subr.bf16.mxu0 %v1152
  %2811 = vmatpush2.bf16.msra.mxu0 %v1151
  %2812 = vmatprep.mubr.bf16.mxu0 %v2749
  %2813 = vmatmul.mubr.bf16.gmra.mxu0 %v2748
  %v2814 = vpop.f32.mrf.mxu0
  %v2815 = vadd.f32 %v304, %v2814
  %v2816 = vpop.f32.mrf.mxu0
  %v2817 = vadd.f32 %v308, %v2816
  %v2818 = vpop.f32.mrf.mxu0
  %v2819 = vpop.f32.mrf.mxu0
  %2820 = vdwg.mxu0
  %2821 = vmatprep.subr.bf16.mxu0 %v1182
  %2822 = vmatpush1.bf16.msra.mxu0 %v1181
  %2823 = vmatprep.subr.bf16.mxu0 %v1180
  %2824 = vmatpush1.bf16.msra.mxu0 %v1179
  %2825 = vmatprep.subr.bf16.mxu0 %v1178
  %2826 = vmatpush1.bf16.msra.mxu0 %v1177
  %2827 = vmatprep.subr.bf16.mxu0 %v1176
  %2828 = vmatpush1.bf16.msra.mxu0 %v1175
  %2829 = vmatprep.subr.bf16.mxu0 %v1174
  %2830 = vmatpush1.bf16.msra.mxu0 %v1173
  %2831 = vmatprep.subr.bf16.mxu0 %v1172
  %2832 = vmatpush1.bf16.msra.mxu0 %v1171
  %2833 = vmatprep.subr.bf16.mxu0 %v1170
  %2834 = vmatpush1.bf16.msra.mxu0 %v1169
  %2835 = vmatprep.subr.bf16.mxu0 %v1168
  %2836 = vmatpush1.bf16.msra.mxu0 %v1167
  %2837 = vmatprep.subr.bf16.mxu0 %v1198
  %2838 = vmatpush2.bf16.msra.mxu0 %v1197
  %2839 = vmatprep.subr.bf16.mxu0 %v1196
  %2840 = vmatpush2.bf16.msra.mxu0 %v1195
  %2841 = vmatprep.subr.bf16.mxu0 %v1194
  %2842 = vmatpush2.bf16.msra.mxu0 %v1193
  %2843 = vmatprep.subr.bf16.mxu0 %v1192
  %2844 = vmatpush2.bf16.msra.mxu0 %v1191
  %2845 = vmatprep.subr.bf16.mxu0 %v1190
  %2846 = vmatpush2.bf16.msra.mxu0 %v1189
  %2847 = vmatprep.subr.bf16.mxu0 %v1188
  %2848 = vmatpush2.bf16.msra.mxu0 %v1187
  %2849 = vmatprep.subr.bf16.mxu0 %v1186
  %2850 = vmatpush2.bf16.msra.mxu0 %v1185
  %2851 = vmatprep.subr.bf16.mxu0 %v1184
  %2852 = vmatpush2.bf16.msra.mxu0 %v1183
  %2853 = vmatprep.mubr.bf16.mxu0 %v2751
  %2854 = vmatmul.mubr.bf16.gmra.mxu0 %v2750
  %v2855 = vpop.f32.mrf.mxu0
  %v2856 = vadd.f32 %v2815, %v2855
  %v2857 = vpop.f32.mrf.mxu0
  %v2858 = vadd.f32 %v2817, %v2857
  %v2859 = vpop.f32.mrf.mxu0
  %v2860 = vpop.f32.mrf.mxu0
  %2861 = vdwg.mxu0
  %2862 = vmatprep.subr.bf16.mxu0 %v1214
  %2863 = vmatpush1.bf16.msra.mxu0 %v1213
  %2864 = vmatprep.subr.bf16.mxu0 %v1212
  %2865 = vmatpush1.bf16.msra.mxu0 %v1211
  %2866 = vmatprep.subr.bf16.mxu0 %v1210
  %2867 = vmatpush1.bf16.msra.mxu0 %v1209
  %2868 = vmatprep.subr.bf16.mxu0 %v1208
  %2869 = vmatpush1.bf16.msra.mxu0 %v1207
  %2870 = vmatprep.subr.bf16.mxu0 %v1206
  %2871 = vmatpush1.bf16.msra.mxu0 %v1205
  %2872 = vmatprep.subr.bf16.mxu0 %v1204
  %2873 = vmatpush1.bf16.msra.mxu0 %v1203
  %2874 = vmatprep.subr.bf16.mxu0 %v1202
  %2875 = vmatpush1.bf16.msra.mxu0 %v1201
  %2876 = vmatprep.subr.bf16.mxu0 %v1200
  %2877 = vmatpush1.bf16.msra.mxu0 %v1199
  %2878 = vmatprep.subr.bf16.mxu0 %v1230
  %2879 = vmatpush2.bf16.msra.mxu0 %v1229
  %2880 = vmatprep.subr.bf16.mxu0 %v1228
  %2881 = vmatpush2.bf16.msra.mxu0 %v1227
  %2882 = vmatprep.subr.bf16.mxu0 %v1226
  %2883 = vmatpush2.bf16.msra.mxu0 %v1225
  %2884 = vmatprep.subr.bf16.mxu0 %v1224
  %2885 = vmatpush2.bf16.msra.mxu0 %v1223
  %2886 = vmatprep.subr.bf16.mxu0 %v1222
  %2887 = vmatpush2.bf16.msra.mxu0 %v1221
  %2888 = vmatprep.subr.bf16.mxu0 %v1220
  %2889 = vmatpush2.bf16.msra.mxu0 %v1219
  %2890 = vmatprep.subr.bf16.mxu0 %v1218
  %2891 = vmatpush2.bf16.msra.mxu0 %v1217
  %2892 = vmatprep.subr.bf16.mxu0 %v1216
  %2893 = vmatpush2.bf16.msra.mxu0 %v1215
  %2894 = vmatprep.mubr.bf16.mxu0 %v2753
  %2895 = vmatmul.mubr.bf16.gmra.mxu0 %v2752
  %v2896 = vpop.f32.mrf.mxu0
  %v2897 = vadd.f32 %v2856, %v2896
  %v2898 = vpop.f32.mrf.mxu0
  %v2899 = vadd.f32 %v2858, %v2898
  %v2900 = vpop.f32.mrf.mxu0
  %v2901 = vpop.f32.mrf.mxu0
  %2902 = vdwg.mxu0
  %2903 = vmatprep.subr.bf16.mxu0 %v1246
  %2904 = vmatpush1.bf16.msra.mxu0 %v1245
  %2905 = vmatprep.subr.bf16.mxu0 %v1244
  %2906 = vmatpush1.bf16.msra.mxu0 %v1243
  %2907 = vmatprep.subr.bf16.mxu0 %v1242
  %2908 = vmatpush1.bf16.msra.mxu0 %v1241
  %2909 = vmatprep.subr.bf16.mxu0 %v1240
  %2910 = vmatpush1.bf16.msra.mxu0 %v1239
  %2911 = vmatprep.subr.bf16.mxu0 %v1238
  %2912 = vmatpush1.bf16.msra.mxu0 %v1237
  %2913 = vmatprep.subr.bf16.mxu0 %v1236
  %2914 = vmatpush1.bf16.msra.mxu0 %v1235
  %2915 = vmatprep.subr.bf16.mxu0 %v1234
  %2916 = vmatpush1.bf16.msra.mxu0 %v1233
  %2917 = vmatprep.subr.bf16.mxu0 %v1232
  %2918 = vmatpush1.bf16.msra.mxu0 %v1231
  %2919 = vmatprep.subr.bf16.mxu0 %v1262
  %2920 = vmatpush2.bf16.msra.mxu0 %v1261
  %2921 = vmatprep.subr.bf16.mxu0 %v1260
  %2922 = vmatpush2.bf16.msra.mxu0 %v1259
  %2923 = vmatprep.subr.bf16.mxu0 %v1258
  %2924 = vmatpush2.bf16.msra.mxu0 %v1257
  %2925 = vmatprep.subr.bf16.mxu0 %v1256
  %2926 = vmatpush2.bf16.msra.mxu0 %v1255
  %2927 = vmatprep.subr.bf16.mxu0 %v1254
  %2928 = vmatpush2.bf16.msra.mxu0 %v1253
  %2929 = vmatprep.subr.bf16.mxu0 %v1252
  %2930 = vmatpush2.bf16.msra.mxu0 %v1251
  %2931 = vmatprep.subr.bf16.mxu0 %v1250
  %2932 = vmatpush2.bf16.msra.mxu0 %v1249
  %2933 = vmatprep.subr.bf16.mxu0 %v1248
  %2934 = vmatpush2.bf16.msra.mxu0 %v1247
  %2935 = vmatprep.mubr.bf16.mxu0 %v2755
  %2936 = vmatmul.mubr.bf16.gmra.mxu0 %v2754
  %v2937 = vpop.f32.mrf.mxu0
  %v2938 = vadd.f32 %v2897, %v2937
  %v2939 = vpop.f32.mrf.mxu0
  %v2940 = vadd.f32 %v2899, %v2939
  %v2941 = vpop.f32.mrf.mxu0
  %v2942 = vpop.f32.mrf.mxu0
  %2943 = vdwg.mxu0
  %2944 = vmatprep.subr.bf16.mxu0 %v1278
  %2945 = vmatpush1.bf16.msra.mxu0 %v1277
  %2946 = vmatprep.subr.bf16.mxu0 %v1276
  %2947 = vmatpush1.bf16.msra.mxu0 %v1275
  %2948 = vmatprep.subr.bf16.mxu0 %v1274
  %2949 = vmatpush1.bf16.msra.mxu0 %v1273
  %2950 = vmatprep.subr.bf16.mxu0 %v1272
  %2951 = vmatpush1.bf16.msra.mxu0 %v1271
  %2952 = vmatprep.subr.bf16.mxu0 %v1270
  %2953 = vmatpush1.bf16.msra.mxu0 %v1269
  %2954 = vmatprep.subr.bf16.mxu0 %v1268
  %2955 = vmatpush1.bf16.msra.mxu0 %v1267
  %2956 = vmatprep.subr.bf16.mxu0 %v1266
  %2957 = vmatpush1.bf16.msra.mxu0 %v1265
  %2958 = vmatprep.subr.bf16.mxu0 %v1264
  %2959 = vmatpush1.bf16.msra.mxu0 %v1263
  %2960 = vmatprep.subr.bf16.mxu0 %v1294
  %2961 = vmatpush2.bf16.msra.mxu0 %v1293
  %2962 = vmatprep.subr.bf16.mxu0 %v1292
  %2963 = vmatpush2.bf16.msra.mxu0 %v1291
  %2964 = vmatprep.subr.bf16.mxu0 %v1290
  %2965 = vmatpush2.bf16.msra.mxu0 %v1289
  %2966 = vmatprep.subr.bf16.mxu0 %v1288
  %2967 = vmatpush2.bf16.msra.mxu0 %v1287
  %2968 = vmatprep.subr.bf16.mxu0 %v1286
  %2969 = vmatpush2.bf16.msra.mxu0 %v1285
  %2970 = vmatprep.subr.bf16.mxu0 %v1284
  %2971 = vmatpush2.bf16.msra.mxu0 %v1283
  %2972 = vmatprep.subr.bf16.mxu0 %v1282
  %2973 = vmatpush2.bf16.msra.mxu0 %v1281
  %2974 = vmatprep.subr.bf16.mxu0 %v1280
  %2975 = vmatpush2.bf16.msra.mxu0 %v1279
  %2976 = vmatprep.mubr.bf16.mxu0 %v2757
  %2977 = vmatmul.mubr.bf16.gmra.mxu0 %v2756
  %v2978 = vpop.f32.mrf.mxu0
  %v2979 = vadd.f32 %v2938, %v2978
  %v2980 = vpop.f32.mrf.mxu0
  %v2981 = vadd.f32 %v2940, %v2980
  %v2982 = vpop.f32.mrf.mxu0
  %v2983 = vpop.f32.mrf.mxu0
  %2984 = vdwg.mxu0
  %2985 = vmatprep.subr.bf16.mxu0 %v1310
  %2986 = vmatpush1.bf16.msra.mxu0 %v1309
  %2987 = vmatprep.subr.bf16.mxu0 %v1308
  %2988 = vmatpush1.bf16.msra.mxu0 %v1307
  %2989 = vmatprep.subr.bf16.mxu0 %v1306
  %2990 = vmatpush1.bf16.msra.mxu0 %v1305
  %2991 = vmatprep.subr.bf16.mxu0 %v1304
  %2992 = vmatpush1.bf16.msra.mxu0 %v1303
  %2993 = vmatprep.subr.bf16.mxu0 %v1302
  %2994 = vmatpush1.bf16.msra.mxu0 %v1301
  %2995 = vmatprep.subr.bf16.mxu0 %v1300
  %2996 = vmatpush1.bf16.msra.mxu0 %v1299
  %2997 = vmatprep.subr.bf16.mxu0 %v1298
  %2998 = vmatpush1.bf16.msra.mxu0 %v1297
  %2999 = vmatprep.subr.bf16.mxu0 %v1296
  %3000 = vmatpush1.bf16.msra.mxu0 %v1295
  %3001 = vmatprep.subr.bf16.mxu0 %v1326
  %3002 = vmatpush2.bf16.msra.mxu0 %v1325
  %3003 = vmatprep.subr.bf16.mxu0 %v1324
  %3004 = vmatpush2.bf16.msra.mxu0 %v1323
  %3005 = vmatprep.subr.bf16.mxu0 %v1322
  %3006 = vmatpush2.bf16.msra.mxu0 %v1321
  %3007 = vmatprep.subr.bf16.mxu0 %v1320
  %3008 = vmatpush2.bf16.msra.mxu0 %v1319
  %3009 = vmatprep.subr.bf16.mxu0 %v1318
  %3010 = vmatpush2.bf16.msra.mxu0 %v1317
  %3011 = vmatprep.subr.bf16.mxu0 %v1316
  %3012 = vmatpush2.bf16.msra.mxu0 %v1315
  %3013 = vmatprep.subr.bf16.mxu0 %v1314
  %3014 = vmatpush2.bf16.msra.mxu0 %v1313
  %3015 = vmatprep.subr.bf16.mxu0 %v1312
  %3016 = vmatpush2.bf16.msra.mxu0 %v1311
  %3017 = vmatprep.mubr.bf16.mxu0 %v2759
  %3018 = vmatmul.mubr.bf16.gmra.mxu0 %v2758
  %v3019 = vpop.f32.mrf.mxu0
  %v3020 = vadd.f32 %v2979, %v3019
  %v3021 = vpop.f32.mrf.mxu0
  %v3022 = vadd.f32 %v2981, %v3021
  %v3023 = vpop.f32.mrf.mxu0
  %v3024 = vpop.f32.mrf.mxu0
  %3025 = vdwg.mxu0
  %3026 = vmatprep.subr.bf16.mxu0 %v1342
  %3027 = vmatpush1.bf16.msra.mxu0 %v1341
  %3028 = vmatprep.subr.bf16.mxu0 %v1340
  %3029 = vmatpush1.bf16.msra.mxu0 %v1339
  %3030 = vmatprep.subr.bf16.mxu0 %v1338
  %3031 = vmatpush1.bf16.msra.mxu0 %v1337
  %3032 = vmatprep.subr.bf16.mxu0 %v1336
  %3033 = vmatpush1.bf16.msra.mxu0 %v1335
  %3034 = vmatprep.subr.bf16.mxu0 %v1334
  %3035 = vmatpush1.bf16.msra.mxu0 %v1333
  %3036 = vmatprep.subr.bf16.mxu0 %v1332
  %3037 = vmatpush1.bf16.msra.mxu0 %v1331
  %3038 = vmatprep.subr.bf16.mxu0 %v1330
  %3039 = vmatpush1.bf16.msra.mxu0 %v1329
  %3040 = vmatprep.subr.bf16.mxu0 %v1328
  %3041 = vmatpush1.bf16.msra.mxu0 %v1327
  %3042 = vmatprep.subr.bf16.mxu0 %v1358
  %3043 = vmatpush2.bf16.msra.mxu0 %v1357
  %3044 = vmatprep.subr.bf16.mxu0 %v1356
  %3045 = vmatpush2.bf16.msra.mxu0 %v1355
  %3046 = vmatprep.subr.bf16.mxu0 %v1354
  %3047 = vmatpush2.bf16.msra.mxu0 %v1353
  %3048 = vmatprep.subr.bf16.mxu0 %v1352
  %3049 = vmatpush2.bf16.msra.mxu0 %v1351
  %3050 = vmatprep.subr.bf16.mxu0 %v1350
  %3051 = vmatpush2.bf16.msra.mxu0 %v1349
  %3052 = vmatprep.subr.bf16.mxu0 %v1348
  %3053 = vmatpush2.bf16.msra.mxu0 %v1347
  %3054 = vmatprep.subr.bf16.mxu0 %v1346
  %3055 = vmatpush2.bf16.msra.mxu0 %v1345
  %3056 = vmatprep.subr.bf16.mxu0 %v1344
  %3057 = vmatpush2.bf16.msra.mxu0 %v1343
  %3058 = vmatprep.mubr.bf16.mxu0 %v2761
  %3059 = vmatmul.mubr.bf16.gmra.mxu0 %v2760
  %v3060 = vpop.f32.mrf.mxu0
  %v3061 = vadd.f32 %v3020, %v3060
  %v3062 = vpop.f32.mrf.mxu0
  %v3063 = vadd.f32 %v3022, %v3062
  %v3064 = vpop.f32.mrf.mxu0
  %v3065 = vpop.f32.mrf.mxu0
  %3066 = vdwg.mxu0
  %3067 = vmatprep.subr.bf16.mxu0 %v1374
  %3068 = vmatpush1.bf16.msra.mxu0 %v1373
  %3069 = vmatprep.subr.bf16.mxu0 %v1372
  %3070 = vmatpush1.bf16.msra.mxu0 %v1371
  %3071 = vmatprep.subr.bf16.mxu0 %v1370
  %3072 = vmatpush1.bf16.msra.mxu0 %v1369
  %3073 = vmatprep.subr.bf16.mxu0 %v1368
  %3074 = vmatpush1.bf16.msra.mxu0 %v1367
  %3075 = vmatprep.subr.bf16.mxu0 %v1366
  %3076 = vmatpush1.bf16.msra.mxu0 %v1365
  %3077 = vmatprep.subr.bf16.mxu0 %v1364
  %3078 = vmatpush1.bf16.msra.mxu0 %v1363
  %3079 = vmatprep.subr.bf16.mxu0 %v1362
  %3080 = vmatpush1.bf16.msra.mxu0 %v1361
  %3081 = vmatprep.subr.bf16.mxu0 %v1360
  %3082 = vmatpush1.bf16.msra.mxu0 %v1359
  %3083 = vmatprep.subr.bf16.mxu0 %v1390
  %3084 = vmatpush2.bf16.msra.mxu0 %v1389
  %3085 = vmatprep.subr.bf16.mxu0 %v1388
  %3086 = vmatpush2.bf16.msra.mxu0 %v1387
  %3087 = vmatprep.subr.bf16.mxu0 %v1386
  %3088 = vmatpush2.bf16.msra.mxu0 %v1385
  %3089 = vmatprep.subr.bf16.mxu0 %v1384
  %3090 = vmatpush2.bf16.msra.mxu0 %v1383
  %3091 = vmatprep.subr.bf16.mxu0 %v1382
  %3092 = vmatpush2.bf16.msra.mxu0 %v1381
  %3093 = vmatprep.subr.bf16.mxu0 %v1380
  %3094 = vmatpush2.bf16.msra.mxu0 %v1379
  %3095 = vmatprep.subr.bf16.mxu0 %v1378
  %3096 = vmatpush2.bf16.msra.mxu0 %v1377
  %3097 = vmatprep.subr.bf16.mxu0 %v1376
  %3098 = vmatpush2.bf16.msra.mxu0 %v1375
  %3099 = vmatprep.mubr.bf16.mxu0 %v2763
  %3100 = vmatmul.mubr.bf16.gmra.mxu0 %v2762
  %v3101 = vpop.f32.mrf.mxu0
  %v3102 = vadd.f32 %v3061, %v3101
  %v3103 = vpop.f32.mrf.mxu0
  %v3104 = vadd.f32 %v3063, %v3103
  %v3105 = vpop.f32.mrf.mxu0
  %v3106 = vpop.f32.mrf.mxu0
  %3107 = vdwg.mxu0
  %v3108 = vmax.f32 %v3102, 0.0
  %v3109 = vmax.f32 %v3104, 0.0
  %v3110 = vpack.c.bf16 %v3108, %v3108
  %v3111 = vpack.c.bf16 %v3109, %v3109
  %s3112 = scalar_lea.vmem %s3, 256
  %v3113 = vld [vmem:[%s3112] sm:$0xf]
  %v3114 = vld [vmem:[%s3112 + $0x4] sm:$0xf]
  %v3115 = vld [vmem:[%s3112 + $0x8] sm:$0xf]
  %v3116 = vld [vmem:[%s3112 + $0xc] sm:$0xf]
  %v3117 = vld [vmem:[%s3112 + $0x10] sm:$0xf]
  %v3118 = vld [vmem:[%s3112 + $0x14] sm:$0xf]
  %v3119 = vld [vmem:[%s3112 + $0x18] sm:$0xf]
  %v3120 = vld [vmem:[%s3112 + $0x1c] sm:$0xf]
  %v3121 = vld [vmem:[%s3112 + $0x20] sm:$0xf]
  %v3122 = vld [vmem:[%s3112 + $0x24] sm:$0xf]
  %v3123 = vld [vmem:[%s3112 + $0x28] sm:$0xf]
  %v3124 = vld [vmem:[%s3112 + $0x2c] sm:$0xf]
  %v3125 = vld [vmem:[%s3112 + $0x30] sm:$0xf]
  %v3126 = vld [vmem:[%s3112 + $0x34] sm:$0xf]
  %v3127 = vld [vmem:[%s3112 + $0x38] sm:$0xf]
  %v3128 = vld [vmem:[%s3112 + $0x3c] sm:$0xf]
  %v3129 = vld [vmem:[%s3112 + $0x40] sm:$0xf]
  %v3130 = vld [vmem:[%s3112 + $0x44] sm:$0xf]
  %v3131 = vld [vmem:[%s3112 + $0x48] sm:$0xf]
  %v3132 = vld [vmem:[%s3112 + $0x4c] sm:$0xf]
  %v3133 = vld [vmem:[%s3112 + $0x50] sm:$0xf]
  %v3134 = vld [vmem:[%s3112 + $0x54] sm:$0xf]
  %v3135 = vld [vmem:[%s3112 + $0x58] sm:$0xf]
  %v3136 = vld [vmem:[%s3112 + $0x5c] sm:$0xf]
  %v3137 = vld [vmem:[%s3112 + $0x60] sm:$0xf]
  %v3138 = vld [vmem:[%s3112 + $0x64] sm:$0xf]
  %v3139 = vld [vmem:[%s3112 + $0x68] sm:$0xf]
  %v3140 = vld [vmem:[%s3112 + $0x6c] sm:$0xf]
  %v3141 = vld [vmem:[%s3112 + $0x70] sm:$0xf]
  %v3142 = vld [vmem:[%s3112 + $0x74] sm:$0xf]
  %v3143 = vld [vmem:[%s3112 + $0x78] sm:$0xf]
  %v3144 = vld [vmem:[%s3112 + $0x7c] sm:$0xf]
  %v3177 = vunpack.c.l.b16 %v3113
  %v3178 = vunpack.c.l.b16 %v3114
  %v3179 = vunpack.c.l.b16 %v3115
  %v3180 = vunpack.c.l.b16 %v3116
  %v3181 = vunpack.c.l.b16 %v3117
  %v3182 = vunpack.c.l.b16 %v3118
  %v3183 = vunpack.c.l.b16 %v3119
  %v3184 = vunpack.c.l.b16 %v3120
  %v3185 = vunpack.c.l.b16 %v3121
  %v3186 = vunpack.c.l.b16 %v3122
  %v3187 = vunpack.c.l.b16 %v3123
  %v3188 = vunpack.c.l.b16 %v3124
  %v3189 = vunpack.c.l.b16 %v3125
  %v3190 = vunpack.c.l.b16 %v3126
  %v3191 = vunpack.c.l.b16 %v3127
  %v3192 = vunpack.c.l.b16 %v3128
  %v3193 = vunpack.c.l.b16 %v3129
  %v3194 = vunpack.c.l.b16 %v3130
  %v3195 = vunpack.c.l.b16 %v3131
  %v3196 = vunpack.c.l.b16 %v3132
  %v3197 = vunpack.c.l.b16 %v3133
  %v3198 = vunpack.c.l.b16 %v3134
  %v3199 = vunpack.c.l.b16 %v3135
  %v3200 = vunpack.c.l.b16 %v3136
  %v3201 = vunpack.c.l.b16 %v3137
  %v3202 = vunpack.c.l.b16 %v3138
  %v3203 = vunpack.c.l.b16 %v3139
  %v3204 = vunpack.c.l.b16 %v3140
  %v3205 = vunpack.c.l.b16 %v3141
  %v3206 = vunpack.c.l.b16 %v3142
  %v3207 = vunpack.c.l.b16 %v3143
  %v3208 = vunpack.c.l.b16 %v3144
  %v3209 = vpack.c.b16 %v3178, %v3177
  %v3210 = vpack.c.b16 %v3180, %v3179
  %v3211 = vpack.c.b16 %v3182, %v3181
  %v3212 = vpack.c.b16 %v3184, %v3183
  %v3213 = vpack.c.b16 %v3186, %v3185
  %v3214 = vpack.c.b16 %v3188, %v3187
  %v3215 = vpack.c.b16 %v3190, %v3189
  %v3216 = vpack.c.b16 %v3192, %v3191
  %v3217 = vpack.c.b16 %v3194, %v3193
  %v3218 = vpack.c.b16 %v3196, %v3195
  %v3219 = vpack.c.b16 %v3198, %v3197
  %v3220 = vpack.c.b16 %v3200, %v3199
  %v3221 = vpack.c.b16 %v3202, %v3201
  %v3222 = vpack.c.b16 %v3204, %v3203
  %v3223 = vpack.c.b16 %v3206, %v3205
  %v3224 = vpack.c.b16 %v3208, %v3207
  %3241 = vmatprep.subr.bf16.mxu0 0
  %3242 = vmatpush1.bf16.msra.mxu0 %v3216
  %3243 = vmatprep.subr.bf16.mxu0 0
  %3244 = vmatpush1.bf16.msra.mxu0 %v3215
  %3245 = vmatprep.subr.bf16.mxu0 0
  %3246 = vmatpush1.bf16.msra.mxu0 %v3214
  %3247 = vmatprep.subr.bf16.mxu0 0
  %3248 = vmatpush1.bf16.msra.mxu0 %v3213
  %3249 = vmatprep.subr.bf16.mxu0 0
  %3250 = vmatpush1.bf16.msra.mxu0 %v3212
  %3251 = vmatprep.subr.bf16.mxu0 0
  %3252 = vmatpush1.bf16.msra.mxu0 %v3211
  %3253 = vmatprep.subr.bf16.mxu0 0
  %3254 = vmatpush1.bf16.msra.mxu0 %v3210
  %3255 = vmatprep.subr.bf16.mxu0 0
  %3256 = vmatpush1.bf16.msra.mxu0 %v3209
  %3257 = vmatprep.subr.bf16.mxu0 0
  %3258 = vmatpush2.bf16.msra.mxu0 %v3224
  %3259 = vmatprep.subr.bf16.mxu0 0
  %3260 = vmatpush2.bf16.msra.mxu0 %v3223
  %3261 = vmatprep.subr.bf16.mxu0 0
  %3262 = vmatpush2.bf16.msra.mxu0 %v3222
  %3263 = vmatprep.subr.bf16.mxu0 0
  %3264 = vmatpush2.bf16.msra.mxu0 %v3221
  %3265 = vmatprep.subr.bf16.mxu0 0
  %3266 = vmatpush2.bf16.msra.mxu0 %v3220
  %3267 = vmatprep.subr.bf16.mxu0 0
  %3268 = vmatpush2.bf16.msra.mxu0 %v3219
  %3269 = vmatprep.subr.bf16.mxu0 0
  %3270 = vmatpush2.bf16.msra.mxu0 %v3218
  %3271 = vmatprep.subr.bf16.mxu0 0
  %3272 = vmatpush2.bf16.msra.mxu0 %v3217
  %3273 = vmatprep.mubr.bf16.mxu0 %v3111
  %3274 = vmatmul.mubr.bf16.gmra.mxu0 %v3110
  %v3275 = vpop.f32.mrf.mxu0
  %v3276 = vadd.f32 0.0, %v3275
  %v3277 = vpop.f32.mrf.mxu0
  %v3278 = vpop.f32.mrf.mxu0
  %v3279 = vpop.f32.mrf.mxu0
  %3280 = vdwg.mxu0
  %v3281 = vadd.f32 %v2714, %v3276
  %s3282 = scalar_lea.vmem %s0, 192
  %v3283 = vld [vmem:[%s3282] sm:$0xff]
  %v3284 = vld [vmem:[%s3282 + $0x8] sm:$0xff]
  %v3285 = vld [vmem:[%s3282 + $0x10] sm:$0xff]
  %v3286 = vld [vmem:[%s3282 + $0x18] sm:$0xff]
  %v3287 = vld [vmem:[%s3282 + $0x20] sm:$0xff]
  %v3288 = vld [vmem:[%s3282 + $0x28] sm:$0xff]
  %v3289 = vld [vmem:[%s3282 + $0x30] sm:$0xff]
  %v3290 = vld [vmem:[%s3282 + $0x38] sm:$0xff]
  %v3299 = vunpack.c.l.b16 %v3283
  %v3300 = vunpack.c.h.b16 %v3283
  %v3301 = vunpack.c.l.b16 %v3284
  %v3302 = vunpack.c.h.b16 %v3284
  %v3303 = vunpack.c.l.b16 %v3285
  %v3304 = vunpack.c.h.b16 %v3285
  %v3305 = vunpack.c.l.b16 %v3286
  %v3306 = vunpack.c.h.b16 %v3286
  %v3307 = vunpack.c.l.b16 %v3287
  %v3308 = vunpack.c.h.b16 %v3287
  %v3309 = vunpack.c.l.b16 %v3288
  %v3310 = vunpack.c.h.b16 %v3288
  %v3311 = vunpack.c.l.b16 %v3289
  %v3312 = vunpack.c.h.b16 %v3289
  %v3313 = vunpack.c.l.b16 %v3290
  %v3314 = vunpack.c.h.b16 %v3290
  %v3315 = vpack.c.b16 %v3299, %v3299
  %v3316 = vpack.c.b16 %v3300, %v3300
  %v3317 = vpack.c.b16 %v3301, %v3301
  %v3318 = vpack.c.b16 %v3302, %v3302
  %v3319 = vpack.c.b16 %v3303, %v3303
  %v3320 = vpack.c.b16 %v3304, %v3304
  %v3321 = vpack.c.b16 %v3305, %v3305
  %v3322 = vpack.c.b16 %v3306, %v3306
  %v3323 = vpack.c.b16 %v3307, %v3307
  %v3324 = vpack.c.b16 %v3308, %v3308
  %v3325 = vpack.c.b16 %v3309, %v3309
  %v3326 = vpack.c.b16 %v3310, %v3310
  %v3327 = vpack.c.b16 %v3311, %v3311
  %v3328 = vpack.c.b16 %v3312, %v3312
  %v3329 = vpack.c.b16 %v3313, %v3313
  %v3330 = vpack.c.b16 %v3314, %v3314
  %3347 = vmatprep.subr.bf16.mxu0 %v1150
  %3348 = vmatpush1.bf16.msra.mxu0 %v1149
  %3349 = vmatprep.subr.bf16.mxu0 %v1148
  %3350 = vmatpush1.bf16.msra.mxu0 %v1147
  %3351 = vmatprep.subr.bf16.mxu0 %v1146
  %3352 = vmatpush1.bf16.msra.mxu0 %v1145
  %3353 = vmatprep.subr.bf16.mxu0 %v1144
  %3354 = vmatpush1.bf16.msra.mxu0 %v1143
  %3355 = vmatprep.subr.bf16.mxu0 %v1142
  %3356 = vmatpush1.bf16.msra.mxu0 %v1141
  %3357 = vmatprep.subr.bf16.mxu0 %v1140
  %3358 = vmatpush1.bf16.msra.mxu0 %v1139
  %3359 = vmatprep.subr.bf16.mxu0 %v1138
  %3360 = vmatpush1.bf16.msra.mxu0 %v1137
  %3361 = vmatprep.subr.bf16.mxu0 %v1136
  %3362 = vmatpush1.bf16.msra.mxu0 %v1135
  %3363 = vmatprep.subr.bf16.mxu0 %v1166
  %3364 = vmatpush2.bf16.msra.mxu0 %v1165
  %3365 = vmatprep.subr.bf16.mxu0 %v1164
  %3366 = vmatpush2.bf16.msra.mxu0 %v1163
  %3367 = vmatprep.subr.bf16.mxu0 %v1162
  %3368 = vmatpush2.bf16.msra.mxu0 %v1161
  %3369 = vmatprep.subr.bf16.mxu0 %v1160
  %3370 = vmatpush2.bf16.msra.mxu0 %v1159
  %3371 = vmatprep.subr.bf16.mxu0 %v1158
  %3372 = vmatpush2.bf16.msra.mxu0 %v1157
  %3373 = vmatprep.subr.bf16.mxu0 %v1156
  %3374 = vmatpush2.bf16.msra.mxu0 %v1155
  %3375 = vmatprep.subr.bf16.mxu0 %v1154
  %3376 = vmatpush2.bf16.msra.mxu0 %v1153
  %3377 = vmatprep.subr.bf16.mxu0 %v1152
  %3378 = vmatpush2.bf16.msra.mxu0 %v1151
  %3379 = vmatprep.mubr.bf16.mxu0 %v3316
  %3380 = vmatmul.mubr.bf16.gmra.mxu0 %v3315
  %v3381 = vpop.f32.mrf.mxu0
  %v3382 = vadd.f32 %v304, %v3381
  %v3383 = vpop.f32.mrf.mxu0
  %v3384 = vadd.f32 %v308, %v3383
  %v3385 = vpop.f32.mrf.mxu0
  %v3386 = vpop.f32.mrf.mxu0
  %3387 = vdwg.mxu0
  %3388 = vmatprep.subr.bf16.mxu0 %v1182
  %3389 = vmatpush1.bf16.msra.mxu0 %v1181
  %3390 = vmatprep.subr.bf16.mxu0 %v1180
  %3391 = vmatpush1.bf16.msra.mxu0 %v1179
  %3392 = vmatprep.subr.bf16.mxu0 %v1178
  %3393 = vmatpush1.bf16.msra.mxu0 %v1177
  %3394 = vmatprep.subr.bf16.mxu0 %v1176
  %3395 = vmatpush1.bf16.msra.mxu0 %v1175
  %3396 = vmatprep.subr.bf16.mxu0 %v1174
  %3397 = vmatpush1.bf16.msra.mxu0 %v1173
  %3398 = vmatprep.subr.bf16.mxu0 %v1172
  %3399 = vmatpush1.bf16.msra.mxu0 %v1171
  %3400 = vmatprep.subr.bf16.mxu0 %v1170
  %3401 = vmatpush1.bf16.msra.mxu0 %v1169
  %3402 = vmatprep.subr.bf16.mxu0 %v1168
  %3403 = vmatpush1.bf16.msra.mxu0 %v1167
  %3404 = vmatprep.subr.bf16.mxu0 %v1198
  %3405 = vmatpush2.bf16.msra.mxu0 %v1197
  %3406 = vmatprep.subr.bf16.mxu0 %v1196
  %3407 = vmatpush2.bf16.msra.mxu0 %v1195
  %3408 = vmatprep.subr.bf16.mxu0 %v1194
  %3409 = vmatpush2.bf16.msra.mxu0 %v1193
  %3410 = vmatprep.subr.bf16.mxu0 %v1192
  %3411 = vmatpush2.bf16.msra.mxu0 %v1191
  %3412 = vmatprep.subr.bf16.mxu0 %v1190
  %3413 = vmatpush2.bf16.msra.mxu0 %v1189
  %3414 = vmatprep.subr.bf16.mxu0 %v1188
  %3415 = vmatpush2.bf16.msra.mxu0 %v1187
  %3416 = vmatprep.subr.bf16.mxu0 %v1186
  %3417 = vmatpush2.bf16.msra.mxu0 %v1185
  %3418 = vmatprep.subr.bf16.mxu0 %v1184
  %3419 = vmatpush2.bf16.msra.mxu0 %v1183
  %3420 = vmatprep.mubr.bf16.mxu0 %v3318
  %3421 = vmatmul.mubr.bf16.gmra.mxu0 %v3317
  %v3422 = vpop.f32.mrf.mxu0
  %v3423 = vadd.f32 %v3382, %v3422
  %v3424 = vpop.f32.mrf.mxu0
  %v3425 = vadd.f32 %v3384, %v3424
  %v3426 = vpop.f32.mrf.mxu0
  %v3427 = vpop.f32.mrf.mxu0
  %3428 = vdwg.mxu0
  %3429 = vmatprep.subr.bf16.mxu0 %v1214
  %3430 = vmatpush1.bf16.msra.mxu0 %v1213
  %3431 = vmatprep.subr.bf16.mxu0 %v1212
  %3432 = vmatpush1.bf16.msra.mxu0 %v1211
  %3433 = vmatprep.subr.bf16.mxu0 %v1210
  %3434 = vmatpush1.bf16.msra.mxu0 %v1209
  %3435 = vmatprep.subr.bf16.mxu0 %v1208
  %3436 = vmatpush1.bf16.msra.mxu0 %v1207
  %3437 = vmatprep.subr.bf16.mxu0 %v1206
  %3438 = vmatpush1.bf16.msra.mxu0 %v1205
  %3439 = vmatprep.subr.bf16.mxu0 %v1204
  %3440 = vmatpush1.bf16.msra.mxu0 %v1203
  %3441 = vmatprep.subr.bf16.mxu0 %v1202
  %3442 = vmatpush1.bf16.msra.mxu0 %v1201
  %3443 = vmatprep.subr.bf16.mxu0 %v1200
  %3444 = vmatpush1.bf16.msra.mxu0 %v1199
  %3445 = vmatprep.subr.bf16.mxu0 %v1230
  %3446 = vmatpush2.bf16.msra.mxu0 %v1229
  %3447 = vmatprep.subr.bf16.mxu0 %v1228
  %3448 = vmatpush2.bf16.msra.mxu0 %v1227
  %3449 = vmatprep.subr.bf16.mxu0 %v1226
  %3450 = vmatpush2.bf16.msra.mxu0 %v1225
  %3451 = vmatprep.subr.bf16.mxu0 %v1224
  %3452 = vmatpush2.bf16.msra.mxu0 %v1223
  %3453 = vmatprep.subr.bf16.mxu0 %v1222
  %3454 = vmatpush2.bf16.msra.mxu0 %v1221
  %3455 = vmatprep.subr.bf16.mxu0 %v1220
  %3456 = vmatpush2.bf16.msra.mxu0 %v1219
  %3457 = vmatprep.subr.bf16.mxu0 %v1218
  %3458 = vmatpush2.bf16.msra.mxu0 %v1217
  %3459 = vmatprep.subr.bf16.mxu0 %v1216
  %3460 = vmatpush2.bf16.msra.mxu0 %v1215
  %3461 = vmatprep.mubr.bf16.mxu0 %v3320
  %3462 = vmatmul.mubr.bf16.gmra.mxu0 %v3319
  %v3463 = vpop.f32.mrf.mxu0
  %v3464 = vadd.f32 %v3423, %v3463
  %v3465 = vpop.f32.mrf.mxu0
  %v3466 = vadd.f32 %v3425, %v3465
  %v3467 = vpop.f32.mrf.mxu0
  %v3468 = vpop.f32.mrf.mxu0
  %3469 = vdwg.mxu0
  %3470 = vmatprep.subr.bf16.mxu0 %v1246
  %3471 = vmatpush1.bf16.msra.mxu0 %v1245
  %3472 = vmatprep.subr.bf16.mxu0 %v1244
  %3473 = vmatpush1.bf16.msra.mxu0 %v1243
  %3474 = vmatprep.subr.bf16.mxu0 %v1242
  %3475 = vmatpush1.bf16.msra.mxu0 %v1241
  %3476 = vmatprep.subr.bf16.mxu0 %v1240
  %3477 = vmatpush1.bf16.msra.mxu0 %v1239
  %3478 = vmatprep.subr.bf16.mxu0 %v1238
  %3479 = vmatpush1.bf16.msra.mxu0 %v1237
  %3480 = vmatprep.subr.bf16.mxu0 %v1236
  %3481 = vmatpush1.bf16.msra.mxu0 %v1235
  %3482 = vmatprep.subr.bf16.mxu0 %v1234
  %3483 = vmatpush1.bf16.msra.mxu0 %v1233
  %3484 = vmatprep.subr.bf16.mxu0 %v1232
  %3485 = vmatpush1.bf16.msra.mxu0 %v1231
  %3486 = vmatprep.subr.bf16.mxu0 %v1262
  %3487 = vmatpush2.bf16.msra.mxu0 %v1261
  %3488 = vmatprep.subr.bf16.mxu0 %v1260
  %3489 = vmatpush2.bf16.msra.mxu0 %v1259
  %3490 = vmatprep.subr.bf16.mxu0 %v1258
  %3491 = vmatpush2.bf16.msra.mxu0 %v1257
  %3492 = vmatprep.subr.bf16.mxu0 %v1256
  %3493 = vmatpush2.bf16.msra.mxu0 %v1255
  %3494 = vmatprep.subr.bf16.mxu0 %v1254
  %3495 = vmatpush2.bf16.msra.mxu0 %v1253
  %3496 = vmatprep.subr.bf16.mxu0 %v1252
  %3497 = vmatpush2.bf16.msra.mxu0 %v1251
  %3498 = vmatprep.subr.bf16.mxu0 %v1250
  %3499 = vmatpush2.bf16.msra.mxu0 %v1249
  %3500 = vmatprep.subr.bf16.mxu0 %v1248
  %3501 = vmatpush2.bf16.msra.mxu0 %v1247
  %3502 = vmatprep.mubr.bf16.mxu0 %v3322
  %3503 = vmatmul.mubr.bf16.gmra.mxu0 %v3321
  %v3504 = vpop.f32.mrf.mxu0
  %v3505 = vadd.f32 %v3464, %v3504
  %v3506 = vpop.f32.mrf.mxu0
  %v3507 = vadd.f32 %v3466, %v3506
  %v3508 = vpop.f32.mrf.mxu0
  %v3509 = vpop.f32.mrf.mxu0
  %3510 = vdwg.mxu0
  %3511 = vmatprep.subr.bf16.mxu0 %v1278
  %3512 = vmatpush1.bf16.msra.mxu0 %v1277
  %3513 = vmatprep.subr.bf16.mxu0 %v1276
  %3514 = vmatpush1.bf16.msra.mxu0 %v1275
  %3515 = vmatprep.subr.bf16.mxu0 %v1274
  %3516 = vmatpush1.bf16.msra.mxu0 %v1273
  %3517 = vmatprep.subr.bf16.mxu0 %v1272
  %3518 = vmatpush1.bf16.msra.mxu0 %v1271
  %3519 = vmatprep.subr.bf16.mxu0 %v1270
  %3520 = vmatpush1.bf16.msra.mxu0 %v1269
  %3521 = vmatprep.subr.bf16.mxu0 %v1268
  %3522 = vmatpush1.bf16.msra.mxu0 %v1267
  %3523 = vmatprep.subr.bf16.mxu0 %v1266
  %3524 = vmatpush1.bf16.msra.mxu0 %v1265
  %3525 = vmatprep.subr.bf16.mxu0 %v1264
  %3526 = vmatpush1.bf16.msra.mxu0 %v1263
  %3527 = vmatprep.subr.bf16.mxu0 %v1294
  %3528 = vmatpush2.bf16.msra.mxu0 %v1293
  %3529 = vmatprep.subr.bf16.mxu0 %v1292
  %3530 = vmatpush2.bf16.msra.mxu0 %v1291
  %3531 = vmatprep.subr.bf16.mxu0 %v1290
  %3532 = vmatpush2.bf16.msra.mxu0 %v1289
  %3533 = vmatprep.subr.bf16.mxu0 %v1288
  %3534 = vmatpush2.bf16.msra.mxu0 %v1287
  %3535 = vmatprep.subr.bf16.mxu0 %v1286
  %3536 = vmatpush2.bf16.msra.mxu0 %v1285
  %3537 = vmatprep.subr.bf16.mxu0 %v1284
  %3538 = vmatpush2.bf16.msra.mxu0 %v1283
  %3539 = vmatprep.subr.bf16.mxu0 %v1282
  %3540 = vmatpush2.bf16.msra.mxu0 %v1281
  %3541 = vmatprep.subr.bf16.mxu0 %v1280
  %3542 = vmatpush2.bf16.msra.mxu0 %v1279
  %3543 = vmatprep.mubr.bf16.mxu0 %v3324
  %3544 = vmatmul.mubr.bf16.gmra.mxu0 %v3323
  %v3545 = vpop.f32.mrf.mxu0
  %v3546 = vadd.f32 %v3505, %v3545
  %v3547 = vpop.f32.mrf.mxu0
  %v3548 = vadd.f32 %v3507, %v3547
  %v3549 = vpop.f32.mrf.mxu0
  %v3550 = vpop.f32.mrf.mxu0
  %3551 = vdwg.mxu0
  %3552 = vmatprep.subr.bf16.mxu0 %v1310
  %3553 = vmatpush1.bf16.msra.mxu0 %v1309
  %3554 = vmatprep.subr.bf16.mxu0 %v1308
  %3555 = vmatpush1.bf16.msra.mxu0 %v1307
  %3556 = vmatprep.subr.bf16.mxu0 %v1306
  %3557 = vmatpush1.bf16.msra.mxu0 %v1305
  %3558 = vmatprep.subr.bf16.mxu0 %v1304
  %3559 = vmatpush1.bf16.msra.mxu0 %v1303
  %3560 = vmatprep.subr.bf16.mxu0 %v1302
  %3561 = vmatpush1.bf16.msra.mxu0 %v1301
  %3562 = vmatprep.subr.bf16.mxu0 %v1300
  %3563 = vmatpush1.bf16.msra.mxu0 %v1299
  %3564 = vmatprep.subr.bf16.mxu0 %v1298
  %3565 = vmatpush1.bf16.msra.mxu0 %v1297
  %3566 = vmatprep.subr.bf16.mxu0 %v1296
  %3567 = vmatpush1.bf16.msra.mxu0 %v1295
  %3568 = vmatprep.subr.bf16.mxu0 %v1326
  %3569 = vmatpush2.bf16.msra.mxu0 %v1325
  %3570 = vmatprep.subr.bf16.mxu0 %v1324
  %3571 = vmatpush2.bf16.msra.mxu0 %v1323
  %3572 = vmatprep.subr.bf16.mxu0 %v1322
  %3573 = vmatpush2.bf16.msra.mxu0 %v1321
  %3574 = vmatprep.subr.bf16.mxu0 %v1320
  %3575 = vmatpush2.bf16.msra.mxu0 %v1319
  %3576 = vmatprep.subr.bf16.mxu0 %v1318
  %3577 = vmatpush2.bf16.msra.mxu0 %v1317
  %3578 = vmatprep.subr.bf16.mxu0 %v1316
  %3579 = vmatpush2.bf16.msra.mxu0 %v1315
  %3580 = vmatprep.subr.bf16.mxu0 %v1314
  %3581 = vmatpush2.bf16.msra.mxu0 %v1313
  %3582 = vmatprep.subr.bf16.mxu0 %v1312
  %3583 = vmatpush2.bf16.msra.mxu0 %v1311
  %3584 = vmatprep.mubr.bf16.mxu0 %v3326
  %3585 = vmatmul.mubr.bf16.gmra.mxu0 %v3325
  %v3586 = vpop.f32.mrf.mxu0
  %v3587 = vadd.f32 %v3546, %v3586
  %v3588 = vpop.f32.mrf.mxu0
  %v3589 = vadd.f32 %v3548, %v3588
  %v3590 = vpop.f32.mrf.mxu0
  %v3591 = vpop.f32.mrf.mxu0
  %3592 = vdwg.mxu0
  %3593 = vmatprep.subr.bf16.mxu0 %v1342
  %3594 = vmatpush1.bf16.msra.mxu0 %v1341
  %3595 = vmatprep.subr.bf16.mxu0 %v1340
  %3596 = vmatpush1.bf16.msra.mxu0 %v1339
  %3597 = vmatprep.subr.bf16.mxu0 %v1338
  %3598 = vmatpush1.bf16.msra.mxu0 %v1337
  %3599 = vmatprep.subr.bf16.mxu0 %v1336
  %3600 = vmatpush1.bf16.msra.mxu0 %v1335
  %3601 = vmatprep.subr.bf16.mxu0 %v1334
  %3602 = vmatpush1.bf16.msra.mxu0 %v1333
  %3603 = vmatprep.subr.bf16.mxu0 %v1332
  %3604 = vmatpush1.bf16.msra.mxu0 %v1331
  %3605 = vmatprep.subr.bf16.mxu0 %v1330
  %3606 = vmatpush1.bf16.msra.mxu0 %v1329
  %3607 = vmatprep.subr.bf16.mxu0 %v1328
  %3608 = vmatpush1.bf16.msra.mxu0 %v1327
  %3609 = vmatprep.subr.bf16.mxu0 %v1358
  %3610 = vmatpush2.bf16.msra.mxu0 %v1357
  %3611 = vmatprep.subr.bf16.mxu0 %v1356
  %3612 = vmatpush2.bf16.msra.mxu0 %v1355
  %3613 = vmatprep.subr.bf16.mxu0 %v1354
  %3614 = vmatpush2.bf16.msra.mxu0 %v1353
  %3615 = vmatprep.subr.bf16.mxu0 %v1352
  %3616 = vmatpush2.bf16.msra.mxu0 %v1351
  %3617 = vmatprep.subr.bf16.mxu0 %v1350
  %3618 = vmatpush2.bf16.msra.mxu0 %v1349
  %3619 = vmatprep.subr.bf16.mxu0 %v1348
  %3620 = vmatpush2.bf16.msra.mxu0 %v1347
  %3621 = vmatprep.subr.bf16.mxu0 %v1346
  %3622 = vmatpush2.bf16.msra.mxu0 %v1345
  %3623 = vmatprep.subr.bf16.mxu0 %v1344
  %3624 = vmatpush2.bf16.msra.mxu0 %v1343
  %3625 = vmatprep.mubr.bf16.mxu0 %v3328
  %3626 = vmatmul.mubr.bf16.gmra.mxu0 %v3327
  %v3627 = vpop.f32.mrf.mxu0
  %v3628 = vadd.f32 %v3587, %v3627
  %v3629 = vpop.f32.mrf.mxu0
  %v3630 = vadd.f32 %v3589, %v3629
  %v3631 = vpop.f32.mrf.mxu0
  %v3632 = vpop.f32.mrf.mxu0
  %3633 = vdwg.mxu0
  %3634 = vmatprep.subr.bf16.mxu0 %v1374
  %3635 = vmatpush1.bf16.msra.mxu0 %v1373
  %3636 = vmatprep.subr.bf16.mxu0 %v1372
  %3637 = vmatpush1.bf16.msra.mxu0 %v1371
  %3638 = vmatprep.subr.bf16.mxu0 %v1370
  %3639 = vmatpush1.bf16.msra.mxu0 %v1369
  %3640 = vmatprep.subr.bf16.mxu0 %v1368
  %3641 = vmatpush1.bf16.msra.mxu0 %v1367
  %3642 = vmatprep.subr.bf16.mxu0 %v1366
  %3643 = vmatpush1.bf16.msra.mxu0 %v1365
  %3644 = vmatprep.subr.bf16.mxu0 %v1364
  %3645 = vmatpush1.bf16.msra.mxu0 %v1363
  %3646 = vmatprep.subr.bf16.mxu0 %v1362
  %3647 = vmatpush1.bf16.msra.mxu0 %v1361
  %3648 = vmatprep.subr.bf16.mxu0 %v1360
  %3649 = vmatpush1.bf16.msra.mxu0 %v1359
  %3650 = vmatprep.subr.bf16.mxu0 %v1390
  %3651 = vmatpush2.bf16.msra.mxu0 %v1389
  %3652 = vmatprep.subr.bf16.mxu0 %v1388
  %3653 = vmatpush2.bf16.msra.mxu0 %v1387
  %3654 = vmatprep.subr.bf16.mxu0 %v1386
  %3655 = vmatpush2.bf16.msra.mxu0 %v1385
  %3656 = vmatprep.subr.bf16.mxu0 %v1384
  %3657 = vmatpush2.bf16.msra.mxu0 %v1383
  %3658 = vmatprep.subr.bf16.mxu0 %v1382
  %3659 = vmatpush2.bf16.msra.mxu0 %v1381
  %3660 = vmatprep.subr.bf16.mxu0 %v1380
  %3661 = vmatpush2.bf16.msra.mxu0 %v1379
  %3662 = vmatprep.subr.bf16.mxu0 %v1378
  %3663 = vmatpush2.bf16.msra.mxu0 %v1377
  %3664 = vmatprep.subr.bf16.mxu0 %v1376
  %3665 = vmatpush2.bf16.msra.mxu0 %v1375
  %3666 = vmatprep.mubr.bf16.mxu0 %v3330
  %3667 = vmatmul.mubr.bf16.gmra.mxu0 %v3329
  %v3668 = vpop.f32.mrf.mxu0
  %v3669 = vadd.f32 %v3628, %v3668
  %v3670 = vpop.f32.mrf.mxu0
  %v3671 = vadd.f32 %v3630, %v3670
  %v3672 = vpop.f32.mrf.mxu0
  %v3673 = vpop.f32.mrf.mxu0
  %3674 = vdwg.mxu0
  %v3675 = vmax.f32 %v3669, 0.0
  %v3676 = vmax.f32 %v3671, 0.0
  %v3677 = vpack.c.bf16 %v3675, %v3675
  %v3678 = vpack.c.bf16 %v3676, %v3676
  %s3679 = scalar_lea.vmem %s3, 384
  %v3680 = vld [vmem:[%s3679] sm:$0xf]
  %v3681 = vld [vmem:[%s3679 + $0x4] sm:$0xf]
  %v3682 = vld [vmem:[%s3679 + $0x8] sm:$0xf]
  %v3683 = vld [vmem:[%s3679 + $0xc] sm:$0xf]
  %v3684 = vld [vmem:[%s3679 + $0x10] sm:$0xf]
  %v3685 = vld [vmem:[%s3679 + $0x14] sm:$0xf]
  %v3686 = vld [vmem:[%s3679 + $0x18] sm:$0xf]
  %v3687 = vld [vmem:[%s3679 + $0x1c] sm:$0xf]
  %v3688 = vld [vmem:[%s3679 + $0x20] sm:$0xf]
  %v3689 = vld [vmem:[%s3679 + $0x24] sm:$0xf]
  %v3690 = vld [vmem:[%s3679 + $0x28] sm:$0xf]
  %v3691 = vld [vmem:[%s3679 + $0x2c] sm:$0xf]
  %v3692 = vld [vmem:[%s3679 + $0x30] sm:$0xf]
  %v3693 = vld [vmem:[%s3679 + $0x34] sm:$0xf]
  %v3694 = vld [vmem:[%s3679 + $0x38] sm:$0xf]
  %v3695 = vld [vmem:[%s3679 + $0x3c] sm:$0xf]
  %v3696 = vld [vmem:[%s3679 + $0x40] sm:$0xf]
  %v3697 = vld [vmem:[%s3679 + $0x44] sm:$0xf]
  %v3698 = vld [vmem:[%s3679 + $0x48] sm:$0xf]
  %v3699 = vld [vmem:[%s3679 + $0x4c] sm:$0xf]
  %v3700 = vld [vmem:[%s3679 + $0x50] sm:$0xf]
  %v3701 = vld [vmem:[%s3679 + $0x54] sm:$0xf]
  %v3702 = vld [vmem:[%s3679 + $0x58] sm:$0xf]
  %v3703 = vld [vmem:[%s3679 + $0x5c] sm:$0xf]
  %v3704 = vld [vmem:[%s3679 + $0x60] sm:$0xf]
  %v3705 = vld [vmem:[%s3679 + $0x64] sm:$0xf]
  %v3706 = vld [vmem:[%s3679 + $0x68] sm:$0xf]
  %v3707 = vld [vmem:[%s3679 + $0x6c] sm:$0xf]
  %v3708 = vld [vmem:[%s3679 + $0x70] sm:$0xf]
  %v3709 = vld [vmem:[%s3679 + $0x74] sm:$0xf]
  %v3710 = vld [vmem:[%s3679 + $0x78] sm:$0xf]
  %v3711 = vld [vmem:[%s3679 + $0x7c] sm:$0xf]
  %v3744 = vunpack.c.l.b16 %v3680
  %v3745 = vunpack.c.l.b16 %v3681
  %v3746 = vunpack.c.l.b16 %v3682
  %v3747 = vunpack.c.l.b16 %v3683
  %v3748 = vunpack.c.l.b16 %v3684
  %v3749 = vunpack.c.l.b16 %v3685
  %v3750 = vunpack.c.l.b16 %v3686
  %v3751 = vunpack.c.l.b16 %v3687
  %v3752 = vunpack.c.l.b16 %v3688
  %v3753 = vunpack.c.l.b16 %v3689
  %v3754 = vunpack.c.l.b16 %v3690
  %v3755 = vunpack.c.l.b16 %v3691
  %v3756 = vunpack.c.l.b16 %v3692
  %v3757 = vunpack.c.l.b16 %v3693
  %v3758 = vunpack.c.l.b16 %v3694
  %v3759 = vunpack.c.l.b16 %v3695
  %v3760 = vunpack.c.l.b16 %v3696
  %v3761 = vunpack.c.l.b16 %v3697
  %v3762 = vunpack.c.l.b16 %v3698
  %v3763 = vunpack.c.l.b16 %v3699
  %v3764 = vunpack.c.l.b16 %v3700
  %v3765 = vunpack.c.l.b16 %v3701
  %v3766 = vunpack.c.l.b16 %v3702
  %v3767 = vunpack.c.l.b16 %v3703
  %v3768 = vunpack.c.l.b16 %v3704
  %v3769 = vunpack.c.l.b16 %v3705
  %v3770 = vunpack.c.l.b16 %v3706
  %v3771 = vunpack.c.l.b16 %v3707
  %v3772 = vunpack.c.l.b16 %v3708
  %v3773 = vunpack.c.l.b16 %v3709
  %v3774 = vunpack.c.l.b16 %v3710
  %v3775 = vunpack.c.l.b16 %v3711
  %v3776 = vpack.c.b16 %v3745, %v3744
  %v3777 = vpack.c.b16 %v3747, %v3746
  %v3778 = vpack.c.b16 %v3749, %v3748
  %v3779 = vpack.c.b16 %v3751, %v3750
  %v3780 = vpack.c.b16 %v3753, %v3752
  %v3781 = vpack.c.b16 %v3755, %v3754
  %v3782 = vpack.c.b16 %v3757, %v3756
  %v3783 = vpack.c.b16 %v3759, %v3758
  %v3784 = vpack.c.b16 %v3761, %v3760
  %v3785 = vpack.c.b16 %v3763, %v3762
  %v3786 = vpack.c.b16 %v3765, %v3764
  %v3787 = vpack.c.b16 %v3767, %v3766
  %v3788 = vpack.c.b16 %v3769, %v3768
  %v3789 = vpack.c.b16 %v3771, %v3770
  %v3790 = vpack.c.b16 %v3773, %v3772
  %v3791 = vpack.c.b16 %v3775, %v3774
  %3808 = vmatprep.subr.bf16.mxu0 0
  %3809 = vmatpush1.bf16.msra.mxu0 %v3783
  %3810 = vmatprep.subr.bf16.mxu0 0
  %3811 = vmatpush1.bf16.msra.mxu0 %v3782
  %3812 = vmatprep.subr.bf16.mxu0 0
  %3813 = vmatpush1.bf16.msra.mxu0 %v3781
  %3814 = vmatprep.subr.bf16.mxu0 0
  %3815 = vmatpush1.bf16.msra.mxu0 %v3780
  %3816 = vmatprep.subr.bf16.mxu0 0
  %3817 = vmatpush1.bf16.msra.mxu0 %v3779
  %3818 = vmatprep.subr.bf16.mxu0 0
  %3819 = vmatpush1.bf16.msra.mxu0 %v3778
  %3820 = vmatprep.subr.bf16.mxu0 0
  %3821 = vmatpush1.bf16.msra.mxu0 %v3777
  %3822 = vmatprep.subr.bf16.mxu0 0
  %3823 = vmatpush1.bf16.msra.mxu0 %v3776
  %3824 = vmatprep.subr.bf16.mxu0 0
  %3825 = vmatpush2.bf16.msra.mxu0 %v3791
  %3826 = vmatprep.subr.bf16.mxu0 0
  %3827 = vmatpush2.bf16.msra.mxu0 %v3790
  %3828 = vmatprep.subr.bf16.mxu0 0
  %3829 = vmatpush2.bf16.msra.mxu0 %v3789
  %3830 = vmatprep.subr.bf16.mxu0 0
  %3831 = vmatpush2.bf16.msra.mxu0 %v3788
  %3832 = vmatprep.subr.bf16.mxu0 0
  %3833 = vmatpush2.bf16.msra.mxu0 %v3787
  %3834 = vmatprep.subr.bf16.mxu0 0
  %3835 = vmatpush2.bf16.msra.mxu0 %v3786
  %3836 = vmatprep.subr.bf16.mxu0 0
  %3837 = vmatpush2.bf16.msra.mxu0 %v3785
  %3838 = vmatprep.subr.bf16.mxu0 0
  %3839 = vmatpush2.bf16.msra.mxu0 %v3784
  %3840 = vmatprep.mubr.bf16.mxu0 %v3678
  %3841 = vmatmul.mubr.bf16.gmra.mxu0 %v3677
  %v3842 = vpop.f32.mrf.mxu0
  %v3843 = vadd.f32 0.0, %v3842
  %v3844 = vpop.f32.mrf.mxu0
  %v3845 = vpop.f32.mrf.mxu0
  %v3846 = vpop.f32.mrf.mxu0
  %3847 = vdwg.mxu0
  %v3848 = vadd.f32 %v3281, %v3843
  %s3849 = scalar_lea.vmem %s0, 256
  %v3850 = vld [vmem:[%s3849] sm:$0xff]
  %v3851 = vld [vmem:[%s3849 + $0x8] sm:$0xff]
  %v3852 = vld [vmem:[%s3849 + $0x10] sm:$0xff]
  %v3853 = vld [vmem:[%s3849 + $0x18] sm:$0xff]
  %v3854 = vld [vmem:[%s3849 + $0x20] sm:$0xff]
  %v3855 = vld [vmem:[%s3849 + $0x28] sm:$0xff]
  %v3856 = vld [vmem:[%s3849 + $0x30] sm:$0xff]
  %v3857 = vld [vmem:[%s3849 + $0x38] sm:$0xff]
  %v3866 = vunpack.c.l.b16 %v3850
  %v3867 = vunpack.c.h.b16 %v3850
  %v3868 = vunpack.c.l.b16 %v3851
  %v3869 = vunpack.c.h.b16 %v3851
  %v3870 = vunpack.c.l.b16 %v3852
  %v3871 = vunpack.c.h.b16 %v3852
  %v3872 = vunpack.c.l.b16 %v3853
  %v3873 = vunpack.c.h.b16 %v3853
  %v3874 = vunpack.c.l.b16 %v3854
  %v3875 = vunpack.c.h.b16 %v3854
  %v3876 = vunpack.c.l.b16 %v3855
  %v3877 = vunpack.c.h.b16 %v3855
  %v3878 = vunpack.c.l.b16 %v3856
  %v3879 = vunpack.c.h.b16 %v3856
  %v3880 = vunpack.c.l.b16 %v3857
  %v3881 = vunpack.c.h.b16 %v3857
  %v3882 = vpack.c.b16 %v3866, %v3866
  %v3883 = vpack.c.b16 %v3867, %v3867
  %v3884 = vpack.c.b16 %v3868, %v3868
  %v3885 = vpack.c.b16 %v3869, %v3869
  %v3886 = vpack.c.b16 %v3870, %v3870
  %v3887 = vpack.c.b16 %v3871, %v3871
  %v3888 = vpack.c.b16 %v3872, %v3872
  %v3889 = vpack.c.b16 %v3873, %v3873
  %v3890 = vpack.c.b16 %v3874, %v3874
  %v3891 = vpack.c.b16 %v3875, %v3875
  %v3892 = vpack.c.b16 %v3876, %v3876
  %v3893 = vpack.c.b16 %v3877, %v3877
  %v3894 = vpack.c.b16 %v3878, %v3878
  %v3895 = vpack.c.b16 %v3879, %v3879
  %v3896 = vpack.c.b16 %v3880, %v3880
  %v3897 = vpack.c.b16 %v3881, %v3881
  %3914 = vmatprep.subr.bf16.mxu0 %v1150
  %3915 = vmatpush1.bf16.msra.mxu0 %v1149
  %3916 = vmatprep.subr.bf16.mxu0 %v1148
  %3917 = vmatpush1.bf16.msra.mxu0 %v1147
  %3918 = vmatprep.subr.bf16.mxu0 %v1146
  %3919 = vmatpush1.bf16.msra.mxu0 %v1145
  %3920 = vmatprep.subr.bf16.mxu0 %v1144
  %3921 = vmatpush1.bf16.msra.mxu0 %v1143
  %3922 = vmatprep.subr.bf16.mxu0 %v1142
  %3923 = vmatpush1.bf16.msra.mxu0 %v1141
  %3924 = vmatprep.subr.bf16.mxu0 %v1140
  %3925 = vmatpush1.bf16.msra.mxu0 %v1139
  %3926 = vmatprep.subr.bf16.mxu0 %v1138
  %3927 = vmatpush1.bf16.msra.mxu0 %v1137
  %3928 = vmatprep.subr.bf16.mxu0 %v1136
  %3929 = vmatpush1.bf16.msra.mxu0 %v1135
  %3930 = vmatprep.subr.bf16.mxu0 %v1166
  %3931 = vmatpush2.bf16.msra.mxu0 %v1165
  %3932 = vmatprep.subr.bf16.mxu0 %v1164
  %3933 = vmatpush2.bf16.msra.mxu0 %v1163
  %3934 = vmatprep.subr.bf16.mxu0 %v1162
  %3935 = vmatpush2.bf16.msra.mxu0 %v1161
  %3936 = vmatprep.subr.bf16.mxu0 %v1160
  %3937 = vmatpush2.bf16.msra.mxu0 %v1159
  %3938 = vmatprep.subr.bf16.mxu0 %v1158
  %3939 = vmatpush2.bf16.msra.mxu0 %v1157
  %3940 = vmatprep.subr.bf16.mxu0 %v1156
  %3941 = vmatpush2.bf16.msra.mxu0 %v1155
  %3942 = vmatprep.subr.bf16.mxu0 %v1154
  %3943 = vmatpush2.bf16.msra.mxu0 %v1153
  %3944 = vmatprep.subr.bf16.mxu0 %v1152
  %3945 = vmatpush2.bf16.msra.mxu0 %v1151
  %3946 = vmatprep.mubr.bf16.mxu0 %v3883
  %3947 = vmatmul.mubr.bf16.gmra.mxu0 %v3882
  %v3948 = vpop.f32.mrf.mxu0
  %v3949 = vadd.f32 %v304, %v3948
  %v3950 = vpop.f32.mrf.mxu0
  %v3951 = vadd.f32 %v308, %v3950
  %v3952 = vpop.f32.mrf.mxu0
  %v3953 = vpop.f32.mrf.mxu0
  %3954 = vdwg.mxu0
  %3955 = vmatprep.subr.bf16.mxu0 %v1182
  %3956 = vmatpush1.bf16.msra.mxu0 %v1181
  %3957 = vmatprep.subr.bf16.mxu0 %v1180
  %3958 = vmatpush1.bf16.msra.mxu0 %v1179
  %3959 = vmatprep.subr.bf16.mxu0 %v1178
  %3960 = vmatpush1.bf16.msra.mxu0 %v1177
  %3961 = vmatprep.subr.bf16.mxu0 %v1176
  %3962 = vmatpush1.bf16.msra.mxu0 %v1175
  %3963 = vmatprep.subr.bf16.mxu0 %v1174
  %3964 = vmatpush1.bf16.msra.mxu0 %v1173
  %3965 = vmatprep.subr.bf16.mxu0 %v1172
  %3966 = vmatpush1.bf16.msra.mxu0 %v1171
  %3967 = vmatprep.subr.bf16.mxu0 %v1170
  %3968 = vmatpush1.bf16.msra.mxu0 %v1169
  %3969 = vmatprep.subr.bf16.mxu0 %v1168
  %3970 = vmatpush1.bf16.msra.mxu0 %v1167
  %3971 = vmatprep.subr.bf16.mxu0 %v1198
  %3972 = vmatpush2.bf16.msra.mxu0 %v1197
  %3973 = vmatprep.subr.bf16.mxu0 %v1196
  %3974 = vmatpush2.bf16.msra.mxu0 %v1195
  %3975 = vmatprep.subr.bf16.mxu0 %v1194
  %3976 = vmatpush2.bf16.msra.mxu0 %v1193
  %3977 = vmatprep.subr.bf16.mxu0 %v1192
  %3978 = vmatpush2.bf16.msra.mxu0 %v1191
  %3979 = vmatprep.subr.bf16.mxu0 %v1190
  %3980 = vmatpush2.bf16.msra.mxu0 %v1189
  %3981 = vmatprep.subr.bf16.mxu0 %v1188
  %3982 = vmatpush2.bf16.msra.mxu0 %v1187
  %3983 = vmatprep.subr.bf16.mxu0 %v1186
  %3984 = vmatpush2.bf16.msra.mxu0 %v1185
  %3985 = vmatprep.subr.bf16.mxu0 %v1184
  %3986 = vmatpush2.bf16.msra.mxu0 %v1183
  %3987 = vmatprep.mubr.bf16.mxu0 %v3885
  %3988 = vmatmul.mubr.bf16.gmra.mxu0 %v3884
  %v3989 = vpop.f32.mrf.mxu0
  %v3990 = vadd.f32 %v3949, %v3989
  %v3991 = vpop.f32.mrf.mxu0
  %v3992 = vadd.f32 %v3951, %v3991
  %v3993 = vpop.f32.mrf.mxu0
  %v3994 = vpop.f32.mrf.mxu0
  %3995 = vdwg.mxu0
  %3996 = vmatprep.subr.bf16.mxu0 %v1214
  %3997 = vmatpush1.bf16.msra.mxu0 %v1213
  %3998 = vmatprep.subr.bf16.mxu0 %v1212
  %3999 = vmatpush1.bf16.msra.mxu0 %v1211
  %4000 = vmatprep.subr.bf16.mxu0 %v1210
  %4001 = vmatpush1.bf16.msra.mxu0 %v1209
  %4002 = vmatprep.subr.bf16.mxu0 %v1208
  %4003 = vmatpush1.bf16.msra.mxu0 %v1207
  %4004 = vmatprep.subr.bf16.mxu0 %v1206
  %4005 = vmatpush1.bf16.msra.mxu0 %v1205
  %4006 = vmatprep.subr.bf16.mxu0 %v1204
  %4007 = vmatpush1.bf16.msra.mxu0 %v1203
  %4008 = vmatprep.subr.bf16.mxu0 %v1202
  %4009 = vmatpush1.bf16.msra.mxu0 %v1201
  %4010 = vmatprep.subr.bf16.mxu0 %v1200
  %4011 = vmatpush1.bf16.msra.mxu0 %v1199
  %4012 = vmatprep.subr.bf16.mxu0 %v1230
  %4013 = vmatpush2.bf16.msra.mxu0 %v1229
  %4014 = vmatprep.subr.bf16.mxu0 %v1228
  %4015 = vmatpush2.bf16.msra.mxu0 %v1227
  %4016 = vmatprep.subr.bf16.mxu0 %v1226
  %4017 = vmatpush2.bf16.msra.mxu0 %v1225
  %4018 = vmatprep.subr.bf16.mxu0 %v1224
  %4019 = vmatpush2.bf16.msra.mxu0 %v1223
  %4020 = vmatprep.subr.bf16.mxu0 %v1222
  %4021 = vmatpush2.bf16.msra.mxu0 %v1221
  %4022 = vmatprep.subr.bf16.mxu0 %v1220
  %4023 = vmatpush2.bf16.msra.mxu0 %v1219
  %4024 = vmatprep.subr.bf16.mxu0 %v1218
  %4025 = vmatpush2.bf16.msra.mxu0 %v1217
  %4026 = vmatprep.subr.bf16.mxu0 %v1216
  %4027 = vmatpush2.bf16.msra.mxu0 %v1215
  %4028 = vmatprep.mubr.bf16.mxu0 %v3887
  %4029 = vmatmul.mubr.bf16.gmra.mxu0 %v3886
  %v4030 = vpop.f32.mrf.mxu0
  %v4031 = vadd.f32 %v3990, %v4030
  %v4032 = vpop.f32.mrf.mxu0
  %v4033 = vadd.f32 %v3992, %v4032
  %v4034 = vpop.f32.mrf.mxu0
  %v4035 = vpop.f32.mrf.mxu0
  %4036 = vdwg.mxu0
  %4037 = vmatprep.subr.bf16.mxu0 %v1246
  %4038 = vmatpush1.bf16.msra.mxu0 %v1245
  %4039 = vmatprep.subr.bf16.mxu0 %v1244
  %4040 = vmatpush1.bf16.msra.mxu0 %v1243
  %4041 = vmatprep.subr.bf16.mxu0 %v1242
  %4042 = vmatpush1.bf16.msra.mxu0 %v1241
  %4043 = vmatprep.subr.bf16.mxu0 %v1240
  %4044 = vmatpush1.bf16.msra.mxu0 %v1239
  %4045 = vmatprep.subr.bf16.mxu0 %v1238
  %4046 = vmatpush1.bf16.msra.mxu0 %v1237
  %4047 = vmatprep.subr.bf16.mxu0 %v1236
  %4048 = vmatpush1.bf16.msra.mxu0 %v1235
  %4049 = vmatprep.subr.bf16.mxu0 %v1234
  %4050 = vmatpush1.bf16.msra.mxu0 %v1233
  %4051 = vmatprep.subr.bf16.mxu0 %v1232
  %4052 = vmatpush1.bf16.msra.mxu0 %v1231
  %4053 = vmatprep.subr.bf16.mxu0 %v1262
  %4054 = vmatpush2.bf16.msra.mxu0 %v1261
  %4055 = vmatprep.subr.bf16.mxu0 %v1260
  %4056 = vmatpush2.bf16.msra.mxu0 %v1259
  %4057 = vmatprep.subr.bf16.mxu0 %v1258
  %4058 = vmatpush2.bf16.msra.mxu0 %v1257
  %4059 = vmatprep.subr.bf16.mxu0 %v1256
  %4060 = vmatpush2.bf16.msra.mxu0 %v1255
  %4061 = vmatprep.subr.bf16.mxu0 %v1254
  %4062 = vmatpush2.bf16.msra.mxu0 %v1253
  %4063 = vmatprep.subr.bf16.mxu0 %v1252
  %4064 = vmatpush2.bf16.msra.mxu0 %v1251
  %4065 = vmatprep.subr.bf16.mxu0 %v1250
  %4066 = vmatpush2.bf16.msra.mxu0 %v1249
  %4067 = vmatprep.subr.bf16.mxu0 %v1248
  %4068 = vmatpush2.bf16.msra.mxu0 %v1247
  %4069 = vmatprep.mubr.bf16.mxu0 %v3889
  %4070 = vmatmul.mubr.bf16.gmra.mxu0 %v3888
  %v4071 = vpop.f32.mrf.mxu0
  %v4072 = vadd.f32 %v4031, %v4071
  %v4073 = vpop.f32.mrf.mxu0
  %v4074 = vadd.f32 %v4033, %v4073
  %v4075 = vpop.f32.mrf.mxu0
  %v4076 = vpop.f32.mrf.mxu0
  %4077 = vdwg.mxu0
  %4078 = vmatprep.subr.bf16.mxu0 %v1278
  %4079 = vmatpush1.bf16.msra.mxu0 %v1277
  %4080 = vmatprep.subr.bf16.mxu0 %v1276
  %4081 = vmatpush1.bf16.msra.mxu0 %v1275
  %4082 = vmatprep.subr.bf16.mxu0 %v1274
  %4083 = vmatpush1.bf16.msra.mxu0 %v1273
  %4084 = vmatprep.subr.bf16.mxu0 %v1272
  %4085 = vmatpush1.bf16.msra.mxu0 %v1271
  %4086 = vmatprep.subr.bf16.mxu0 %v1270
  %4087 = vmatpush1.bf16.msra.mxu0 %v1269
  %4088 = vmatprep.subr.bf16.mxu0 %v1268
  %4089 = vmatpush1.bf16.msra.mxu0 %v1267
  %4090 = vmatprep.subr.bf16.mxu0 %v1266
  %4091 = vmatpush1.bf16.msra.mxu0 %v1265
  %4092 = vmatprep.subr.bf16.mxu0 %v1264
  %4093 = vmatpush1.bf16.msra.mxu0 %v1263
  %4094 = vmatprep.subr.bf16.mxu0 %v1294
  %4095 = vmatpush2.bf16.msra.mxu0 %v1293
  %4096 = vmatprep.subr.bf16.mxu0 %v1292
  %4097 = vmatpush2.bf16.msra.mxu0 %v1291
  %4098 = vmatprep.subr.bf16.mxu0 %v1290
  %4099 = vmatpush2.bf16.msra.mxu0 %v1289
  %4100 = vmatprep.subr.bf16.mxu0 %v1288
  %4101 = vmatpush2.bf16.msra.mxu0 %v1287
  %4102 = vmatprep.subr.bf16.mxu0 %v1286
  %4103 = vmatpush2.bf16.msra.mxu0 %v1285
  %4104 = vmatprep.subr.bf16.mxu0 %v1284
  %4105 = vmatpush2.bf16.msra.mxu0 %v1283
  %4106 = vmatprep.subr.bf16.mxu0 %v1282
  %4107 = vmatpush2.bf16.msra.mxu0 %v1281
  %4108 = vmatprep.subr.bf16.mxu0 %v1280
  %4109 = vmatpush2.bf16.msra.mxu0 %v1279
  %4110 = vmatprep.mubr.bf16.mxu0 %v3891
  %4111 = vmatmul.mubr.bf16.gmra.mxu0 %v3890
  %v4112 = vpop.f32.mrf.mxu0
  %v4113 = vadd.f32 %v4072, %v4112
  %v4114 = vpop.f32.mrf.mxu0
  %v4115 = vadd.f32 %v4074, %v4114
  %v4116 = vpop.f32.mrf.mxu0
  %v4117 = vpop.f32.mrf.mxu0
  %4118 = vdwg.mxu0
  %4119 = vmatprep.subr.bf16.mxu0 %v1310
  %4120 = vmatpush1.bf16.msra.mxu0 %v1309
  %4121 = vmatprep.subr.bf16.mxu0 %v1308
  %4122 = vmatpush1.bf16.msra.mxu0 %v1307
  %4123 = vmatprep.subr.bf16.mxu0 %v1306
  %4124 = vmatpush1.bf16.msra.mxu0 %v1305
  %4125 = vmatprep.subr.bf16.mxu0 %v1304
  %4126 = vmatpush1.bf16.msra.mxu0 %v1303
  %4127 = vmatprep.subr.bf16.mxu0 %v1302
  %4128 = vmatpush1.bf16.msra.mxu0 %v1301
  %4129 = vmatprep.subr.bf16.mxu0 %v1300
  %4130 = vmatpush1.bf16.msra.mxu0 %v1299
  %4131 = vmatprep.subr.bf16.mxu0 %v1298
  %4132 = vmatpush1.bf16.msra.mxu0 %v1297
  %4133 = vmatprep.subr.bf16.mxu0 %v1296
  %4134 = vmatpush1.bf16.msra.mxu0 %v1295
  %4135 = vmatprep.subr.bf16.mxu0 %v1326
  %4136 = vmatpush2.bf16.msra.mxu0 %v1325
  %4137 = vmatprep.subr.bf16.mxu0 %v1324
  %4138 = vmatpush2.bf16.msra.mxu0 %v1323
  %4139 = vmatprep.subr.bf16.mxu0 %v1322
  %4140 = vmatpush2.bf16.msra.mxu0 %v1321
  %4141 = vmatprep.subr.bf16.mxu0 %v1320
  %4142 = vmatpush2.bf16.msra.mxu0 %v1319
  %4143 = vmatprep.subr.bf16.mxu0 %v1318
  %4144 = vmatpush2.bf16.msra.mxu0 %v1317
  %4145 = vmatprep.subr.bf16.mxu0 %v1316
  %4146 = vmatpush2.bf16.msra.mxu0 %v1315
  %4147 = vmatprep.subr.bf16.mxu0 %v1314
  %4148 = vmatpush2.bf16.msra.mxu0 %v1313
  %4149 = vmatprep.subr.bf16.mxu0 %v1312
  %4150 = vmatpush2.bf16.msra.mxu0 %v1311
  %4151 = vmatprep.mubr.bf16.mxu0 %v3893
  %4152 = vmatmul.mubr.bf16.gmra.mxu0 %v3892
  %v4153 = vpop.f32.mrf.mxu0
  %v4154 = vadd.f32 %v4113, %v4153
  %v4155 = vpop.f32.mrf.mxu0
  %v4156 = vadd.f32 %v4115, %v4155
  %v4157 = vpop.f32.mrf.mxu0
  %v4158 = vpop.f32.mrf.mxu0
  %4159 = vdwg.mxu0
  %4160 = vmatprep.subr.bf16.mxu0 %v1342
  %4161 = vmatpush1.bf16.msra.mxu0 %v1341
  %4162 = vmatprep.subr.bf16.mxu0 %v1340
  %4163 = vmatpush1.bf16.msra.mxu0 %v1339
  %4164 = vmatprep.subr.bf16.mxu0 %v1338
  %4165 = vmatpush1.bf16.msra.mxu0 %v1337
  %4166 = vmatprep.subr.bf16.mxu0 %v1336
  %4167 = vmatpush1.bf16.msra.mxu0 %v1335
  %4168 = vmatprep.subr.bf16.mxu0 %v1334
  %4169 = vmatpush1.bf16.msra.mxu0 %v1333
  %4170 = vmatprep.subr.bf16.mxu0 %v1332
  %4171 = vmatpush1.bf16.msra.mxu0 %v1331
  %4172 = vmatprep.subr.bf16.mxu0 %v1330
  %4173 = vmatpush1.bf16.msra.mxu0 %v1329
  %4174 = vmatprep.subr.bf16.mxu0 %v1328
  %4175 = vmatpush1.bf16.msra.mxu0 %v1327
  %4176 = vmatprep.subr.bf16.mxu0 %v1358
  %4177 = vmatpush2.bf16.msra.mxu0 %v1357
  %4178 = vmatprep.subr.bf16.mxu0 %v1356
  %4179 = vmatpush2.bf16.msra.mxu0 %v1355
  %4180 = vmatprep.subr.bf16.mxu0 %v1354
  %4181 = vmatpush2.bf16.msra.mxu0 %v1353
  %4182 = vmatprep.subr.bf16.mxu0 %v1352
  %4183 = vmatpush2.bf16.msra.mxu0 %v1351
  %4184 = vmatprep.subr.bf16.mxu0 %v1350
  %4185 = vmatpush2.bf16.msra.mxu0 %v1349
  %4186 = vmatprep.subr.bf16.mxu0 %v1348
  %4187 = vmatpush2.bf16.msra.mxu0 %v1347
  %4188 = vmatprep.subr.bf16.mxu0 %v1346
  %4189 = vmatpush2.bf16.msra.mxu0 %v1345
  %4190 = vmatprep.subr.bf16.mxu0 %v1344
  %4191 = vmatpush2.bf16.msra.mxu0 %v1343
  %4192 = vmatprep.mubr.bf16.mxu0 %v3895
  %4193 = vmatmul.mubr.bf16.gmra.mxu0 %v3894
  %v4194 = vpop.f32.mrf.mxu0
  %v4195 = vadd.f32 %v4154, %v4194
  %v4196 = vpop.f32.mrf.mxu0
  %v4197 = vadd.f32 %v4156, %v4196
  %v4198 = vpop.f32.mrf.mxu0
  %v4199 = vpop.f32.mrf.mxu0
  %4200 = vdwg.mxu0
  %4201 = vmatprep.subr.bf16.mxu0 %v1374
  %4202 = vmatpush1.bf16.msra.mxu0 %v1373
  %4203 = vmatprep.subr.bf16.mxu0 %v1372
  %4204 = vmatpush1.bf16.msra.mxu0 %v1371
  %4205 = vmatprep.subr.bf16.mxu0 %v1370
  %4206 = vmatpush1.bf16.msra.mxu0 %v1369
  %4207 = vmatprep.subr.bf16.mxu0 %v1368
  %4208 = vmatpush1.bf16.msra.mxu0 %v1367
  %4209 = vmatprep.subr.bf16.mxu0 %v1366
  %4210 = vmatpush1.bf16.msra.mxu0 %v1365
  %4211 = vmatprep.subr.bf16.mxu0 %v1364
  %4212 = vmatpush1.bf16.msra.mxu0 %v1363
  %4213 = vmatprep.subr.bf16.mxu0 %v1362
  %4214 = vmatpush1.bf16.msra.mxu0 %v1361
  %4215 = vmatprep.subr.bf16.mxu0 %v1360
  %4216 = vmatpush1.bf16.msra.mxu0 %v1359
  %4217 = vmatprep.subr.bf16.mxu0 %v1390
  %4218 = vmatpush2.bf16.msra.mxu0 %v1389
  %4219 = vmatprep.subr.bf16.mxu0 %v1388
  %4220 = vmatpush2.bf16.msra.mxu0 %v1387
  %4221 = vmatprep.subr.bf16.mxu0 %v1386
  %4222 = vmatpush2.bf16.msra.mxu0 %v1385
  %4223 = vmatprep.subr.bf16.mxu0 %v1384
  %4224 = vmatpush2.bf16.msra.mxu0 %v1383
  %4225 = vmatprep.subr.bf16.mxu0 %v1382
  %4226 = vmatpush2.bf16.msra.mxu0 %v1381
  %4227 = vmatprep.subr.bf16.mxu0 %v1380
  %4228 = vmatpush2.bf16.msra.mxu0 %v1379
  %4229 = vmatprep.subr.bf16.mxu0 %v1378
  %4230 = vmatpush2.bf16.msra.mxu0 %v1377
  %4231 = vmatprep.subr.bf16.mxu0 %v1376
  %4232 = vmatpush2.bf16.msra.mxu0 %v1375
  %4233 = vmatprep.mubr.bf16.mxu0 %v3897
  %4234 = vmatmul.mubr.bf16.gmra.mxu0 %v3896
  %v4235 = vpop.f32.mrf.mxu0
  %v4236 = vadd.f32 %v4195, %v4235
  %v4237 = vpop.f32.mrf.mxu0
  %v4238 = vadd.f32 %v4197, %v4237
  %v4239 = vpop.f32.mrf.mxu0
  %v4240 = vpop.f32.mrf.mxu0
  %4241 = vdwg.mxu0
  %v4242 = vmax.f32 %v4236, 0.0
  %v4243 = vmax.f32 %v4238, 0.0
  %v4244 = vpack.c.bf16 %v4242, %v4242
  %v4245 = vpack.c.bf16 %v4243, %v4243
  %s4246 = scalar_lea.vmem %s3, 512
  %v4247 = vld [vmem:[%s4246] sm:$0xf]
  %v4248 = vld [vmem:[%s4246 + $0x4] sm:$0xf]
  %v4249 = vld [vmem:[%s4246 + $0x8] sm:$0xf]
  %v4250 = vld [vmem:[%s4246 + $0xc] sm:$0xf]
  %v4251 = vld [vmem:[%s4246 + $0x10] sm:$0xf]
  %v4252 = vld [vmem:[%s4246 + $0x14] sm:$0xf]
  %v4253 = vld [vmem:[%s4246 + $0x18] sm:$0xf]
  %v4254 = vld [vmem:[%s4246 + $0x1c] sm:$0xf]
  %v4255 = vld [vmem:[%s4246 + $0x20] sm:$0xf]
  %v4256 = vld [vmem:[%s4246 + $0x24] sm:$0xf]
  %v4257 = vld [vmem:[%s4246 + $0x28] sm:$0xf]
  %v4258 = vld [vmem:[%s4246 + $0x2c] sm:$0xf]
  %v4259 = vld [vmem:[%s4246 + $0x30] sm:$0xf]
  %v4260 = vld [vmem:[%s4246 + $0x34] sm:$0xf]
  %v4261 = vld [vmem:[%s4246 + $0x38] sm:$0xf]
  %v4262 = vld [vmem:[%s4246 + $0x3c] sm:$0xf]
  %v4263 = vld [vmem:[%s4246 + $0x40] sm:$0xf]
  %v4264 = vld [vmem:[%s4246 + $0x44] sm:$0xf]
  %v4265 = vld [vmem:[%s4246 + $0x48] sm:$0xf]
  %v4266 = vld [vmem:[%s4246 + $0x4c] sm:$0xf]
  %v4267 = vld [vmem:[%s4246 + $0x50] sm:$0xf]
  %v4268 = vld [vmem:[%s4246 + $0x54] sm:$0xf]
  %v4269 = vld [vmem:[%s4246 + $0x58] sm:$0xf]
  %v4270 = vld [vmem:[%s4246 + $0x5c] sm:$0xf]
  %v4271 = vld [vmem:[%s4246 + $0x60] sm:$0xf]
  %v4272 = vld [vmem:[%s4246 + $0x64] sm:$0xf]
  %v4273 = vld [vmem:[%s4246 + $0x68] sm:$0xf]
  %v4274 = vld [vmem:[%s4246 + $0x6c] sm:$0xf]
  %v4275 = vld [vmem:[%s4246 + $0x70] sm:$0xf]
  %v4276 = vld [vmem:[%s4246 + $0x74] sm:$0xf]
  %v4277 = vld [vmem:[%s4246 + $0x78] sm:$0xf]
  %v4278 = vld [vmem:[%s4246 + $0x7c] sm:$0xf]
  %v4311 = vunpack.c.l.b16 %v4247
  %v4312 = vunpack.c.l.b16 %v4248
  %v4313 = vunpack.c.l.b16 %v4249
  %v4314 = vunpack.c.l.b16 %v4250
  %v4315 = vunpack.c.l.b16 %v4251
  %v4316 = vunpack.c.l.b16 %v4252
  %v4317 = vunpack.c.l.b16 %v4253
  %v4318 = vunpack.c.l.b16 %v4254
  %v4319 = vunpack.c.l.b16 %v4255
  %v4320 = vunpack.c.l.b16 %v4256
  %v4321 = vunpack.c.l.b16 %v4257
  %v4322 = vunpack.c.l.b16 %v4258
  %v4323 = vunpack.c.l.b16 %v4259
  %v4324 = vunpack.c.l.b16 %v4260
  %v4325 = vunpack.c.l.b16 %v4261
  %v4326 = vunpack.c.l.b16 %v4262
  %v4327 = vunpack.c.l.b16 %v4263
  %v4328 = vunpack.c.l.b16 %v4264
  %v4329 = vunpack.c.l.b16 %v4265
  %v4330 = vunpack.c.l.b16 %v4266
  %v4331 = vunpack.c.l.b16 %v4267
  %v4332 = vunpack.c.l.b16 %v4268
  %v4333 = vunpack.c.l.b16 %v4269
  %v4334 = vunpack.c.l.b16 %v4270
  %v4335 = vunpack.c.l.b16 %v4271
  %v4336 = vunpack.c.l.b16 %v4272
  %v4337 = vunpack.c.l.b16 %v4273
  %v4338 = vunpack.c.l.b16 %v4274
  %v4339 = vunpack.c.l.b16 %v4275
  %v4340 = vunpack.c.l.b16 %v4276
  %v4341 = vunpack.c.l.b16 %v4277
  %v4342 = vunpack.c.l.b16 %v4278
  %v4343 = vpack.c.b16 %v4312, %v4311
  %v4344 = vpack.c.b16 %v4314, %v4313
  %v4345 = vpack.c.b16 %v4316, %v4315
  %v4346 = vpack.c.b16 %v4318, %v4317
  %v4347 = vpack.c.b16 %v4320, %v4319
  %v4348 = vpack.c.b16 %v4322, %v4321
  %v4349 = vpack.c.b16 %v4324, %v4323
  %v4350 = vpack.c.b16 %v4326, %v4325
  %v4351 = vpack.c.b16 %v4328, %v4327
  %v4352 = vpack.c.b16 %v4330, %v4329
  %v4353 = vpack.c.b16 %v4332, %v4331
  %v4354 = vpack.c.b16 %v4334, %v4333
  %v4355 = vpack.c.b16 %v4336, %v4335
  %v4356 = vpack.c.b16 %v4338, %v4337
  %v4357 = vpack.c.b16 %v4340, %v4339
  %v4358 = vpack.c.b16 %v4342, %v4341
  %4375 = vmatprep.subr.bf16.mxu0 0
  %4376 = vmatpush1.bf16.msra.mxu0 %v4350
  %4377 = vmatprep.subr.bf16.mxu0 0
  %4378 = vmatpush1.bf16.msra.mxu0 %v4349
  %4379 = vmatprep.subr.bf16.mxu0 0
  %4380 = vmatpush1.bf16.msra.mxu0 %v4348
  %4381 = vmatprep.subr.bf16.mxu0 0
  %4382 = vmatpush1.bf16.msra.mxu0 %v4347
  %4383 = vmatprep.subr.bf16.mxu0 0
  %4384 = vmatpush1.bf16.msra.mxu0 %v4346
  %4385 = vmatprep.subr.bf16.mxu0 0
  %4386 = vmatpush1.bf16.msra.mxu0 %v4345
  %4387 = vmatprep.subr.bf16.mxu0 0
  %4388 = vmatpush1.bf16.msra.mxu0 %v4344
  %4389 = vmatprep.subr.bf16.mxu0 0
  %4390 = vmatpush1.bf16.msra.mxu0 %v4343
  %4391 = vmatprep.subr.bf16.mxu0 0
  %4392 = vmatpush2.bf16.msra.mxu0 %v4358
  %4393 = vmatprep.subr.bf16.mxu0 0
  %4394 = vmatpush2.bf16.msra.mxu0 %v4357
  %4395 = vmatprep.subr.bf16.mxu0 0
  %4396 = vmatpush2.bf16.msra.mxu0 %v4356
  %4397 = vmatprep.subr.bf16.mxu0 0
  %4398 = vmatpush2.bf16.msra.mxu0 %v4355
  %4399 = vmatprep.subr.bf16.mxu0 0
  %4400 = vmatpush2.bf16.msra.mxu0 %v4354
  %4401 = vmatprep.subr.bf16.mxu0 0
  %4402 = vmatpush2.bf16.msra.mxu0 %v4353
  %4403 = vmatprep.subr.bf16.mxu0 0
  %4404 = vmatpush2.bf16.msra.mxu0 %v4352
  %4405 = vmatprep.subr.bf16.mxu0 0
  %4406 = vmatpush2.bf16.msra.mxu0 %v4351
  %4407 = vmatprep.mubr.bf16.mxu0 %v4245
  %4408 = vmatmul.mubr.bf16.gmra.mxu0 %v4244
  %v4409 = vpop.f32.mrf.mxu0
  %v4410 = vadd.f32 0.0, %v4409
  %v4411 = vpop.f32.mrf.mxu0
  %v4412 = vpop.f32.mrf.mxu0
  %v4413 = vpop.f32.mrf.mxu0
  %4414 = vdwg.mxu0
  %v4415 = vadd.f32 %v3848, %v4410
  %s4416 = scalar_lea.vmem %s0, 320
  %v4417 = vld [vmem:[%s4416] sm:$0xff]
  %v4418 = vld [vmem:[%s4416 + $0x8] sm:$0xff]
  %v4419 = vld [vmem:[%s4416 + $0x10] sm:$0xff]
  %v4420 = vld [vmem:[%s4416 + $0x18] sm:$0xff]
  %v4421 = vld [vmem:[%s4416 + $0x20] sm:$0xff]
  %v4422 = vld [vmem:[%s4416 + $0x28] sm:$0xff]
  %v4423 = vld [vmem:[%s4416 + $0x30] sm:$0xff]
  %v4424 = vld [vmem:[%s4416 + $0x38] sm:$0xff]
  %v4433 = vunpack.c.l.b16 %v4417
  %v4434 = vunpack.c.h.b16 %v4417
  %v4435 = vunpack.c.l.b16 %v4418
  %v4436 = vunpack.c.h.b16 %v4418
  %v4437 = vunpack.c.l.b16 %v4419
  %v4438 = vunpack.c.h.b16 %v4419
  %v4439 = vunpack.c.l.b16 %v4420
  %v4440 = vunpack.c.h.b16 %v4420
  %v4441 = vunpack.c.l.b16 %v4421
  %v4442 = vunpack.c.h.b16 %v4421
  %v4443 = vunpack.c.l.b16 %v4422
  %v4444 = vunpack.c.h.b16 %v4422
  %v4445 = vunpack.c.l.b16 %v4423
  %v4446 = vunpack.c.h.b16 %v4423
  %v4447 = vunpack.c.l.b16 %v4424
  %v4448 = vunpack.c.h.b16 %v4424
  %v4449 = vpack.c.b16 %v4433, %v4433
  %v4450 = vpack.c.b16 %v4434, %v4434
  %v4451 = vpack.c.b16 %v4435, %v4435
  %v4452 = vpack.c.b16 %v4436, %v4436
  %v4453 = vpack.c.b16 %v4437, %v4437
  %v4454 = vpack.c.b16 %v4438, %v4438
  %v4455 = vpack.c.b16 %v4439, %v4439
  %v4456 = vpack.c.b16 %v4440, %v4440
  %v4457 = vpack.c.b16 %v4441, %v4441
  %v4458 = vpack.c.b16 %v4442, %v4442
  %v4459 = vpack.c.b16 %v4443, %v4443
  %v4460 = vpack.c.b16 %v4444, %v4444
  %v4461 = vpack.c.b16 %v4445, %v4445
  %v4462 = vpack.c.b16 %v4446, %v4446
  %v4463 = vpack.c.b16 %v4447, %v4447
  %v4464 = vpack.c.b16 %v4448, %v4448
  %4481 = vmatprep.subr.bf16.mxu0 %v1150
  %4482 = vmatpush1.bf16.msra.mxu0 %v1149
  %4483 = vmatprep.subr.bf16.mxu0 %v1148
  %4484 = vmatpush1.bf16.msra.mxu0 %v1147
  %4485 = vmatprep.subr.bf16.mxu0 %v1146
  %4486 = vmatpush1.bf16.msra.mxu0 %v1145
  %4487 = vmatprep.subr.bf16.mxu0 %v1144
  %4488 = vmatpush1.bf16.msra.mxu0 %v1143
  %4489 = vmatprep.subr.bf16.mxu0 %v1142
  %4490 = vmatpush1.bf16.msra.mxu0 %v1141
  %4491 = vmatprep.subr.bf16.mxu0 %v1140
  %4492 = vmatpush1.bf16.msra.mxu0 %v1139
  %4493 = vmatprep.subr.bf16.mxu0 %v1138
  %4494 = vmatpush1.bf16.msra.mxu0 %v1137
  %4495 = vmatprep.subr.bf16.mxu0 %v1136
  %4496 = vmatpush1.bf16.msra.mxu0 %v1135
  %4497 = vmatprep.subr.bf16.mxu0 %v1166
  %4498 = vmatpush2.bf16.msra.mxu0 %v1165
  %4499 = vmatprep.subr.bf16.mxu0 %v1164
  %4500 = vmatpush2.bf16.msra.mxu0 %v1163
  %4501 = vmatprep.subr.bf16.mxu0 %v1162
  %4502 = vmatpush2.bf16.msra.mxu0 %v1161
  %4503 = vmatprep.subr.bf16.mxu0 %v1160
  %4504 = vmatpush2.bf16.msra.mxu0 %v1159
  %4505 = vmatprep.subr.bf16.mxu0 %v1158
  %4506 = vmatpush2.bf16.msra.mxu0 %v1157
  %4507 = vmatprep.subr.bf16.mxu0 %v1156
  %4508 = vmatpush2.bf16.msra.mxu0 %v1155
  %4509 = vmatprep.subr.bf16.mxu0 %v1154
  %4510 = vmatpush2.bf16.msra.mxu0 %v1153
  %4511 = vmatprep.subr.bf16.mxu0 %v1152
  %4512 = vmatpush2.bf16.msra.mxu0 %v1151
  %4513 = vmatprep.mubr.bf16.mxu0 %v4450
  %4514 = vmatmul.mubr.bf16.gmra.mxu0 %v4449
  %v4515 = vpop.f32.mrf.mxu0
  %v4516 = vadd.f32 %v304, %v4515
  %v4517 = vpop.f32.mrf.mxu0
  %v4518 = vadd.f32 %v308, %v4517
  %v4519 = vpop.f32.mrf.mxu0
  %v4520 = vpop.f32.mrf.mxu0
  %4521 = vdwg.mxu0
  %4522 = vmatprep.subr.bf16.mxu0 %v1182
  %4523 = vmatpush1.bf16.msra.mxu0 %v1181
  %4524 = vmatprep.subr.bf16.mxu0 %v1180
  %4525 = vmatpush1.bf16.msra.mxu0 %v1179
  %4526 = vmatprep.subr.bf16.mxu0 %v1178
  %4527 = vmatpush1.bf16.msra.mxu0 %v1177
  %4528 = vmatprep.subr.bf16.mxu0 %v1176
  %4529 = vmatpush1.bf16.msra.mxu0 %v1175
  %4530 = vmatprep.subr.bf16.mxu0 %v1174
  %4531 = vmatpush1.bf16.msra.mxu0 %v1173
  %4532 = vmatprep.subr.bf16.mxu0 %v1172
  %4533 = vmatpush1.bf16.msra.mxu0 %v1171
  %4534 = vmatprep.subr.bf16.mxu0 %v1170
  %4535 = vmatpush1.bf16.msra.mxu0 %v1169
  %4536 = vmatprep.subr.bf16.mxu0 %v1168
  %4537 = vmatpush1.bf16.msra.mxu0 %v1167
  %4538 = vmatprep.subr.bf16.mxu0 %v1198
  %4539 = vmatpush2.bf16.msra.mxu0 %v1197
  %4540 = vmatprep.subr.bf16.mxu0 %v1196
  %4541 = vmatpush2.bf16.msra.mxu0 %v1195
  %4542 = vmatprep.subr.bf16.mxu0 %v1194
  %4543 = vmatpush2.bf16.msra.mxu0 %v1193
  %4544 = vmatprep.subr.bf16.mxu0 %v1192
  %4545 = vmatpush2.bf16.msra.mxu0 %v1191
  %4546 = vmatprep.subr.bf16.mxu0 %v1190
  %4547 = vmatpush2.bf16.msra.mxu0 %v1189
  %4548 = vmatprep.subr.bf16.mxu0 %v1188
  %4549 = vmatpush2.bf16.msra.mxu0 %v1187
  %4550 = vmatprep.subr.bf16.mxu0 %v1186
  %4551 = vmatpush2.bf16.msra.mxu0 %v1185
  %4552 = vmatprep.subr.bf16.mxu0 %v1184
  %4553 = vmatpush2.bf16.msra.mxu0 %v1183
  %4554 = vmatprep.mubr.bf16.mxu0 %v4452
  %4555 = vmatmul.mubr.bf16.gmra.mxu0 %v4451
  %v4556 = vpop.f32.mrf.mxu0
  %v4557 = vadd.f32 %v4516, %v4556
  %v4558 = vpop.f32.mrf.mxu0
  %v4559 = vadd.f32 %v4518, %v4558
  %v4560 = vpop.f32.mrf.mxu0
  %v4561 = vpop.f32.mrf.mxu0
  %4562 = vdwg.mxu0
  %4563 = vmatprep.subr.bf16.mxu0 %v1214
  %4564 = vmatpush1.bf16.msra.mxu0 %v1213
  %4565 = vmatprep.subr.bf16.mxu0 %v1212
  %4566 = vmatpush1.bf16.msra.mxu0 %v1211
  %4567 = vmatprep.subr.bf16.mxu0 %v1210
  %4568 = vmatpush1.bf16.msra.mxu0 %v1209
  %4569 = vmatprep.subr.bf16.mxu0 %v1208
  %4570 = vmatpush1.bf16.msra.mxu0 %v1207
  %4571 = vmatprep.subr.bf16.mxu0 %v1206
  %4572 = vmatpush1.bf16.msra.mxu0 %v1205
  %4573 = vmatprep.subr.bf16.mxu0 %v1204
  %4574 = vmatpush1.bf16.msra.mxu0 %v1203
  %4575 = vmatprep.subr.bf16.mxu0 %v1202
  %4576 = vmatpush1.bf16.msra.mxu0 %v1201
  %4577 = vmatprep.subr.bf16.mxu0 %v1200
  %4578 = vmatpush1.bf16.msra.mxu0 %v1199
  %4579 = vmatprep.subr.bf16.mxu0 %v1230
  %4580 = vmatpush2.bf16.msra.mxu0 %v1229
  %4581 = vmatprep.subr.bf16.mxu0 %v1228
  %4582 = vmatpush2.bf16.msra.mxu0 %v1227
  %4583 = vmatprep.subr.bf16.mxu0 %v1226
  %4584 = vmatpush2.bf16.msra.mxu0 %v1225
  %4585 = vmatprep.subr.bf16.mxu0 %v1224
  %4586 = vmatpush2.bf16.msra.mxu0 %v1223
  %4587 = vmatprep.subr.bf16.mxu0 %v1222
  %4588 = vmatpush2.bf16.msra.mxu0 %v1221
  %4589 = vmatprep.subr.bf16.mxu0 %v1220
  %4590 = vmatpush2.bf16.msra.mxu0 %v1219
  %4591 = vmatprep.subr.bf16.mxu0 %v1218
  %4592 = vmatpush2.bf16.msra.mxu0 %v1217
  %4593 = vmatprep.subr.bf16.mxu0 %v1216
  %4594 = vmatpush2.bf16.msra.mxu0 %v1215
  %4595 = vmatprep.mubr.bf16.mxu0 %v4454
  %4596 = vmatmul.mubr.bf16.gmra.mxu0 %v4453
  %v4597 = vpop.f32.mrf.mxu0
  %v4598 = vadd.f32 %v4557, %v4597
  %v4599 = vpop.f32.mrf.mxu0
  %v4600 = vadd.f32 %v4559, %v4599
  %v4601 = vpop.f32.mrf.mxu0
  %v4602 = vpop.f32.mrf.mxu0
  %4603 = vdwg.mxu0
  %4604 = vmatprep.subr.bf16.mxu0 %v1246
  %4605 = vmatpush1.bf16.msra.mxu0 %v1245
  %4606 = vmatprep.subr.bf16.mxu0 %v1244
  %4607 = vmatpush1.bf16.msra.mxu0 %v1243
  %4608 = vmatprep.subr.bf16.mxu0 %v1242
  %4609 = vmatpush1.bf16.msra.mxu0 %v1241
  %4610 = vmatprep.subr.bf16.mxu0 %v1240
  %4611 = vmatpush1.bf16.msra.mxu0 %v1239
  %4612 = vmatprep.subr.bf16.mxu0 %v1238
  %4613 = vmatpush1.bf16.msra.mxu0 %v1237
  %4614 = vmatprep.subr.bf16.mxu0 %v1236
  %4615 = vmatpush1.bf16.msra.mxu0 %v1235
  %4616 = vmatprep.subr.bf16.mxu0 %v1234
  %4617 = vmatpush1.bf16.msra.mxu0 %v1233
  %4618 = vmatprep.subr.bf16.mxu0 %v1232
  %4619 = vmatpush1.bf16.msra.mxu0 %v1231
  %4620 = vmatprep.subr.bf16.mxu0 %v1262
  %4621 = vmatpush2.bf16.msra.mxu0 %v1261
  %4622 = vmatprep.subr.bf16.mxu0 %v1260
  %4623 = vmatpush2.bf16.msra.mxu0 %v1259
  %4624 = vmatprep.subr.bf16.mxu0 %v1258
  %4625 = vmatpush2.bf16.msra.mxu0 %v1257
  %4626 = vmatprep.subr.bf16.mxu0 %v1256
  %4627 = vmatpush2.bf16.msra.mxu0 %v1255
  %4628 = vmatprep.subr.bf16.mxu0 %v1254
  %4629 = vmatpush2.bf16.msra.mxu0 %v1253
  %4630 = vmatprep.subr.bf16.mxu0 %v1252
  %4631 = vmatpush2.bf16.msra.mxu0 %v1251
  %4632 = vmatprep.subr.bf16.mxu0 %v1250
  %4633 = vmatpush2.bf16.msra.mxu0 %v1249
  %4634 = vmatprep.subr.bf16.mxu0 %v1248
  %4635 = vmatpush2.bf16.msra.mxu0 %v1247
  %4636 = vmatprep.mubr.bf16.mxu0 %v4456
  %4637 = vmatmul.mubr.bf16.gmra.mxu0 %v4455
  %v4638 = vpop.f32.mrf.mxu0
  %v4639 = vadd.f32 %v4598, %v4638
  %v4640 = vpop.f32.mrf.mxu0
  %v4641 = vadd.f32 %v4600, %v4640
  %v4642 = vpop.f32.mrf.mxu0
  %v4643 = vpop.f32.mrf.mxu0
  %4644 = vdwg.mxu0
  %4645 = vmatprep.subr.bf16.mxu0 %v1278
  %4646 = vmatpush1.bf16.msra.mxu0 %v1277
  %4647 = vmatprep.subr.bf16.mxu0 %v1276
  %4648 = vmatpush1.bf16.msra.mxu0 %v1275
  %4649 = vmatprep.subr.bf16.mxu0 %v1274
  %4650 = vmatpush1.bf16.msra.mxu0 %v1273
  %4651 = vmatprep.subr.bf16.mxu0 %v1272
  %4652 = vmatpush1.bf16.msra.mxu0 %v1271
  %4653 = vmatprep.subr.bf16.mxu0 %v1270
  %4654 = vmatpush1.bf16.msra.mxu0 %v1269
  %4655 = vmatprep.subr.bf16.mxu0 %v1268
  %4656 = vmatpush1.bf16.msra.mxu0 %v1267
  %4657 = vmatprep.subr.bf16.mxu0 %v1266
  %4658 = vmatpush1.bf16.msra.mxu0 %v1265
  %4659 = vmatprep.subr.bf16.mxu0 %v1264
  %4660 = vmatpush1.bf16.msra.mxu0 %v1263
  %4661 = vmatprep.subr.bf16.mxu0 %v1294
  %4662 = vmatpush2.bf16.msra.mxu0 %v1293
  %4663 = vmatprep.subr.bf16.mxu0 %v1292
  %4664 = vmatpush2.bf16.msra.mxu0 %v1291
  %4665 = vmatprep.subr.bf16.mxu0 %v1290
  %4666 = vmatpush2.bf16.msra.mxu0 %v1289
  %4667 = vmatprep.subr.bf16.mxu0 %v1288
  %4668 = vmatpush2.bf16.msra.mxu0 %v1287
  %4669 = vmatprep.subr.bf16.mxu0 %v1286
  %4670 = vmatpush2.bf16.msra.mxu0 %v1285
  %4671 = vmatprep.subr.bf16.mxu0 %v1284
  %4672 = vmatpush2.bf16.msra.mxu0 %v1283
  %4673 = vmatprep.subr.bf16.mxu0 %v1282
  %4674 = vmatpush2.bf16.msra.mxu0 %v1281
  %4675 = vmatprep.subr.bf16.mxu0 %v1280
  %4676 = vmatpush2.bf16.msra.mxu0 %v1279
  %4677 = vmatprep.mubr.bf16.mxu0 %v4458
  %4678 = vmatmul.mubr.bf16.gmra.mxu0 %v4457
  %v4679 = vpop.f32.mrf.mxu0
  %v4680 = vadd.f32 %v4639, %v4679
  %v4681 = vpop.f32.mrf.mxu0
  %v4682 = vadd.f32 %v4641, %v4681
  %v4683 = vpop.f32.mrf.mxu0
  %v4684 = vpop.f32.mrf.mxu0
  %4685 = vdwg.mxu0
  %4686 = vmatprep.subr.bf16.mxu0 %v1310
  %4687 = vmatpush1.bf16.msra.mxu0 %v1309
  %4688 = vmatprep.subr.bf16.mxu0 %v1308
  %4689 = vmatpush1.bf16.msra.mxu0 %v1307
  %4690 = vmatprep.subr.bf16.mxu0 %v1306
  %4691 = vmatpush1.bf16.msra.mxu0 %v1305
  %4692 = vmatprep.subr.bf16.mxu0 %v1304
  %4693 = vmatpush1.bf16.msra.mxu0 %v1303
  %4694 = vmatprep.subr.bf16.mxu0 %v1302
  %4695 = vmatpush1.bf16.msra.mxu0 %v1301
  %4696 = vmatprep.subr.bf16.mxu0 %v1300
  %4697 = vmatpush1.bf16.msra.mxu0 %v1299
  %4698 = vmatprep.subr.bf16.mxu0 %v1298
  %4699 = vmatpush1.bf16.msra.mxu0 %v1297
  %4700 = vmatprep.subr.bf16.mxu0 %v1296
  %4701 = vmatpush1.bf16.msra.mxu0 %v1295
  %4702 = vmatprep.subr.bf16.mxu0 %v1326
  %4703 = vmatpush2.bf16.msra.mxu0 %v1325
  %4704 = vmatprep.subr.bf16.mxu0 %v1324
  %4705 = vmatpush2.bf16.msra.mxu0 %v1323
  %4706 = vmatprep.subr.bf16.mxu0 %v1322
  %4707 = vmatpush2.bf16.msra.mxu0 %v1321
  %4708 = vmatprep.subr.bf16.mxu0 %v1320
  %4709 = vmatpush2.bf16.msra.mxu0 %v1319
  %4710 = vmatprep.subr.bf16.mxu0 %v1318
  %4711 = vmatpush2.bf16.msra.mxu0 %v1317
  %4712 = vmatprep.subr.bf16.mxu0 %v1316
  %4713 = vmatpush2.bf16.msra.mxu0 %v1315
  %4714 = vmatprep.subr.bf16.mxu0 %v1314
  %4715 = vmatpush2.bf16.msra.mxu0 %v1313
  %4716 = vmatprep.subr.bf16.mxu0 %v1312
  %4717 = vmatpush2.bf16.msra.mxu0 %v1311
  %4718 = vmatprep.mubr.bf16.mxu0 %v4460
  %4719 = vmatmul.mubr.bf16.gmra.mxu0 %v4459
  %v4720 = vpop.f32.mrf.mxu0
  %v4721 = vadd.f32 %v4680, %v4720
  %v4722 = vpop.f32.mrf.mxu0
  %v4723 = vadd.f32 %v4682, %v4722
  %v4724 = vpop.f32.mrf.mxu0
  %v4725 = vpop.f32.mrf.mxu0
  %4726 = vdwg.mxu0
  %4727 = vmatprep.subr.bf16.mxu0 %v1342
  %4728 = vmatpush1.bf16.msra.mxu0 %v1341
  %4729 = vmatprep.subr.bf16.mxu0 %v1340
  %4730 = vmatpush1.bf16.msra.mxu0 %v1339
  %4731 = vmatprep.subr.bf16.mxu0 %v1338
  %4732 = vmatpush1.bf16.msra.mxu0 %v1337
  %4733 = vmatprep.subr.bf16.mxu0 %v1336
  %4734 = vmatpush1.bf16.msra.mxu0 %v1335
  %4735 = vmatprep.subr.bf16.mxu0 %v1334
  %4736 = vmatpush1.bf16.msra.mxu0 %v1333
  %4737 = vmatprep.subr.bf16.mxu0 %v1332
  %4738 = vmatpush1.bf16.msra.mxu0 %v1331
  %4739 = vmatprep.subr.bf16.mxu0 %v1330
  %4740 = vmatpush1.bf16.msra.mxu0 %v1329
  %4741 = vmatprep.subr.bf16.mxu0 %v1328
  %4742 = vmatpush1.bf16.msra.mxu0 %v1327
  %4743 = vmatprep.subr.bf16.mxu0 %v1358
  %4744 = vmatpush2.bf16.msra.mxu0 %v1357
  %4745 = vmatprep.subr.bf16.mxu0 %v1356
  %4746 = vmatpush2.bf16.msra.mxu0 %v1355
  %4747 = vmatprep.subr.bf16.mxu0 %v1354
  %4748 = vmatpush2.bf16.msra.mxu0 %v1353
  %4749 = vmatprep.subr.bf16.mxu0 %v1352
  %4750 = vmatpush2.bf16.msra.mxu0 %v1351
  %4751 = vmatprep.subr.bf16.mxu0 %v1350
  %4752 = vmatpush2.bf16.msra.mxu0 %v1349
  %4753 = vmatprep.subr.bf16.mxu0 %v1348
  %4754 = vmatpush2.bf16.msra.mxu0 %v1347
  %4755 = vmatprep.subr.bf16.mxu0 %v1346
  %4756 = vmatpush2.bf16.msra.mxu0 %v1345
  %4757 = vmatprep.subr.bf16.mxu0 %v1344
  %4758 = vmatpush2.bf16.msra.mxu0 %v1343
  %4759 = vmatprep.mubr.bf16.mxu0 %v4462
  %4760 = vmatmul.mubr.bf16.gmra.mxu0 %v4461
  %v4761 = vpop.f32.mrf.mxu0
  %v4762 = vadd.f32 %v4721, %v4761
  %v4763 = vpop.f32.mrf.mxu0
  %v4764 = vadd.f32 %v4723, %v4763
  %v4765 = vpop.f32.mrf.mxu0
  %v4766 = vpop.f32.mrf.mxu0
  %4767 = vdwg.mxu0
  %4768 = vmatprep.subr.bf16.mxu0 %v1374
  %4769 = vmatpush1.bf16.msra.mxu0 %v1373
  %4770 = vmatprep.subr.bf16.mxu0 %v1372
  %4771 = vmatpush1.bf16.msra.mxu0 %v1371
  %4772 = vmatprep.subr.bf16.mxu0 %v1370
  %4773 = vmatpush1.bf16.msra.mxu0 %v1369
  %4774 = vmatprep.subr.bf16.mxu0 %v1368
  %4775 = vmatpush1.bf16.msra.mxu0 %v1367
  %4776 = vmatprep.subr.bf16.mxu0 %v1366
  %4777 = vmatpush1.bf16.msra.mxu0 %v1365
  %4778 = vmatprep.subr.bf16.mxu0 %v1364
  %4779 = vmatpush1.bf16.msra.mxu0 %v1363
  %4780 = vmatprep.subr.bf16.mxu0 %v1362
  %4781 = vmatpush1.bf16.msra.mxu0 %v1361
  %4782 = vmatprep.subr.bf16.mxu0 %v1360
  %4783 = vmatpush1.bf16.msra.mxu0 %v1359
  %4784 = vmatprep.subr.bf16.mxu0 %v1390
  %4785 = vmatpush2.bf16.msra.mxu0 %v1389
  %4786 = vmatprep.subr.bf16.mxu0 %v1388
  %4787 = vmatpush2.bf16.msra.mxu0 %v1387
  %4788 = vmatprep.subr.bf16.mxu0 %v1386
  %4789 = vmatpush2.bf16.msra.mxu0 %v1385
  %4790 = vmatprep.subr.bf16.mxu0 %v1384
  %4791 = vmatpush2.bf16.msra.mxu0 %v1383
  %4792 = vmatprep.subr.bf16.mxu0 %v1382
  %4793 = vmatpush2.bf16.msra.mxu0 %v1381
  %4794 = vmatprep.subr.bf16.mxu0 %v1380
  %4795 = vmatpush2.bf16.msra.mxu0 %v1379
  %4796 = vmatprep.subr.bf16.mxu0 %v1378
  %4797 = vmatpush2.bf16.msra.mxu0 %v1377
  %4798 = vmatprep.subr.bf16.mxu0 %v1376
  %4799 = vmatpush2.bf16.msra.mxu0 %v1375
  %4800 = vmatprep.mubr.bf16.mxu0 %v4464
  %4801 = vmatmul.mubr.bf16.gmra.mxu0 %v4463
  %v4802 = vpop.f32.mrf.mxu0
  %v4803 = vadd.f32 %v4762, %v4802
  %v4804 = vpop.f32.mrf.mxu0
  %v4805 = vadd.f32 %v4764, %v4804
  %v4806 = vpop.f32.mrf.mxu0
  %v4807 = vpop.f32.mrf.mxu0
  %4808 = vdwg.mxu0
  %v4809 = vmax.f32 %v4803, 0.0
  %v4810 = vmax.f32 %v4805, 0.0
  %v4811 = vpack.c.bf16 %v4809, %v4809
  %v4812 = vpack.c.bf16 %v4810, %v4810
  %s4813 = scalar_lea.vmem %s3, 640
  %v4814 = vld [vmem:[%s4813] sm:$0xf]
  %v4815 = vld [vmem:[%s4813 + $0x4] sm:$0xf]
  %v4816 = vld [vmem:[%s4813 + $0x8] sm:$0xf]
  %v4817 = vld [vmem:[%s4813 + $0xc] sm:$0xf]
  %v4818 = vld [vmem:[%s4813 + $0x10] sm:$0xf]
  %v4819 = vld [vmem:[%s4813 + $0x14] sm:$0xf]
  %v4820 = vld [vmem:[%s4813 + $0x18] sm:$0xf]
  %v4821 = vld [vmem:[%s4813 + $0x1c] sm:$0xf]
  %v4822 = vld [vmem:[%s4813 + $0x20] sm:$0xf]
  %v4823 = vld [vmem:[%s4813 + $0x24] sm:$0xf]
  %v4824 = vld [vmem:[%s4813 + $0x28] sm:$0xf]
  %v4825 = vld [vmem:[%s4813 + $0x2c] sm:$0xf]
  %v4826 = vld [vmem:[%s4813 + $0x30] sm:$0xf]
  %v4827 = vld [vmem:[%s4813 + $0x34] sm:$0xf]
  %v4828 = vld [vmem:[%s4813 + $0x38] sm:$0xf]
  %v4829 = vld [vmem:[%s4813 + $0x3c] sm:$0xf]
  %v4830 = vld [vmem:[%s4813 + $0x40] sm:$0xf]
  %v4831 = vld [vmem:[%s4813 + $0x44] sm:$0xf]
  %v4832 = vld [vmem:[%s4813 + $0x48] sm:$0xf]
  %v4833 = vld [vmem:[%s4813 + $0x4c] sm:$0xf]
  %v4834 = vld [vmem:[%s4813 + $0x50] sm:$0xf]
  %v4835 = vld [vmem:[%s4813 + $0x54] sm:$0xf]
  %v4836 = vld [vmem:[%s4813 + $0x58] sm:$0xf]
  %v4837 = vld [vmem:[%s4813 + $0x5c] sm:$0xf]
  %v4838 = vld [vmem:[%s4813 + $0x60] sm:$0xf]
  %v4839 = vld [vmem:[%s4813 + $0x64] sm:$0xf]
  %v4840 = vld [vmem:[%s4813 + $0x68] sm:$0xf]
  %v4841 = vld [vmem:[%s4813 + $0x6c] sm:$0xf]
  %v4842 = vld [vmem:[%s4813 + $0x70] sm:$0xf]
  %v4843 = vld [vmem:[%s4813 + $0x74] sm:$0xf]
  %v4844 = vld [vmem:[%s4813 + $0x78] sm:$0xf]
  %v4845 = vld [vmem:[%s4813 + $0x7c] sm:$0xf]
  %v4878 = vunpack.c.l.b16 %v4814
  %v4879 = vunpack.c.l.b16 %v4815
  %v4880 = vunpack.c.l.b16 %v4816
  %v4881 = vunpack.c.l.b16 %v4817
  %v4882 = vunpack.c.l.b16 %v4818
  %v4883 = vunpack.c.l.b16 %v4819
  %v4884 = vunpack.c.l.b16 %v4820
  %v4885 = vunpack.c.l.b16 %v4821
  %v4886 = vunpack.c.l.b16 %v4822
  %v4887 = vunpack.c.l.b16 %v4823
  %v4888 = vunpack.c.l.b16 %v4824
  %v4889 = vunpack.c.l.b16 %v4825
  %v4890 = vunpack.c.l.b16 %v4826
  %v4891 = vunpack.c.l.b16 %v4827
  %v4892 = vunpack.c.l.b16 %v4828
  %v4893 = vunpack.c.l.b16 %v4829
  %v4894 = vunpack.c.l.b16 %v4830
  %v4895 = vunpack.c.l.b16 %v4831
  %v4896 = vunpack.c.l.b16 %v4832
  %v4897 = vunpack.c.l.b16 %v4833
  %v4898 = vunpack.c.l.b16 %v4834
  %v4899 = vunpack.c.l.b16 %v4835
  %v4900 = vunpack.c.l.b16 %v4836
  %v4901 = vunpack.c.l.b16 %v4837
  %v4902 = vunpack.c.l.b16 %v4838
  %v4903 = vunpack.c.l.b16 %v4839
  %v4904 = vunpack.c.l.b16 %v4840
  %v4905 = vunpack.c.l.b16 %v4841
  %v4906 = vunpack.c.l.b16 %v4842
  %v4907 = vunpack.c.l.b16 %v4843
  %v4908 = vunpack.c.l.b16 %v4844
  %v4909 = vunpack.c.l.b16 %v4845
  %v4910 = vpack.c.b16 %v4879, %v4878
  %v4911 = vpack.c.b16 %v4881, %v4880
  %v4912 = vpack.c.b16 %v4883, %v4882
  %v4913 = vpack.c.b16 %v4885, %v4884
  %v4914 = vpack.c.b16 %v4887, %v4886
  %v4915 = vpack.c.b16 %v4889, %v4888
  %v4916 = vpack.c.b16 %v4891, %v4890
  %v4917 = vpack.c.b16 %v4893, %v4892
  %v4918 = vpack.c.b16 %v4895, %v4894
  %v4919 = vpack.c.b16 %v4897, %v4896
  %v4920 = vpack.c.b16 %v4899, %v4898
  %v4921 = vpack.c.b16 %v4901, %v4900
  %v4922 = vpack.c.b16 %v4903, %v4902
  %v4923 = vpack.c.b16 %v4905, %v4904
  %v4924 = vpack.c.b16 %v4907, %v4906
  %v4925 = vpack.c.b16 %v4909, %v4908
  %4942 = vmatprep.subr.bf16.mxu0 0
  %4943 = vmatpush1.bf16.msra.mxu0 %v4917
  %4944 = vmatprep.subr.bf16.mxu0 0
  %4945 = vmatpush1.bf16.msra.mxu0 %v4916
  %4946 = vmatprep.subr.bf16.mxu0 0
  %4947 = vmatpush1.bf16.msra.mxu0 %v4915
  %4948 = vmatprep.subr.bf16.mxu0 0
  %4949 = vmatpush1.bf16.msra.mxu0 %v4914
  %4950 = vmatprep.subr.bf16.mxu0 0
  %4951 = vmatpush1.bf16.msra.mxu0 %v4913
  %4952 = vmatprep.subr.bf16.mxu0 0
  %4953 = vmatpush1.bf16.msra.mxu0 %v4912
  %4954 = vmatprep.subr.bf16.mxu0 0
  %4955 = vmatpush1.bf16.msra.mxu0 %v4911
  %4956 = vmatprep.subr.bf16.mxu0 0
  %4957 = vmatpush1.bf16.msra.mxu0 %v4910
  %4958 = vmatprep.subr.bf16.mxu0 0
  %4959 = vmatpush2.bf16.msra.mxu0 %v4925
  %4960 = vmatprep.subr.bf16.mxu0 0
  %4961 = vmatpush2.bf16.msra.mxu0 %v4924
  %4962 = vmatprep.subr.bf16.mxu0 0
  %4963 = vmatpush2.bf16.msra.mxu0 %v4923
  %4964 = vmatprep.subr.bf16.mxu0 0
  %4965 = vmatpush2.bf16.msra.mxu0 %v4922
  %4966 = vmatprep.subr.bf16.mxu0 0
  %4967 = vmatpush2.bf16.msra.mxu0 %v4921
  %4968 = vmatprep.subr.bf16.mxu0 0
  %4969 = vmatpush2.bf16.msra.mxu0 %v4920
  %4970 = vmatprep.subr.bf16.mxu0 0
  %4971 = vmatpush2.bf16.msra.mxu0 %v4919
  %4972 = vmatprep.subr.bf16.mxu0 0
  %4973 = vmatpush2.bf16.msra.mxu0 %v4918
  %4974 = vmatprep.mubr.bf16.mxu0 %v4812
  %4975 = vmatmul.mubr.bf16.gmra.mxu0 %v4811
  %v4976 = vpop.f32.mrf.mxu0
  %v4977 = vadd.f32 0.0, %v4976
  %v4978 = vpop.f32.mrf.mxu0
  %v4979 = vpop.f32.mrf.mxu0
  %v4980 = vpop.f32.mrf.mxu0
  %4981 = vdwg.mxu0
  %v4982 = vadd.f32 %v4415, %v4977
  %s4983 = scalar_lea.vmem %s0, 384
  %v4984 = vld [vmem:[%s4983] sm:$0xff]
  %v4985 = vld [vmem:[%s4983 + $0x8] sm:$0xff]
  %v4986 = vld [vmem:[%s4983 + $0x10] sm:$0xff]
  %v4987 = vld [vmem:[%s4983 + $0x18] sm:$0xff]
  %v4988 = vld [vmem:[%s4983 + $0x20] sm:$0xff]
  %v4989 = vld [vmem:[%s4983 + $0x28] sm:$0xff]
  %v4990 = vld [vmem:[%s4983 + $0x30] sm:$0xff]
  %v4991 = vld [vmem:[%s4983 + $0x38] sm:$0xff]
  %v5000 = vunpack.c.l.b16 %v4984
  %v5001 = vunpack.c.h.b16 %v4984
  %v5002 = vunpack.c.l.b16 %v4985
  %v5003 = vunpack.c.h.b16 %v4985
  %v5004 = vunpack.c.l.b16 %v4986
  %v5005 = vunpack.c.h.b16 %v4986
  %v5006 = vunpack.c.l.b16 %v4987
  %v5007 = vunpack.c.h.b16 %v4987
  %v5008 = vunpack.c.l.b16 %v4988
  %v5009 = vunpack.c.h.b16 %v4988
  %v5010 = vunpack.c.l.b16 %v4989
  %v5011 = vunpack.c.h.b16 %v4989
  %v5012 = vunpack.c.l.b16 %v4990
  %v5013 = vunpack.c.h.b16 %v4990
  %v5014 = vunpack.c.l.b16 %v4991
  %v5015 = vunpack.c.h.b16 %v4991
  %v5016 = vpack.c.b16 %v5000, %v5000
  %v5017 = vpack.c.b16 %v5001, %v5001
  %v5018 = vpack.c.b16 %v5002, %v5002
  %v5019 = vpack.c.b16 %v5003, %v5003
  %v5020 = vpack.c.b16 %v5004, %v5004
  %v5021 = vpack.c.b16 %v5005, %v5005
  %v5022 = vpack.c.b16 %v5006, %v5006
  %v5023 = vpack.c.b16 %v5007, %v5007
  %v5024 = vpack.c.b16 %v5008, %v5008
  %v5025 = vpack.c.b16 %v5009, %v5009
  %v5026 = vpack.c.b16 %v5010, %v5010
  %v5027 = vpack.c.b16 %v5011, %v5011
  %v5028 = vpack.c.b16 %v5012, %v5012
  %v5029 = vpack.c.b16 %v5013, %v5013
  %v5030 = vpack.c.b16 %v5014, %v5014
  %v5031 = vpack.c.b16 %v5015, %v5015
  %5048 = vmatprep.subr.bf16.mxu0 %v1150
  %5049 = vmatpush1.bf16.msra.mxu0 %v1149
  %5050 = vmatprep.subr.bf16.mxu0 %v1148
  %5051 = vmatpush1.bf16.msra.mxu0 %v1147
  %5052 = vmatprep.subr.bf16.mxu0 %v1146
  %5053 = vmatpush1.bf16.msra.mxu0 %v1145
  %5054 = vmatprep.subr.bf16.mxu0 %v1144
  %5055 = vmatpush1.bf16.msra.mxu0 %v1143
  %5056 = vmatprep.subr.bf16.mxu0 %v1142
  %5057 = vmatpush1.bf16.msra.mxu0 %v1141
  %5058 = vmatprep.subr.bf16.mxu0 %v1140
  %5059 = vmatpush1.bf16.msra.mxu0 %v1139
  %5060 = vmatprep.subr.bf16.mxu0 %v1138
  %5061 = vmatpush1.bf16.msra.mxu0 %v1137
  %5062 = vmatprep.subr.bf16.mxu0 %v1136
  %5063 = vmatpush1.bf16.msra.mxu0 %v1135
  %5064 = vmatprep.subr.bf16.mxu0 %v1166
  %5065 = vmatpush2.bf16.msra.mxu0 %v1165
  %5066 = vmatprep.subr.bf16.mxu0 %v1164
  %5067 = vmatpush2.bf16.msra.mxu0 %v1163
  %5068 = vmatprep.subr.bf16.mxu0 %v1162
  %5069 = vmatpush2.bf16.msra.mxu0 %v1161
  %5070 = vmatprep.subr.bf16.mxu0 %v1160
  %5071 = vmatpush2.bf16.msra.mxu0 %v1159
  %5072 = vmatprep.subr.bf16.mxu0 %v1158
  %5073 = vmatpush2.bf16.msra.mxu0 %v1157
  %5074 = vmatprep.subr.bf16.mxu0 %v1156
  %5075 = vmatpush2.bf16.msra.mxu0 %v1155
  %5076 = vmatprep.subr.bf16.mxu0 %v1154
  %5077 = vmatpush2.bf16.msra.mxu0 %v1153
  %5078 = vmatprep.subr.bf16.mxu0 %v1152
  %5079 = vmatpush2.bf16.msra.mxu0 %v1151
  %5080 = vmatprep.mubr.bf16.mxu0 %v5017
  %5081 = vmatmul.mubr.bf16.gmra.mxu0 %v5016
  %v5082 = vpop.f32.mrf.mxu0
  %v5083 = vadd.f32 %v304, %v5082
  %v5084 = vpop.f32.mrf.mxu0
  %v5085 = vadd.f32 %v308, %v5084
  %v5086 = vpop.f32.mrf.mxu0
  %v5087 = vpop.f32.mrf.mxu0
  %5088 = vdwg.mxu0
  %5089 = vmatprep.subr.bf16.mxu0 %v1182
  %5090 = vmatpush1.bf16.msra.mxu0 %v1181
  %5091 = vmatprep.subr.bf16.mxu0 %v1180
  %5092 = vmatpush1.bf16.msra.mxu0 %v1179
  %5093 = vmatprep.subr.bf16.mxu0 %v1178
  %5094 = vmatpush1.bf16.msra.mxu0 %v1177
  %5095 = vmatprep.subr.bf16.mxu0 %v1176
  %5096 = vmatpush1.bf16.msra.mxu0 %v1175
  %5097 = vmatprep.subr.bf16.mxu0 %v1174
  %5098 = vmatpush1.bf16.msra.mxu0 %v1173
  %5099 = vmatprep.subr.bf16.mxu0 %v1172
  %5100 = vmatpush1.bf16.msra.mxu0 %v1171
  %5101 = vmatprep.subr.bf16.mxu0 %v1170
  %5102 = vmatpush1.bf16.msra.mxu0 %v1169
  %5103 = vmatprep.subr.bf16.mxu0 %v1168
  %5104 = vmatpush1.bf16.msra.mxu0 %v1167
  %5105 = vmatprep.subr.bf16.mxu0 %v1198
  %5106 = vmatpush2.bf16.msra.mxu0 %v1197
  %5107 = vmatprep.subr.bf16.mxu0 %v1196
  %5108 = vmatpush2.bf16.msra.mxu0 %v1195
  %5109 = vmatprep.subr.bf16.mxu0 %v1194
  %5110 = vmatpush2.bf16.msra.mxu0 %v1193
  %5111 = vmatprep.subr.bf16.mxu0 %v1192
  %5112 = vmatpush2.bf16.msra.mxu0 %v1191
  %5113 = vmatprep.subr.bf16.mxu0 %v1190
  %5114 = vmatpush2.bf16.msra.mxu0 %v1189
  %5115 = vmatprep.subr.bf16.mxu0 %v1188
  %5116 = vmatpush2.bf16.msra.mxu0 %v1187
  %5117 = vmatprep.subr.bf16.mxu0 %v1186
  %5118 = vmatpush2.bf16.msra.mxu0 %v1185
  %5119 = vmatprep.subr.bf16.mxu0 %v1184
  %5120 = vmatpush2.bf16.msra.mxu0 %v1183
  %5121 = vmatprep.mubr.bf16.mxu0 %v5019
  %5122 = vmatmul.mubr.bf16.gmra.mxu0 %v5018
  %v5123 = vpop.f32.mrf.mxu0
  %v5124 = vadd.f32 %v5083, %v5123
  %v5125 = vpop.f32.mrf.mxu0
  %v5126 = vadd.f32 %v5085, %v5125
  %v5127 = vpop.f32.mrf.mxu0
  %v5128 = vpop.f32.mrf.mxu0
  %5129 = vdwg.mxu0
  %5130 = vmatprep.subr.bf16.mxu0 %v1214
  %5131 = vmatpush1.bf16.msra.mxu0 %v1213
  %5132 = vmatprep.subr.bf16.mxu0 %v1212
  %5133 = vmatpush1.bf16.msra.mxu0 %v1211
  %5134 = vmatprep.subr.bf16.mxu0 %v1210
  %5135 = vmatpush1.bf16.msra.mxu0 %v1209
  %5136 = vmatprep.subr.bf16.mxu0 %v1208
  %5137 = vmatpush1.bf16.msra.mxu0 %v1207
  %5138 = vmatprep.subr.bf16.mxu0 %v1206
  %5139 = vmatpush1.bf16.msra.mxu0 %v1205
  %5140 = vmatprep.subr.bf16.mxu0 %v1204
  %5141 = vmatpush1.bf16.msra.mxu0 %v1203
  %5142 = vmatprep.subr.bf16.mxu0 %v1202
  %5143 = vmatpush1.bf16.msra.mxu0 %v1201
  %5144 = vmatprep.subr.bf16.mxu0 %v1200
  %5145 = vmatpush1.bf16.msra.mxu0 %v1199
  %5146 = vmatprep.subr.bf16.mxu0 %v1230
  %5147 = vmatpush2.bf16.msra.mxu0 %v1229
  %5148 = vmatprep.subr.bf16.mxu0 %v1228
  %5149 = vmatpush2.bf16.msra.mxu0 %v1227
  %5150 = vmatprep.subr.bf16.mxu0 %v1226
  %5151 = vmatpush2.bf16.msra.mxu0 %v1225
  %5152 = vmatprep.subr.bf16.mxu0 %v1224
  %5153 = vmatpush2.bf16.msra.mxu0 %v1223
  %5154 = vmatprep.subr.bf16.mxu0 %v1222
  %5155 = vmatpush2.bf16.msra.mxu0 %v1221
  %5156 = vmatprep.subr.bf16.mxu0 %v1220
  %5157 = vmatpush2.bf16.msra.mxu0 %v1219
  %5158 = vmatprep.subr.bf16.mxu0 %v1218
  %5159 = vmatpush2.bf16.msra.mxu0 %v1217
  %5160 = vmatprep.subr.bf16.mxu0 %v1216
  %5161 = vmatpush2.bf16.msra.mxu0 %v1215
  %5162 = vmatprep.mubr.bf16.mxu0 %v5021
  %5163 = vmatmul.mubr.bf16.gmra.mxu0 %v5020
  %v5164 = vpop.f32.mrf.mxu0
  %v5165 = vadd.f32 %v5124, %v5164
  %v5166 = vpop.f32.mrf.mxu0
  %v5167 = vadd.f32 %v5126, %v5166
  %v5168 = vpop.f32.mrf.mxu0
  %v5169 = vpop.f32.mrf.mxu0
  %5170 = vdwg.mxu0
  %5171 = vmatprep.subr.bf16.mxu0 %v1246
  %5172 = vmatpush1.bf16.msra.mxu0 %v1245
  %5173 = vmatprep.subr.bf16.mxu0 %v1244
  %5174 = vmatpush1.bf16.msra.mxu0 %v1243
  %5175 = vmatprep.subr.bf16.mxu0 %v1242
  %5176 = vmatpush1.bf16.msra.mxu0 %v1241
  %5177 = vmatprep.subr.bf16.mxu0 %v1240
  %5178 = vmatpush1.bf16.msra.mxu0 %v1239
  %5179 = vmatprep.subr.bf16.mxu0 %v1238
  %5180 = vmatpush1.bf16.msra.mxu0 %v1237
  %5181 = vmatprep.subr.bf16.mxu0 %v1236
  %5182 = vmatpush1.bf16.msra.mxu0 %v1235
  %5183 = vmatprep.subr.bf16.mxu0 %v1234
  %5184 = vmatpush1.bf16.msra.mxu0 %v1233
  %5185 = vmatprep.subr.bf16.mxu0 %v1232
  %5186 = vmatpush1.bf16.msra.mxu0 %v1231
  %5187 = vmatprep.subr.bf16.mxu0 %v1262
  %5188 = vmatpush2.bf16.msra.mxu0 %v1261
  %5189 = vmatprep.subr.bf16.mxu0 %v1260
  %5190 = vmatpush2.bf16.msra.mxu0 %v1259
  %5191 = vmatprep.subr.bf16.mxu0 %v1258
  %5192 = vmatpush2.bf16.msra.mxu0 %v1257
  %5193 = vmatprep.subr.bf16.mxu0 %v1256
  %5194 = vmatpush2.bf16.msra.mxu0 %v1255
  %5195 = vmatprep.subr.bf16.mxu0 %v1254
  %5196 = vmatpush2.bf16.msra.mxu0 %v1253
  %5197 = vmatprep.subr.bf16.mxu0 %v1252
  %5198 = vmatpush2.bf16.msra.mxu0 %v1251
  %5199 = vmatprep.subr.bf16.mxu0 %v1250
  %5200 = vmatpush2.bf16.msra.mxu0 %v1249
  %5201 = vmatprep.subr.bf16.mxu0 %v1248
  %5202 = vmatpush2.bf16.msra.mxu0 %v1247
  %5203 = vmatprep.mubr.bf16.mxu0 %v5023
  %5204 = vmatmul.mubr.bf16.gmra.mxu0 %v5022
  %v5205 = vpop.f32.mrf.mxu0
  %v5206 = vadd.f32 %v5165, %v5205
  %v5207 = vpop.f32.mrf.mxu0
  %v5208 = vadd.f32 %v5167, %v5207
  %v5209 = vpop.f32.mrf.mxu0
  %v5210 = vpop.f32.mrf.mxu0
  %5211 = vdwg.mxu0
  %5212 = vmatprep.subr.bf16.mxu0 %v1278
  %5213 = vmatpush1.bf16.msra.mxu0 %v1277
  %5214 = vmatprep.subr.bf16.mxu0 %v1276
  %5215 = vmatpush1.bf16.msra.mxu0 %v1275
  %5216 = vmatprep.subr.bf16.mxu0 %v1274
  %5217 = vmatpush1.bf16.msra.mxu0 %v1273
  %5218 = vmatprep.subr.bf16.mxu0 %v1272
  %5219 = vmatpush1.bf16.msra.mxu0 %v1271
  %5220 = vmatprep.subr.bf16.mxu0 %v1270
  %5221 = vmatpush1.bf16.msra.mxu0 %v1269
  %5222 = vmatprep.subr.bf16.mxu0 %v1268
  %5223 = vmatpush1.bf16.msra.mxu0 %v1267
  %5224 = vmatprep.subr.bf16.mxu0 %v1266
  %5225 = vmatpush1.bf16.msra.mxu0 %v1265
  %5226 = vmatprep.subr.bf16.mxu0 %v1264
  %5227 = vmatpush1.bf16.msra.mxu0 %v1263
  %5228 = vmatprep.subr.bf16.mxu0 %v1294
  %5229 = vmatpush2.bf16.msra.mxu0 %v1293
  %5230 = vmatprep.subr.bf16.mxu0 %v1292
  %5231 = vmatpush2.bf16.msra.mxu0 %v1291
  %5232 = vmatprep.subr.bf16.mxu0 %v1290
  %5233 = vmatpush2.bf16.msra.mxu0 %v1289
  %5234 = vmatprep.subr.bf16.mxu0 %v1288
  %5235 = vmatpush2.bf16.msra.mxu0 %v1287
  %5236 = vmatprep.subr.bf16.mxu0 %v1286
  %5237 = vmatpush2.bf16.msra.mxu0 %v1285
  %5238 = vmatprep.subr.bf16.mxu0 %v1284
  %5239 = vmatpush2.bf16.msra.mxu0 %v1283
  %5240 = vmatprep.subr.bf16.mxu0 %v1282
  %5241 = vmatpush2.bf16.msra.mxu0 %v1281
  %5242 = vmatprep.subr.bf16.mxu0 %v1280
  %5243 = vmatpush2.bf16.msra.mxu0 %v1279
  %5244 = vmatprep.mubr.bf16.mxu0 %v5025
  %5245 = vmatmul.mubr.bf16.gmra.mxu0 %v5024
  %v5246 = vpop.f32.mrf.mxu0
  %v5247 = vadd.f32 %v5206, %v5246
  %v5248 = vpop.f32.mrf.mxu0
  %v5249 = vadd.f32 %v5208, %v5248
  %v5250 = vpop.f32.mrf.mxu0
  %v5251 = vpop.f32.mrf.mxu0
  %5252 = vdwg.mxu0
  %5253 = vmatprep.subr.bf16.mxu0 %v1310
  %5254 = vmatpush1.bf16.msra.mxu0 %v1309
  %5255 = vmatprep.subr.bf16.mxu0 %v1308
  %5256 = vmatpush1.bf16.msra.mxu0 %v1307
  %5257 = vmatprep.subr.bf16.mxu0 %v1306
  %5258 = vmatpush1.bf16.msra.mxu0 %v1305
  %5259 = vmatprep.subr.bf16.mxu0 %v1304
  %5260 = vmatpush1.bf16.msra.mxu0 %v1303
  %5261 = vmatprep.subr.bf16.mxu0 %v1302
  %5262 = vmatpush1.bf16.msra.mxu0 %v1301
  %5263 = vmatprep.subr.bf16.mxu0 %v1300
  %5264 = vmatpush1.bf16.msra.mxu0 %v1299
  %5265 = vmatprep.subr.bf16.mxu0 %v1298
  %5266 = vmatpush1.bf16.msra.mxu0 %v1297
  %5267 = vmatprep.subr.bf16.mxu0 %v1296
  %5268 = vmatpush1.bf16.msra.mxu0 %v1295
  %5269 = vmatprep.subr.bf16.mxu0 %v1326
  %5270 = vmatpush2.bf16.msra.mxu0 %v1325
  %5271 = vmatprep.subr.bf16.mxu0 %v1324
  %5272 = vmatpush2.bf16.msra.mxu0 %v1323
  %5273 = vmatprep.subr.bf16.mxu0 %v1322
  %5274 = vmatpush2.bf16.msra.mxu0 %v1321
  %5275 = vmatprep.subr.bf16.mxu0 %v1320
  %5276 = vmatpush2.bf16.msra.mxu0 %v1319
  %5277 = vmatprep.subr.bf16.mxu0 %v1318
  %5278 = vmatpush2.bf16.msra.mxu0 %v1317
  %5279 = vmatprep.subr.bf16.mxu0 %v1316
  %5280 = vmatpush2.bf16.msra.mxu0 %v1315
  %5281 = vmatprep.subr.bf16.mxu0 %v1314
  %5282 = vmatpush2.bf16.msra.mxu0 %v1313
  %5283 = vmatprep.subr.bf16.mxu0 %v1312
  %5284 = vmatpush2.bf16.msra.mxu0 %v1311
  %5285 = vmatprep.mubr.bf16.mxu0 %v5027
  %5286 = vmatmul.mubr.bf16.gmra.mxu0 %v5026
  %v5287 = vpop.f32.mrf.mxu0
  %v5288 = vadd.f32 %v5247, %v5287
  %v5289 = vpop.f32.mrf.mxu0
  %v5290 = vadd.f32 %v5249, %v5289
  %v5291 = vpop.f32.mrf.mxu0
  %v5292 = vpop.f32.mrf.mxu0
  %5293 = vdwg.mxu0
  %5294 = vmatprep.subr.bf16.mxu0 %v1342
  %5295 = vmatpush1.bf16.msra.mxu0 %v1341
  %5296 = vmatprep.subr.bf16.mxu0 %v1340
  %5297 = vmatpush1.bf16.msra.mxu0 %v1339
  %5298 = vmatprep.subr.bf16.mxu0 %v1338
  %5299 = vmatpush1.bf16.msra.mxu0 %v1337
  %5300 = vmatprep.subr.bf16.mxu0 %v1336
  %5301 = vmatpush1.bf16.msra.mxu0 %v1335
  %5302 = vmatprep.subr.bf16.mxu0 %v1334
  %5303 = vmatpush1.bf16.msra.mxu0 %v1333
  %5304 = vmatprep.subr.bf16.mxu0 %v1332
  %5305 = vmatpush1.bf16.msra.mxu0 %v1331
  %5306 = vmatprep.subr.bf16.mxu0 %v1330
  %5307 = vmatpush1.bf16.msra.mxu0 %v1329
  %5308 = vmatprep.subr.bf16.mxu0 %v1328
  %5309 = vmatpush1.bf16.msra.mxu0 %v1327
  %5310 = vmatprep.subr.bf16.mxu0 %v1358
  %5311 = vmatpush2.bf16.msra.mxu0 %v1357
  %5312 = vmatprep.subr.bf16.mxu0 %v1356
  %5313 = vmatpush2.bf16.msra.mxu0 %v1355
  %5314 = vmatprep.subr.bf16.mxu0 %v1354
  %5315 = vmatpush2.bf16.msra.mxu0 %v1353
  %5316 = vmatprep.subr.bf16.mxu0 %v1352
  %5317 = vmatpush2.bf16.msra.mxu0 %v1351
  %5318 = vmatprep.subr.bf16.mxu0 %v1350
  %5319 = vmatpush2.bf16.msra.mxu0 %v1349
  %5320 = vmatprep.subr.bf16.mxu0 %v1348
  %5321 = vmatpush2.bf16.msra.mxu0 %v1347
  %5322 = vmatprep.subr.bf16.mxu0 %v1346
  %5323 = vmatpush2.bf16.msra.mxu0 %v1345
  %5324 = vmatprep.subr.bf16.mxu0 %v1344
  %5325 = vmatpush2.bf16.msra.mxu0 %v1343
  %5326 = vmatprep.mubr.bf16.mxu0 %v5029
  %5327 = vmatmul.mubr.bf16.gmra.mxu0 %v5028
  %v5328 = vpop.f32.mrf.mxu0
  %v5329 = vadd.f32 %v5288, %v5328
  %v5330 = vpop.f32.mrf.mxu0
  %v5331 = vadd.f32 %v5290, %v5330
  %v5332 = vpop.f32.mrf.mxu0
  %v5333 = vpop.f32.mrf.mxu0
  %5334 = vdwg.mxu0
  %5335 = vmatprep.subr.bf16.mxu0 %v1374
  %5336 = vmatpush1.bf16.msra.mxu0 %v1373
  %5337 = vmatprep.subr.bf16.mxu0 %v1372
  %5338 = vmatpush1.bf16.msra.mxu0 %v1371
  %5339 = vmatprep.subr.bf16.mxu0 %v1370
  %5340 = vmatpush1.bf16.msra.mxu0 %v1369
  %5341 = vmatprep.subr.bf16.mxu0 %v1368
  %5342 = vmatpush1.bf16.msra.mxu0 %v1367
  %5343 = vmatprep.subr.bf16.mxu0 %v1366
  %5344 = vmatpush1.bf16.msra.mxu0 %v1365
  %5345 = vmatprep.subr.bf16.mxu0 %v1364
  %5346 = vmatpush1.bf16.msra.mxu0 %v1363
  %5347 = vmatprep.subr.bf16.mxu0 %v1362
  %5348 = vmatpush1.bf16.msra.mxu0 %v1361
  %5349 = vmatprep.subr.bf16.mxu0 %v1360
  %5350 = vmatpush1.bf16.msra.mxu0 %v1359
  %5351 = vmatprep.subr.bf16.mxu0 %v1390
  %5352 = vmatpush2.bf16.msra.mxu0 %v1389
  %5353 = vmatprep.subr.bf16.mxu0 %v1388
  %5354 = vmatpush2.bf16.msra.mxu0 %v1387
  %5355 = vmatprep.subr.bf16.mxu0 %v1386
  %5356 = vmatpush2.bf16.msra.mxu0 %v1385
  %5357 = vmatprep.subr.bf16.mxu0 %v1384
  %5358 = vmatpush2.bf16.msra.mxu0 %v1383
  %5359 = vmatprep.subr.bf16.mxu0 %v1382
  %5360 = vmatpush2.bf16.msra.mxu0 %v1381
  %5361 = vmatprep.subr.bf16.mxu0 %v1380
  %5362 = vmatpush2.bf16.msra.mxu0 %v1379
  %5363 = vmatprep.subr.bf16.mxu0 %v1378
  %5364 = vmatpush2.bf16.msra.mxu0 %v1377
  %5365 = vmatprep.subr.bf16.mxu0 %v1376
  %5366 = vmatpush2.bf16.msra.mxu0 %v1375
  %5367 = vmatprep.mubr.bf16.mxu0 %v5031
  %5368 = vmatmul.mubr.bf16.gmra.mxu0 %v5030
  %v5369 = vpop.f32.mrf.mxu0
  %v5370 = vadd.f32 %v5329, %v5369
  %v5371 = vpop.f32.mrf.mxu0
  %v5372 = vadd.f32 %v5331, %v5371
  %v5373 = vpop.f32.mrf.mxu0
  %v5374 = vpop.f32.mrf.mxu0
  %5375 = vdwg.mxu0
  %v5376 = vmax.f32 %v5370, 0.0
  %v5377 = vmax.f32 %v5372, 0.0
  %v5378 = vpack.c.bf16 %v5376, %v5376
  %v5379 = vpack.c.bf16 %v5377, %v5377
  %s5380 = scalar_lea.vmem %s3, 768
  %v5381 = vld [vmem:[%s5380] sm:$0xf]
  %v5382 = vld [vmem:[%s5380 + $0x4] sm:$0xf]
  %v5383 = vld [vmem:[%s5380 + $0x8] sm:$0xf]
  %v5384 = vld [vmem:[%s5380 + $0xc] sm:$0xf]
  %v5385 = vld [vmem:[%s5380 + $0x10] sm:$0xf]
  %v5386 = vld [vmem:[%s5380 + $0x14] sm:$0xf]
  %v5387 = vld [vmem:[%s5380 + $0x18] sm:$0xf]
  %v5388 = vld [vmem:[%s5380 + $0x1c] sm:$0xf]
  %v5389 = vld [vmem:[%s5380 + $0x20] sm:$0xf]
  %v5390 = vld [vmem:[%s5380 + $0x24] sm:$0xf]
  %v5391 = vld [vmem:[%s5380 + $0x28] sm:$0xf]
  %v5392 = vld [vmem:[%s5380 + $0x2c] sm:$0xf]
  %v5393 = vld [vmem:[%s5380 + $0x30] sm:$0xf]
  %v5394 = vld [vmem:[%s5380 + $0x34] sm:$0xf]
  %v5395 = vld [vmem:[%s5380 + $0x38] sm:$0xf]
  %v5396 = vld [vmem:[%s5380 + $0x3c] sm:$0xf]
  %v5397 = vld [vmem:[%s5380 + $0x40] sm:$0xf]
  %v5398 = vld [vmem:[%s5380 + $0x44] sm:$0xf]
  %v5399 = vld [vmem:[%s5380 + $0x48] sm:$0xf]
  %v5400 = vld [vmem:[%s5380 + $0x4c] sm:$0xf]
  %v5401 = vld [vmem:[%s5380 + $0x50] sm:$0xf]
  %v5402 = vld [vmem:[%s5380 + $0x54] sm:$0xf]
  %v5403 = vld [vmem:[%s5380 + $0x58] sm:$0xf]
  %v5404 = vld [vmem:[%s5380 + $0x5c] sm:$0xf]
  %v5405 = vld [vmem:[%s5380 + $0x60] sm:$0xf]
  %v5406 = vld [vmem:[%s5380 + $0x64] sm:$0xf]
  %v5407 = vld [vmem:[%s5380 + $0x68] sm:$0xf]
  %v5408 = vld [vmem:[%s5380 + $0x6c] sm:$0xf]
  %v5409 = vld [vmem:[%s5380 + $0x70] sm:$0xf]
  %v5410 = vld [vmem:[%s5380 + $0x74] sm:$0xf]
  %v5411 = vld [vmem:[%s5380 + $0x78] sm:$0xf]
  %v5412 = vld [vmem:[%s5380 + $0x7c] sm:$0xf]
  %v5445 = vunpack.c.l.b16 %v5381
  %v5446 = vunpack.c.l.b16 %v5382
  %v5447 = vunpack.c.l.b16 %v5383
  %v5448 = vunpack.c.l.b16 %v5384
  %v5449 = vunpack.c.l.b16 %v5385
  %v5450 = vunpack.c.l.b16 %v5386
  %v5451 = vunpack.c.l.b16 %v5387
  %v5452 = vunpack.c.l.b16 %v5388
  %v5453 = vunpack.c.l.b16 %v5389
  %v5454 = vunpack.c.l.b16 %v5390
  %v5455 = vunpack.c.l.b16 %v5391
  %v5456 = vunpack.c.l.b16 %v5392
  %v5457 = vunpack.c.l.b16 %v5393
  %v5458 = vunpack.c.l.b16 %v5394
  %v5459 = vunpack.c.l.b16 %v5395
  %v5460 = vunpack.c.l.b16 %v5396
  %v5461 = vunpack.c.l.b16 %v5397
  %v5462 = vunpack.c.l.b16 %v5398
  %v5463 = vunpack.c.l.b16 %v5399
  %v5464 = vunpack.c.l.b16 %v5400
  %v5465 = vunpack.c.l.b16 %v5401
  %v5466 = vunpack.c.l.b16 %v5402
  %v5467 = vunpack.c.l.b16 %v5403
  %v5468 = vunpack.c.l.b16 %v5404
  %v5469 = vunpack.c.l.b16 %v5405
  %v5470 = vunpack.c.l.b16 %v5406
  %v5471 = vunpack.c.l.b16 %v5407
  %v5472 = vunpack.c.l.b16 %v5408
  %v5473 = vunpack.c.l.b16 %v5409
  %v5474 = vunpack.c.l.b16 %v5410
  %v5475 = vunpack.c.l.b16 %v5411
  %v5476 = vunpack.c.l.b16 %v5412
  %v5477 = vpack.c.b16 %v5446, %v5445
  %v5478 = vpack.c.b16 %v5448, %v5447
  %v5479 = vpack.c.b16 %v5450, %v5449
  %v5480 = vpack.c.b16 %v5452, %v5451
  %v5481 = vpack.c.b16 %v5454, %v5453
  %v5482 = vpack.c.b16 %v5456, %v5455
  %v5483 = vpack.c.b16 %v5458, %v5457
  %v5484 = vpack.c.b16 %v5460, %v5459
  %v5485 = vpack.c.b16 %v5462, %v5461
  %v5486 = vpack.c.b16 %v5464, %v5463
  %v5487 = vpack.c.b16 %v5466, %v5465
  %v5488 = vpack.c.b16 %v5468, %v5467
  %v5489 = vpack.c.b16 %v5470, %v5469
  %v5490 = vpack.c.b16 %v5472, %v5471
  %v5491 = vpack.c.b16 %v5474, %v5473
  %v5492 = vpack.c.b16 %v5476, %v5475
  %5509 = vmatprep.subr.bf16.mxu0 0
  %5510 = vmatpush1.bf16.msra.mxu0 %v5484
  %5511 = vmatprep.subr.bf16.mxu0 0
  %5512 = vmatpush1.bf16.msra.mxu0 %v5483
  %5513 = vmatprep.subr.bf16.mxu0 0
  %5514 = vmatpush1.bf16.msra.mxu0 %v5482
  %5515 = vmatprep.subr.bf16.mxu0 0
  %5516 = vmatpush1.bf16.msra.mxu0 %v5481
  %5517 = vmatprep.subr.bf16.mxu0 0
  %5518 = vmatpush1.bf16.msra.mxu0 %v5480
  %5519 = vmatprep.subr.bf16.mxu0 0
  %5520 = vmatpush1.bf16.msra.mxu0 %v5479
  %5521 = vmatprep.subr.bf16.mxu0 0
  %5522 = vmatpush1.bf16.msra.mxu0 %v5478
  %5523 = vmatprep.subr.bf16.mxu0 0
  %5524 = vmatpush1.bf16.msra.mxu0 %v5477
  %5525 = vmatprep.subr.bf16.mxu0 0
  %5526 = vmatpush2.bf16.msra.mxu0 %v5492
  %5527 = vmatprep.subr.bf16.mxu0 0
  %5528 = vmatpush2.bf16.msra.mxu0 %v5491
  %5529 = vmatprep.subr.bf16.mxu0 0
  %5530 = vmatpush2.bf16.msra.mxu0 %v5490
  %5531 = vmatprep.subr.bf16.mxu0 0
  %5532 = vmatpush2.bf16.msra.mxu0 %v5489
  %5533 = vmatprep.subr.bf16.mxu0 0
  %5534 = vmatpush2.bf16.msra.mxu0 %v5488
  %5535 = vmatprep.subr.bf16.mxu0 0
  %5536 = vmatpush2.bf16.msra.mxu0 %v5487
  %5537 = vmatprep.subr.bf16.mxu0 0
  %5538 = vmatpush2.bf16.msra.mxu0 %v5486
  %5539 = vmatprep.subr.bf16.mxu0 0
  %5540 = vmatpush2.bf16.msra.mxu0 %v5485
  %5541 = vmatprep.mubr.bf16.mxu0 %v5379
  %5542 = vmatmul.mubr.bf16.gmra.mxu0 %v5378
  %v5543 = vpop.f32.mrf.mxu0
  %v5544 = vadd.f32 0.0, %v5543
  %v5545 = vpop.f32.mrf.mxu0
  %v5546 = vpop.f32.mrf.mxu0
  %v5547 = vpop.f32.mrf.mxu0
  %5548 = vdwg.mxu0
  %v5549 = vadd.f32 %v4982, %v5544
  %s5550 = scalar_lea.vmem %s0, 448
  %v5551 = vld [vmem:[%s5550] sm:$0xff]
  %v5552 = vld [vmem:[%s5550 + $0x8] sm:$0xff]
  %v5553 = vld [vmem:[%s5550 + $0x10] sm:$0xff]
  %v5554 = vld [vmem:[%s5550 + $0x18] sm:$0xff]
  %v5555 = vld [vmem:[%s5550 + $0x20] sm:$0xff]
  %v5556 = vld [vmem:[%s5550 + $0x28] sm:$0xff]
  %v5557 = vld [vmem:[%s5550 + $0x30] sm:$0xff]
  %v5558 = vld [vmem:[%s5550 + $0x38] sm:$0xff]
  %v5567 = vunpack.c.l.b16 %v5551
  %v5568 = vunpack.c.h.b16 %v5551
  %v5569 = vunpack.c.l.b16 %v5552
  %v5570 = vunpack.c.h.b16 %v5552
  %v5571 = vunpack.c.l.b16 %v5553
  %v5572 = vunpack.c.h.b16 %v5553
  %v5573 = vunpack.c.l.b16 %v5554
  %v5574 = vunpack.c.h.b16 %v5554
  %v5575 = vunpack.c.l.b16 %v5555
  %v5576 = vunpack.c.h.b16 %v5555
  %v5577 = vunpack.c.l.b16 %v5556
  %v5578 = vunpack.c.h.b16 %v5556
  %v5579 = vunpack.c.l.b16 %v5557
  %v5580 = vunpack.c.h.b16 %v5557
  %v5581 = vunpack.c.l.b16 %v5558
  %v5582 = vunpack.c.h.b16 %v5558
  %v5583 = vpack.c.b16 %v5567, %v5567
  %v5584 = vpack.c.b16 %v5568, %v5568
  %v5585 = vpack.c.b16 %v5569, %v5569
  %v5586 = vpack.c.b16 %v5570, %v5570
  %v5587 = vpack.c.b16 %v5571, %v5571
  %v5588 = vpack.c.b16 %v5572, %v5572
  %v5589 = vpack.c.b16 %v5573, %v5573
  %v5590 = vpack.c.b16 %v5574, %v5574
  %v5591 = vpack.c.b16 %v5575, %v5575
  %v5592 = vpack.c.b16 %v5576, %v5576
  %v5593 = vpack.c.b16 %v5577, %v5577
  %v5594 = vpack.c.b16 %v5578, %v5578
  %v5595 = vpack.c.b16 %v5579, %v5579
  %v5596 = vpack.c.b16 %v5580, %v5580
  %v5597 = vpack.c.b16 %v5581, %v5581
  %v5598 = vpack.c.b16 %v5582, %v5582
  %5615 = vmatprep.subr.bf16.mxu0 %v1150
  %5616 = vmatpush1.bf16.msra.mxu0 %v1149
  %5617 = vmatprep.subr.bf16.mxu0 %v1148
  %5618 = vmatpush1.bf16.msra.mxu0 %v1147
  %5619 = vmatprep.subr.bf16.mxu0 %v1146
  %5620 = vmatpush1.bf16.msra.mxu0 %v1145
  %5621 = vmatprep.subr.bf16.mxu0 %v1144
  %5622 = vmatpush1.bf16.msra.mxu0 %v1143
  %5623 = vmatprep.subr.bf16.mxu0 %v1142
  %5624 = vmatpush1.bf16.msra.mxu0 %v1141
  %5625 = vmatprep.subr.bf16.mxu0 %v1140
  %5626 = vmatpush1.bf16.msra.mxu0 %v1139
  %5627 = vmatprep.subr.bf16.mxu0 %v1138
  %5628 = vmatpush1.bf16.msra.mxu0 %v1137
  %5629 = vmatprep.subr.bf16.mxu0 %v1136
  %5630 = vmatpush1.bf16.msra.mxu0 %v1135
  %5631 = vmatprep.subr.bf16.mxu0 %v1166
  %5632 = vmatpush2.bf16.msra.mxu0 %v1165
  %5633 = vmatprep.subr.bf16.mxu0 %v1164
  %5634 = vmatpush2.bf16.msra.mxu0 %v1163
  %5635 = vmatprep.subr.bf16.mxu0 %v1162
  %5636 = vmatpush2.bf16.msra.mxu0 %v1161
  %5637 = vmatprep.subr.bf16.mxu0 %v1160
  %5638 = vmatpush2.bf16.msra.mxu0 %v1159
  %5639 = vmatprep.subr.bf16.mxu0 %v1158
  %5640 = vmatpush2.bf16.msra.mxu0 %v1157
  %5641 = vmatprep.subr.bf16.mxu0 %v1156
  %5642 = vmatpush2.bf16.msra.mxu0 %v1155
  %5643 = vmatprep.subr.bf16.mxu0 %v1154
  %5644 = vmatpush2.bf16.msra.mxu0 %v1153
  %5645 = vmatprep.subr.bf16.mxu0 %v1152
  %5646 = vmatpush2.bf16.msra.mxu0 %v1151
  %5647 = vmatprep.mubr.bf16.mxu0 %v5584
  %5648 = vmatmul.mubr.bf16.gmra.mxu0 %v5583
  %v5649 = vpop.f32.mrf.mxu0
  %v5650 = vadd.f32 %v304, %v5649
  %v5651 = vpop.f32.mrf.mxu0
  %v5652 = vadd.f32 %v308, %v5651
  %v5653 = vpop.f32.mrf.mxu0
  %v5654 = vpop.f32.mrf.mxu0
  %5655 = vdwg.mxu0
  %5656 = vmatprep.subr.bf16.mxu0 %v1182
  %5657 = vmatpush1.bf16.msra.mxu0 %v1181
  %5658 = vmatprep.subr.bf16.mxu0 %v1180
  %5659 = vmatpush1.bf16.msra.mxu0 %v1179
  %5660 = vmatprep.subr.bf16.mxu0 %v1178
  %5661 = vmatpush1.bf16.msra.mxu0 %v1177
  %5662 = vmatprep.subr.bf16.mxu0 %v1176
  %5663 = vmatpush1.bf16.msra.mxu0 %v1175
  %5664 = vmatprep.subr.bf16.mxu0 %v1174
  %5665 = vmatpush1.bf16.msra.mxu0 %v1173
  %5666 = vmatprep.subr.bf16.mxu0 %v1172
  %5667 = vmatpush1.bf16.msra.mxu0 %v1171
  %5668 = vmatprep.subr.bf16.mxu0 %v1170
  %5669 = vmatpush1.bf16.msra.mxu0 %v1169
  %5670 = vmatprep.subr.bf16.mxu0 %v1168
  %5671 = vmatpush1.bf16.msra.mxu0 %v1167
  %5672 = vmatprep.subr.bf16.mxu0 %v1198
  %5673 = vmatpush2.bf16.msra.mxu0 %v1197
  %5674 = vmatprep.subr.bf16.mxu0 %v1196
  %5675 = vmatpush2.bf16.msra.mxu0 %v1195
  %5676 = vmatprep.subr.bf16.mxu0 %v1194
  %5677 = vmatpush2.bf16.msra.mxu0 %v1193
  %5678 = vmatprep.subr.bf16.mxu0 %v1192
  %5679 = vmatpush2.bf16.msra.mxu0 %v1191
  %5680 = vmatprep.subr.bf16.mxu0 %v1190
  %5681 = vmatpush2.bf16.msra.mxu0 %v1189
  %5682 = vmatprep.subr.bf16.mxu0 %v1188
  %5683 = vmatpush2.bf16.msra.mxu0 %v1187
  %5684 = vmatprep.subr.bf16.mxu0 %v1186
  %5685 = vmatpush2.bf16.msra.mxu0 %v1185
  %5686 = vmatprep.subr.bf16.mxu0 %v1184
  %5687 = vmatpush2.bf16.msra.mxu0 %v1183
  %5688 = vmatprep.mubr.bf16.mxu0 %v5586
  %5689 = vmatmul.mubr.bf16.gmra.mxu0 %v5585
  %v5690 = vpop.f32.mrf.mxu0
  %v5691 = vadd.f32 %v5650, %v5690
  %v5692 = vpop.f32.mrf.mxu0
  %v5693 = vadd.f32 %v5652, %v5692
  %v5694 = vpop.f32.mrf.mxu0
  %v5695 = vpop.f32.mrf.mxu0
  %5696 = vdwg.mxu0
  %5697 = vmatprep.subr.bf16.mxu0 %v1214
  %5698 = vmatpush1.bf16.msra.mxu0 %v1213
  %5699 = vmatprep.subr.bf16.mxu0 %v1212
  %5700 = vmatpush1.bf16.msra.mxu0 %v1211
  %5701 = vmatprep.subr.bf16.mxu0 %v1210
  %5702 = vmatpush1.bf16.msra.mxu0 %v1209
  %5703 = vmatprep.subr.bf16.mxu0 %v1208
  %5704 = vmatpush1.bf16.msra.mxu0 %v1207
  %5705 = vmatprep.subr.bf16.mxu0 %v1206
  %5706 = vmatpush1.bf16.msra.mxu0 %v1205
  %5707 = vmatprep.subr.bf16.mxu0 %v1204
  %5708 = vmatpush1.bf16.msra.mxu0 %v1203
  %5709 = vmatprep.subr.bf16.mxu0 %v1202
  %5710 = vmatpush1.bf16.msra.mxu0 %v1201
  %5711 = vmatprep.subr.bf16.mxu0 %v1200
  %5712 = vmatpush1.bf16.msra.mxu0 %v1199
  %5713 = vmatprep.subr.bf16.mxu0 %v1230
  %5714 = vmatpush2.bf16.msra.mxu0 %v1229
  %5715 = vmatprep.subr.bf16.mxu0 %v1228
  %5716 = vmatpush2.bf16.msra.mxu0 %v1227
  %5717 = vmatprep.subr.bf16.mxu0 %v1226
  %5718 = vmatpush2.bf16.msra.mxu0 %v1225
  %5719 = vmatprep.subr.bf16.mxu0 %v1224
  %5720 = vmatpush2.bf16.msra.mxu0 %v1223
  %5721 = vmatprep.subr.bf16.mxu0 %v1222
  %5722 = vmatpush2.bf16.msra.mxu0 %v1221
  %5723 = vmatprep.subr.bf16.mxu0 %v1220
  %5724 = vmatpush2.bf16.msra.mxu0 %v1219
  %5725 = vmatprep.subr.bf16.mxu0 %v1218
  %5726 = vmatpush2.bf16.msra.mxu0 %v1217
  %5727 = vmatprep.subr.bf16.mxu0 %v1216
  %5728 = vmatpush2.bf16.msra.mxu0 %v1215
  %5729 = vmatprep.mubr.bf16.mxu0 %v5588
  %5730 = vmatmul.mubr.bf16.gmra.mxu0 %v5587
  %v5731 = vpop.f32.mrf.mxu0
  %v5732 = vadd.f32 %v5691, %v5731
  %v5733 = vpop.f32.mrf.mxu0
  %v5734 = vadd.f32 %v5693, %v5733
  %v5735 = vpop.f32.mrf.mxu0
  %v5736 = vpop.f32.mrf.mxu0
  %5737 = vdwg.mxu0
  %5738 = vmatprep.subr.bf16.mxu0 %v1246
  %5739 = vmatpush1.bf16.msra.mxu0 %v1245
  %5740 = vmatprep.subr.bf16.mxu0 %v1244
  %5741 = vmatpush1.bf16.msra.mxu0 %v1243
  %5742 = vmatprep.subr.bf16.mxu0 %v1242
  %5743 = vmatpush1.bf16.msra.mxu0 %v1241
  %5744 = vmatprep.subr.bf16.mxu0 %v1240
  %5745 = vmatpush1.bf16.msra.mxu0 %v1239
  %5746 = vmatprep.subr.bf16.mxu0 %v1238
  %5747 = vmatpush1.bf16.msra.mxu0 %v1237
  %5748 = vmatprep.subr.bf16.mxu0 %v1236
  %5749 = vmatpush1.bf16.msra.mxu0 %v1235
  %5750 = vmatprep.subr.bf16.mxu0 %v1234
  %5751 = vmatpush1.bf16.msra.mxu0 %v1233
  %5752 = vmatprep.subr.bf16.mxu0 %v1232
  %5753 = vmatpush1.bf16.msra.mxu0 %v1231
  %5754 = vmatprep.subr.bf16.mxu0 %v1262
  %5755 = vmatpush2.bf16.msra.mxu0 %v1261
  %5756 = vmatprep.subr.bf16.mxu0 %v1260
  %5757 = vmatpush2.bf16.msra.mxu0 %v1259
  %5758 = vmatprep.subr.bf16.mxu0 %v1258
  %5759 = vmatpush2.bf16.msra.mxu0 %v1257
  %5760 = vmatprep.subr.bf16.mxu0 %v1256
  %5761 = vmatpush2.bf16.msra.mxu0 %v1255
  %5762 = vmatprep.subr.bf16.mxu0 %v1254
  %5763 = vmatpush2.bf16.msra.mxu0 %v1253
  %5764 = vmatprep.subr.bf16.mxu0 %v1252
  %5765 = vmatpush2.bf16.msra.mxu0 %v1251
  %5766 = vmatprep.subr.bf16.mxu0 %v1250
  %5767 = vmatpush2.bf16.msra.mxu0 %v1249
  %5768 = vmatprep.subr.bf16.mxu0 %v1248
  %5769 = vmatpush2.bf16.msra.mxu0 %v1247
  %5770 = vmatprep.mubr.bf16.mxu0 %v5590
  %5771 = vmatmul.mubr.bf16.gmra.mxu0 %v5589
  %v5772 = vpop.f32.mrf.mxu0
  %v5773 = vadd.f32 %v5732, %v5772
  %v5774 = vpop.f32.mrf.mxu0
  %v5775 = vadd.f32 %v5734, %v5774
  %v5776 = vpop.f32.mrf.mxu0
  %v5777 = vpop.f32.mrf.mxu0
  %5778 = vdwg.mxu0
  %5779 = vmatprep.subr.bf16.mxu0 %v1278
  %5780 = vmatpush1.bf16.msra.mxu0 %v1277
  %5781 = vmatprep.subr.bf16.mxu0 %v1276
  %5782 = vmatpush1.bf16.msra.mxu0 %v1275
  %5783 = vmatprep.subr.bf16.mxu0 %v1274
  %5784 = vmatpush1.bf16.msra.mxu0 %v1273
  %5785 = vmatprep.subr.bf16.mxu0 %v1272
  %5786 = vmatpush1.bf16.msra.mxu0 %v1271
  %5787 = vmatprep.subr.bf16.mxu0 %v1270
  %5788 = vmatpush1.bf16.msra.mxu0 %v1269
  %5789 = vmatprep.subr.bf16.mxu0 %v1268
  %5790 = vmatpush1.bf16.msra.mxu0 %v1267
  %5791 = vmatprep.subr.bf16.mxu0 %v1266
  %5792 = vmatpush1.bf16.msra.mxu0 %v1265
  %5793 = vmatprep.subr.bf16.mxu0 %v1264
  %5794 = vmatpush1.bf16.msra.mxu0 %v1263
  %5795 = vmatprep.subr.bf16.mxu0 %v1294
  %5796 = vmatpush2.bf16.msra.mxu0 %v1293
  %5797 = vmatprep.subr.bf16.mxu0 %v1292
  %5798 = vmatpush2.bf16.msra.mxu0 %v1291
  %5799 = vmatprep.subr.bf16.mxu0 %v1290
  %5800 = vmatpush2.bf16.msra.mxu0 %v1289
  %5801 = vmatprep.subr.bf16.mxu0 %v1288
  %5802 = vmatpush2.bf16.msra.mxu0 %v1287
  %5803 = vmatprep.subr.bf16.mxu0 %v1286
  %5804 = vmatpush2.bf16.msra.mxu0 %v1285
  %5805 = vmatprep.subr.bf16.mxu0 %v1284
  %5806 = vmatpush2.bf16.msra.mxu0 %v1283
  %5807 = vmatprep.subr.bf16.mxu0 %v1282
  %5808 = vmatpush2.bf16.msra.mxu0 %v1281
  %5809 = vmatprep.subr.bf16.mxu0 %v1280
  %5810 = vmatpush2.bf16.msra.mxu0 %v1279
  %5811 = vmatprep.mubr.bf16.mxu0 %v5592
  %5812 = vmatmul.mubr.bf16.gmra.mxu0 %v5591
  %v5813 = vpop.f32.mrf.mxu0
  %v5814 = vadd.f32 %v5773, %v5813
  %v5815 = vpop.f32.mrf.mxu0
  %v5816 = vadd.f32 %v5775, %v5815
  %v5817 = vpop.f32.mrf.mxu0
  %v5818 = vpop.f32.mrf.mxu0
  %5819 = vdwg.mxu0
  %5820 = vmatprep.subr.bf16.mxu0 %v1310
  %5821 = vmatpush1.bf16.msra.mxu0 %v1309
  %5822 = vmatprep.subr.bf16.mxu0 %v1308
  %5823 = vmatpush1.bf16.msra.mxu0 %v1307
  %5824 = vmatprep.subr.bf16.mxu0 %v1306
  %5825 = vmatpush1.bf16.msra.mxu0 %v1305
  %5826 = vmatprep.subr.bf16.mxu0 %v1304
  %5827 = vmatpush1.bf16.msra.mxu0 %v1303
  %5828 = vmatprep.subr.bf16.mxu0 %v1302
  %5829 = vmatpush1.bf16.msra.mxu0 %v1301
  %5830 = vmatprep.subr.bf16.mxu0 %v1300
  %5831 = vmatpush1.bf16.msra.mxu0 %v1299
  %5832 = vmatprep.subr.bf16.mxu0 %v1298
  %5833 = vmatpush1.bf16.msra.mxu0 %v1297
  %5834 = vmatprep.subr.bf16.mxu0 %v1296
  %5835 = vmatpush1.bf16.msra.mxu0 %v1295
  %5836 = vmatprep.subr.bf16.mxu0 %v1326
  %5837 = vmatpush2.bf16.msra.mxu0 %v1325
  %5838 = vmatprep.subr.bf16.mxu0 %v1324
  %5839 = vmatpush2.bf16.msra.mxu0 %v1323
  %5840 = vmatprep.subr.bf16.mxu0 %v1322
  %5841 = vmatpush2.bf16.msra.mxu0 %v1321
  %5842 = vmatprep.subr.bf16.mxu0 %v1320
  %5843 = vmatpush2.bf16.msra.mxu0 %v1319
  %5844 = vmatprep.subr.bf16.mxu0 %v1318
  %5845 = vmatpush2.bf16.msra.mxu0 %v1317
  %5846 = vmatprep.subr.bf16.mxu0 %v1316
  %5847 = vmatpush2.bf16.msra.mxu0 %v1315
  %5848 = vmatprep.subr.bf16.mxu0 %v1314
  %5849 = vmatpush2.bf16.msra.mxu0 %v1313
  %5850 = vmatprep.subr.bf16.mxu0 %v1312
  %5851 = vmatpush2.bf16.msra.mxu0 %v1311
  %5852 = vmatprep.mubr.bf16.mxu0 %v5594
  %5853 = vmatmul.mubr.bf16.gmra.mxu0 %v5593
  %v5854 = vpop.f32.mrf.mxu0
  %v5855 = vadd.f32 %v5814, %v5854
  %v5856 = vpop.f32.mrf.mxu0
  %v5857 = vadd.f32 %v5816, %v5856
  %v5858 = vpop.f32.mrf.mxu0
  %v5859 = vpop.f32.mrf.mxu0
  %5860 = vdwg.mxu0
  %5861 = vmatprep.subr.bf16.mxu0 %v1342
  %5862 = vmatpush1.bf16.msra.mxu0 %v1341
  %5863 = vmatprep.subr.bf16.mxu0 %v1340
  %5864 = vmatpush1.bf16.msra.mxu0 %v1339
  %5865 = vmatprep.subr.bf16.mxu0 %v1338
  %5866 = vmatpush1.bf16.msra.mxu0 %v1337
  %5867 = vmatprep.subr.bf16.mxu0 %v1336
  %5868 = vmatpush1.bf16.msra.mxu0 %v1335
  %5869 = vmatprep.subr.bf16.mxu0 %v1334
  %5870 = vmatpush1.bf16.msra.mxu0 %v1333
  %5871 = vmatprep.subr.bf16.mxu0 %v1332
  %5872 = vmatpush1.bf16.msra.mxu0 %v1331
  %5873 = vmatprep.subr.bf16.mxu0 %v1330
  %5874 = vmatpush1.bf16.msra.mxu0 %v1329
  %5875 = vmatprep.subr.bf16.mxu0 %v1328
  %5876 = vmatpush1.bf16.msra.mxu0 %v1327
  %5877 = vmatprep.subr.bf16.mxu0 %v1358
  %5878 = vmatpush2.bf16.msra.mxu0 %v1357
  %5879 = vmatprep.subr.bf16.mxu0 %v1356
  %5880 = vmatpush2.bf16.msra.mxu0 %v1355
  %5881 = vmatprep.subr.bf16.mxu0 %v1354
  %5882 = vmatpush2.bf16.msra.mxu0 %v1353
  %5883 = vmatprep.subr.bf16.mxu0 %v1352
  %5884 = vmatpush2.bf16.msra.mxu0 %v1351
  %5885 = vmatprep.subr.bf16.mxu0 %v1350
  %5886 = vmatpush2.bf16.msra.mxu0 %v1349
  %5887 = vmatprep.subr.bf16.mxu0 %v1348
  %5888 = vmatpush2.bf16.msra.mxu0 %v1347
  %5889 = vmatprep.subr.bf16.mxu0 %v1346
  %5890 = vmatpush2.bf16.msra.mxu0 %v1345
  %5891 = vmatprep.subr.bf16.mxu0 %v1344
  %5892 = vmatpush2.bf16.msra.mxu0 %v1343
  %5893 = vmatprep.mubr.bf16.mxu0 %v5596
  %5894 = vmatmul.mubr.bf16.gmra.mxu0 %v5595
  %v5895 = vpop.f32.mrf.mxu0
  %v5896 = vadd.f32 %v5855, %v5895
  %v5897 = vpop.f32.mrf.mxu0
  %v5898 = vadd.f32 %v5857, %v5897
  %v5899 = vpop.f32.mrf.mxu0
  %v5900 = vpop.f32.mrf.mxu0
  %5901 = vdwg.mxu0
  %5902 = vmatprep.subr.bf16.mxu0 %v1374
  %5903 = vmatpush1.bf16.msra.mxu0 %v1373
  %5904 = vmatprep.subr.bf16.mxu0 %v1372
  %5905 = vmatpush1.bf16.msra.mxu0 %v1371
  %5906 = vmatprep.subr.bf16.mxu0 %v1370
  %5907 = vmatpush1.bf16.msra.mxu0 %v1369
  %5908 = vmatprep.subr.bf16.mxu0 %v1368
  %5909 = vmatpush1.bf16.msra.mxu0 %v1367
  %5910 = vmatprep.subr.bf16.mxu0 %v1366
  %5911 = vmatpush1.bf16.msra.mxu0 %v1365
  %5912 = vmatprep.subr.bf16.mxu0 %v1364
  %5913 = vmatpush1.bf16.msra.mxu0 %v1363
  %5914 = vmatprep.subr.bf16.mxu0 %v1362
  %5915 = vmatpush1.bf16.msra.mxu0 %v1361
  %5916 = vmatprep.subr.bf16.mxu0 %v1360
  %5917 = vmatpush1.bf16.msra.mxu0 %v1359
  %5918 = vmatprep.subr.bf16.mxu0 %v1390
  %5919 = vmatpush2.bf16.msra.mxu0 %v1389
  %5920 = vmatprep.subr.bf16.mxu0 %v1388
  %5921 = vmatpush2.bf16.msra.mxu0 %v1387
  %5922 = vmatprep.subr.bf16.mxu0 %v1386
  %5923 = vmatpush2.bf16.msra.mxu0 %v1385
  %5924 = vmatprep.subr.bf16.mxu0 %v1384
  %5925 = vmatpush2.bf16.msra.mxu0 %v1383
  %5926 = vmatprep.subr.bf16.mxu0 %v1382
  %5927 = vmatpush2.bf16.msra.mxu0 %v1381
  %5928 = vmatprep.subr.bf16.mxu0 %v1380
  %5929 = vmatpush2.bf16.msra.mxu0 %v1379
  %5930 = vmatprep.subr.bf16.mxu0 %v1378
  %5931 = vmatpush2.bf16.msra.mxu0 %v1377
  %5932 = vmatprep.subr.bf16.mxu0 %v1376
  %5933 = vmatpush2.bf16.msra.mxu0 %v1375
  %5934 = vmatprep.mubr.bf16.mxu0 %v5598
  %5935 = vmatmul.mubr.bf16.gmra.mxu0 %v5597
  %v5936 = vpop.f32.mrf.mxu0
  %v5937 = vadd.f32 %v5896, %v5936
  %v5938 = vpop.f32.mrf.mxu0
  %v5939 = vadd.f32 %v5898, %v5938
  %v5940 = vpop.f32.mrf.mxu0
  %v5941 = vpop.f32.mrf.mxu0
  %5942 = vdwg.mxu0
  %v5943 = vmax.f32 %v5937, 0.0
  %v5944 = vmax.f32 %v5939, 0.0
  %v5945 = vpack.c.bf16 %v5943, %v5943
  %v5946 = vpack.c.bf16 %v5944, %v5944
  %s5947 = scalar_lea.vmem %s3, 896
  %v5948 = vld [vmem:[%s5947] sm:$0xf]
  %v5949 = vld [vmem:[%s5947 + $0x4] sm:$0xf]
  %v5950 = vld [vmem:[%s5947 + $0x8] sm:$0xf]
  %v5951 = vld [vmem:[%s5947 + $0xc] sm:$0xf]
  %v5952 = vld [vmem:[%s5947 + $0x10] sm:$0xf]
  %v5953 = vld [vmem:[%s5947 + $0x14] sm:$0xf]
  %v5954 = vld [vmem:[%s5947 + $0x18] sm:$0xf]
  %v5955 = vld [vmem:[%s5947 + $0x1c] sm:$0xf]
  %v5956 = vld [vmem:[%s5947 + $0x20] sm:$0xf]
  %v5957 = vld [vmem:[%s5947 + $0x24] sm:$0xf]
  %v5958 = vld [vmem:[%s5947 + $0x28] sm:$0xf]
  %v5959 = vld [vmem:[%s5947 + $0x2c] sm:$0xf]
  %v5960 = vld [vmem:[%s5947 + $0x30] sm:$0xf]
  %v5961 = vld [vmem:[%s5947 + $0x34] sm:$0xf]
  %v5962 = vld [vmem:[%s5947 + $0x38] sm:$0xf]
  %v5963 = vld [vmem:[%s5947 + $0x3c] sm:$0xf]
  %v5964 = vld [vmem:[%s5947 + $0x40] sm:$0xf]
  %v5965 = vld [vmem:[%s5947 + $0x44] sm:$0xf]
  %v5966 = vld [vmem:[%s5947 + $0x48] sm:$0xf]
  %v5967 = vld [vmem:[%s5947 + $0x4c] sm:$0xf]
  %v5968 = vld [vmem:[%s5947 + $0x50] sm:$0xf]
  %v5969 = vld [vmem:[%s5947 + $0x54] sm:$0xf]
  %v5970 = vld [vmem:[%s5947 + $0x58] sm:$0xf]
  %v5971 = vld [vmem:[%s5947 + $0x5c] sm:$0xf]
  %v5972 = vld [vmem:[%s5947 + $0x60] sm:$0xf]
  %v5973 = vld [vmem:[%s5947 + $0x64] sm:$0xf]
  %v5974 = vld [vmem:[%s5947 + $0x68] sm:$0xf]
  %v5975 = vld [vmem:[%s5947 + $0x6c] sm:$0xf]
  %v5976 = vld [vmem:[%s5947 + $0x70] sm:$0xf]
  %v5977 = vld [vmem:[%s5947 + $0x74] sm:$0xf]
  %v5978 = vld [vmem:[%s5947 + $0x78] sm:$0xf]
  %v5979 = vld [vmem:[%s5947 + $0x7c] sm:$0xf]
  %v6012 = vunpack.c.l.b16 %v5948
  %v6013 = vunpack.c.l.b16 %v5949
  %v6014 = vunpack.c.l.b16 %v5950
  %v6015 = vunpack.c.l.b16 %v5951
  %v6016 = vunpack.c.l.b16 %v5952
  %v6017 = vunpack.c.l.b16 %v5953
  %v6018 = vunpack.c.l.b16 %v5954
  %v6019 = vunpack.c.l.b16 %v5955
  %v6020 = vunpack.c.l.b16 %v5956
  %v6021 = vunpack.c.l.b16 %v5957
  %v6022 = vunpack.c.l.b16 %v5958
  %v6023 = vunpack.c.l.b16 %v5959
  %v6024 = vunpack.c.l.b16 %v5960
  %v6025 = vunpack.c.l.b16 %v5961
  %v6026 = vunpack.c.l.b16 %v5962
  %v6027 = vunpack.c.l.b16 %v5963
  %v6028 = vunpack.c.l.b16 %v5964
  %v6029 = vunpack.c.l.b16 %v5965
  %v6030 = vunpack.c.l.b16 %v5966
  %v6031 = vunpack.c.l.b16 %v5967
  %v6032 = vunpack.c.l.b16 %v5968
  %v6033 = vunpack.c.l.b16 %v5969
  %v6034 = vunpack.c.l.b16 %v5970
  %v6035 = vunpack.c.l.b16 %v5971
  %v6036 = vunpack.c.l.b16 %v5972
  %v6037 = vunpack.c.l.b16 %v5973
  %v6038 = vunpack.c.l.b16 %v5974
  %v6039 = vunpack.c.l.b16 %v5975
  %v6040 = vunpack.c.l.b16 %v5976
  %v6041 = vunpack.c.l.b16 %v5977
  %v6042 = vunpack.c.l.b16 %v5978
  %v6043 = vunpack.c.l.b16 %v5979
  %v6044 = vpack.c.b16 %v6013, %v6012
  %v6045 = vpack.c.b16 %v6015, %v6014
  %v6046 = vpack.c.b16 %v6017, %v6016
  %v6047 = vpack.c.b16 %v6019, %v6018
  %v6048 = vpack.c.b16 %v6021, %v6020
  %v6049 = vpack.c.b16 %v6023, %v6022
  %v6050 = vpack.c.b16 %v6025, %v6024
  %v6051 = vpack.c.b16 %v6027, %v6026
  %v6052 = vpack.c.b16 %v6029, %v6028
  %v6053 = vpack.c.b16 %v6031, %v6030
  %v6054 = vpack.c.b16 %v6033, %v6032
  %v6055 = vpack.c.b16 %v6035, %v6034
  %v6056 = vpack.c.b16 %v6037, %v6036
  %v6057 = vpack.c.b16 %v6039, %v6038
  %v6058 = vpack.c.b16 %v6041, %v6040
  %v6059 = vpack.c.b16 %v6043, %v6042
  %6076 = vmatprep.subr.bf16.mxu0 0
  %6077 = vmatpush1.bf16.msra.mxu0 %v6051
  %6078 = vmatprep.subr.bf16.mxu0 0
  %6079 = vmatpush1.bf16.msra.mxu0 %v6050
  %6080 = vmatprep.subr.bf16.mxu0 0
  %6081 = vmatpush1.bf16.msra.mxu0 %v6049
  %6082 = vmatprep.subr.bf16.mxu0 0
  %6083 = vmatpush1.bf16.msra.mxu0 %v6048
  %6084 = vmatprep.subr.bf16.mxu0 0
  %6085 = vmatpush1.bf16.msra.mxu0 %v6047
  %6086 = vmatprep.subr.bf16.mxu0 0
  %6087 = vmatpush1.bf16.msra.mxu0 %v6046
  %6088 = vmatprep.subr.bf16.mxu0 0
  %6089 = vmatpush1.bf16.msra.mxu0 %v6045
  %6090 = vmatprep.subr.bf16.mxu0 0
  %6091 = vmatpush1.bf16.msra.mxu0 %v6044
  %6092 = vmatprep.subr.bf16.mxu0 0
  %6093 = vmatpush2.bf16.msra.mxu0 %v6059
  %6094 = vmatprep.subr.bf16.mxu0 0
  %6095 = vmatpush2.bf16.msra.mxu0 %v6058
  %6096 = vmatprep.subr.bf16.mxu0 0
  %6097 = vmatpush2.bf16.msra.mxu0 %v6057
  %6098 = vmatprep.subr.bf16.mxu0 0
  %6099 = vmatpush2.bf16.msra.mxu0 %v6056
  %6100 = vmatprep.subr.bf16.mxu0 0
  %6101 = vmatpush2.bf16.msra.mxu0 %v6055
  %6102 = vmatprep.subr.bf16.mxu0 0
  %6103 = vmatpush2.bf16.msra.mxu0 %v6054
  %6104 = vmatprep.subr.bf16.mxu0 0
  %6105 = vmatpush2.bf16.msra.mxu0 %v6053
  %6106 = vmatprep.subr.bf16.mxu0 0
  %6107 = vmatpush2.bf16.msra.mxu0 %v6052
  %6108 = vmatprep.mubr.bf16.mxu0 %v5946
  %6109 = vmatmul.mubr.bf16.gmra.mxu0 %v5945
  %v6110 = vpop.f32.mrf.mxu0
  %v6111 = vadd.f32 0.0, %v6110
  %v6112 = vpop.f32.mrf.mxu0
  %v6113 = vpop.f32.mrf.mxu0
  %v6114 = vpop.f32.mrf.mxu0
  %6115 = vdwg.mxu0
  %v6116 = vadd.f32 %v5549, %v6111
  %v6117 = vmax.f32 %v6116, 0.0
  %v6118 = vpack.c.bf16 %v6117, %v6117
  %v6119 = vld [vmem:[%s5] sm:$0xf]
  %v6120 = vld [vmem:[%s5 + $0x4] sm:$0xf]
  %v6121 = vld [vmem:[%s5 + $0x8] sm:$0xf]
  %v6122 = vld [vmem:[%s5 + $0xc] sm:$0xf]
  %v6123 = vld [vmem:[%s5 + $0x10] sm:$0xf]
  %v6124 = vld [vmem:[%s5 + $0x14] sm:$0xf]
  %v6125 = vld [vmem:[%s5 + $0x18] sm:$0xf]
  %v6126 = vld [vmem:[%s5 + $0x1c] sm:$0xf]
  %v6127 = vld [vmem:[%s5 + $0x20] sm:$0xf]
  %v6128 = vld [vmem:[%s5 + $0x24] sm:$0xf]
  %v6129 = vld [vmem:[%s5 + $0x28] sm:$0xf]
  %v6130 = vld [vmem:[%s5 + $0x2c] sm:$0xf]
  %v6131 = vld [vmem:[%s5 + $0x30] sm:$0xf]
  %v6132 = vld [vmem:[%s5 + $0x34] sm:$0xf]
  %v6133 = vld [vmem:[%s5 + $0x38] sm:$0xf]
  %v6134 = vld [vmem:[%s5 + $0x3c] sm:$0xf]
  %v6135 = vld [vmem:[%s6] sm:$0x1]
  %v6137 = vlaneseq
  %v6138 = vshrl.u32 %v6137, 7
  %v6139 = vsub.s32 0, %v6138
  %v6140 = vrot.slane %v6135, %v6139
  %v6158 = vunpack.c.l.b16 %v6119
  %v6159 = vunpack.c.l.b16 %v6120
  %v6160 = vunpack.c.l.b16 %v6121
  %v6161 = vunpack.c.l.b16 %v6122
  %v6162 = vunpack.c.l.b16 %v6123
  %v6163 = vunpack.c.l.b16 %v6124
  %v6164 = vunpack.c.l.b16 %v6125
  %v6165 = vunpack.c.l.b16 %v6126
  %v6166 = vunpack.c.l.b16 %v6127
  %v6167 = vunpack.c.l.b16 %v6128
  %v6168 = vunpack.c.l.b16 %v6129
  %v6169 = vunpack.c.l.b16 %v6130
  %v6170 = vunpack.c.l.b16 %v6131
  %v6171 = vunpack.c.l.b16 %v6132
  %v6172 = vunpack.c.l.b16 %v6133
  %v6173 = vunpack.c.l.b16 %v6134
  %v6174 = vpack.c.b16 %v6159, %v6158
  %v6175 = vpack.c.b16 %v6161, %v6160
  %v6176 = vpack.c.b16 %v6163, %v6162
  %v6177 = vpack.c.b16 %v6165, %v6164
  %v6178 = vpack.c.b16 %v6167, %v6166
  %v6179 = vpack.c.b16 %v6169, %v6168
  %v6180 = vpack.c.b16 %v6171, %v6170
  %v6181 = vpack.c.b16 %v6173, %v6172
  %6190 = vmatprep.subr.bf16.mxu0 0
  %6191 = vmatpush1.bf16.msra.mxu0 %v6181
  %6192 = vmatprep.subr.bf16.mxu0 0
  %6193 = vmatpush1.bf16.msra.mxu0 %v6180
  %6194 = vmatprep.subr.bf16.mxu0 0
  %6195 = vmatpush1.bf16.msra.mxu0 %v6179
  %6196 = vmatprep.subr.bf16.mxu0 0
  %6197 = vmatpush1.bf16.msra.mxu0 %v6178
  %6198 = vmatprep.subr.bf16.mxu0 0
  %6199 = vmatpush1.bf16.msra.mxu0 %v6177
  %6200 = vmatprep.subr.bf16.mxu0 0
  %6201 = vmatpush1.bf16.msra.mxu0 %v6176
  %6202 = vmatprep.subr.bf16.mxu0 0
  %6203 = vmatpush1.bf16.msra.mxu0 %v6175
  %6204 = vmatprep.subr.bf16.mxu0 0
  %6205 = vmatpush1.bf16.msra.mxu0 %v6174
  %6206 = vmatprep.subr.bf16.mxu0 0
  %6207 = vmatpush2.bf16.msra.mxu0 0
  %6208 = vmatprep.subr.bf16.mxu0 0
  %6209 = vmatpush2.bf16.msra.mxu0 0
  %6210 = vmatprep.subr.bf16.mxu0 0
  %6211 = vmatpush2.bf16.msra.mxu0 0
  %6212 = vmatprep.subr.bf16.mxu0 0
  %6213 = vmatpush2.bf16.msra.mxu0 0
  %6214 = vmatprep.subr.bf16.mxu0 0
  %6215 = vmatpush2.bf16.msra.mxu0 0
  %6216 = vmatprep.subr.bf16.mxu0 0
  %6217 = vmatpush2.bf16.msra.mxu0 0
  %6218 = vmatprep.subr.bf16.mxu0 0
  %6219 = vmatpush2.bf16.msra.mxu0 0
  %6220 = vmatprep.subr.bf16.mxu0 0
  %6221 = vmatpush2.bf16.msra.mxu0 0
  %6222 = vmatprep.mubr.bf16.mxu0 0
  %6223 = vmatmul.mubr.bf16.gmra.mxu0 %v6118
  %v6224 = vpop.f32.mrf.mxu0
  %v6225 = vadd.f32 %v6140, %v6224
  %v6226 = vpop.f32.mrf.mxu0
  %v6227 = vpop.f32.mrf.mxu0
  %v6228 = vpop.f32.mrf.mxu0
  %6229 = vdwg.mxu0
  %vm6230 = vcmask 48128
  %v6231 = vsel %vm6230, %v6225, -inf
  %6232 = vmax.xlane.f32.xlu0 %v6231
  %v6233 = vpop.xlane.xlu0 %6232
  %v6234 = vsub.f32 %v6225, %v6233
  %v6235 = vmul.f32 %v6234, 1.442695
  %v6236 = vpow.pop %v6235
  %v6237 = vsel %vm6230, %v6236, 0.0
  %6238 = vadd.xlane.f32.xlu0 %v6237
  %v6239 = vpop.xlane.xlu0 %6238
  %v6240 = vrcp.pop %v6239
  %v6241 = vmul.f32 %v6236, %v6240
  %6242 = vst.msk [vmem:[%s7] sm:$0xff] %vm6230, %v6241
  // Predicated region
  $region30: #{policy_forward.3} parent=0 // pred_check
    _
  $region31: #{policy_forward.3} parent=0 // pred_check_branch
    %6244 = sbr.rel (0) target = $region33
  $region32: #{policy_forward.3} parent=0 // pred_region
    _
  $region33: #{policy_forward.3} parent=0 // pred_fallthru
    _
  // Predicated region
  $region34: #{policy_forward.3} parent=0 // pred_check
    _
  $region35: #{policy_forward.3} parent=0 // pred_check_branch
    %6246 = sbr.rel (0) target = $region37
  $region36: #{policy_forward.3} parent=0 // pred_region
    _
  $region37: #{policy_forward.3} parent=0 // pred_fallthru
    _

</llo_original>
